<compile_context>
chip_gen: v6e
topology: v6e:2x2x1
jax: 0.10.0
libtpu: 0.0.40
codegen_flags: <defaults>
</compile_context>

<pallas_src>
import numpy as np
import jax
import jax.numpy as jnp
from jax.experimental import pallas as pl
from jax.experimental.pallas import tpu as pltpu


# --------------------------------------------------------------------------
# Fused kernel factory (static shapes closed over as Python ints).
# --------------------------------------------------------------------------
def _make_fused_kernel(B, H, W, C1, C2, EMB, K1):
    H2, W2 = H // 2, W // 2          # spatial after pool1 (= conv2 spatial)
    H4, W4 = H // 4, W // 4          # spatial after pool2
    Hp, Wp = H2 + 2, W2 + 2          # conv2 padded spatial
    M1 = B * H * W                   # conv1 matmul rows
    M2 = B * H2 * W2                 # conv2 matmul rows
    FLAT = H4 * W4 * C2

    def kernel(p1_ref, w1_ref, b1_ref, w2_ref, b2_ref,
               wl1_ref, bl1_ref, wl2_ref, bl2_ref, a_ref,
               o_ref, xp2_ref):
        # PReLU slopes live in SMEM (scalars).
        a1 = a_ref[0]
        a2 = a_ref[1]
        a3 = a_ref[2]

        # ---- zero ONLY conv2's pad=1 border (interior is fully overwritten) ----
        # (Do NOT gate this on program_id==0: each v7x core has a private scratch.)
        xp2_ref[:, 0:1, :, :] = jnp.zeros((B, 1, Wp, C1), jnp.float32)
        xp2_ref[:, Hp - 1:Hp, :, :] = jnp.zeros((B, 1, Wp, C1), jnp.float32)
        xp2_ref[:, :, 0:1, :] = jnp.zeros((B, Hp, 1, C1), jnp.float32)
        xp2_ref[:, :, Wp - 1:Wp, :] = jnp.zeros((B, Hp, 1, C1), jnp.float32)

        # ---- conv1: single im2col matmul over the whole batch block ----
        p1 = p1_ref[...].reshape(M1, K1)                         # (B*H*W, K1) bf16
        y = jnp.dot(p1, w1_ref[...], preferred_element_type=jnp.float32)
        y = y + b1_ref[...]                                      # (M1, C1) f32
        y = jnp.where(y >= 0.0, y, a1 * y)                       # PReLU

        # ---- pool1 (2x2, stride 2) on the full conv1 output ----
        yh = y.reshape(B * H2, 2 * W, C1)                        # pairs of image rows
        vh = jnp.maximum(yh[:, 0:W, :], yh[:, W:2 * W, :])       # (B*H2, W, C1)
        vw = vh.reshape(B * H2 * W2, 2, C1)
        pooled = jnp.maximum(vw[:, 0, :], vw[:, 1, :])           # (B*H2*W2, C1)

        # One store of the whole pooled interior into the zero-bordered scratch.
        xp2_ref[:, 1:H2 + 1, 1:W2 + 1, :] = pooled.reshape(B, H2, W2, C1)

        # ---- conv2: 9 per-tap accumulating matmuls (no 9x im2col buffer) ----
        x2 = xp2_ref[...].astype(jnp.bfloat16)                   # (B, Hp, Wp, C1)
        acc2 = None
        for kh in range(3):
            for kw in range(3):
                t = kh * 3 + kw
                tap = x2[:, kh:kh + H2, kw:kw + W2, :].reshape(M2, C1)
                w_t = w2_ref[t * C1:(t + 1) * C1, :]             # (C1, C2)
                part = jnp.dot(tap, w_t, preferred_element_type=jnp.float32)
                acc2 = part if acc2 is None else acc2 + part
        y2 = acc2 + b2_ref[...]                                  # (M2, C2) f32
        y2 = jnp.where(y2 >= 0.0, y2, a2 * y2)                   # PReLU

        # ---- pool2 (2x2, stride 2) ----
        y2 = y2.reshape(B * H4, 2 * W2, C2)
        v2 = jnp.maximum(y2[:, 0:W2, :], y2[:, W2:2 * W2, :])    # (B*H4, W2, C2)
        v2 = v2.reshape(B * H4 * W4, 2, C2)
        pooled2 = jnp.maximum(v2[:, 0, :], v2[:, 1, :])          # (B*H4*W4, C2)

        # ---- FC head, M = B (NHWC flatten; w_l1 rows pre-permuted to match) ----
        flat = pooled2.reshape(B, FLAT).astype(jnp.bfloat16)     # (B, H4*W4*C2)
        h = jnp.dot(flat, wl1_ref[...], preferred_element_type=jnp.float32)
        h = h + bl1_ref[...]                                     # (B, EMB)
        h = jnp.where(h >= 0.0, h, a3 * h)                       # PReLU
        out = jnp.dot(h.astype(jnp.bfloat16), wl2_ref[...],
                      preferred_element_type=jnp.float32)
        out = out + bl2_ref[...]                                 # (B, EMB)
        o_ref[0] = out.astype(o_ref.dtype)

    return kernel


def _pick_batch_block(n, max_b=8):
    # Largest divisor of n that still leaves >= 2 grid steps (keeps both v7x
    # TensorCores busy with dimension_semantics=("parallel",)); capped to bound
    # per-step VMEM growth.
    best = 1
    for b in range(1, min(n, max_b) + 1):
        if n % b == 0 and (n // b >= 2 or n == 1):
            best = b
    return best


# --------------------------------------------------------------------------
# Full forward (backbone treated as identity -- see TODO above).
# --------------------------------------------------------------------------
def embedding_net_forward(x_nchw, p, batch_block=None):
    N, Cin, H, W = x_nchw.shape
    assert H % 4 == 0 and W % 4 == 0, "MaxPool2d(2,2) twice needs H,W % 4 == 0"
    KH1 = KW1 = 5
    PAD1 = 2
    C1 = p["w_c1"].shape[3]
    C2 = p["w_c2"].shape[3]
    EMB = p["w_l2"].shape[1]
    H2, W2, H4, W4 = H // 2, W // 2, H // 4, W // 4
    K1 = KH1 * KW1 * Cin
    K2 = 3 * 3 * C1
    FLAT = H4 * W4 * C2

    B = batch_block if batch_block is not None else _pick_batch_block(N)
    assert N % B == 0
    G = N // B

    # NCHW -> NHWC, 'same' pad, conv1 im2col.  Under jit, XLA fuses all of this
    # into one pass producing the patch tensor (fine for small Cin; see TODO).
    x = jnp.transpose(x_nchw, (0, 2, 3, 1))
    xp = jnp.pad(x, ((0, 0), (PAD1, PAD1), (PAD1, PAD1), (0, 0)))
    patches1 = jnp.concatenate(
        [xp[:, kh:kh + H, kw:kw + W, :]
         for kh in range(KH1) for kw in range(KW1)],
        axis=-1).reshape(N, H * W, K1).astype(jnp.bfloat16)

    # Weights as bf16 MXU operands (biases stay f32 for the accumulate path).
    w1 = p["w_c1"].reshape(K1, C1).astype(jnp.bfloat16)
    w2 = p["w_c2"].reshape(K2, C2).astype(jnp.bfloat16)
    # Pre-permute w_l1 rows: PyTorch flattens (c, h, w) but the kernel flattens
    # (h, w, c); permuting offline keeps semantics identical w/o a transpose.
    wl1 = (p["w_l1"].reshape(C2, H4, W4, EMB)
           .transpose(1, 2, 0, 3).reshape(FLAT, EMB).astype(jnp.bfloat16))
    wl2 = p["w_l2"].astype(jnp.bfloat16)
    b_c1 = p["b_c1"].astype(jnp.float32)
    b_c2 = p["b_c2"].astype(jnp.float32)
    b_l1 = p["b_l1"].astype(jnp.float32)
    b_l2 = p["b_l2"].astype(jnp.float32)
    alphas = jnp.concatenate(
        [p["a_c1"].reshape(1), p["a_c2"].reshape(1), p["a_fc"].reshape(1)]
    ).astype(jnp.float32)                                        # (3,)

    flops = 2 * N * (H * W * K1 * C1 + H2 * W2 * K2 * C2
                     + FLAT * EMB + EMB * EMB)
    bytes_accessed = (patches1.size * 2 + w1.size * 2 + w2.size * 2
                      + wl1.size * 2 + wl2.size * 2 + N * EMB * 4
                      + (b_c1.size + b_c2.size + b_l1.size + b_l2.size + 3) * 4)

    kernel = _make_fused_kernel(B, H, W, C1, C2, EMB, K1)
    out = pl.pallas_call(
        kernel,
        out_shape=jax.ShapeDtypeStruct((G, B, EMB), jnp.float32),
        grid=(G,),
        in_specs=[
            pl.BlockSpec((B, H * W, K1), lambda n: (n, 0, 0)),   # conv1 patches
            pl.BlockSpec((K1, C1), lambda n: (0, 0)),            # conv1 weight
            pl.BlockSpec((1, C1), lambda n: (0, 0)),             # conv1 bias
            pl.BlockSpec((K2, C2), lambda n: (0, 0)),            # conv2 weight
            pl.BlockSpec((1, C2), lambda n: (0, 0)),             # conv2 bias
            pl.BlockSpec((FLAT, EMB), lambda n: (0, 0)),         # fc1 weight (permuted rows)
            pl.BlockSpec((1, EMB), lambda n: (0, 0)),            # fc1 bias
            pl.BlockSpec((EMB, EMB), lambda n: (0, 0)),          # fc2 weight
            pl.BlockSpec((1, EMB), lambda n: (0, 0)),            # fc2 bias
            pl.BlockSpec(memory_space=pltpu.MemorySpace.SMEM),   # PReLU slopes
        ],
        out_specs=pl.BlockSpec((1, B, EMB), lambda n: (n, 0, 0)),
        scratch_shapes=[pltpu.VMEM((B, H2 + 2, W2 + 2, C1), jnp.float32)],
        compiler_params=pltpu.CompilerParams(
            dimension_semantics=("parallel",),
            vmem_limit_bytes=32 * 1024 * 1024),
        cost_estimate=pl.CostEstimate(
            flops=flops, transcendentals=0, bytes_accessed=bytes_accessed),
    )(patches1, w1, b_c1, w2, b_c2, wl1, b_l1, wl2, b_l2, alphas)
    return out.reshape(N, EMB)


# --------------------------------------------------------------------------
# Deterministic synthetic parameter init (mirrors randomize_weights).
# --------------------------------------------------------------------------
def _xavier_uniform(key, shape, fan_in, fan_out):
    bound = float(np.sqrt(6.0 / (fan_in + fan_out)))
    return jax.random.uniform(key, shape, jnp.float32, -bound, bound)


def make_params(key, c_in, c1, c2, flat_dim, emb):
    ks = jax.random.split(key, 8)
    # Conv1: (KH, KW, Cin, Cout) = (5, 5, c_in, c1); xavier on weight only.
    w_c1 = _xavier_uniform(ks[0], (5, 5, c_in, c1), c_in * 25, c1 * 25)
    b_c1 = jax.random.uniform(ks[1], (1, c1), jnp.float32,
                              -1.0 / np.sqrt(c_in * 25), 1.0 / np.sqrt(c_in * 25))
    # Conv2: (3, 3, c1, c2)
    w_c2 = _xavier_uniform(ks[2], (3, 3, c1, c2), c1 * 9, c2 * 9)
    b_c2 = jax.random.uniform(ks[3], (1, c2), jnp.float32,
                              -1.0 / np.sqrt(c1 * 9), 1.0 / np.sqrt(c1 * 9))
    # Linear1: (flat_dim, emb) with rows in PyTorch NCHW-flatten order (c,h,w);
    # bias = 0.01 per randomize_weights.
    w_l1 = _xavier_uniform(ks[4], (flat_dim, emb), flat_dim, emb)
    b_l1 = jnp.full((1, emb), 0.01, jnp.float32)
    # Linear2: (emb, emb)
    w_l2 = _xavier_uniform(ks[5], (emb, emb), emb, emb)
    b_l2 = jnp.full((1, emb), 0.01, jnp.float32)
    # Three independent PReLU slopes (nn.PReLU() default 0.25, one scalar each).
    return {
        "w_c1": w_c1, "b_c1": b_c1, "a_c1": jnp.full((1,), 0.25, jnp.float32),
        "w_c2": w_c2, "b_c2": b_c2, "a_c2": jnp.full((1,), 0.25, jnp.float32),
        "w_l1": w_l1, "b_l1": b_l1, "a_fc": jnp.full((1,), 0.25, jnp.float32),
        "w_l2": w_l2, "b_l2": b_l2,
    }


if __name__ == "__main__":
    # Small shapes consistent with the module: the feature map stands in for
    # backbone(x); conv channel counts follow the module (256 -> 128).
    # N=4 exercises batch-blocking (B=2) while keeping a 2-step grid for v7x.
    N, C_IN, H, W = 4, 8, 16, 16
    C1, C2 = 256, 128
    EMB = 32
    FLAT = C2 * (H // 4) * (W // 4)   # 128 * 4 * 4 = 2048

    key = jax.random.PRNGKey(0)
    k_x, k_p = jax.random.split(key)
    x = jax.random.normal(k_x, (N, C_IN, H, W), jnp.float32)   # NCHW, like PyTorch
    params = make_params(k_p, C_IN, C1, C2, FLAT, EMB)

    fwd = jax.jit(embedding_net_forward)
    out = jax.block_until_ready(fwd(x, params))
    assert out.shape == (N, EMB), out.shape
    assert out.dtype == jnp.float32
    assert bool(jnp.all(jnp.isfinite(out)))
    print("KERNEL_OK")
</pallas_src>

<mosaic_0001>
module attributes {stable_mosaic.version = 11 : i64} {
  func.func @kernel(%arg0: i32, %arg1: memref<2x256x200xbf16, #tpu.memory_space<vmem>>, %arg2: memref<200x256xbf16, #tpu.memory_space<vmem>>, %arg3: memref<1x256xf32, #tpu.memory_space<vmem>>, %arg4: memref<2304x128xbf16, #tpu.memory_space<vmem>>, %arg5: memref<1x128xf32, #tpu.memory_space<vmem>>, %arg6: memref<2048x32xbf16, #tpu.memory_space<vmem>>, %arg7: memref<1x32xf32, #tpu.memory_space<vmem>>, %arg8: memref<32x32xbf16, #tpu.memory_space<vmem>>, %arg9: memref<1x32xf32, #tpu.memory_space<vmem>>, %arg10: memref<3xf32, #tpu.memory_space<smem>>, %arg11: memref<1x2x32xf32, #tpu.memory_space<vmem>>, %arg12: memref<2x10x10x256xf32, #tpu.memory_space<vmem>>) attributes {dimension_semantics = [#tpu.dimension_semantics<parallel>], iteration_bounds = array<i64: 2>, scalar_prefetch = 0 : i64, scratch_operands = 1 : i64, tpu.core_type = #tpu.core_type<tc>, window_params = [{transform_indices = @transform_0, window_bounds = array<i64: 2, 256, 200>}, {pipeline_mode = #tpu.pipeline_mode<synchronous>, transform_indices = @transform_1, window_bounds = array<i64: 200, 256>}, {pipeline_mode = #tpu.pipeline_mode<synchronous>, transform_indices = @transform_2, window_bounds = array<i64: 1, 256>}, {pipeline_mode = #tpu.pipeline_mode<synchronous>, transform_indices = @transform_3, window_bounds = array<i64: 2304, 128>}, {pipeline_mode = #tpu.pipeline_mode<synchronous>, transform_indices = @transform_4, window_bounds = array<i64: 1, 128>}, {pipeline_mode = #tpu.pipeline_mode<synchronous>, transform_indices = @transform_5, window_bounds = array<i64: 2048, 32>}, {pipeline_mode = #tpu.pipeline_mode<synchronous>, transform_indices = @transform_6, window_bounds = array<i64: 1, 32>}, {pipeline_mode = #tpu.pipeline_mode<synchronous>, transform_indices = @transform_7, window_bounds = array<i64: 32, 32>}, {pipeline_mode = #tpu.pipeline_mode<synchronous>, transform_indices = @transform_8, window_bounds = array<i64: 1, 32>}, {transform_indices = @transform_9, window_bounds = array<i64: 3>}, {transform_indices = @transform_10, window_bounds = array<i64: 1, 2, 32>}]} {
    %c0 = arith.constant 0 : index
    %0 = memref.load %arg10[%c0] : memref<3xf32, #tpu.memory_space<smem>>
    %c1 = arith.constant 1 : index
    %1 = memref.load %arg10[%c1] : memref<3xf32, #tpu.memory_space<smem>>
    %c2 = arith.constant 2 : index
    %2 = memref.load %arg10[%c2] : memref<3xf32, #tpu.memory_space<smem>>
    %cst = arith.constant 0.000000e+00 : f32
    %3 = vector.broadcast %cst : f32 to vector<2x1x10x256xf32>
    %c0_0 = arith.constant 0 : index
    %c0_1 = arith.constant 0 : index
    %c0_2 = arith.constant 0 : index
    %c0_3 = arith.constant 0 : index
    %4 = vector.load %arg12[%c0_0, %c0_1, %c0_2, %c0_3] : memref<2x10x10x256xf32, #tpu.memory_space<vmem>>, vector<2x1x10x256xf32>
    tpu.vector_store %arg12[%c0_0, %c0_1, %c0_2, %c0_3], %3 {strides = array<i32>} : memref<2x10x10x256xf32, #tpu.memory_space<vmem>>, vector<2x1x10x256xf32>,
    %cst_4 = arith.constant 0.000000e+00 : f32
    %5 = vector.broadcast %cst_4 : f32 to vector<2x1x10x256xf32>
    %c0_5 = arith.constant 0 : index
    %c9 = arith.constant 9 : index
    %c0_6 = arith.constant 0 : index
    %c0_7 = arith.constant 0 : index
    %6 = vector.load %arg12[%c0_5, %c9, %c0_6, %c0_7] : memref<2x10x10x256xf32, #tpu.memory_space<vmem>>, vector<2x1x10x256xf32>
    tpu.vector_store %arg12[%c0_5, %c9, %c0_6, %c0_7], %5 {strides = array<i32>} : memref<2x10x10x256xf32, #tpu.memory_space<vmem>>, vector<2x1x10x256xf32>,
    %cst_8 = arith.constant 0.000000e+00 : f32
    %7 = vector.broadcast %cst_8 : f32 to vector<2x10x1x256xf32>
    %c0_9 = arith.constant 0 : index
    %c0_10 = arith.constant 0 : index
    %c0_11 = arith.constant 0 : index
    %c0_12 = arith.constant 0 : index
    %8 = vector.load %arg12[%c0_9, %c0_10, %c0_11, %c0_12] : memref<2x10x10x256xf32, #tpu.memory_space<vmem>>, vector<2x10x1x256xf32>
    tpu.vector_store %arg12[%c0_9, %c0_10, %c0_11, %c0_12], %7 {strides = array<i32>} : memref<2x10x10x256xf32, #tpu.memory_space<vmem>>, vector<2x10x1x256xf32>,
    %cst_13 = arith.constant 0.000000e+00 : f32
    %9 = vector.broadcast %cst_13 : f32 to vector<2x10x1x256xf32>
    %c0_14 = arith.constant 0 : index
    %c0_15 = arith.constant 0 : index
    %c9_16 = arith.constant 9 : index
    %c0_17 = arith.constant 0 : index
    %10 = vector.load %arg12[%c0_14, %c0_15, %c9_16, %c0_17] : memref<2x10x10x256xf32, #tpu.memory_space<vmem>>, vector<2x10x1x256xf32>
    tpu.vector_store %arg12[%c0_14, %c0_15, %c9_16, %c0_17], %9 {strides = array<i32>} : memref<2x10x10x256xf32, #tpu.memory_space<vmem>>, vector<2x10x1x256xf32>,
    %c0_18 = arith.constant 0 : index
    %c0_19 = arith.constant 0 : index
    %c0_20 = arith.constant 0 : index
    %11 = vector.load %arg1[%c0_18, %c0_19, %c0_20] : memref<2x256x200xbf16, #tpu.memory_space<vmem>>, vector<2x256x200xbf16>
    %12 = vector.shape_cast %11 : vector<2x256x200xbf16> to vector<512x200xbf16>
    %c0_21 = arith.constant 0 : index
    %c0_22 = arith.constant 0 : index
    %13 = vector.load %arg2[%c0_21, %c0_22] : memref<200x256xbf16, #tpu.memory_space<vmem>>, vector<200x256xbf16>
    %cst_23 = arith.constant dense<0.000000e+00> : vector<512x256xf32>
    %14 = tpu.matmul %12, %13, %cst_23 {dimension_numbers = #tpu.dot_dimension_numbers<[1], [0], [0], [1], [0, 0, 1, 1], [], []>} : vector<512x200xbf16>, vector<200x256xbf16>, vector<512x256xf32> -> vector<512x256xf32>
    %c0_24 = arith.constant 0 : index
    %c0_25 = arith.constant 0 : index
    %15 = vector.load %arg3[%c0_24, %c0_25] : memref<1x256xf32, #tpu.memory_space<vmem>>, vector<1x256xf32>
    %16 = vector.broadcast %15 : vector<1x256xf32> to vector<512x256xf32>
    %17 = arith.addf %14, %16 : vector<512x256xf32>
    %cst_26 = arith.constant 0.000000e+00 : f32
    %18 = vector.broadcast %cst_26 : f32 to vector<512x256xf32>
    %19 = arith.cmpf oge, %17, %18 : vector<512x256xf32>
    %20 = vector.broadcast %0 : f32 to vector<512x256xf32>
    %21 = arith.mulf %20, %17 : vector<512x256xf32>
    %22 = arith.select %19, %17, %21 : vector<512x256xi1>, vector<512x256xf32>
    %23 = vector.shape_cast %22 : vector<512x256xf32> to vector<16x32x256xf32>
    %24 = vector.extract_strided_slice %23 {offsets = [0, 0, 0], sizes = [16, 16, 256], strides = [1, 1, 1]} : vector<16x32x256xf32> to vector<16x16x256xf32>
    %25 = vector.extract_strided_slice %23 {offsets = [0, 16, 0], sizes = [16, 16, 256], strides = [1, 1, 1]} : vector<16x32x256xf32> to vector<16x16x256xf32>
    %26 = arith.maximumf %24, %25 : vector<16x16x256xf32>
    %27 = vector.shape_cast %26 : vector<16x16x256xf32> to vector<128x2x256xf32>
    %28 = vector.extract_strided_slice %27 {offsets = [0, 0, 0], sizes = [128, 1, 256], strides = [1, 1, 1]} : vector<128x2x256xf32> to vector<128x1x256xf32>
    %29 = vector.shape_cast %28 : vector<128x1x256xf32> to vector<128x256xf32>
    %30 = vector.extract_strided_slice %27 {offsets = [0, 1, 0], sizes = [128, 1, 256], strides = [1, 1, 1]} : vector<128x2x256xf32> to vector<128x1x256xf32>
    %31 = vector.shape_cast %30 : vector<128x1x256xf32> to vector<128x256xf32>
    %32 = arith.maximumf %29, %31 : vector<128x256xf32>
    %33 = vector.shape_cast %32 : vector<128x256xf32> to vector<2x8x8x256xf32>
    %c0_27 = arith.constant 0 : index
    %c1_28 = arith.constant 1 : index
    %c1_29 = arith.constant 1 : index
    %c0_30 = arith.constant 0 : index
    %34 = vector.load %arg12[%c0_27, %c1_28, %c1_29, %c0_30] : memref<2x10x10x256xf32, #tpu.memory_space<vmem>>, vector<2x8x8x256xf32>
    tpu.vector_store %arg12[%c0_27, %c1_28, %c1_29, %c0_30], %33 {strides = array<i32>} : memref<2x10x10x256xf32, #tpu.memory_space<vmem>>, vector<2x8x8x256xf32>,
    %c0_31 = arith.constant 0 : index
    %c0_32 = arith.constant 0 : index
    %c0_33 = arith.constant 0 : index
    %c0_34 = arith.constant 0 : index
    %35 = vector.load %arg12[%c0_31, %c0_32, %c0_33, %c0_34] : memref<2x10x10x256xf32, #tpu.memory_space<vmem>>, vector<2x10x10x256xf32>
    %36 = arith.truncf %35 : vector<2x10x10x256xf32> to vector<2x10x10x256xbf16>
    %37 = vector.extract_strided_slice %36 {offsets = [0, 0, 0, 0], sizes = [2, 8, 8, 256], strides = [1, 1, 1, 1]} : vector<2x10x10x256xbf16> to vector<2x8x8x256xbf16>
    %38 = vector.shape_cast %37 : vector<2x8x8x256xbf16> to vector<128x256xbf16>
    %c0_35 = arith.constant 0 : index
    %c0_36 = arith.constant 0 : index
    %39 = vector.load %arg4[%c0_35, %c0_36] : memref<2304x128xbf16, #tpu.memory_space<vmem>>, vector<256x128xbf16>
    %cst_37 = arith.constant dense<0.000000e+00> : vector<128x128xf32>
    %40 = tpu.matmul %38, %39, %cst_37 {dimension_numbers = #tpu.dot_dimension_numbers<[1], [0], [0], [1], [0, 0, 1, 1], [], []>} : vector<128x256xbf16>, vector<256x128xbf16>, vector<128x128xf32> -> vector<128x128xf32>
    %41 = vector.extract_strided_slice %36 {offsets = [0, 0, 1, 0], sizes = [2, 8, 8, 256], strides = [1, 1, 1, 1]} : vector<2x10x10x256xbf16> to vector<2x8x8x256xbf16>
    %42 = vector.shape_cast %41 : vector<2x8x8x256xbf16> to vector<128x256xbf16>
    %c256 = arith.constant 256 : index
    %c0_38 = arith.constant 0 : index
    %43 = vector.load %arg4[%c256, %c0_38] : memref<2304x128xbf16, #tpu.memory_space<vmem>>, vector<256x128xbf16>
    %cst_39 = arith.constant dense<0.000000e+00> : vector<128x128xf32>
    %44 = tpu.matmul %42, %43, %cst_39 {dimension_numbers = #tpu.dot_dimension_numbers<[1], [0], [0], [1], [0, 0, 1, 1], [], []>} : vector<128x256xbf16>, vector<256x128xbf16>, vector<128x128xf32> -> vector<128x128xf32>
    %45 = arith.addf %40, %44 : vector<128x128xf32>
    %46 = vector.extract_strided_slice %36 {offsets = [0, 0, 2, 0], sizes = [2, 8, 8, 256], strides = [1, 1, 1, 1]} : vector<2x10x10x256xbf16> to vector<2x8x8x256xbf16>
    %47 = vector.shape_cast %46 : vector<2x8x8x256xbf16> to vector<128x256xbf16>
    %c512 = arith.constant 512 : index
    %c0_40 = arith.constant 0 : index
    %48 = vector.load %arg4[%c512, %c0_40] : memref<2304x128xbf16, #tpu.memory_space<vmem>>, vector<256x128xbf16>
    %cst_41 = arith.constant dense<0.000000e+00> : vector<128x128xf32>
    %49 = tpu.matmul %47, %48, %cst_41 {dimension_numbers = #tpu.dot_dimension_numbers<[1], [0], [0], [1], [0, 0, 1, 1], [], []>} : vector<128x256xbf16>, vector<256x128xbf16>, vector<128x128xf32> -> vector<128x128xf32>
    %50 = arith.addf %45, %49 : vector<128x128xf32>
    %51 = vector.extract_strided_slice %36 {offsets = [0, 1, 0, 0], sizes = [2, 8, 8, 256], strides = [1, 1, 1, 1]} : vector<2x10x10x256xbf16> to vector<2x8x8x256xbf16>
    %52 = vector.shape_cast %51 : vector<2x8x8x256xbf16> to vector<128x256xbf16>
    %c768 = arith.constant 768 : index
    %c0_42 = arith.constant 0 : index
    %53 = vector.load %arg4[%c768, %c0_42] : memref<2304x128xbf16, #tpu.memory_space<vmem>>, vector<256x128xbf16>
    %cst_43 = arith.constant dense<0.000000e+00> : vector<128x128xf32>
    %54 = tpu.matmul %52, %53, %cst_43 {dimension_numbers = #tpu.dot_dimension_numbers<[1], [0], [0], [1], [0, 0, 1, 1], [], []>} : vector<128x256xbf16>, vector<256x128xbf16>, vector<128x128xf32> -> vector<128x128xf32>
    %55 = arith.addf %50, %54 : vector<128x128xf32>
    %56 = vector.extract_strided_slice %36 {offsets = [0, 1, 1, 0], sizes = [2, 8, 8, 256], strides = [1, 1, 1, 1]} : vector<2x10x10x256xbf16> to vector<2x8x8x256xbf16>
    %57 = vector.shape_cast %56 : vector<2x8x8x256xbf16> to vector<128x256xbf16>
    %c1024 = arith.constant 1024 : index
    %c0_44 = arith.constant 0 : index
    %58 = vector.load %arg4[%c1024, %c0_44] : memref<2304x128xbf16, #tpu.memory_space<vmem>>, vector<256x128xbf16>
    %cst_45 = arith.constant dense<0.000000e+00> : vector<128x128xf32>
    %59 = tpu.matmul %57, %58, %cst_45 {dimension_numbers = #tpu.dot_dimension_numbers<[1], [0], [0], [1], [0, 0, 1, 1], [], []>} : vector<128x256xbf16>, vector<256x128xbf16>, vector<128x128xf32> -> vector<128x128xf32>
    %60 = arith.addf %55, %59 : vector<128x128xf32>
    %61 = vector.extract_strided_slice %36 {offsets = [0, 1, 2, 0], sizes = [2, 8, 8, 256], strides = [1, 1, 1, 1]} : vector<2x10x10x256xbf16> to vector<2x8x8x256xbf16>
    %62 = vector.shape_cast %61 : vector<2x8x8x256xbf16> to vector<128x256xbf16>
    %c1280 = arith.constant 1280 : index
    %c0_46 = arith.constant 0 : index
    %63 = vector.load %arg4[%c1280, %c0_46] : memref<2304x128xbf16, #tpu.memory_space<vmem>>, vector<256x128xbf16>
    %cst_47 = arith.constant dense<0.000000e+00> : vector<128x128xf32>
    %64 = tpu.matmul %62, %63, %cst_47 {dimension_numbers = #tpu.dot_dimension_numbers<[1], [0], [0], [1], [0, 0, 1, 1], [], []>} : vector<128x256xbf16>, vector<256x128xbf16>, vector<128x128xf32> -> vector<128x128xf32>
    %65 = arith.addf %60, %64 : vector<128x128xf32>
    %66 = vector.extract_strided_slice %36 {offsets = [0, 2, 0, 0], sizes = [2, 8, 8, 256], strides = [1, 1, 1, 1]} : vector<2x10x10x256xbf16> to vector<2x8x8x256xbf16>
    %67 = vector.shape_cast %66 : vector<2x8x8x256xbf16> to vector<128x256xbf16>
    %c1536 = arith.constant 1536 : index
    %c0_48 = arith.constant 0 : index
    %68 = vector.load %arg4[%c1536, %c0_48] : memref<2304x128xbf16, #tpu.memory_space<vmem>>, vector<256x128xbf16>
    %cst_49 = arith.constant dense<0.000000e+00> : vector<128x128xf32>
    %69 = tpu.matmul %67, %68, %cst_49 {dimension_numbers = #tpu.dot_dimension_numbers<[1], [0], [0], [1], [0, 0, 1, 1], [], []>} : vector<128x256xbf16>, vector<256x128xbf16>, vector<128x128xf32> -> vector<128x128xf32>
    %70 = arith.addf %65, %69 : vector<128x128xf32>
    %71 = vector.extract_strided_slice %36 {offsets = [0, 2, 1, 0], sizes = [2, 8, 8, 256], strides = [1, 1, 1, 1]} : vector<2x10x10x256xbf16> to vector<2x8x8x256xbf16>
    %72 = vector.shape_cast %71 : vector<2x8x8x256xbf16> to vector<128x256xbf16>
    %c1792 = arith.constant 1792 : index
    %c0_50 = arith.constant 0 : index
    %73 = vector.load %arg4[%c1792, %c0_50] : memref<2304x128xbf16, #tpu.memory_space<vmem>>, vector<256x128xbf16>
    %cst_51 = arith.constant dense<0.000000e+00> : vector<128x128xf32>
    %74 = tpu.matmul %72, %73, %cst_51 {dimension_numbers = #tpu.dot_dimension_numbers<[1], [0], [0], [1], [0, 0, 1, 1], [], []>} : vector<128x256xbf16>, vector<256x128xbf16>, vector<128x128xf32> -> vector<128x128xf32>
    %75 = arith.addf %70, %74 : vector<128x128xf32>
    %76 = vector.extract_strided_slice %36 {offsets = [0, 2, 2, 0], sizes = [2, 8, 8, 256], strides = [1, 1, 1, 1]} : vector<2x10x10x256xbf16> to vector<2x8x8x256xbf16>
    %77 = vector.shape_cast %76 : vector<2x8x8x256xbf16> to vector<128x256xbf16>
    %c2048 = arith.constant 2048 : index
    %c0_52 = arith.constant 0 : index
    %78 = vector.load %arg4[%c2048, %c0_52] : memref<2304x128xbf16, #tpu.memory_space<vmem>>, vector<256x128xbf16>
    %cst_53 = arith.constant dense<0.000000e+00> : vector<128x128xf32>
    %79 = tpu.matmul %77, %78, %cst_53 {dimension_numbers = #tpu.dot_dimension_numbers<[1], [0], [0], [1], [0, 0, 1, 1], [], []>} : vector<128x256xbf16>, vector<256x128xbf16>, vector<128x128xf32> -> vector<128x128xf32>
    %80 = arith.addf %75, %79 : vector<128x128xf32>
    %c0_54 = arith.constant 0 : index
    %c0_55 = arith.constant 0 : index
    %81 = vector.load %arg5[%c0_54, %c0_55] : memref<1x128xf32, #tpu.memory_space<vmem>>, vector<1x128xf32>
    %82 = vector.broadcast %81 : vector<1x128xf32> to vector<128x128xf32>
    %83 = arith.addf %80, %82 : vector<128x128xf32>
    %cst_56 = arith.constant 0.000000e+00 : f32
    %84 = vector.broadcast %cst_56 : f32 to vector<128x128xf32>
    %85 = arith.cmpf oge, %83, %84 : vector<128x128xf32>
    %86 = vector.broadcast %1 : f32 to vector<128x128xf32>
    %87 = arith.mulf %86, %83 : vector<128x128xf32>
    %88 = arith.select %85, %83, %87 : vector<128x128xi1>, vector<128x128xf32>
    %89 = vector.shape_cast %88 : vector<128x128xf32> to vector<8x16x128xf32>
    %90 = vector.extract_strided_slice %89 {offsets = [0, 0, 0], sizes = [8, 8, 128], strides = [1, 1, 1]} : vector<8x16x128xf32> to vector<8x8x128xf32>
    %91 = vector.extract_strided_slice %89 {offsets = [0, 8, 0], sizes = [8, 8, 128], strides = [1, 1, 1]} : vector<8x16x128xf32> to vector<8x8x128xf32>
    %92 = arith.maximumf %90, %91 : vector<8x8x128xf32>
    %93 = vector.shape_cast %92 : vector<8x8x128xf32> to vector<32x2x128xf32>
    %94 = vector.extract_strided_slice %93 {offsets = [0, 0, 0], sizes = [32, 1, 128], strides = [1, 1, 1]} : vector<32x2x128xf32> to vector<32x1x128xf32>
    %95 = vector.shape_cast %94 : vector<32x1x128xf32> to vector<32x128xf32>
    %96 = vector.extract_strided_slice %93 {offsets = [0, 1, 0], sizes = [32, 1, 128], strides = [1, 1, 1]} : vector<32x2x128xf32> to vector<32x1x128xf32>
    %97 = vector.shape_cast %96 : vector<32x1x128xf32> to vector<32x128xf32>
    %98 = arith.maximumf %95, %97 : vector<32x128xf32>
    %99 = vector.shape_cast %98 : vector<32x128xf32> to vector<2x2048xf32>
    %100 = arith.truncf %99 : vector<2x2048xf32> to vector<2x2048xbf16>
    %c0_57 = arith.constant 0 : index
    %c0_58 = arith.constant 0 : index
    %101 = vector.load %arg6[%c0_57, %c0_58] : memref<2048x32xbf16, #tpu.memory_space<vmem>>, vector<2048x32xbf16>
    %cst_59 = arith.constant dense<0.000000e+00> : vector<2x32xf32>
    %102 = tpu.matmul %100, %101, %cst_59 {dimension_numbers = #tpu.dot_dimension_numbers<[1], [0], [0], [1], [0, 0, 1, 1], [], []>} : vector<2x2048xbf16>, vector<2048x32xbf16>, vector<2x32xf32> -> vector<2x32xf32>
    %c0_60 = arith.constant 0 : index
    %c0_61 = arith.constant 0 : index
    %103 = vector.load %arg7[%c0_60, %c0_61] : memref<1x32xf32, #tpu.memory_space<vmem>>, vector<1x32xf32>
    %104 = vector.broadcast %103 : vector<1x32xf32> to vector<2x32xf32>
    %105 = arith.addf %102, %104 : vector<2x32xf32>
    %cst_62 = arith.constant 0.000000e+00 : f32
    %106 = vector.broadcast %cst_62 : f32 to vector<2x32xf32>
    %107 = arith.cmpf oge, %105, %106 : vector<2x32xf32>
    %108 = vector.broadcast %2 : f32 to vector<2x32xf32>
    %109 = arith.mulf %108, %105 : vector<2x32xf32>
    %110 = arith.select %107, %105, %109 : vector<2x32xi1>, vector<2x32xf32>
    %111 = arith.truncf %110 : vector<2x32xf32> to vector<2x32xbf16>
    %c0_63 = arith.constant 0 : index
    %c0_64 = arith.constant 0 : index
    %112 = vector.load %arg8[%c0_63, %c0_64] : memref<32x32xbf16, #tpu.memory_space<vmem>>, vector<32x32xbf16>
    %cst_65 = arith.constant dense<0.000000e+00> : vector<2x32xf32>
    %113 = tpu.matmul %111, %112, %cst_65 {dimension_numbers = #tpu.dot_dimension_numbers<[1], [0], [0], [1], [0, 0, 1, 1], [], []>} : vector<2x32xbf16>, vector<32x32xbf16>, vector<2x32xf32> -> vector<2x32xf32>
    %c0_66 = arith.constant 0 : index
    %c0_67 = arith.constant 0 : index
    %114 = vector.load %arg9[%c0_66, %c0_67] : memref<1x32xf32, #tpu.memory_space<vmem>>, vector<1x32xf32>
    %115 = vector.broadcast %114 : vector<1x32xf32> to vector<2x32xf32>
    %116 = arith.addf %113, %115 : vector<2x32xf32>
    %c0_68 = arith.constant 0 : index
    %c0_69 = arith.constant 0 : index
    %c0_70 = arith.constant 0 : index
    %117 = vector.load %arg11[%c0_68, %c0_69, %c0_70] : memref<1x2x32xf32, #tpu.memory_space<vmem>>, vector<1x2x32xf32>
    %118 = vector.shape_cast %117 : vector<1x2x32xf32> to vector<2x32xf32>
    %119 = vector.shape_cast %116 : vector<2x32xf32> to vector<1x2x32xf32>
    tpu.vector_store %arg11[%c0_68, %c0_69, %c0_70], %119 {strides = array<i32>} : memref<1x2x32xf32, #tpu.memory_space<vmem>>, vector<1x2x32xf32>,
    return
  }
  func.func @transform_0(%arg0: i32) -> (i32, i32, i32) {
    %c0_i32 = arith.constant 0 : i32
    %c0_i32_0 = arith.constant 0 : i32
    %c0_i32_1 = arith.constant 0 : i32
    return %arg0, %c0_i32, %c0_i32_0 : i32, i32, i32
  }
  func.func @transform_1(%arg0: i32) -> (i32, i32) {
    %c0_i32 = arith.constant 0 : i32
    %c0_i32_0 = arith.constant 0 : i32
    %c0_i32_1 = arith.constant 0 : i32
    return %c0_i32, %c0_i32_0 : i32, i32
  }
  func.func @transform_2(%arg0: i32) -> (i32, i32) {
    %c0_i32 = arith.constant 0 : i32
    %c0_i32_0 = arith.constant 0 : i32
    %c0_i32_1 = arith.constant 0 : i32
    return %c0_i32, %c0_i32_0 : i32, i32
  }
  func.func @transform_3(%arg0: i32) -> (i32, i32) {
    %c0_i32 = arith.constant 0 : i32
    %c0_i32_0 = arith.constant 0 : i32
    %c0_i32_1 = arith.constant 0 : i32
    return %c0_i32, %c0_i32_0 : i32, i32
  }
  func.func @transform_4(%arg0: i32) -> (i32, i32) {
    %c0_i32 = arith.constant 0 : i32
    %c0_i32_0 = arith.constant 0 : i32
    %c0_i32_1 = arith.constant 0 : i32
    return %c0_i32, %c0_i32_0 : i32, i32
  }
  func.func @transform_5(%arg0: i32) -> (i32, i32) {
    %c0_i32 = arith.constant 0 : i32
    %c0_i32_0 = arith.constant 0 : i32
    %c0_i32_1 = arith.constant 0 : i32
    return %c0_i32, %c0_i32_0 : i32, i32
  }
  func.func @transform_6(%arg0: i32) -> (i32, i32) {
    %c0_i32 = arith.constant 0 : i32
    %c0_i32_0 = arith.constant 0 : i32
    %c0_i32_1 = arith.constant 0 : i32
    return %c0_i32, %c0_i32_0 : i32, i32
  }
  func.func @transform_7(%arg0: i32) -> (i32, i32) {
    %c0_i32 = arith.constant 0 : i32
    %c0_i32_0 = arith.constant 0 : i32
    %c0_i32_1 = arith.constant 0 : i32
    return %c0_i32, %c0_i32_0 : i32, i32
  }
  func.func @transform_8(%arg0: i32) -> (i32, i32) {
    %c0_i32 = arith.constant 0 : i32
    %c0_i32_0 = arith.constant 0 : i32
    %c0_i32_1 = arith.constant 0 : i32
    return %c0_i32, %c0_i32_0 : i32, i32
  }
  func.func @transform_9(%arg0: i32) -> i32 {
    %c0_i32 = arith.constant 0 : i32
    %c0_i32_0 = arith.constant 0 : i32
    return %c0_i32 : i32
  }
  func.func @transform_10(%arg0: i32) -> (i32, i32, i32) {
    %c0_i32 = arith.constant 0 : i32
    %c0_i32_0 = arith.constant 0 : i32
    %c0_i32_1 = arith.constant 0 : i32
    return %arg0, %c0_i32, %c0_i32_0 : i32, i32, i32
  }
}

</mosaic_0001>

<llo_original>
// kernel: embedding_net_forward.1
$region0: #{embedding_net_forward.1}
  #allocation0 [shape = 'u32[]', space=smem, size = 0x4, offset = 0x4, fixed_abs, tag = 'smem constant byte address 0x4 - core index']
  #allocation1 [shape = 'u32[144,128]{1,0:T(1,128)}', space=vmem, size = 0x12000, scoped, tag = 'internal scratch']
  #allocation2 [shape = 'f32[2,10,10,256]{3,2,1,0:T(8,128)}', space=vmem, size = 0x50000, scoped, tag = 'scratch operand']
  %s0 = inlined_call_operand.vmem [shape: bf16[4,256,200], index: 0, kind: input, shape index: {}]
  %s1 = inlined_call_operand.vmem [shape: bf16[200,256], index: 1, kind: input, shape index: {}]
  %s2 = inlined_call_operand.vmem [shape: f32[1,256], index: 2, kind: input, shape index: {}]
  %s3 = inlined_call_operand.vmem [shape: bf16[2304,128], index: 3, kind: input, shape index: {}]
  %s4 = inlined_call_operand.vmem [shape: f32[1,128], index: 4, kind: input, shape index: {}]
  %s5 = inlined_call_operand.vmem [shape: bf16[2048,32], index: 5, kind: input, shape index: {}]
  %s6 = inlined_call_operand.vmem [shape: f32[1,32], index: 6, kind: input, shape index: {}]
  %s7 = inlined_call_operand.vmem [shape: bf16[32,32], index: 7, kind: input, shape index: {}]
  %s8 = inlined_call_operand.vmem [shape: f32[1,32], index: 8, kind: input, shape index: {}]
  %s9 = inlined_call_operand.vmem [shape: f32[3], index: 9, kind: input, shape index: {}]
  %s10 = inlined_call_operand.hbm [shape: f32[2,2,32], index: 10, kind: output, shape index: {}]
  %s11 = sld [smem:[#allocation0]]
  $region77: #{embedding_net_forward.1} parent=0
    _
  %s13 = ssub.s32 1, %s11
  %s14 = scalar_select 0, %s13, %s11
  $region1: #{embedding_net_forward.1} parent=0
    #allocation3 [shape = 'u8[512]{0}', space=smem, size = 0x200, scoped, tag = 'input window, operand 9, single buffered']
    #allocation4 [shape = 's32[2]{0}', space=sflag, size = 0x8, scoped, tag = 'scoped memory for embedding_net_forward.1']
    #allocation5 [shape = 's32[2]{0}', space=sflag, size = 0x8, scoped, tag = 'scoped memory for embedding_net_forward.1']
    #allocation6 [shape = 'u8[2048]{0}', space=vmem, size = 0x800, scoped, tag = 'output window, operand 0']
    %15 = vsyncpa [#allocation5], 0
    %16 = vsyncpa [#allocation4], 0
    %s17 = scalar_lea.sflag [#allocation4], 1
    %18 = vsyncpa %s17, 0
    loop: start=0, step=1, limit=4
    $region2: #{embedding_net_forward.1} parent=1 // loop_pre_header
      _
    $region3: #{embedding_net_forward.1} parent=1 // loop_header
      %s20 = sphi 0, %s24
      %p21 = scmp.ge.s32.totalorder %s20, 4
      %s30 = sphi 0, %s32
      %s33 = sphi 0, %s30
      %s34 = sphi 0, %s33
      %s50 = sphi 0, %s34
      %s54 = sphi 0, %s54
      %s56 = sphi 0, %s54
      %s57 = sphi 0, %s56
      %s71 = sphi 0, %s57
      %s75 = sphi 0, %s75
      %s77 = sphi 0, %s75
      %s78 = sphi 0, %s77
      %s92 = sphi 0, %s78
      %s96 = sphi 0, %s96
      %s98 = sphi 0, %s96
      %s99 = sphi 0, %s98
      %s113 = sphi 0, %s99
      %s117 = sphi 0, %s117
      %s119 = sphi 0, %s117
      %s120 = sphi 0, %s119
      %s134 = sphi 0, %s120
      %s138 = sphi 0, %s138
      %s140 = sphi 0, %s138
      %s141 = sphi 0, %s140
      %s155 = sphi 0, %s141
      %s159 = sphi 0, %s159
      %s161 = sphi 0, %s159
      %s162 = sphi 0, %s161
      %s176 = sphi 0, %s162
      %s180 = sphi 0, %s180
      %s182 = sphi 0, %s180
      %s183 = sphi 0, %s182
      %s197 = sphi 0, %s183
      %s201 = sphi 0, %s201
      %s203 = sphi 0, %s201
      %s204 = sphi 0, %s203
      %s218 = sphi 0, %s204
      %s222 = sphi 0, %s222
      %s224 = sphi 0, %s222
      %s225 = sphi 0, %s224
      %s239 = sphi 0, %s225
      %s245 = sphi 0, %s247
      %s248 = sphi 0, %s245
      %s249 = sphi 0, %s248
      %s265 = sphi 0, %s249
    $region4: #{embedding_net_forward.1} parent=1 // loop_header_branch
      %23 = sbr.rel (%p21) target = $region8
    $region5: #{embedding_net_forward.1} parent=1 // loop_body
      %s25 = ssub.s32 %s20, 1
      %s26 = ssub.s32 %s20, 2
      %s27 = sadd.s32 %s20, 1
      %s28 = ssub.s32 %s20, %s27
      %p29 = scmp.eq.s32.totalorder %s28, 0
      %s31 = sadd.s32 %s30, 1
      %s32 = scalar_select %p29, %s30, %s31
      %p35 = pneg %p29
      %p36 = scmp.eq.s32.totalorder %s20, 1
      %p37 = por %p35, %p36
      %p38 = scmp.ne.s32.totalorder %s30, %s33
      %p39 = scmp.eq.s32.totalorder %s20, 0
      %p40 = por %p38, %p39
      %p41 = scmp.ne.s32.totalorder %s30, %s33
      %p42 = scmp.eq.s32.totalorder %s25, 1
      %p43 = por %p41, %p42
      %p44 = scmp.ne.s32.totalorder %s33, %s34
      %p45 = scmp.eq.s32.totalorder %s25, 0
      %p46 = por %p44, %p45
      %p47 = scmp.ne.s32.totalorder %s33, %s34
      %p48 = scmp.eq.s32.totalorder %s26, 1
      %p49 = por %p47, %p48
      %p51 = scmp.ne.s32.totalorder %s34, %s50
      %p52 = scmp.eq.s32.totalorder %s26, 0
      %p53 = por %p51, %p52
      %s55 = sadd.s32 %s54, 1
      %p58 = scmp.eq.s32.totalorder %s20, 1
      %p59 = scmp.ne.s32.totalorder %s54, %s56
      %p60 = scmp.eq.s32.totalorder %s20, 0
      %p61 = por %p59, %p60
      %p62 = scmp.ne.s32.totalorder %s54, %s56
      %p63 = scmp.eq.s32.totalorder %s25, 1
      %p64 = por %p62, %p63
      %p65 = scmp.ne.s32.totalorder %s56, %s57
      %p66 = scmp.eq.s32.totalorder %s25, 0
      %p67 = por %p65, %p66
      %p68 = scmp.ne.s32.totalorder %s56, %s57
      %p69 = scmp.eq.s32.totalorder %s26, 1
      %p70 = por %p68, %p69
      %p72 = scmp.ne.s32.totalorder %s57, %s71
      %p73 = scmp.eq.s32.totalorder %s26, 0
      %p74 = por %p72, %p73
      %s76 = sadd.s32 %s75, 1
      %p79 = scmp.eq.s32.totalorder %s20, 1
      %p80 = scmp.ne.s32.totalorder %s75, %s77
      %p81 = scmp.eq.s32.totalorder %s20, 0
      %p82 = por %p80, %p81
      %p83 = scmp.ne.s32.totalorder %s75, %s77
      %p84 = scmp.eq.s32.totalorder %s25, 1
      %p85 = por %p83, %p84
      %p86 = scmp.ne.s32.totalorder %s77, %s78
      %p87 = scmp.eq.s32.totalorder %s25, 0
      %p88 = por %p86, %p87
      %p89 = scmp.ne.s32.totalorder %s77, %s78
      %p90 = scmp.eq.s32.totalorder %s26, 1
      %p91 = por %p89, %p90
      %p93 = scmp.ne.s32.totalorder %s78, %s92
      %p94 = scmp.eq.s32.totalorder %s26, 0
      %p95 = por %p93, %p94
      %s97 = sadd.s32 %s96, 1
      %p100 = scmp.eq.s32.totalorder %s20, 1
      %p101 = scmp.ne.s32.totalorder %s96, %s98
      %p102 = scmp.eq.s32.totalorder %s20, 0
      %p103 = por %p101, %p102
      %p104 = scmp.ne.s32.totalorder %s96, %s98
      %p105 = scmp.eq.s32.totalorder %s25, 1
      %p106 = por %p104, %p105
      %p107 = scmp.ne.s32.totalorder %s98, %s99
      %p108 = scmp.eq.s32.totalorder %s25, 0
      %p109 = por %p107, %p108
      %p110 = scmp.ne.s32.totalorder %s98, %s99
      %p111 = scmp.eq.s32.totalorder %s26, 1
      %p112 = por %p110, %p111
      %p114 = scmp.ne.s32.totalorder %s99, %s113
      %p115 = scmp.eq.s32.totalorder %s26, 0
      %p116 = por %p114, %p115
      %s118 = sadd.s32 %s117, 1
      %p121 = scmp.eq.s32.totalorder %s20, 1
      %p122 = scmp.ne.s32.totalorder %s117, %s119
      %p123 = scmp.eq.s32.totalorder %s20, 0
      %p124 = por %p122, %p123
      %p125 = scmp.ne.s32.totalorder %s117, %s119
      %p126 = scmp.eq.s32.totalorder %s25, 1
      %p127 = por %p125, %p126
      %p128 = scmp.ne.s32.totalorder %s119, %s120
      %p129 = scmp.eq.s32.totalorder %s25, 0
      %p130 = por %p128, %p129
      %p131 = scmp.ne.s32.totalorder %s119, %s120
      %p132 = scmp.eq.s32.totalorder %s26, 1
      %p133 = por %p131, %p132
      %p135 = scmp.ne.s32.totalorder %s120, %s134
      %p136 = scmp.eq.s32.totalorder %s26, 0
      %p137 = por %p135, %p136
      %s139 = sadd.s32 %s138, 1
      %p142 = scmp.eq.s32.totalorder %s20, 1
      %p143 = scmp.ne.s32.totalorder %s138, %s140
      %p144 = scmp.eq.s32.totalorder %s20, 0
      %p145 = por %p143, %p144
      %p146 = scmp.ne.s32.totalorder %s138, %s140
      %p147 = scmp.eq.s32.totalorder %s25, 1
      %p148 = por %p146, %p147
      %p149 = scmp.ne.s32.totalorder %s140, %s141
      %p150 = scmp.eq.s32.totalorder %s25, 0
      %p151 = por %p149, %p150
      %p152 = scmp.ne.s32.totalorder %s140, %s141
      %p153 = scmp.eq.s32.totalorder %s26, 1
      %p154 = por %p152, %p153
      %p156 = scmp.ne.s32.totalorder %s141, %s155
      %p157 = scmp.eq.s32.totalorder %s26, 0
      %p158 = por %p156, %p157
      %s160 = sadd.s32 %s159, 1
      %p163 = scmp.eq.s32.totalorder %s20, 1
      %p164 = scmp.ne.s32.totalorder %s159, %s161
      %p165 = scmp.eq.s32.totalorder %s20, 0
      %p166 = por %p164, %p165
      %p167 = scmp.ne.s32.totalorder %s159, %s161
      %p168 = scmp.eq.s32.totalorder %s25, 1
      %p169 = por %p167, %p168
      %p170 = scmp.ne.s32.totalorder %s161, %s162
      %p171 = scmp.eq.s32.totalorder %s25, 0
      %p172 = por %p170, %p171
      %p173 = scmp.ne.s32.totalorder %s161, %s162
      %p174 = scmp.eq.s32.totalorder %s26, 1
      %p175 = por %p173, %p174
      %p177 = scmp.ne.s32.totalorder %s162, %s176
      %p178 = scmp.eq.s32.totalorder %s26, 0
      %p179 = por %p177, %p178
      %s181 = sadd.s32 %s180, 1
      %p184 = scmp.eq.s32.totalorder %s20, 1
      %p185 = scmp.ne.s32.totalorder %s180, %s182
      %p186 = scmp.eq.s32.totalorder %s20, 0
      %p187 = por %p185, %p186
      %p188 = scmp.ne.s32.totalorder %s180, %s182
      %p189 = scmp.eq.s32.totalorder %s25, 1
      %p190 = por %p188, %p189
      %p191 = scmp.ne.s32.totalorder %s182, %s183
      %p192 = scmp.eq.s32.totalorder %s25, 0
      %p193 = por %p191, %p192
      %p194 = scmp.ne.s32.totalorder %s182, %s183
      %p195 = scmp.eq.s32.totalorder %s26, 1
      %p196 = por %p194, %p195
      %p198 = scmp.ne.s32.totalorder %s183, %s197
      %p199 = scmp.eq.s32.totalorder %s26, 0
      %p200 = por %p198, %p199
      %s202 = sadd.s32 %s201, 1
      %p205 = scmp.eq.s32.totalorder %s20, 1
      %p206 = scmp.ne.s32.totalorder %s201, %s203
      %p207 = scmp.eq.s32.totalorder %s20, 0
      %p208 = por %p206, %p207
      %p209 = scmp.ne.s32.totalorder %s201, %s203
      %p210 = scmp.eq.s32.totalorder %s25, 1
      %p211 = por %p209, %p210
      %p212 = scmp.ne.s32.totalorder %s203, %s204
      %p213 = scmp.eq.s32.totalorder %s25, 0
      %p214 = por %p212, %p213
      %p215 = scmp.ne.s32.totalorder %s203, %s204
      %p216 = scmp.eq.s32.totalorder %s26, 1
      %p217 = por %p215, %p216
      %p219 = scmp.ne.s32.totalorder %s204, %s218
      %p220 = scmp.eq.s32.totalorder %s26, 0
      %p221 = por %p219, %p220
      %s223 = sadd.s32 %s222, 1
      %p226 = scmp.eq.s32.totalorder %s20, 1
      %p227 = scmp.ne.s32.totalorder %s222, %s224
      %p228 = scmp.eq.s32.totalorder %s20, 0
      %p229 = por %p227, %p228
      %p230 = scmp.ne.s32.totalorder %s222, %s224
      %p231 = scmp.eq.s32.totalorder %s25, 1
      %p232 = por %p230, %p231
      %p233 = scmp.ne.s32.totalorder %s224, %s225
      %p234 = scmp.eq.s32.totalorder %s25, 0
      %p235 = por %p233, %p234
      %p236 = scmp.ne.s32.totalorder %s224, %s225
      %p237 = scmp.eq.s32.totalorder %s26, 1
      %p238 = por %p236, %p237
      %p240 = scmp.ne.s32.totalorder %s225, %s239
      %p241 = scmp.eq.s32.totalorder %s26, 0
      %p242 = por %p240, %p241
      %s243 = ssub.s32 %s20, %s27
      %p244 = scmp.eq.s32.totalorder %s243, 0
      %s246 = sadd.s32 %s245, 1
      %s247 = scalar_select %p244, %s245, %s246
      %p250 = pneg %p244
      %p251 = scmp.eq.s32.totalorder %s20, 1
      %p252 = por %p250, %p251
      %p253 = scmp.ne.s32.totalorder %s245, %s248
      %p254 = scmp.eq.s32.totalorder %s20, 0
      %p255 = por %p253, %p254
      %p256 = scmp.ne.s32.totalorder %s245, %s248
      %p257 = scmp.eq.s32.totalorder %s25, 1
      %p258 = por %p256, %p257
      %p259 = scmp.ne.s32.totalorder %s248, %s249
      %p260 = scmp.eq.s32.totalorder %s25, 0
      %p261 = por %p259, %p260
      %p262 = scmp.ne.s32.totalorder %s248, %s249
      %p263 = scmp.eq.s32.totalorder %s26, 1
      %p264 = por %p262, %p263
      %p266 = scmp.ne.s32.totalorder %s249, %s265
      %p267 = scmp.eq.s32.totalorder %s26, 0
      %p268 = por %p266, %p267
      %p269 = scmp.le.s32.totalorder 1, %s20
      %p270 = scmp.lt.s32.totalorder %s20, 3
      %p271 = pnand %p269, %p270
      %p272 = pneg %p271
      // Predicated region
      $region9: #{embedding_net_forward.1} parent=5 // pred_check
        _
      $region10: #{embedding_net_forward.1} parent=5 // pred_check_branch
        %274 = sbr.rel (%p271) target = $region12
      $region11: #{embedding_net_forward.1} parent=5 // pred_region
        %s275 = ssub.s32 %s20, 1
        // Predicated region
        $region13: #{embedding_net_forward.1} parent=11 // pred_check
          %p276 = pneg %p67
        $region14: #{embedding_net_forward.1} parent=11 // pred_check_branch
          %278 = sbr.rel (%p276) target = $region16
        $region15: #{embedding_net_forward.1} parent=11 // pred_region
          _
        $region16: #{embedding_net_forward.1} parent=11 // pred_fallthru
          _
        // Predicated region
        $region17: #{embedding_net_forward.1} parent=11 // pred_check
          %p279 = pneg %p88
        $region18: #{embedding_net_forward.1} parent=11 // pred_check_branch
          %281 = sbr.rel (%p279) target = $region20
        $region19: #{embedding_net_forward.1} parent=11 // pred_region
          _
        $region20: #{embedding_net_forward.1} parent=11 // pred_fallthru
          _
        // Predicated region
        $region21: #{embedding_net_forward.1} parent=11 // pred_check
          %p282 = pneg %p109
        $region22: #{embedding_net_forward.1} parent=11 // pred_check_branch
          %284 = sbr.rel (%p282) target = $region24
        $region23: #{embedding_net_forward.1} parent=11 // pred_region
          _
        $region24: #{embedding_net_forward.1} parent=11 // pred_fallthru
          _
        // Predicated region
        $region25: #{embedding_net_forward.1} parent=11 // pred_check
          %p285 = pneg %p130
        $region26: #{embedding_net_forward.1} parent=11 // pred_check_branch
          %287 = sbr.rel (%p285) target = $region28
        $region27: #{embedding_net_forward.1} parent=11 // pred_region
          _
        $region28: #{embedding_net_forward.1} parent=11 // pred_fallthru
          _
        // Predicated region
        $region29: #{embedding_net_forward.1} parent=11 // pred_check
          %p288 = pneg %p151
        $region30: #{embedding_net_forward.1} parent=11 // pred_check_branch
          %290 = sbr.rel (%p288) target = $region32
        $region31: #{embedding_net_forward.1} parent=11 // pred_region
          _
        $region32: #{embedding_net_forward.1} parent=11 // pred_fallthru
          _
        // Predicated region
        $region33: #{embedding_net_forward.1} parent=11 // pred_check
          %p291 = pneg %p172
        $region34: #{embedding_net_forward.1} parent=11 // pred_check_branch
          %293 = sbr.rel (%p291) target = $region36
        $region35: #{embedding_net_forward.1} parent=11 // pred_region
          _
        $region36: #{embedding_net_forward.1} parent=11 // pred_fallthru
          _
        // Predicated region
        $region37: #{embedding_net_forward.1} parent=11 // pred_check
          %p294 = pneg %p193
        $region38: #{embedding_net_forward.1} parent=11 // pred_check_branch
          %296 = sbr.rel (%p294) target = $region40
        $region39: #{embedding_net_forward.1} parent=11 // pred_region
          _
        $region40: #{embedding_net_forward.1} parent=11 // pred_fallthru
          _
        // Predicated region
        $region41: #{embedding_net_forward.1} parent=11 // pred_check
          %p297 = pneg %p214
        $region42: #{embedding_net_forward.1} parent=11 // pred_check_branch
          %299 = sbr.rel (%p297) target = $region44
        $region43: #{embedding_net_forward.1} parent=11 // pred_region
          _
        $region44: #{embedding_net_forward.1} parent=11 // pred_fallthru
          _
        // Predicated region
        $region45: #{embedding_net_forward.1} parent=11 // pred_check
          %p300 = pneg %p235
        $region46: #{embedding_net_forward.1} parent=11 // pred_check_branch
          %302 = sbr.rel (%p300) target = $region48
        $region47: #{embedding_net_forward.1} parent=11 // pred_region
          %s304 = ssub.s32 16, 16
          %305 = vsyncadd [#allocation5], %s304
          %s307 = sshll.u32 %s9, 4
          %s308 = int_to_ptr.vmem [resolvable:$true] %s307
          %310 = dma.vmem_to_smem %s308, 16, [#allocation3], [#allocation5]
        $region48: #{embedding_net_forward.1} parent=11 // pred_fallthru
          _
      $region12: #{embedding_net_forward.1} parent=5 // pred_fallthru
        _
      %p311 = scmp.lt.s32.totalorder %s20, 2
      // Predicated region
      $region49: #{embedding_net_forward.1} parent=5 // pred_check
        %p312 = pneg %p311
      $region50: #{embedding_net_forward.1} parent=5 // pred_check_branch
        %314 = sbr.rel (%p312) target = $region52
      $region51: #{embedding_net_forward.1} parent=5 // pred_region
        // Predicated region
        $region53: #{embedding_net_forward.1} parent=51 // pred_check
          %p315 = pneg %p40
        $region54: #{embedding_net_forward.1} parent=51 // pred_check_branch
          %317 = sbr.rel (%p315) target = $region56
        $region55: #{embedding_net_forward.1} parent=51 // pred_region
          %s318 = smul.u32 2, %s20
          %p319 = scmp.lt.s32.totalorder %s318, 3
          %s320 = scalar_select %p319, %s318, 3
          %s321 = smul.addr %s320, 64
          %s322 = smul.addr %s321, 4
          %s323 = scalar_lea.vmem %s0, %s322
          %s324 = smul.u32 2, %s20
        $region56: #{embedding_net_forward.1} parent=51 // pred_fallthru
          _
      $region52: #{embedding_net_forward.1} parent=5 // pred_fallthru
        _
      %p325 = scmp.le.s32.totalorder 1, %s20
      %p326 = scmp.lt.s32.totalorder %s20, 3
      %p327 = pnand %p325, %p326
      %p328 = pneg %p327
      // Predicated region
      $region57: #{embedding_net_forward.1} parent=5 // pred_check
        _
      $region58: #{embedding_net_forward.1} parent=5 // pred_check_branch
        %330 = sbr.rel (%p327) target = $region60
      $region59: #{embedding_net_forward.1} parent=5 // pred_region
        %s331 = ssub.s32 %s20, 1
        // Predicated region
        $region61: #{embedding_net_forward.1} parent=59 // pred_check
          %p332 = pneg %p235
        $region62: #{embedding_net_forward.1} parent=59 // pred_check_branch
          %334 = sbr.rel (%p332) target = $region64
        $region63: #{embedding_net_forward.1} parent=59 // pred_region
          %335 = dma.done [#allocation5], 16
        $region64: #{embedding_net_forward.1} parent=59 // pred_fallthru
          _
        %336 = sfence
        %s337 = smul.u32 2, %s25
        %p338 = scmp.lt.s32.totalorder %s337, 3
        %s339 = scalar_select %p338, %s337, 3
        %s340 = smul.addr %s339, 64
        %s341 = smul.addr %s340, 4
        %s342 = scalar_lea.vmem %s0, %s341
        %p343 = pneg %p46
        %p344 = pneg %p43
        %p345 = pneg %p67
        %p346 = pneg %p64
        %p347 = pneg %p88
        %p348 = pneg %p85
        %p349 = pneg %p109
        %p350 = pneg %p106
        %p351 = pneg %p130
        %p352 = pneg %p127
        %p353 = pneg %p151
        %p354 = pneg %p148
        %p355 = pneg %p172
        %p356 = pneg %p169
        %p357 = pneg %p193
        %p358 = pneg %p190
        %p359 = pneg %p214
        %p360 = pneg %p211
        %p361 = pneg %p235
        %p362 = pneg %p232
        %p363 = pneg %p261
        %p364 = pneg %p258
        %s365 = sand.u32 %s248, 1
        %s366 = scalar_lea.sflag [#allocation4], %s365
        %s367 = sand.u32 %s248, 1
        %s368 = smul.addr %s367, 2
        %s369 = scalar_lea.vmem [#allocation6], %s368
        %s370 = smul.u32 2, %s25
        %p371 = scmp.lt.s32.totalorder %s370, 3
        %s372 = scalar_select %p371, %s370, 3
        %s373 = smul.addr %s372, 64
        %s374 = smul.addr %s373, 4
        %s375 = scalar_lea.vmem %s0, %s374
        %s376 = smul.u32 2, %s25
        %s378 = sld [smem:[#allocation3]]
        %s379 = sld [smem:[#allocation3 + $0x1]]
        %s380 = sld [smem:[#allocation3 + $0x2]]
        %381 = vst [vmem:[#allocation2] sm:$0xff] 0.0
        %382 = vst [vmem:[#allocation2 + $0x8] sm:$0xff] 0.0
        %383 = vst [vmem:[#allocation2 + $0x10] sm:$0x3] 0.0
        %384 = vst [vmem:[#allocation2 + $0x18] sm:$0x3] 0.0
        %385 = vst [vmem:[#allocation2 + $0x140] sm:$0xff] 0.0
        %386 = vst [vmem:[#allocation2 + $0x148] sm:$0xff] 0.0
        %387 = vst [vmem:[#allocation2 + $0x150] sm:$0x3] 0.0
        %388 = vst [vmem:[#allocation2 + $0x158] sm:$0x3] 0.0
        %s389 = scalar_lea.vmem [#allocation2], 288
        %390 = vst [vmem:[%s389] sm:$0xff] 0.0
        %391 = vst [vmem:[%s389 + $0x8] sm:$0xff] 0.0
        %392 = vst [vmem:[%s389 + $0x10] sm:$0x3] 0.0
        %393 = vst [vmem:[%s389 + $0x18] sm:$0x3] 0.0
        %394 = vst [vmem:[%s389 + $0x140] sm:$0xff] 0.0
        %395 = vst [vmem:[%s389 + $0x148] sm:$0xff] 0.0
        %396 = vst [vmem:[%s389 + $0x150] sm:$0x3] 0.0
        %397 = vst [vmem:[%s389 + $0x158] sm:$0x3] 0.0
        %v398 = vlaneseq
        %vm399 = vcmp.ge.s32.totalorder %v398, 0
        %vm400 = vcmp.lt.s32.totalorder %v398, 256
        %vm401 = vmand %vm399, %vm400
        %402 = vst.msk [vmem:[#allocation2] ss:$8 sm:$0x3] %vm401, 0.0
        %403 = vst.msk [vmem:[#allocation2] ss:$8 sm:$0x0] %vm401, 0.0
        %s404 = scalar_lea.vmem [#allocation2], 32
        %405 = vst.msk [vmem:[%s404] ss:$8 sm:$0x3] %vm401, 0.0
        %406 = vst.msk [vmem:[%s404] ss:$8 sm:$0x0] %vm401, 0.0
        %s407 = scalar_lea.vmem [#allocation2], 64
        %408 = vst.msk [vmem:[%s407] ss:$8 sm:$0x3] %vm401, 0.0
        %409 = vst.msk [vmem:[%s407] ss:$8 sm:$0x0] %vm401, 0.0
        %s410 = scalar_lea.vmem [#allocation2], 96
        %411 = vst.msk [vmem:[%s410] ss:$8 sm:$0x3] %vm401, 0.0
        %412 = vst.msk [vmem:[%s410] ss:$8 sm:$0x0] %vm401, 0.0
        %s413 = scalar_lea.vmem [#allocation2], 128
        %414 = vst.msk [vmem:[%s413] ss:$8 sm:$0x3] %vm401, 0.0
        %415 = vst.msk [vmem:[%s413] ss:$8 sm:$0x0] %vm401, 0.0
        %s416 = scalar_lea.vmem [#allocation2], 160
        %417 = vst.msk [vmem:[%s416] ss:$8 sm:$0x3] %vm401, 0.0
        %418 = vst.msk [vmem:[%s416] ss:$8 sm:$0x0] %vm401, 0.0
        %s419 = scalar_lea.vmem [#allocation2], 192
        %420 = vst.msk [vmem:[%s419] ss:$8 sm:$0x3] %vm401, 0.0
        %421 = vst.msk [vmem:[%s419] ss:$8 sm:$0x0] %vm401, 0.0
        %s422 = scalar_lea.vmem [#allocation2], 224
        %423 = vst.msk [vmem:[%s422] ss:$8 sm:$0x3] %vm401, 0.0
        %424 = vst.msk [vmem:[%s422] ss:$8 sm:$0x0] %vm401, 0.0
        %s425 = scalar_lea.vmem [#allocation2], 256
        %426 = vst.msk [vmem:[%s425] ss:$8 sm:$0x3] %vm401, 0.0
        %427 = vst.msk [vmem:[%s425] ss:$8 sm:$0x0] %vm401, 0.0
        %s428 = scalar_lea.vmem [#allocation2], 288
        %429 = vst.msk [vmem:[%s428] ss:$8 sm:$0x3] %vm401, 0.0
        %430 = vst.msk [vmem:[%s428] ss:$8 sm:$0x0] %vm401, 0.0
        %s431 = scalar_lea.vmem [#allocation2], 320
        %432 = vst.msk [vmem:[%s431] ss:$8 sm:$0x3] %vm401, 0.0
        %433 = vst.msk [vmem:[%s431] ss:$8 sm:$0x0] %vm401, 0.0
        %s434 = scalar_lea.vmem [#allocation2], 352
        %435 = vst.msk [vmem:[%s434] ss:$8 sm:$0x3] %vm401, 0.0
        %436 = vst.msk [vmem:[%s434] ss:$8 sm:$0x0] %vm401, 0.0
        %s437 = scalar_lea.vmem [#allocation2], 384
        %438 = vst.msk [vmem:[%s437] ss:$8 sm:$0x3] %vm401, 0.0
        %439 = vst.msk [vmem:[%s437] ss:$8 sm:$0x0] %vm401, 0.0
        %s440 = scalar_lea.vmem [#allocation2], 416
        %441 = vst.msk [vmem:[%s440] ss:$8 sm:$0x3] %vm401, 0.0
        %442 = vst.msk [vmem:[%s440] ss:$8 sm:$0x0] %vm401, 0.0
        %s443 = scalar_lea.vmem [#allocation2], 448
        %444 = vst.msk [vmem:[%s443] ss:$8 sm:$0x3] %vm401, 0.0
        %445 = vst.msk [vmem:[%s443] ss:$8 sm:$0x0] %vm401, 0.0
        %s446 = scalar_lea.vmem [#allocation2], 480
        %447 = vst.msk [vmem:[%s446] ss:$8 sm:$0x3] %vm401, 0.0
        %448 = vst.msk [vmem:[%s446] ss:$8 sm:$0x0] %vm401, 0.0
        %s449 = scalar_lea.vmem [#allocation2], 512
        %450 = vst.msk [vmem:[%s449] ss:$8 sm:$0x3] %vm401, 0.0
        %451 = vst.msk [vmem:[%s449] ss:$8 sm:$0x0] %vm401, 0.0
        %s452 = scalar_lea.vmem [#allocation2], 544
        %453 = vst.msk [vmem:[%s452] ss:$8 sm:$0x3] %vm401, 0.0
        %454 = vst.msk [vmem:[%s452] ss:$8 sm:$0x0] %vm401, 0.0
        %s455 = scalar_lea.vmem [#allocation2], 576
        %456 = vst.msk [vmem:[%s455] ss:$8 sm:$0x3] %vm401, 0.0
        %457 = vst.msk [vmem:[%s455] ss:$8 sm:$0x0] %vm401, 0.0
        %s458 = scalar_lea.vmem [#allocation2], 608
        %459 = vst.msk [vmem:[%s458] ss:$8 sm:$0x3] %vm401, 0.0
        %460 = vst.msk [vmem:[%s458] ss:$8 sm:$0x0] %vm401, 0.0
        %s461 = scalar_lea.vmem [#allocation2], 17
        %462 = vst.msk [vmem:[%s461] ss:$8 sm:$0x3] %vm401, 0.0
        %463 = vst.msk [vmem:[%s461] ss:$8 sm:$0x0] %vm401, 0.0
        %s464 = scalar_lea.vmem [#allocation2], 49
        %465 = vst.msk [vmem:[%s464] ss:$8 sm:$0x3] %vm401, 0.0
        %466 = vst.msk [vmem:[%s464] ss:$8 sm:$0x0] %vm401, 0.0
        %s467 = scalar_lea.vmem [#allocation2], 81
        %468 = vst.msk [vmem:[%s467] ss:$8 sm:$0x3] %vm401, 0.0
        %469 = vst.msk [vmem:[%s467] ss:$8 sm:$0x0] %vm401, 0.0
        %s470 = scalar_lea.vmem [#allocation2], 113
        %471 = vst.msk [vmem:[%s470] ss:$8 sm:$0x3] %vm401, 0.0
        %472 = vst.msk [vmem:[%s470] ss:$8 sm:$0x0] %vm401, 0.0
        %s473 = scalar_lea.vmem [#allocation2], 145
        %474 = vst.msk [vmem:[%s473] ss:$8 sm:$0x3] %vm401, 0.0
        %475 = vst.msk [vmem:[%s473] ss:$8 sm:$0x0] %vm401, 0.0
        %s476 = scalar_lea.vmem [#allocation2], 177
        %477 = vst.msk [vmem:[%s476] ss:$8 sm:$0x3] %vm401, 0.0
        %478 = vst.msk [vmem:[%s476] ss:$8 sm:$0x0] %vm401, 0.0
        %s479 = scalar_lea.vmem [#allocation2], 209
        %480 = vst.msk [vmem:[%s479] ss:$8 sm:$0x3] %vm401, 0.0
        %481 = vst.msk [vmem:[%s479] ss:$8 sm:$0x0] %vm401, 0.0
        %s482 = scalar_lea.vmem [#allocation2], 241
        %483 = vst.msk [vmem:[%s482] ss:$8 sm:$0x3] %vm401, 0.0
        %484 = vst.msk [vmem:[%s482] ss:$8 sm:$0x0] %vm401, 0.0
        %s485 = scalar_lea.vmem [#allocation2], 273
        %486 = vst.msk [vmem:[%s485] ss:$8 sm:$0x3] %vm401, 0.0
        %487 = vst.msk [vmem:[%s485] ss:$8 sm:$0x0] %vm401, 0.0
        %s488 = scalar_lea.vmem [#allocation2], 305
        %489 = vst.msk [vmem:[%s488] ss:$8 sm:$0x3] %vm401, 0.0
        %490 = vst.msk [vmem:[%s488] ss:$8 sm:$0x0] %vm401, 0.0
        %s491 = scalar_lea.vmem [#allocation2], 337
        %492 = vst.msk [vmem:[%s491] ss:$8 sm:$0x3] %vm401, 0.0
        %493 = vst.msk [vmem:[%s491] ss:$8 sm:$0x0] %vm401, 0.0
        %s494 = scalar_lea.vmem [#allocation2], 369
        %495 = vst.msk [vmem:[%s494] ss:$8 sm:$0x3] %vm401, 0.0
        %496 = vst.msk [vmem:[%s494] ss:$8 sm:$0x0] %vm401, 0.0
        %s497 = scalar_lea.vmem [#allocation2], 401
        %498 = vst.msk [vmem:[%s497] ss:$8 sm:$0x3] %vm401, 0.0
        %499 = vst.msk [vmem:[%s497] ss:$8 sm:$0x0] %vm401, 0.0
        %s500 = scalar_lea.vmem [#allocation2], 433
        %501 = vst.msk [vmem:[%s500] ss:$8 sm:$0x3] %vm401, 0.0
        %502 = vst.msk [vmem:[%s500] ss:$8 sm:$0x0] %vm401, 0.0
        %s503 = scalar_lea.vmem [#allocation2], 465
        %504 = vst.msk [vmem:[%s503] ss:$8 sm:$0x3] %vm401, 0.0
        %505 = vst.msk [vmem:[%s503] ss:$8 sm:$0x0] %vm401, 0.0
        %s506 = scalar_lea.vmem [#allocation2], 497
        %507 = vst.msk [vmem:[%s506] ss:$8 sm:$0x3] %vm401, 0.0
        %508 = vst.msk [vmem:[%s506] ss:$8 sm:$0x0] %vm401, 0.0
        %s509 = scalar_lea.vmem [#allocation2], 529
        %510 = vst.msk [vmem:[%s509] ss:$8 sm:$0x3] %vm401, 0.0
        %511 = vst.msk [vmem:[%s509] ss:$8 sm:$0x0] %vm401, 0.0
        %s512 = scalar_lea.vmem [#allocation2], 561
        %513 = vst.msk [vmem:[%s512] ss:$8 sm:$0x3] %vm401, 0.0
        %514 = vst.msk [vmem:[%s512] ss:$8 sm:$0x0] %vm401, 0.0
        %s515 = scalar_lea.vmem [#allocation2], 593
        %516 = vst.msk [vmem:[%s515] ss:$8 sm:$0x3] %vm401, 0.0
        %517 = vst.msk [vmem:[%s515] ss:$8 sm:$0x0] %vm401, 0.0
        %s518 = scalar_lea.vmem [#allocation2], 625
        %519 = vst.msk [vmem:[%s518] ss:$8 sm:$0x3] %vm401, 0.0
        %520 = vst.msk [vmem:[%s518] ss:$8 sm:$0x0] %vm401, 0.0
        %v521 = vld [vmem:[%s375] sm:$0xff]
        %v522 = vld [vmem:[%s375 + $0x8] sm:$0xff]
        %v523 = vld [vmem:[%s375 + $0x10] sm:$0xff]
        %v524 = vld [vmem:[%s375 + $0x18] sm:$0xff]
        %v525 = vld [vmem:[%s375 + $0x20] sm:$0xff]
        %v526 = vld [vmem:[%s375 + $0x28] sm:$0xff]
        %v527 = vld [vmem:[%s375 + $0x30] sm:$0xff]
        %v528 = vld [vmem:[%s375 + $0x38] sm:$0xff]
        %v529 = vld [vmem:[%s375 + $0x40] sm:$0xff]
        %v530 = vld [vmem:[%s375 + $0x48] sm:$0xff]
        %v531 = vld [vmem:[%s375 + $0x50] sm:$0xff]
        %v532 = vld [vmem:[%s375 + $0x58] sm:$0xff]
        %v533 = vld [vmem:[%s375 + $0x60] sm:$0xff]
        %v534 = vld [vmem:[%s375 + $0x68] sm:$0xff]
        %v535 = vld [vmem:[%s375 + $0x70] sm:$0xff]
        %v536 = vld [vmem:[%s375 + $0x78] sm:$0xff]
        %v537 = vld [vmem:[%s375 + $0x80] sm:$0xff]
        %v538 = vld [vmem:[%s375 + $0x88] sm:$0xff]
        %v539 = vld [vmem:[%s375 + $0x90] sm:$0xff]
        %v540 = vld [vmem:[%s375 + $0x98] sm:$0xff]
        %v541 = vld [vmem:[%s375 + $0xa0] sm:$0xff]
        %v542 = vld [vmem:[%s375 + $0xa8] sm:$0xff]
        %v543 = vld [vmem:[%s375 + $0xb0] sm:$0xff]
        %v544 = vld [vmem:[%s375 + $0xb8] sm:$0xff]
        %v545 = vld [vmem:[%s375 + $0xc0] sm:$0xff]
        %v546 = vld [vmem:[%s375 + $0xc8] sm:$0xff]
        %v547 = vld [vmem:[%s375 + $0xd0] sm:$0xff]
        %v548 = vld [vmem:[%s375 + $0xd8] sm:$0xff]
        %v549 = vld [vmem:[%s375 + $0xe0] sm:$0xff]
        %v550 = vld [vmem:[%s375 + $0xe8] sm:$0xff]
        %v551 = vld [vmem:[%s375 + $0xf0] sm:$0xff]
        %v552 = vld [vmem:[%s375 + $0xf8] sm:$0xff]
        %v553 = vld [vmem:[%s375 + $0x100] sm:$0xff]
        %v554 = vld [vmem:[%s375 + $0x108] sm:$0xff]
        %v555 = vld [vmem:[%s375 + $0x110] sm:$0xff]
        %v556 = vld [vmem:[%s375 + $0x118] sm:$0xff]
        %v557 = vld [vmem:[%s375 + $0x120] sm:$0xff]
        %v558 = vld [vmem:[%s375 + $0x128] sm:$0xff]
        %v559 = vld [vmem:[%s375 + $0x130] sm:$0xff]
        %v560 = vld [vmem:[%s375 + $0x138] sm:$0xff]
        %v561 = vld [vmem:[%s375 + $0x140] sm:$0xff]
        %v562 = vld [vmem:[%s375 + $0x148] sm:$0xff]
        %v563 = vld [vmem:[%s375 + $0x150] sm:$0xff]
        %v564 = vld [vmem:[%s375 + $0x158] sm:$0xff]
        %v565 = vld [vmem:[%s375 + $0x160] sm:$0xff]
        %v566 = vld [vmem:[%s375 + $0x168] sm:$0xff]
        %v567 = vld [vmem:[%s375 + $0x170] sm:$0xff]
        %v568 = vld [vmem:[%s375 + $0x178] sm:$0xff]
        %v569 = vld [vmem:[%s375 + $0x180] sm:$0xff]
        %v570 = vld [vmem:[%s375 + $0x188] sm:$0xff]
        %v571 = vld [vmem:[%s375 + $0x190] sm:$0xff]
        %v572 = vld [vmem:[%s375 + $0x198] sm:$0xff]
        %v573 = vld [vmem:[%s375 + $0x1a0] sm:$0xff]
        %v574 = vld [vmem:[%s375 + $0x1a8] sm:$0xff]
        %v575 = vld [vmem:[%s375 + $0x1b0] sm:$0xff]
        %v576 = vld [vmem:[%s375 + $0x1b8] sm:$0xff]
        %v577 = vld [vmem:[%s375 + $0x1c0] sm:$0xff]
        %v578 = vld [vmem:[%s375 + $0x1c8] sm:$0xff]
        %v579 = vld [vmem:[%s375 + $0x1d0] sm:$0xff]
        %v580 = vld [vmem:[%s375 + $0x1d8] sm:$0xff]
        %v581 = vld [vmem:[%s375 + $0x1e0] sm:$0xff]
        %v582 = vld [vmem:[%s375 + $0x1e8] sm:$0xff]
        %v583 = vld [vmem:[%s375 + $0x1f0] sm:$0xff]
        %v584 = vld [vmem:[%s375 + $0x1f8] sm:$0xff]
        %v585 = vld [vmem:[%s1] sm:$0xff]
        %v586 = vld [vmem:[%s1 + $0x8] sm:$0xff]
        %v587 = vld [vmem:[%s1 + $0x10] sm:$0xff]
        %v588 = vld [vmem:[%s1 + $0x18] sm:$0xff]
        %v589 = vld [vmem:[%s1 + $0x20] sm:$0xff]
        %v590 = vld [vmem:[%s1 + $0x28] sm:$0xff]
        %v591 = vld [vmem:[%s1 + $0x30] sm:$0xff]
        %v592 = vld [vmem:[%s1 + $0x38] sm:$0xff]
        %v593 = vld [vmem:[%s1 + $0x40] sm:$0xff]
        %v594 = vld [vmem:[%s1 + $0x48] sm:$0xff]
        %v595 = vld [vmem:[%s1 + $0x50] sm:$0xff]
        %v596 = vld [vmem:[%s1 + $0x58] sm:$0xff]
        %v597 = vld [vmem:[%s1 + $0x60] sm:$0xff]
        %v598 = vld [vmem:[%s1 + $0x68] sm:$0xff]
        %v599 = vld [vmem:[%s1 + $0x70] sm:$0xff]
        %v600 = vld [vmem:[%s1 + $0x78] sm:$0xff]
        %v601 = vld [vmem:[%s1 + $0x80] sm:$0xff]
        %v602 = vld [vmem:[%s1 + $0x88] sm:$0xff]
        %v603 = vld [vmem:[%s1 + $0x90] sm:$0xff]
        %v604 = vld [vmem:[%s1 + $0x98] sm:$0xff]
        %v605 = vld [vmem:[%s1 + $0xa0] sm:$0xff]
        %v606 = vld [vmem:[%s1 + $0xa8] sm:$0xff]
        %v607 = vld [vmem:[%s1 + $0xb0] sm:$0xff]
        %v608 = vld [vmem:[%s1 + $0xb8] sm:$0xff]
        %v609 = vld [vmem:[%s1 + $0xc0] sm:$0xff]
        %v610 = vld [vmem:[%s2] sm:$0x3]
        %v612 = vlaneseq
        %v613 = vshrl.u32 %v612, 7
        %v614 = vsub.s32 0, %v613
        %v615 = vrot.slane %v610, %v614
        %v616 = vlaneseq
        %v617 = vshrl.u32 %v616, 7
        %v618 = vsub.s32 1, %v617
        %v619 = vrot.slane %v610, %v618
        %v686 = vunpack.c.l.b16 %v521
        %v687 = vunpack.c.h.b16 %v521
        %v688 = vunpack.c.l.b16 %v522
        %v689 = vunpack.c.h.b16 %v522
        %v690 = vunpack.c.l.b16 %v523
        %v691 = vunpack.c.h.b16 %v523
        %v692 = vunpack.c.l.b16 %v524
        %v693 = vunpack.c.h.b16 %v524
        %v694 = vunpack.c.l.b16 %v525
        %v695 = vunpack.c.h.b16 %v525
        %v696 = vunpack.c.l.b16 %v526
        %v697 = vunpack.c.h.b16 %v526
        %v698 = vunpack.c.l.b16 %v527
        %v699 = vunpack.c.h.b16 %v527
        %v700 = vunpack.c.l.b16 %v528
        %v701 = vunpack.c.h.b16 %v528
        %v702 = vunpack.c.l.b16 %v529
        %v703 = vunpack.c.h.b16 %v529
        %v704 = vunpack.c.l.b16 %v530
        %v705 = vunpack.c.h.b16 %v530
        %v706 = vunpack.c.l.b16 %v531
        %v707 = vunpack.c.h.b16 %v531
        %v708 = vunpack.c.l.b16 %v532
        %v709 = vunpack.c.h.b16 %v532
        %v710 = vunpack.c.l.b16 %v533
        %v711 = vunpack.c.h.b16 %v533
        %v712 = vunpack.c.l.b16 %v534
        %v713 = vunpack.c.h.b16 %v534
        %v714 = vunpack.c.l.b16 %v535
        %v715 = vunpack.c.h.b16 %v535
        %v716 = vunpack.c.l.b16 %v536
        %v717 = vunpack.c.h.b16 %v536
        %v718 = vunpack.c.l.b16 %v537
        %v719 = vunpack.c.h.b16 %v537
        %v720 = vunpack.c.l.b16 %v538
        %v721 = vunpack.c.h.b16 %v538
        %v722 = vunpack.c.l.b16 %v539
        %v723 = vunpack.c.h.b16 %v539
        %v724 = vunpack.c.l.b16 %v540
        %v725 = vunpack.c.h.b16 %v540
        %v726 = vunpack.c.l.b16 %v541
        %v727 = vunpack.c.h.b16 %v541
        %v728 = vunpack.c.l.b16 %v542
        %v729 = vunpack.c.h.b16 %v542
        %v730 = vunpack.c.l.b16 %v543
        %v731 = vunpack.c.h.b16 %v543
        %v732 = vunpack.c.l.b16 %v544
        %v733 = vunpack.c.h.b16 %v544
        %v734 = vunpack.c.l.b16 %v545
        %v735 = vunpack.c.h.b16 %v545
        %v736 = vunpack.c.l.b16 %v546
        %v737 = vunpack.c.h.b16 %v546
        %v738 = vunpack.c.l.b16 %v547
        %v739 = vunpack.c.h.b16 %v547
        %v740 = vunpack.c.l.b16 %v548
        %v741 = vunpack.c.h.b16 %v548
        %v742 = vunpack.c.l.b16 %v549
        %v743 = vunpack.c.h.b16 %v549
        %v744 = vunpack.c.l.b16 %v550
        %v745 = vunpack.c.h.b16 %v550
        %v746 = vunpack.c.l.b16 %v551
        %v747 = vunpack.c.h.b16 %v551
        %v748 = vunpack.c.l.b16 %v552
        %v749 = vunpack.c.h.b16 %v552
        %v750 = vunpack.c.l.b16 %v553
        %v751 = vunpack.c.h.b16 %v553
        %v752 = vunpack.c.l.b16 %v554
        %v753 = vunpack.c.h.b16 %v554
        %v754 = vunpack.c.l.b16 %v555
        %v755 = vunpack.c.h.b16 %v555
        %v756 = vunpack.c.l.b16 %v556
        %v757 = vunpack.c.h.b16 %v556
        %v758 = vunpack.c.l.b16 %v557
        %v759 = vunpack.c.h.b16 %v557
        %v760 = vunpack.c.l.b16 %v558
        %v761 = vunpack.c.h.b16 %v558
        %v762 = vunpack.c.l.b16 %v559
        %v763 = vunpack.c.h.b16 %v559
        %v764 = vunpack.c.l.b16 %v560
        %v765 = vunpack.c.h.b16 %v560
        %v766 = vunpack.c.l.b16 %v561
        %v767 = vunpack.c.h.b16 %v561
        %v768 = vunpack.c.l.b16 %v562
        %v769 = vunpack.c.h.b16 %v562
        %v770 = vunpack.c.l.b16 %v563
        %v771 = vunpack.c.h.b16 %v563
        %v772 = vunpack.c.l.b16 %v564
        %v773 = vunpack.c.h.b16 %v564
        %v774 = vunpack.c.l.b16 %v565
        %v775 = vunpack.c.h.b16 %v565
        %v776 = vunpack.c.l.b16 %v566
        %v777 = vunpack.c.h.b16 %v566
        %v778 = vunpack.c.l.b16 %v567
        %v779 = vunpack.c.h.b16 %v567
        %v780 = vunpack.c.l.b16 %v568
        %v781 = vunpack.c.h.b16 %v568
        %v782 = vunpack.c.l.b16 %v569
        %v783 = vunpack.c.h.b16 %v569
        %v784 = vunpack.c.l.b16 %v570
        %v785 = vunpack.c.h.b16 %v570
        %v786 = vunpack.c.l.b16 %v571
        %v787 = vunpack.c.h.b16 %v571
        %v788 = vunpack.c.l.b16 %v572
        %v789 = vunpack.c.h.b16 %v572
        %v790 = vunpack.c.l.b16 %v573
        %v791 = vunpack.c.h.b16 %v573
        %v792 = vunpack.c.l.b16 %v574
        %v793 = vunpack.c.h.b16 %v574
        %v794 = vunpack.c.l.b16 %v575
        %v795 = vunpack.c.h.b16 %v575
        %v796 = vunpack.c.l.b16 %v576
        %v797 = vunpack.c.h.b16 %v576
        %v798 = vunpack.c.l.b16 %v577
        %v799 = vunpack.c.h.b16 %v577
        %v800 = vunpack.c.l.b16 %v578
        %v801 = vunpack.c.h.b16 %v578
        %v802 = vunpack.c.l.b16 %v579
        %v803 = vunpack.c.h.b16 %v579
        %v804 = vunpack.c.l.b16 %v580
        %v805 = vunpack.c.h.b16 %v580
        %v806 = vunpack.c.l.b16 %v581
        %v807 = vunpack.c.h.b16 %v581
        %v808 = vunpack.c.l.b16 %v582
        %v809 = vunpack.c.h.b16 %v582
        %v810 = vunpack.c.l.b16 %v583
        %v811 = vunpack.c.h.b16 %v583
        %v812 = vunpack.c.l.b16 %v584
        %v813 = vunpack.c.h.b16 %v584
        %v814 = vpack.c.b16 %v688, %v686
        %v815 = vpack.c.b16 %v689, %v687
        %v816 = vpack.c.b16 %v692, %v690
        %v817 = vpack.c.b16 %v693, %v691
        %v818 = vpack.c.b16 %v696, %v694
        %v819 = vpack.c.b16 %v697, %v695
        %v820 = vpack.c.b16 %v700, %v698
        %v821 = vpack.c.b16 %v701, %v699
        %v822 = vpack.c.b16 %v704, %v702
        %v823 = vpack.c.b16 %v705, %v703
        %v824 = vpack.c.b16 %v708, %v706
        %v825 = vpack.c.b16 %v709, %v707
        %v826 = vpack.c.b16 %v712, %v710
        %v827 = vpack.c.b16 %v713, %v711
        %v828 = vpack.c.b16 %v716, %v714
        %v829 = vpack.c.b16 %v717, %v715
        %v830 = vpack.c.b16 %v720, %v718
        %v831 = vpack.c.b16 %v721, %v719
        %v832 = vpack.c.b16 %v724, %v722
        %v833 = vpack.c.b16 %v725, %v723
        %v834 = vpack.c.b16 %v728, %v726
        %v835 = vpack.c.b16 %v729, %v727
        %v836 = vpack.c.b16 %v732, %v730
        %v837 = vpack.c.b16 %v733, %v731
        %v838 = vpack.c.b16 %v736, %v734
        %v839 = vpack.c.b16 %v737, %v735
        %v840 = vpack.c.b16 %v740, %v738
        %v841 = vpack.c.b16 %v741, %v739
        %v842 = vpack.c.b16 %v744, %v742
        %v843 = vpack.c.b16 %v745, %v743
        %v844 = vpack.c.b16 %v748, %v746
        %v845 = vpack.c.b16 %v749, %v747
        %v846 = vpack.c.b16 %v752, %v750
        %v847 = vpack.c.b16 %v753, %v751
        %v848 = vpack.c.b16 %v756, %v754
        %v849 = vpack.c.b16 %v757, %v755
        %v850 = vpack.c.b16 %v760, %v758
        %v851 = vpack.c.b16 %v761, %v759
        %v852 = vpack.c.b16 %v764, %v762
        %v853 = vpack.c.b16 %v765, %v763
        %v854 = vpack.c.b16 %v768, %v766
        %v855 = vpack.c.b16 %v769, %v767
        %v856 = vpack.c.b16 %v772, %v770
        %v857 = vpack.c.b16 %v773, %v771
        %v858 = vpack.c.b16 %v776, %v774
        %v859 = vpack.c.b16 %v777, %v775
        %v860 = vpack.c.b16 %v780, %v778
        %v861 = vpack.c.b16 %v781, %v779
        %v862 = vpack.c.b16 %v784, %v782
        %v863 = vpack.c.b16 %v785, %v783
        %v864 = vpack.c.b16 %v788, %v786
        %v865 = vpack.c.b16 %v789, %v787
        %v866 = vpack.c.b16 %v792, %v790
        %v867 = vpack.c.b16 %v793, %v791
        %v868 = vpack.c.b16 %v796, %v794
        %v869 = vpack.c.b16 %v797, %v795
        %v870 = vpack.c.b16 %v800, %v798
        %v871 = vpack.c.b16 %v801, %v799
        %v872 = vpack.c.b16 %v804, %v802
        %v873 = vpack.c.b16 %v805, %v803
        %v874 = vpack.c.b16 %v808, %v806
        %v875 = vpack.c.b16 %v809, %v807
        %v876 = vpack.c.b16 %v812, %v810
        %v877 = vpack.c.b16 %v813, %v811
        %v935 = vunpack.c.l.b16 %v585
        %v936 = vunpack.c.h.b16 %v585
        %v937 = vunpack.c.l.b16 %v586
        %v938 = vunpack.c.h.b16 %v586
        %v939 = vunpack.c.l.b16 %v587
        %v940 = vunpack.c.h.b16 %v587
        %v941 = vunpack.c.l.b16 %v588
        %v942 = vunpack.c.h.b16 %v588
        %v943 = vunpack.c.l.b16 %v589
        %v944 = vunpack.c.h.b16 %v589
        %v945 = vunpack.c.l.b16 %v590
        %v946 = vunpack.c.h.b16 %v590
        %v947 = vunpack.c.l.b16 %v591
        %v948 = vunpack.c.h.b16 %v591
        %v949 = vunpack.c.l.b16 %v592
        %v950 = vunpack.c.h.b16 %v592
        %v951 = vunpack.c.l.b16 %v593
        %v952 = vunpack.c.h.b16 %v593
        %v953 = vunpack.c.l.b16 %v594
        %v954 = vunpack.c.h.b16 %v594
        %v955 = vunpack.c.l.b16 %v595
        %v956 = vunpack.c.h.b16 %v595
        %v957 = vunpack.c.l.b16 %v596
        %v958 = vunpack.c.h.b16 %v596
        %v959 = vunpack.c.l.b16 %v597
        %v960 = vunpack.c.h.b16 %v597
        %v961 = vunpack.c.l.b16 %v598
        %v962 = vunpack.c.h.b16 %v598
        %v963 = vunpack.c.l.b16 %v599
        %v964 = vunpack.c.h.b16 %v599
        %v965 = vunpack.c.l.b16 %v600
        %v966 = vunpack.c.h.b16 %v600
        %v967 = vunpack.c.l.b16 %v601
        %v968 = vunpack.c.h.b16 %v601
        %v969 = vunpack.c.l.b16 %v602
        %v970 = vunpack.c.h.b16 %v602
        %v971 = vunpack.c.l.b16 %v603
        %v972 = vunpack.c.h.b16 %v603
        %v973 = vunpack.c.l.b16 %v604
        %v974 = vunpack.c.h.b16 %v604
        %v975 = vunpack.c.l.b16 %v605
        %v976 = vunpack.c.h.b16 %v605
        %v977 = vunpack.c.l.b16 %v606
        %v978 = vunpack.c.h.b16 %v606
        %v979 = vunpack.c.l.b16 %v607
        %v980 = vunpack.c.h.b16 %v607
        %v981 = vunpack.c.l.b16 %v608
        %v982 = vunpack.c.h.b16 %v608
        %v983 = vunpack.c.l.b16 %v609
        %v984 = vunpack.c.h.b16 %v609
        %v985 = vpack.c.b16 %v937, %v935
        %v986 = vpack.c.b16 %v938, %v936
        %v987 = vpack.c.b16 %v941, %v939
        %v988 = vpack.c.b16 %v942, %v940
        %v989 = vpack.c.b16 %v945, %v943
        %v990 = vpack.c.b16 %v946, %v944
        %v991 = vpack.c.b16 %v949, %v947
        %v992 = vpack.c.b16 %v950, %v948
        %v993 = vpack.c.b16 %v953, %v951
        %v994 = vpack.c.b16 %v954, %v952
        %v995 = vpack.c.b16 %v957, %v955
        %v996 = vpack.c.b16 %v958, %v956
        %v997 = vpack.c.b16 %v961, %v959
        %v998 = vpack.c.b16 %v962, %v960
        %v999 = vpack.c.b16 %v965, %v963
        %v1000 = vpack.c.b16 %v966, %v964
        %v1001 = vpack.c.b16 %v969, %v967
        %v1002 = vpack.c.b16 %v970, %v968
        %v1003 = vpack.c.b16 %v973, %v971
        %v1004 = vpack.c.b16 %v974, %v972
        %v1005 = vpack.c.b16 %v977, %v975
        %v1006 = vpack.c.b16 %v978, %v976
        %v1007 = vpack.c.b16 %v981, %v979
        %v1008 = vpack.c.b16 %v982, %v980
        %v1009 = vpack.c.b16 %v983, %v983
        %v1010 = vpack.c.b16 %v984, %v984
        %vm1035 = vcmask 588800
        %v1037 = vsel %vm1035, %v815, 0
        %v1040 = vsel %vm1035, %v817, 0
        %v1043 = vsel %vm1035, %v819, 0
        %v1046 = vsel %vm1035, %v821, 0
        %v1049 = vsel %vm1035, %v823, 0
        %v1052 = vsel %vm1035, %v825, 0
        %v1055 = vsel %vm1035, %v827, 0
        %v1058 = vsel %vm1035, %v829, 0
        %v1061 = vsel %vm1035, %v831, 0
        %v1064 = vsel %vm1035, %v833, 0
        %v1067 = vsel %vm1035, %v835, 0
        %v1070 = vsel %vm1035, %v837, 0
        %v1073 = vsel %vm1035, %v839, 0
        %v1076 = vsel %vm1035, %v841, 0
        %v1079 = vsel %vm1035, %v843, 0
        %v1082 = vsel %vm1035, %v845, 0
        %v1085 = vsel %vm1035, %v847, 0
        %v1088 = vsel %vm1035, %v849, 0
        %v1091 = vsel %vm1035, %v851, 0
        %v1094 = vsel %vm1035, %v853, 0
        %v1097 = vsel %vm1035, %v855, 0
        %v1100 = vsel %vm1035, %v857, 0
        %v1103 = vsel %vm1035, %v859, 0
        %v1106 = vsel %vm1035, %v861, 0
        %v1109 = vsel %vm1035, %v863, 0
        %v1112 = vsel %vm1035, %v865, 0
        %v1115 = vsel %vm1035, %v867, 0
        %v1118 = vsel %vm1035, %v869, 0
        %v1121 = vsel %vm1035, %v871, 0
        %v1124 = vsel %vm1035, %v873, 0
        %v1127 = vsel %vm1035, %v875, 0
        %v1130 = vsel %vm1035, %v877, 0
        %vm1132 = vcmask 1043456
        %v1134 = vsel %vm1132, %v1009, 0
        %v1137 = vsel %vm1132, %v1010, 0
        %1139 = vmatprep.subr.bf16.mxu0 %v1000
        %1140 = vmatpush1.bf16.msra.mxu0 %v999
        %1141 = vmatprep.subr.bf16.mxu0 %v998
        %1142 = vmatpush1.bf16.msra.mxu0 %v997
        %1143 = vmatprep.subr.bf16.mxu0 %v996
        %1144 = vmatpush1.bf16.msra.mxu0 %v995
        %1145 = vmatprep.subr.bf16.mxu0 %v994
        %1146 = vmatpush1.bf16.msra.mxu0 %v993
        %1147 = vmatprep.subr.bf16.mxu0 %v992
        %1148 = vmatpush1.bf16.msra.mxu0 %v991
        %1149 = vmatprep.subr.bf16.mxu0 %v990
        %1150 = vmatpush1.bf16.msra.mxu0 %v989
        %1151 = vmatprep.subr.bf16.mxu0 %v988
        %1152 = vmatpush1.bf16.msra.mxu0 %v987
        %1153 = vmatprep.subr.bf16.mxu0 %v986
        %1154 = vmatpush1.bf16.msra.mxu0 %v985
        %1155 = vmatprep.subr.bf16.mxu0 0
        %1156 = vmatpush2.bf16.msra.mxu0 0
        %1157 = vmatprep.subr.bf16.mxu0 0
        %1158 = vmatpush2.bf16.msra.mxu0 0
        %1159 = vmatprep.subr.bf16.mxu0 0
        %1160 = vmatpush2.bf16.msra.mxu0 0
        %1161 = vmatprep.subr.bf16.mxu0 %v1137
        %1162 = vmatpush2.bf16.msra.mxu0 %v1134
        %1163 = vmatprep.subr.bf16.mxu0 %v1008
        %1164 = vmatpush2.bf16.msra.mxu0 %v1007
        %1165 = vmatprep.subr.bf16.mxu0 %v1006
        %1166 = vmatpush2.bf16.msra.mxu0 %v1005
        %1167 = vmatprep.subr.bf16.mxu0 %v1004
        %1168 = vmatpush2.bf16.msra.mxu0 %v1003
        %1169 = vmatprep.subr.bf16.mxu0 %v1002
        %1170 = vmatpush2.bf16.msra.mxu0 %v1001
        %1171 = vmatprep.mubr.bf16.mxu0 %v1037
        %1172 = vmatmul.mubr.bf16.gmra.mxu0 %v814
        %v1173 = vpop.f32.mrf.mxu0
        %v1174 = vadd.f32 %v615, %v1173
        %v1175 = vpop.f32.mrf.mxu0
        %v1176 = vadd.f32 %v619, %v1175
        %v1177 = vpop.f32.mrf.mxu0
        %v1178 = vadd.f32 %v615, %v1177
        %v1179 = vpop.f32.mrf.mxu0
        %v1180 = vadd.f32 %v619, %v1179
        %1181 = vmatprep.mubr.bf16.mxu0 %v1040
        %1182 = vmatmul.mubr.bf16.gmra.mxu0 %v816
        %v1183 = vpop.f32.mrf.mxu0
        %v1184 = vadd.f32 %v615, %v1183
        %v1185 = vpop.f32.mrf.mxu0
        %v1186 = vadd.f32 %v619, %v1185
        %v1187 = vpop.f32.mrf.mxu0
        %v1188 = vadd.f32 %v615, %v1187
        %v1189 = vpop.f32.mrf.mxu0
        %v1190 = vadd.f32 %v619, %v1189
        %1191 = vmatprep.mubr.bf16.mxu0 %v1043
        %1192 = vmatmul.mubr.bf16.gmra.mxu0 %v818
        %v1193 = vpop.f32.mrf.mxu0
        %v1194 = vadd.f32 %v615, %v1193
        %v1195 = vpop.f32.mrf.mxu0
        %v1196 = vadd.f32 %v619, %v1195
        %v1197 = vpop.f32.mrf.mxu0
        %v1198 = vadd.f32 %v615, %v1197
        %v1199 = vpop.f32.mrf.mxu0
        %v1200 = vadd.f32 %v619, %v1199
        %1201 = vmatprep.mubr.bf16.mxu0 %v1046
        %1202 = vmatmul.mubr.bf16.gmra.mxu0 %v820
        %v1203 = vpop.f32.mrf.mxu0
        %v1204 = vadd.f32 %v615, %v1203
        %v1205 = vpop.f32.mrf.mxu0
        %v1206 = vadd.f32 %v619, %v1205
        %v1207 = vpop.f32.mrf.mxu0
        %v1208 = vadd.f32 %v615, %v1207
        %v1209 = vpop.f32.mrf.mxu0
        %v1210 = vadd.f32 %v619, %v1209
        %1211 = vmatprep.mubr.bf16.mxu0 %v1049
        %1212 = vmatmul.mubr.bf16.gmra.mxu0 %v822
        %v1213 = vpop.f32.mrf.mxu0
        %v1214 = vadd.f32 %v615, %v1213
        %v1215 = vpop.f32.mrf.mxu0
        %v1216 = vadd.f32 %v619, %v1215
        %v1217 = vpop.f32.mrf.mxu0
        %v1218 = vadd.f32 %v615, %v1217
        %v1219 = vpop.f32.mrf.mxu0
        %v1220 = vadd.f32 %v619, %v1219
        %1221 = vmatprep.mubr.bf16.mxu0 %v1052
        %1222 = vmatmul.mubr.bf16.gmra.mxu0 %v824
        %v1223 = vpop.f32.mrf.mxu0
        %v1224 = vadd.f32 %v615, %v1223
        %v1225 = vpop.f32.mrf.mxu0
        %v1226 = vadd.f32 %v619, %v1225
        %v1227 = vpop.f32.mrf.mxu0
        %v1228 = vadd.f32 %v615, %v1227
        %v1229 = vpop.f32.mrf.mxu0
        %v1230 = vadd.f32 %v619, %v1229
        %1231 = vmatprep.mubr.bf16.mxu0 %v1055
        %1232 = vmatmul.mubr.bf16.gmra.mxu0 %v826
        %v1233 = vpop.f32.mrf.mxu0
        %v1234 = vadd.f32 %v615, %v1233
        %v1235 = vpop.f32.mrf.mxu0
        %v1236 = vadd.f32 %v619, %v1235
        %v1237 = vpop.f32.mrf.mxu0
        %v1238 = vadd.f32 %v615, %v1237
        %v1239 = vpop.f32.mrf.mxu0
        %v1240 = vadd.f32 %v619, %v1239
        %1241 = vmatprep.mubr.bf16.mxu0 %v1058
        %1242 = vmatmul.mubr.bf16.gmra.mxu0 %v828
        %v1243 = vpop.f32.mrf.mxu0
        %v1244 = vadd.f32 %v615, %v1243
        %v1245 = vpop.f32.mrf.mxu0
        %v1246 = vadd.f32 %v619, %v1245
        %v1247 = vpop.f32.mrf.mxu0
        %v1248 = vadd.f32 %v615, %v1247
        %v1249 = vpop.f32.mrf.mxu0
        %v1250 = vadd.f32 %v619, %v1249
        %1251 = vmatprep.mubr.bf16.mxu0 %v1061
        %1252 = vmatmul.mubr.bf16.gmra.mxu0 %v830
        %v1253 = vpop.f32.mrf.mxu0
        %v1254 = vadd.f32 %v615, %v1253
        %v1255 = vpop.f32.mrf.mxu0
        %v1256 = vadd.f32 %v619, %v1255
        %v1257 = vpop.f32.mrf.mxu0
        %v1258 = vadd.f32 %v615, %v1257
        %v1259 = vpop.f32.mrf.mxu0
        %v1260 = vadd.f32 %v619, %v1259
        %1261 = vmatprep.mubr.bf16.mxu0 %v1064
        %1262 = vmatmul.mubr.bf16.gmra.mxu0 %v832
        %v1263 = vpop.f32.mrf.mxu0
        %v1264 = vadd.f32 %v615, %v1263
        %v1265 = vpop.f32.mrf.mxu0
        %v1266 = vadd.f32 %v619, %v1265
        %v1267 = vpop.f32.mrf.mxu0
        %v1268 = vadd.f32 %v615, %v1267
        %v1269 = vpop.f32.mrf.mxu0
        %v1270 = vadd.f32 %v619, %v1269
        %1271 = vmatprep.mubr.bf16.mxu0 %v1067
        %1272 = vmatmul.mubr.bf16.gmra.mxu0 %v834
        %v1273 = vpop.f32.mrf.mxu0
        %v1274 = vadd.f32 %v615, %v1273
        %v1275 = vpop.f32.mrf.mxu0
        %v1276 = vadd.f32 %v619, %v1275
        %v1277 = vpop.f32.mrf.mxu0
        %v1278 = vadd.f32 %v615, %v1277
        %v1279 = vpop.f32.mrf.mxu0
        %v1280 = vadd.f32 %v619, %v1279
        %1281 = vmatprep.mubr.bf16.mxu0 %v1070
        %1282 = vmatmul.mubr.bf16.gmra.mxu0 %v836
        %v1283 = vpop.f32.mrf.mxu0
        %v1284 = vadd.f32 %v615, %v1283
        %v1285 = vpop.f32.mrf.mxu0
        %v1286 = vadd.f32 %v619, %v1285
        %v1287 = vpop.f32.mrf.mxu0
        %v1288 = vadd.f32 %v615, %v1287
        %v1289 = vpop.f32.mrf.mxu0
        %v1290 = vadd.f32 %v619, %v1289
        %1291 = vmatprep.mubr.bf16.mxu0 %v1073
        %1292 = vmatmul.mubr.bf16.gmra.mxu0 %v838
        %v1293 = vpop.f32.mrf.mxu0
        %v1294 = vadd.f32 %v615, %v1293
        %v1295 = vpop.f32.mrf.mxu0
        %v1296 = vadd.f32 %v619, %v1295
        %v1297 = vpop.f32.mrf.mxu0
        %v1298 = vadd.f32 %v615, %v1297
        %v1299 = vpop.f32.mrf.mxu0
        %v1300 = vadd.f32 %v619, %v1299
        %1301 = vmatprep.mubr.bf16.mxu0 %v1076
        %1302 = vmatmul.mubr.bf16.gmra.mxu0 %v840
        %v1303 = vpop.f32.mrf.mxu0
        %v1304 = vadd.f32 %v615, %v1303
        %v1305 = vpop.f32.mrf.mxu0
        %v1306 = vadd.f32 %v619, %v1305
        %v1307 = vpop.f32.mrf.mxu0
        %v1308 = vadd.f32 %v615, %v1307
        %v1309 = vpop.f32.mrf.mxu0
        %v1310 = vadd.f32 %v619, %v1309
        %1311 = vmatprep.mubr.bf16.mxu0 %v1079
        %1312 = vmatmul.mubr.bf16.gmra.mxu0 %v842
        %v1313 = vpop.f32.mrf.mxu0
        %v1314 = vadd.f32 %v615, %v1313
        %v1315 = vpop.f32.mrf.mxu0
        %v1316 = vadd.f32 %v619, %v1315
        %v1317 = vpop.f32.mrf.mxu0
        %v1318 = vadd.f32 %v615, %v1317
        %v1319 = vpop.f32.mrf.mxu0
        %v1320 = vadd.f32 %v619, %v1319
        %1321 = vmatprep.mubr.bf16.mxu0 %v1082
        %1322 = vmatmul.mubr.bf16.gmra.mxu0 %v844
        %v1323 = vpop.f32.mrf.mxu0
        %v1324 = vadd.f32 %v615, %v1323
        %v1325 = vpop.f32.mrf.mxu0
        %v1326 = vadd.f32 %v619, %v1325
        %v1327 = vpop.f32.mrf.mxu0
        %v1328 = vadd.f32 %v615, %v1327
        %v1329 = vpop.f32.mrf.mxu0
        %v1330 = vadd.f32 %v619, %v1329
        %1331 = vmatprep.mubr.bf16.mxu0 %v1085
        %1332 = vmatmul.mubr.bf16.gmra.mxu0 %v846
        %v1333 = vpop.f32.mrf.mxu0
        %v1334 = vadd.f32 %v615, %v1333
        %v1335 = vpop.f32.mrf.mxu0
        %v1336 = vadd.f32 %v619, %v1335
        %v1337 = vpop.f32.mrf.mxu0
        %v1338 = vadd.f32 %v615, %v1337
        %v1339 = vpop.f32.mrf.mxu0
        %v1340 = vadd.f32 %v619, %v1339
        %1341 = vmatprep.mubr.bf16.mxu0 %v1088
        %1342 = vmatmul.mubr.bf16.gmra.mxu0 %v848
        %v1343 = vpop.f32.mrf.mxu0
        %v1344 = vadd.f32 %v615, %v1343
        %v1345 = vpop.f32.mrf.mxu0
        %v1346 = vadd.f32 %v619, %v1345
        %v1347 = vpop.f32.mrf.mxu0
        %v1348 = vadd.f32 %v615, %v1347
        %v1349 = vpop.f32.mrf.mxu0
        %v1350 = vadd.f32 %v619, %v1349
        %1351 = vmatprep.mubr.bf16.mxu0 %v1091
        %1352 = vmatmul.mubr.bf16.gmra.mxu0 %v850
        %v1353 = vpop.f32.mrf.mxu0
        %v1354 = vadd.f32 %v615, %v1353
        %v1355 = vpop.f32.mrf.mxu0
        %v1356 = vadd.f32 %v619, %v1355
        %v1357 = vpop.f32.mrf.mxu0
        %v1358 = vadd.f32 %v615, %v1357
        %v1359 = vpop.f32.mrf.mxu0
        %v1360 = vadd.f32 %v619, %v1359
        %1361 = vmatprep.mubr.bf16.mxu0 %v1094
        %1362 = vmatmul.mubr.bf16.gmra.mxu0 %v852
        %v1363 = vpop.f32.mrf.mxu0
        %v1364 = vadd.f32 %v615, %v1363
        %v1365 = vpop.f32.mrf.mxu0
        %v1366 = vadd.f32 %v619, %v1365
        %v1367 = vpop.f32.mrf.mxu0
        %v1368 = vadd.f32 %v615, %v1367
        %v1369 = vpop.f32.mrf.mxu0
        %v1370 = vadd.f32 %v619, %v1369
        %1371 = vmatprep.mubr.bf16.mxu0 %v1097
        %1372 = vmatmul.mubr.bf16.gmra.mxu0 %v854
        %v1373 = vpop.f32.mrf.mxu0
        %v1374 = vadd.f32 %v615, %v1373
        %v1375 = vpop.f32.mrf.mxu0
        %v1376 = vadd.f32 %v619, %v1375
        %v1377 = vpop.f32.mrf.mxu0
        %v1378 = vadd.f32 %v615, %v1377
        %v1379 = vpop.f32.mrf.mxu0
        %v1380 = vadd.f32 %v619, %v1379
        %1381 = vmatprep.mubr.bf16.mxu0 %v1100
        %1382 = vmatmul.mubr.bf16.gmra.mxu0 %v856
        %v1383 = vpop.f32.mrf.mxu0
        %v1384 = vadd.f32 %v615, %v1383
        %v1385 = vpop.f32.mrf.mxu0
        %v1386 = vadd.f32 %v619, %v1385
        %v1387 = vpop.f32.mrf.mxu0
        %v1388 = vadd.f32 %v615, %v1387
        %v1389 = vpop.f32.mrf.mxu0
        %v1390 = vadd.f32 %v619, %v1389
        %1391 = vmatprep.mubr.bf16.mxu0 %v1103
        %1392 = vmatmul.mubr.bf16.gmra.mxu0 %v858
        %v1393 = vpop.f32.mrf.mxu0
        %v1394 = vadd.f32 %v615, %v1393
        %v1395 = vpop.f32.mrf.mxu0
        %v1396 = vadd.f32 %v619, %v1395
        %v1397 = vpop.f32.mrf.mxu0
        %v1398 = vadd.f32 %v615, %v1397
        %v1399 = vpop.f32.mrf.mxu0
        %v1400 = vadd.f32 %v619, %v1399
        %1401 = vmatprep.mubr.bf16.mxu0 %v1106
        %1402 = vmatmul.mubr.bf16.gmra.mxu0 %v860
        %v1403 = vpop.f32.mrf.mxu0
        %v1404 = vadd.f32 %v615, %v1403
        %v1405 = vpop.f32.mrf.mxu0
        %v1406 = vadd.f32 %v619, %v1405
        %v1407 = vpop.f32.mrf.mxu0
        %v1408 = vadd.f32 %v615, %v1407
        %v1409 = vpop.f32.mrf.mxu0
        %v1410 = vadd.f32 %v619, %v1409
        %1411 = vmatprep.mubr.bf16.mxu0 %v1109
        %1412 = vmatmul.mubr.bf16.gmra.mxu0 %v862
        %v1413 = vpop.f32.mrf.mxu0
        %v1414 = vadd.f32 %v615, %v1413
        %v1415 = vpop.f32.mrf.mxu0
        %v1416 = vadd.f32 %v619, %v1415
        %v1417 = vpop.f32.mrf.mxu0
        %v1418 = vadd.f32 %v615, %v1417
        %v1419 = vpop.f32.mrf.mxu0
        %v1420 = vadd.f32 %v619, %v1419
        %1421 = vmatprep.mubr.bf16.mxu0 %v1112
        %1422 = vmatmul.mubr.bf16.gmra.mxu0 %v864
        %v1423 = vpop.f32.mrf.mxu0
        %v1424 = vadd.f32 %v615, %v1423
        %v1425 = vpop.f32.mrf.mxu0
        %v1426 = vadd.f32 %v619, %v1425
        %v1427 = vpop.f32.mrf.mxu0
        %v1428 = vadd.f32 %v615, %v1427
        %v1429 = vpop.f32.mrf.mxu0
        %v1430 = vadd.f32 %v619, %v1429
        %1431 = vmatprep.mubr.bf16.mxu0 %v1115
        %1432 = vmatmul.mubr.bf16.gmra.mxu0 %v866
        %v1433 = vpop.f32.mrf.mxu0
        %v1434 = vadd.f32 %v615, %v1433
        %v1435 = vpop.f32.mrf.mxu0
        %v1436 = vadd.f32 %v619, %v1435
        %v1437 = vpop.f32.mrf.mxu0
        %v1438 = vadd.f32 %v615, %v1437
        %v1439 = vpop.f32.mrf.mxu0
        %v1440 = vadd.f32 %v619, %v1439
        %1441 = vmatprep.mubr.bf16.mxu0 %v1118
        %1442 = vmatmul.mubr.bf16.gmra.mxu0 %v868
        %v1443 = vpop.f32.mrf.mxu0
        %v1444 = vadd.f32 %v615, %v1443
        %v1445 = vpop.f32.mrf.mxu0
        %v1446 = vadd.f32 %v619, %v1445
        %v1447 = vpop.f32.mrf.mxu0
        %v1448 = vadd.f32 %v615, %v1447
        %v1449 = vpop.f32.mrf.mxu0
        %v1450 = vadd.f32 %v619, %v1449
        %1451 = vmatprep.mubr.bf16.mxu0 %v1121
        %1452 = vmatmul.mubr.bf16.gmra.mxu0 %v870
        %v1453 = vpop.f32.mrf.mxu0
        %v1454 = vadd.f32 %v615, %v1453
        %v1455 = vpop.f32.mrf.mxu0
        %v1456 = vadd.f32 %v619, %v1455
        %v1457 = vpop.f32.mrf.mxu0
        %v1458 = vadd.f32 %v615, %v1457
        %v1459 = vpop.f32.mrf.mxu0
        %v1460 = vadd.f32 %v619, %v1459
        %1461 = vmatprep.mubr.bf16.mxu0 %v1124
        %1462 = vmatmul.mubr.bf16.gmra.mxu0 %v872
        %v1463 = vpop.f32.mrf.mxu0
        %v1464 = vadd.f32 %v615, %v1463
        %v1465 = vpop.f32.mrf.mxu0
        %v1466 = vadd.f32 %v619, %v1465
        %v1467 = vpop.f32.mrf.mxu0
        %v1468 = vadd.f32 %v615, %v1467
        %v1469 = vpop.f32.mrf.mxu0
        %v1470 = vadd.f32 %v619, %v1469
        %1471 = vmatprep.mubr.bf16.mxu0 %v1127
        %1472 = vmatmul.mubr.bf16.gmra.mxu0 %v874
        %v1473 = vpop.f32.mrf.mxu0
        %v1474 = vadd.f32 %v615, %v1473
        %v1475 = vpop.f32.mrf.mxu0
        %v1476 = vadd.f32 %v619, %v1475
        %v1477 = vpop.f32.mrf.mxu0
        %v1478 = vadd.f32 %v615, %v1477
        %v1479 = vpop.f32.mrf.mxu0
        %v1480 = vadd.f32 %v619, %v1479
        %1481 = vmatprep.mubr.bf16.mxu0 %v1130
        %1482 = vmatmul.mubr.bf16.gmra.mxu0 %v876
        %v1483 = vpop.f32.mrf.mxu0
        %v1484 = vadd.f32 %v615, %v1483
        %v1485 = vpop.f32.mrf.mxu0
        %v1486 = vadd.f32 %v619, %v1485
        %v1487 = vpop.f32.mrf.mxu0
        %v1488 = vadd.f32 %v615, %v1487
        %v1489 = vpop.f32.mrf.mxu0
        %v1490 = vadd.f32 %v619, %v1489
        %1491 = vdwg.mxu0
        %vm1492 = vcmp.ge.f32.partialorder %v1174, 0.0
        %vm1493 = vcmp.ge.f32.partialorder %v1176, 0.0
        %vm1494 = vcmp.ge.f32.partialorder %v1178, 0.0
        %vm1495 = vcmp.ge.f32.partialorder %v1180, 0.0
        %vm1496 = vcmp.ge.f32.partialorder %v1184, 0.0
        %vm1497 = vcmp.ge.f32.partialorder %v1186, 0.0
        %vm1498 = vcmp.ge.f32.partialorder %v1188, 0.0
        %vm1499 = vcmp.ge.f32.partialorder %v1190, 0.0
        %vm1500 = vcmp.ge.f32.partialorder %v1194, 0.0
        %vm1501 = vcmp.ge.f32.partialorder %v1196, 0.0
        %vm1502 = vcmp.ge.f32.partialorder %v1198, 0.0
        %vm1503 = vcmp.ge.f32.partialorder %v1200, 0.0
        %vm1504 = vcmp.ge.f32.partialorder %v1204, 0.0
        %vm1505 = vcmp.ge.f32.partialorder %v1206, 0.0
        %vm1506 = vcmp.ge.f32.partialorder %v1208, 0.0
        %vm1507 = vcmp.ge.f32.partialorder %v1210, 0.0
        %vm1508 = vcmp.ge.f32.partialorder %v1214, 0.0
        %vm1509 = vcmp.ge.f32.partialorder %v1216, 0.0
        %vm1510 = vcmp.ge.f32.partialorder %v1218, 0.0
        %vm1511 = vcmp.ge.f32.partialorder %v1220, 0.0
        %vm1512 = vcmp.ge.f32.partialorder %v1224, 0.0
        %vm1513 = vcmp.ge.f32.partialorder %v1226, 0.0
        %vm1514 = vcmp.ge.f32.partialorder %v1228, 0.0
        %vm1515 = vcmp.ge.f32.partialorder %v1230, 0.0
        %vm1516 = vcmp.ge.f32.partialorder %v1234, 0.0
        %vm1517 = vcmp.ge.f32.partialorder %v1236, 0.0
        %vm1518 = vcmp.ge.f32.partialorder %v1238, 0.0
        %vm1519 = vcmp.ge.f32.partialorder %v1240, 0.0
        %vm1520 = vcmp.ge.f32.partialorder %v1244, 0.0
        %vm1521 = vcmp.ge.f32.partialorder %v1246, 0.0
        %vm1522 = vcmp.ge.f32.partialorder %v1248, 0.0
        %vm1523 = vcmp.ge.f32.partialorder %v1250, 0.0
        %vm1524 = vcmp.ge.f32.partialorder %v1254, 0.0
        %vm1525 = vcmp.ge.f32.partialorder %v1256, 0.0
        %vm1526 = vcmp.ge.f32.partialorder %v1258, 0.0
        %vm1527 = vcmp.ge.f32.partialorder %v1260, 0.0
        %vm1528 = vcmp.ge.f32.partialorder %v1264, 0.0
        %vm1529 = vcmp.ge.f32.partialorder %v1266, 0.0
        %vm1530 = vcmp.ge.f32.partialorder %v1268, 0.0
        %vm1531 = vcmp.ge.f32.partialorder %v1270, 0.0
        %vm1532 = vcmp.ge.f32.partialorder %v1274, 0.0
        %vm1533 = vcmp.ge.f32.partialorder %v1276, 0.0
        %vm1534 = vcmp.ge.f32.partialorder %v1278, 0.0
        %vm1535 = vcmp.ge.f32.partialorder %v1280, 0.0
        %vm1536 = vcmp.ge.f32.partialorder %v1284, 0.0
        %vm1537 = vcmp.ge.f32.partialorder %v1286, 0.0
        %vm1538 = vcmp.ge.f32.partialorder %v1288, 0.0
        %vm1539 = vcmp.ge.f32.partialorder %v1290, 0.0
        %vm1540 = vcmp.ge.f32.partialorder %v1294, 0.0
        %vm1541 = vcmp.ge.f32.partialorder %v1296, 0.0
        %vm1542 = vcmp.ge.f32.partialorder %v1298, 0.0
        %vm1543 = vcmp.ge.f32.partialorder %v1300, 0.0
        %vm1544 = vcmp.ge.f32.partialorder %v1304, 0.0
        %vm1545 = vcmp.ge.f32.partialorder %v1306, 0.0
        %vm1546 = vcmp.ge.f32.partialorder %v1308, 0.0
        %vm1547 = vcmp.ge.f32.partialorder %v1310, 0.0
        %vm1548 = vcmp.ge.f32.partialorder %v1314, 0.0
        %vm1549 = vcmp.ge.f32.partialorder %v1316, 0.0
        %vm1550 = vcmp.ge.f32.partialorder %v1318, 0.0
        %vm1551 = vcmp.ge.f32.partialorder %v1320, 0.0
        %vm1552 = vcmp.ge.f32.partialorder %v1324, 0.0
        %vm1553 = vcmp.ge.f32.partialorder %v1326, 0.0
        %vm1554 = vcmp.ge.f32.partialorder %v1328, 0.0
        %vm1555 = vcmp.ge.f32.partialorder %v1330, 0.0
        %vm1556 = vcmp.ge.f32.partialorder %v1334, 0.0
        %vm1557 = vcmp.ge.f32.partialorder %v1336, 0.0
        %vm1558 = vcmp.ge.f32.partialorder %v1338, 0.0
        %vm1559 = vcmp.ge.f32.partialorder %v1340, 0.0
        %vm1560 = vcmp.ge.f32.partialorder %v1344, 0.0
        %vm1561 = vcmp.ge.f32.partialorder %v1346, 0.0
        %vm1562 = vcmp.ge.f32.partialorder %v1348, 0.0
        %vm1563 = vcmp.ge.f32.partialorder %v1350, 0.0
        %vm1564 = vcmp.ge.f32.partialorder %v1354, 0.0
        %vm1565 = vcmp.ge.f32.partialorder %v1356, 0.0
        %vm1566 = vcmp.ge.f32.partialorder %v1358, 0.0
        %vm1567 = vcmp.ge.f32.partialorder %v1360, 0.0
        %vm1568 = vcmp.ge.f32.partialorder %v1364, 0.0
        %vm1569 = vcmp.ge.f32.partialorder %v1366, 0.0
        %vm1570 = vcmp.ge.f32.partialorder %v1368, 0.0
        %vm1571 = vcmp.ge.f32.partialorder %v1370, 0.0
        %vm1572 = vcmp.ge.f32.partialorder %v1374, 0.0
        %vm1573 = vcmp.ge.f32.partialorder %v1376, 0.0
        %vm1574 = vcmp.ge.f32.partialorder %v1378, 0.0
        %vm1575 = vcmp.ge.f32.partialorder %v1380, 0.0
        %vm1576 = vcmp.ge.f32.partialorder %v1384, 0.0
        %vm1577 = vcmp.ge.f32.partialorder %v1386, 0.0
        %vm1578 = vcmp.ge.f32.partialorder %v1388, 0.0
        %vm1579 = vcmp.ge.f32.partialorder %v1390, 0.0
        %vm1580 = vcmp.ge.f32.partialorder %v1394, 0.0
        %vm1581 = vcmp.ge.f32.partialorder %v1396, 0.0
        %vm1582 = vcmp.ge.f32.partialorder %v1398, 0.0
        %vm1583 = vcmp.ge.f32.partialorder %v1400, 0.0
        %vm1584 = vcmp.ge.f32.partialorder %v1404, 0.0
        %vm1585 = vcmp.ge.f32.partialorder %v1406, 0.0
        %vm1586 = vcmp.ge.f32.partialorder %v1408, 0.0
        %vm1587 = vcmp.ge.f32.partialorder %v1410, 0.0
        %vm1588 = vcmp.ge.f32.partialorder %v1414, 0.0
        %vm1589 = vcmp.ge.f32.partialorder %v1416, 0.0
        %vm1590 = vcmp.ge.f32.partialorder %v1418, 0.0
        %vm1591 = vcmp.ge.f32.partialorder %v1420, 0.0
        %vm1592 = vcmp.ge.f32.partialorder %v1424, 0.0
        %vm1593 = vcmp.ge.f32.partialorder %v1426, 0.0
        %vm1594 = vcmp.ge.f32.partialorder %v1428, 0.0
        %vm1595 = vcmp.ge.f32.partialorder %v1430, 0.0
        %vm1596 = vcmp.ge.f32.partialorder %v1434, 0.0
        %vm1597 = vcmp.ge.f32.partialorder %v1436, 0.0
        %vm1598 = vcmp.ge.f32.partialorder %v1438, 0.0
        %vm1599 = vcmp.ge.f32.partialorder %v1440, 0.0
        %vm1600 = vcmp.ge.f32.partialorder %v1444, 0.0
        %vm1601 = vcmp.ge.f32.partialorder %v1446, 0.0
        %vm1602 = vcmp.ge.f32.partialorder %v1448, 0.0
        %vm1603 = vcmp.ge.f32.partialorder %v1450, 0.0
        %vm1604 = vcmp.ge.f32.partialorder %v1454, 0.0
        %vm1605 = vcmp.ge.f32.partialorder %v1456, 0.0
        %vm1606 = vcmp.ge.f32.partialorder %v1458, 0.0
        %vm1607 = vcmp.ge.f32.partialorder %v1460, 0.0
        %vm1608 = vcmp.ge.f32.partialorder %v1464, 0.0
        %vm1609 = vcmp.ge.f32.partialorder %v1466, 0.0
        %vm1610 = vcmp.ge.f32.partialorder %v1468, 0.0
        %vm1611 = vcmp.ge.f32.partialorder %v1470, 0.0
        %vm1612 = vcmp.ge.f32.partialorder %v1474, 0.0
        %vm1613 = vcmp.ge.f32.partialorder %v1476, 0.0
        %vm1614 = vcmp.ge.f32.partialorder %v1478, 0.0
        %vm1615 = vcmp.ge.f32.partialorder %v1480, 0.0
        %vm1616 = vcmp.ge.f32.partialorder %v1484, 0.0
        %vm1617 = vcmp.ge.f32.partialorder %v1486, 0.0
        %vm1618 = vcmp.ge.f32.partialorder %v1488, 0.0
        %vm1619 = vcmp.ge.f32.partialorder %v1490, 0.0
        %v1620 = vstv %s378
        %v1621 = vmul.f32 %v1620, %v1174
        %v1622 = vmul.f32 %v1620, %v1176
        %v1623 = vmul.f32 %v1620, %v1178
        %v1624 = vmul.f32 %v1620, %v1180
        %v1625 = vmul.f32 %v1620, %v1184
        %v1626 = vmul.f32 %v1620, %v1186
        %v1627 = vmul.f32 %v1620, %v1188
        %v1628 = vmul.f32 %v1620, %v1190
        %v1629 = vmul.f32 %v1620, %v1194
        %v1630 = vmul.f32 %v1620, %v1196
        %v1631 = vmul.f32 %v1620, %v1198
        %v1632 = vmul.f32 %v1620, %v1200
        %v1633 = vmul.f32 %v1620, %v1204
        %v1634 = vmul.f32 %v1620, %v1206
        %v1635 = vmul.f32 %v1620, %v1208
        %v1636 = vmul.f32 %v1620, %v1210
        %v1637 = vmul.f32 %v1620, %v1214
        %v1638 = vmul.f32 %v1620, %v1216
        %v1639 = vmul.f32 %v1620, %v1218
        %v1640 = vmul.f32 %v1620, %v1220
        %v1641 = vmul.f32 %v1620, %v1224
        %v1642 = vmul.f32 %v1620, %v1226
        %v1643 = vmul.f32 %v1620, %v1228
        %v1644 = vmul.f32 %v1620, %v1230
        %v1645 = vmul.f32 %v1620, %v1234
        %v1646 = vmul.f32 %v1620, %v1236
        %v1647 = vmul.f32 %v1620, %v1238
        %v1648 = vmul.f32 %v1620, %v1240
        %v1649 = vmul.f32 %v1620, %v1244
        %v1650 = vmul.f32 %v1620, %v1246
        %v1651 = vmul.f32 %v1620, %v1248
        %v1652 = vmul.f32 %v1620, %v1250
        %v1653 = vmul.f32 %v1620, %v1254
        %v1654 = vmul.f32 %v1620, %v1256
        %v1655 = vmul.f32 %v1620, %v1258
        %v1656 = vmul.f32 %v1620, %v1260
        %v1657 = vmul.f32 %v1620, %v1264
        %v1658 = vmul.f32 %v1620, %v1266
        %v1659 = vmul.f32 %v1620, %v1268
        %v1660 = vmul.f32 %v1620, %v1270
        %v1661 = vmul.f32 %v1620, %v1274
        %v1662 = vmul.f32 %v1620, %v1276
        %v1663 = vmul.f32 %v1620, %v1278
        %v1664 = vmul.f32 %v1620, %v1280
        %v1665 = vmul.f32 %v1620, %v1284
        %v1666 = vmul.f32 %v1620, %v1286
        %v1667 = vmul.f32 %v1620, %v1288
        %v1668 = vmul.f32 %v1620, %v1290
        %v1669 = vmul.f32 %v1620, %v1294
        %v1670 = vmul.f32 %v1620, %v1296
        %v1671 = vmul.f32 %v1620, %v1298
        %v1672 = vmul.f32 %v1620, %v1300
        %v1673 = vmul.f32 %v1620, %v1304
        %v1674 = vmul.f32 %v1620, %v1306
        %v1675 = vmul.f32 %v1620, %v1308
        %v1676 = vmul.f32 %v1620, %v1310
        %v1677 = vmul.f32 %v1620, %v1314
        %v1678 = vmul.f32 %v1620, %v1316
        %v1679 = vmul.f32 %v1620, %v1318
        %v1680 = vmul.f32 %v1620, %v1320
        %v1681 = vmul.f32 %v1620, %v1324
        %v1682 = vmul.f32 %v1620, %v1326
        %v1683 = vmul.f32 %v1620, %v1328
        %v1684 = vmul.f32 %v1620, %v1330
        %v1685 = vmul.f32 %v1620, %v1334
        %v1686 = vmul.f32 %v1620, %v1336
        %v1687 = vmul.f32 %v1620, %v1338
        %v1688 = vmul.f32 %v1620, %v1340
        %v1689 = vmul.f32 %v1620, %v1344
        %v1690 = vmul.f32 %v1620, %v1346
        %v1691 = vmul.f32 %v1620, %v1348
        %v1692 = vmul.f32 %v1620, %v1350
        %v1693 = vmul.f32 %v1620, %v1354
        %v1694 = vmul.f32 %v1620, %v1356
        %v1695 = vmul.f32 %v1620, %v1358
        %v1696 = vmul.f32 %v1620, %v1360
        %v1697 = vmul.f32 %v1620, %v1364
        %v1698 = vmul.f32 %v1620, %v1366
        %v1699 = vmul.f32 %v1620, %v1368
        %v1700 = vmul.f32 %v1620, %v1370
        %v1701 = vmul.f32 %v1620, %v1374
        %v1702 = vmul.f32 %v1620, %v1376
        %v1703 = vmul.f32 %v1620, %v1378
        %v1704 = vmul.f32 %v1620, %v1380
        %v1705 = vmul.f32 %v1620, %v1384
        %v1706 = vmul.f32 %v1620, %v1386
        %v1707 = vmul.f32 %v1620, %v1388
        %v1708 = vmul.f32 %v1620, %v1390
        %v1709 = vmul.f32 %v1620, %v1394
        %v1710 = vmul.f32 %v1620, %v1396
        %v1711 = vmul.f32 %v1620, %v1398
        %v1712 = vmul.f32 %v1620, %v1400
        %v1713 = vmul.f32 %v1620, %v1404
        %v1714 = vmul.f32 %v1620, %v1406
        %v1715 = vmul.f32 %v1620, %v1408
        %v1716 = vmul.f32 %v1620, %v1410
        %v1717 = vmul.f32 %v1620, %v1414
        %v1718 = vmul.f32 %v1620, %v1416
        %v1719 = vmul.f32 %v1620, %v1418
        %v1720 = vmul.f32 %v1620, %v1420
        %v1721 = vmul.f32 %v1620, %v1424
        %v1722 = vmul.f32 %v1620, %v1426
        %v1723 = vmul.f32 %v1620, %v1428
        %v1724 = vmul.f32 %v1620, %v1430
        %v1725 = vmul.f32 %v1620, %v1434
        %v1726 = vmul.f32 %v1620, %v1436
        %v1727 = vmul.f32 %v1620, %v1438
        %v1728 = vmul.f32 %v1620, %v1440
        %v1729 = vmul.f32 %v1620, %v1444
        %v1730 = vmul.f32 %v1620, %v1446
        %v1731 = vmul.f32 %v1620, %v1448
        %v1732 = vmul.f32 %v1620, %v1450
        %v1733 = vmul.f32 %v1620, %v1454
        %v1734 = vmul.f32 %v1620, %v1456
        %v1735 = vmul.f32 %v1620, %v1458
        %v1736 = vmul.f32 %v1620, %v1460
        %v1737 = vmul.f32 %v1620, %v1464
        %v1738 = vmul.f32 %v1620, %v1466
        %v1739 = vmul.f32 %v1620, %v1468
        %v1740 = vmul.f32 %v1620, %v1470
        %v1741 = vmul.f32 %v1620, %v1474
        %v1742 = vmul.f32 %v1620, %v1476
        %v1743 = vmul.f32 %v1620, %v1478
        %v1744 = vmul.f32 %v1620, %v1480
        %v1745 = vmul.f32 %v1620, %v1484
        %v1746 = vmul.f32 %v1620, %v1486
        %v1747 = vmul.f32 %v1620, %v1488
        %v1748 = vmul.f32 %v1620, %v1490
        %v1749 = vsel %vm1492, %v1174, %v1621
        %v1750 = vsel %vm1493, %v1176, %v1622
        %v1751 = vsel %vm1494, %v1178, %v1623
        %v1752 = vsel %vm1495, %v1180, %v1624
        %v1753 = vsel %vm1496, %v1184, %v1625
        %v1754 = vsel %vm1497, %v1186, %v1626
        %v1755 = vsel %vm1498, %v1188, %v1627
        %v1756 = vsel %vm1499, %v1190, %v1628
        %v1757 = vsel %vm1500, %v1194, %v1629
        %v1758 = vsel %vm1501, %v1196, %v1630
        %v1759 = vsel %vm1502, %v1198, %v1631
        %v1760 = vsel %vm1503, %v1200, %v1632
        %v1761 = vsel %vm1504, %v1204, %v1633
        %v1762 = vsel %vm1505, %v1206, %v1634
        %v1763 = vsel %vm1506, %v1208, %v1635
        %v1764 = vsel %vm1507, %v1210, %v1636
        %v1765 = vsel %vm1508, %v1214, %v1637
        %v1766 = vsel %vm1509, %v1216, %v1638
        %v1767 = vsel %vm1510, %v1218, %v1639
        %v1768 = vsel %vm1511, %v1220, %v1640
        %v1769 = vsel %vm1512, %v1224, %v1641
        %v1770 = vsel %vm1513, %v1226, %v1642
        %v1771 = vsel %vm1514, %v1228, %v1643
        %v1772 = vsel %vm1515, %v1230, %v1644
        %v1773 = vsel %vm1516, %v1234, %v1645
        %v1774 = vsel %vm1517, %v1236, %v1646
        %v1775 = vsel %vm1518, %v1238, %v1647
        %v1776 = vsel %vm1519, %v1240, %v1648
        %v1777 = vsel %vm1520, %v1244, %v1649
        %v1778 = vsel %vm1521, %v1246, %v1650
        %v1779 = vsel %vm1522, %v1248, %v1651
        %v1780 = vsel %vm1523, %v1250, %v1652
        %v1781 = vsel %vm1524, %v1254, %v1653
        %v1782 = vsel %vm1525, %v1256, %v1654
        %v1783 = vsel %vm1526, %v1258, %v1655
        %v1784 = vsel %vm1527, %v1260, %v1656
        %v1785 = vsel %vm1528, %v1264, %v1657
        %v1786 = vsel %vm1529, %v1266, %v1658
        %v1787 = vsel %vm1530, %v1268, %v1659
        %v1788 = vsel %vm1531, %v1270, %v1660
        %v1789 = vsel %vm1532, %v1274, %v1661
        %v1790 = vsel %vm1533, %v1276, %v1662
        %v1791 = vsel %vm1534, %v1278, %v1663
        %v1792 = vsel %vm1535, %v1280, %v1664
        %v1793 = vsel %vm1536, %v1284, %v1665
        %v1794 = vsel %vm1537, %v1286, %v1666
        %v1795 = vsel %vm1538, %v1288, %v1667
        %v1796 = vsel %vm1539, %v1290, %v1668
        %v1797 = vsel %vm1540, %v1294, %v1669
        %v1798 = vsel %vm1541, %v1296, %v1670
        %v1799 = vsel %vm1542, %v1298, %v1671
        %v1800 = vsel %vm1543, %v1300, %v1672
        %v1801 = vsel %vm1544, %v1304, %v1673
        %v1802 = vsel %vm1545, %v1306, %v1674
        %v1803 = vsel %vm1546, %v1308, %v1675
        %v1804 = vsel %vm1547, %v1310, %v1676
        %v1805 = vsel %vm1548, %v1314, %v1677
        %v1806 = vsel %vm1549, %v1316, %v1678
        %v1807 = vsel %vm1550, %v1318, %v1679
        %v1808 = vsel %vm1551, %v1320, %v1680
        %v1809 = vsel %vm1552, %v1324, %v1681
        %v1810 = vsel %vm1553, %v1326, %v1682
        %v1811 = vsel %vm1554, %v1328, %v1683
        %v1812 = vsel %vm1555, %v1330, %v1684
        %v1813 = vsel %vm1556, %v1334, %v1685
        %v1814 = vsel %vm1557, %v1336, %v1686
        %v1815 = vsel %vm1558, %v1338, %v1687
        %v1816 = vsel %vm1559, %v1340, %v1688
        %v1817 = vsel %vm1560, %v1344, %v1689
        %v1818 = vsel %vm1561, %v1346, %v1690
        %v1819 = vsel %vm1562, %v1348, %v1691
        %v1820 = vsel %vm1563, %v1350, %v1692
        %v1821 = vsel %vm1564, %v1354, %v1693
        %v1822 = vsel %vm1565, %v1356, %v1694
        %v1823 = vsel %vm1566, %v1358, %v1695
        %v1824 = vsel %vm1567, %v1360, %v1696
        %v1825 = vsel %vm1568, %v1364, %v1697
        %v1826 = vsel %vm1569, %v1366, %v1698
        %v1827 = vsel %vm1570, %v1368, %v1699
        %v1828 = vsel %vm1571, %v1370, %v1700
        %v1829 = vsel %vm1572, %v1374, %v1701
        %v1830 = vsel %vm1573, %v1376, %v1702
        %v1831 = vsel %vm1574, %v1378, %v1703
        %v1832 = vsel %vm1575, %v1380, %v1704
        %v1833 = vsel %vm1576, %v1384, %v1705
        %v1834 = vsel %vm1577, %v1386, %v1706
        %v1835 = vsel %vm1578, %v1388, %v1707
        %v1836 = vsel %vm1579, %v1390, %v1708
        %v1837 = vsel %vm1580, %v1394, %v1709
        %v1838 = vsel %vm1581, %v1396, %v1710
        %v1839 = vsel %vm1582, %v1398, %v1711
        %v1840 = vsel %vm1583, %v1400, %v1712
        %v1841 = vsel %vm1584, %v1404, %v1713
        %v1842 = vsel %vm1585, %v1406, %v1714
        %v1843 = vsel %vm1586, %v1408, %v1715
        %v1844 = vsel %vm1587, %v1410, %v1716
        %v1845 = vsel %vm1588, %v1414, %v1717
        %v1846 = vsel %vm1589, %v1416, %v1718
        %v1847 = vsel %vm1590, %v1418, %v1719
        %v1848 = vsel %vm1591, %v1420, %v1720
        %v1849 = vsel %vm1592, %v1424, %v1721
        %v1850 = vsel %vm1593, %v1426, %v1722
        %v1851 = vsel %vm1594, %v1428, %v1723
        %v1852 = vsel %vm1595, %v1430, %v1724
        %v1853 = vsel %vm1596, %v1434, %v1725
        %v1854 = vsel %vm1597, %v1436, %v1726
        %v1855 = vsel %vm1598, %v1438, %v1727
        %v1856 = vsel %vm1599, %v1440, %v1728
        %v1857 = vsel %vm1600, %v1444, %v1729
        %v1858 = vsel %vm1601, %v1446, %v1730
        %v1859 = vsel %vm1602, %v1448, %v1731
        %v1860 = vsel %vm1603, %v1450, %v1732
        %v1861 = vsel %vm1604, %v1454, %v1733
        %v1862 = vsel %vm1605, %v1456, %v1734
        %v1863 = vsel %vm1606, %v1458, %v1735
        %v1864 = vsel %vm1607, %v1460, %v1736
        %v1865 = vsel %vm1608, %v1464, %v1737
        %v1866 = vsel %vm1609, %v1466, %v1738
        %v1867 = vsel %vm1610, %v1468, %v1739
        %v1868 = vsel %vm1611, %v1470, %v1740
        %v1869 = vsel %vm1612, %v1474, %v1741
        %v1870 = vsel %vm1613, %v1476, %v1742
        %v1871 = vsel %vm1614, %v1478, %v1743
        %v1872 = vsel %vm1615, %v1480, %v1744
        %v1873 = vsel %vm1616, %v1484, %v1745
        %v1874 = vsel %vm1617, %v1486, %v1746
        %v1875 = vsel %vm1618, %v1488, %v1747
        %v1876 = vsel %vm1619, %v1490, %v1748
        %v1877 = vmax.f32 %v1749, %v1753
        %v1878 = vmax.f32 %v1750, %v1754
        %v1879 = vmax.f32 %v1751, %v1755
        %v1880 = vmax.f32 %v1752, %v1756
        %v1881 = vmax.f32 %v1757, %v1761
        %v1882 = vmax.f32 %v1758, %v1762
        %v1883 = vmax.f32 %v1759, %v1763
        %v1884 = vmax.f32 %v1760, %v1764
        %v1885 = vmax.f32 %v1765, %v1769
        %v1886 = vmax.f32 %v1766, %v1770
        %v1887 = vmax.f32 %v1767, %v1771
        %v1888 = vmax.f32 %v1768, %v1772
        %v1889 = vmax.f32 %v1773, %v1777
        %v1890 = vmax.f32 %v1774, %v1778
        %v1891 = vmax.f32 %v1775, %v1779
        %v1892 = vmax.f32 %v1776, %v1780
        %v1893 = vmax.f32 %v1781, %v1785
        %v1894 = vmax.f32 %v1782, %v1786
        %v1895 = vmax.f32 %v1783, %v1787
        %v1896 = vmax.f32 %v1784, %v1788
        %v1897 = vmax.f32 %v1789, %v1793
        %v1898 = vmax.f32 %v1790, %v1794
        %v1899 = vmax.f32 %v1791, %v1795
        %v1900 = vmax.f32 %v1792, %v1796
        %v1901 = vmax.f32 %v1797, %v1801
        %v1902 = vmax.f32 %v1798, %v1802
        %v1903 = vmax.f32 %v1799, %v1803
        %v1904 = vmax.f32 %v1800, %v1804
        %v1905 = vmax.f32 %v1805, %v1809
        %v1906 = vmax.f32 %v1806, %v1810
        %v1907 = vmax.f32 %v1807, %v1811
        %v1908 = vmax.f32 %v1808, %v1812
        %v1909 = vmax.f32 %v1813, %v1817
        %v1910 = vmax.f32 %v1814, %v1818
        %v1911 = vmax.f32 %v1815, %v1819
        %v1912 = vmax.f32 %v1816, %v1820
        %v1913 = vmax.f32 %v1821, %v1825
        %v1914 = vmax.f32 %v1822, %v1826
        %v1915 = vmax.f32 %v1823, %v1827
        %v1916 = vmax.f32 %v1824, %v1828
        %v1917 = vmax.f32 %v1829, %v1833
        %v1918 = vmax.f32 %v1830, %v1834
        %v1919 = vmax.f32 %v1831, %v1835
        %v1920 = vmax.f32 %v1832, %v1836
        %v1921 = vmax.f32 %v1837, %v1841
        %v1922 = vmax.f32 %v1838, %v1842
        %v1923 = vmax.f32 %v1839, %v1843
        %v1924 = vmax.f32 %v1840, %v1844
        %v1925 = vmax.f32 %v1845, %v1849
        %v1926 = vmax.f32 %v1846, %v1850
        %v1927 = vmax.f32 %v1847, %v1851
        %v1928 = vmax.f32 %v1848, %v1852
        %v1929 = vmax.f32 %v1853, %v1857
        %v1930 = vmax.f32 %v1854, %v1858
        %v1931 = vmax.f32 %v1855, %v1859
        %v1932 = vmax.f32 %v1856, %v1860
        %v1933 = vmax.f32 %v1861, %v1865
        %v1934 = vmax.f32 %v1862, %v1866
        %v1935 = vmax.f32 %v1863, %v1867
        %v1936 = vmax.f32 %v1864, %v1868
        %v1937 = vmax.f32 %v1869, %v1873
        %v1938 = vmax.f32 %v1870, %v1874
        %v1939 = vmax.f32 %v1871, %v1875
        %v1940 = vmax.f32 %v1872, %v1876
        %v2005 = vcombine.low %v1877, %v1878
        %v2006 = vcombine.high %v1877, %v1878
        %v2008 = vunpack.c.l.s4 1983009808
        %v2009 = vunpack.c.0.s8 %v2008
        %v2010 = vlaneseq
        %v2011 = vshrl.u32 %v2010, 7
        %v2012 = vsub.s32 %v2009, %v2011
        %v2013 = vrot.slane %v2005, %v2012
        %v2015 = vunpack.c.l.s4 1983009808
        %v2016 = vunpack.c.0.s8 %v2015
        %v2017 = vlaneseq
        %v2018 = vshrl.u32 %v2017, 7
        %v2019 = vsub.s32 %v2016, %v2018
        %v2020 = vrot.slane %v2006, %v2019
        %v2021 = vcombine.high %v2013, %v2013
        %v2022 = vcombine.high %v2020, %v2020
        %v2023 = vcombine.low %v1879, %v1880
        %v2024 = vcombine.high %v1879, %v1880
        %v2026 = vunpack.c.l.s4 1983009808
        %v2027 = vunpack.c.0.s8 %v2026
        %v2028 = vlaneseq
        %v2029 = vshrl.u32 %v2028, 7
        %v2030 = vsub.s32 %v2027, %v2029
        %v2031 = vrot.slane %v2023, %v2030
        %v2033 = vunpack.c.l.s4 1983009808
        %v2034 = vunpack.c.0.s8 %v2033
        %v2035 = vlaneseq
        %v2036 = vshrl.u32 %v2035, 7
        %v2037 = vsub.s32 %v2034, %v2036
        %v2038 = vrot.slane %v2024, %v2037
        %v2039 = vcombine.high %v2031, %v2031
        %v2040 = vcombine.high %v2038, %v2038
        %v2041 = vcombine.low %v1881, %v1882
        %v2042 = vcombine.high %v1881, %v1882
        %v2044 = vunpack.c.l.s4 1983009808
        %v2045 = vunpack.c.0.s8 %v2044
        %v2046 = vlaneseq
        %v2047 = vshrl.u32 %v2046, 7
        %v2048 = vsub.s32 %v2045, %v2047
        %v2049 = vrot.slane %v2041, %v2048
        %v2051 = vunpack.c.l.s4 1983009808
        %v2052 = vunpack.c.0.s8 %v2051
        %v2053 = vlaneseq
        %v2054 = vshrl.u32 %v2053, 7
        %v2055 = vsub.s32 %v2052, %v2054
        %v2056 = vrot.slane %v2042, %v2055
        %v2057 = vcombine.high %v2049, %v2049
        %v2058 = vcombine.high %v2056, %v2056
        %v2059 = vcombine.low %v1883, %v1884
        %v2060 = vcombine.high %v1883, %v1884
        %v2062 = vunpack.c.l.s4 1983009808
        %v2063 = vunpack.c.0.s8 %v2062
        %v2064 = vlaneseq
        %v2065 = vshrl.u32 %v2064, 7
        %v2066 = vsub.s32 %v2063, %v2065
        %v2067 = vrot.slane %v2059, %v2066
        %v2069 = vunpack.c.l.s4 1983009808
        %v2070 = vunpack.c.0.s8 %v2069
        %v2071 = vlaneseq
        %v2072 = vshrl.u32 %v2071, 7
        %v2073 = vsub.s32 %v2070, %v2072
        %v2074 = vrot.slane %v2060, %v2073
        %v2075 = vcombine.high %v2067, %v2067
        %v2076 = vcombine.high %v2074, %v2074
        %v2077 = vcombine.low %v1885, %v1886
        %v2078 = vcombine.high %v1885, %v1886
        %v2080 = vunpack.c.l.s4 1983009808
        %v2081 = vunpack.c.0.s8 %v2080
        %v2082 = vlaneseq
        %v2083 = vshrl.u32 %v2082, 7
        %v2084 = vsub.s32 %v2081, %v2083
        %v2085 = vrot.slane %v2077, %v2084
        %v2087 = vunpack.c.l.s4 1983009808
        %v2088 = vunpack.c.0.s8 %v2087
        %v2089 = vlaneseq
        %v2090 = vshrl.u32 %v2089, 7
        %v2091 = vsub.s32 %v2088, %v2090
        %v2092 = vrot.slane %v2078, %v2091
        %v2093 = vcombine.high %v2085, %v2085
        %v2094 = vcombine.high %v2092, %v2092
        %v2095 = vcombine.low %v1887, %v1888
        %v2096 = vcombine.high %v1887, %v1888
        %v2098 = vunpack.c.l.s4 1983009808
        %v2099 = vunpack.c.0.s8 %v2098
        %v2100 = vlaneseq
        %v2101 = vshrl.u32 %v2100, 7
        %v2102 = vsub.s32 %v2099, %v2101
        %v2103 = vrot.slane %v2095, %v2102
        %v2105 = vunpack.c.l.s4 1983009808
        %v2106 = vunpack.c.0.s8 %v2105
        %v2107 = vlaneseq
        %v2108 = vshrl.u32 %v2107, 7
        %v2109 = vsub.s32 %v2106, %v2108
        %v2110 = vrot.slane %v2096, %v2109
        %v2111 = vcombine.high %v2103, %v2103
        %v2112 = vcombine.high %v2110, %v2110
        %v2113 = vcombine.low %v1889, %v1890
        %v2114 = vcombine.high %v1889, %v1890
        %v2116 = vunpack.c.l.s4 1983009808
        %v2117 = vunpack.c.0.s8 %v2116
        %v2118 = vlaneseq
        %v2119 = vshrl.u32 %v2118, 7
        %v2120 = vsub.s32 %v2117, %v2119
        %v2121 = vrot.slane %v2113, %v2120
        %v2123 = vunpack.c.l.s4 1983009808
        %v2124 = vunpack.c.0.s8 %v2123
        %v2125 = vlaneseq
        %v2126 = vshrl.u32 %v2125, 7
        %v2127 = vsub.s32 %v2124, %v2126
        %v2128 = vrot.slane %v2114, %v2127
        %v2129 = vcombine.high %v2121, %v2121
        %v2130 = vcombine.high %v2128, %v2128
        %v2131 = vcombine.low %v1891, %v1892
        %v2132 = vcombine.high %v1891, %v1892
        %v2134 = vunpack.c.l.s4 1983009808
        %v2135 = vunpack.c.0.s8 %v2134
        %v2136 = vlaneseq
        %v2137 = vshrl.u32 %v2136, 7
        %v2138 = vsub.s32 %v2135, %v2137
        %v2139 = vrot.slane %v2131, %v2138
        %v2141 = vunpack.c.l.s4 1983009808
        %v2142 = vunpack.c.0.s8 %v2141
        %v2143 = vlaneseq
        %v2144 = vshrl.u32 %v2143, 7
        %v2145 = vsub.s32 %v2142, %v2144
        %v2146 = vrot.slane %v2132, %v2145
        %v2147 = vcombine.high %v2139, %v2139
        %v2148 = vcombine.high %v2146, %v2146
        %v2149 = vcombine.low %v1893, %v1894
        %v2150 = vcombine.high %v1893, %v1894
        %v2152 = vunpack.c.l.s4 1983009808
        %v2153 = vunpack.c.0.s8 %v2152
        %v2154 = vlaneseq
        %v2155 = vshrl.u32 %v2154, 7
        %v2156 = vsub.s32 %v2153, %v2155
        %v2157 = vrot.slane %v2149, %v2156
        %v2159 = vunpack.c.l.s4 1983009808
        %v2160 = vunpack.c.0.s8 %v2159
        %v2161 = vlaneseq
        %v2162 = vshrl.u32 %v2161, 7
        %v2163 = vsub.s32 %v2160, %v2162
        %v2164 = vrot.slane %v2150, %v2163
        %v2165 = vcombine.high %v2157, %v2157
        %v2166 = vcombine.high %v2164, %v2164
        %v2167 = vcombine.low %v1895, %v1896
        %v2168 = vcombine.high %v1895, %v1896
        %v2170 = vunpack.c.l.s4 1983009808
        %v2171 = vunpack.c.0.s8 %v2170
        %v2172 = vlaneseq
        %v2173 = vshrl.u32 %v2172, 7
        %v2174 = vsub.s32 %v2171, %v2173
        %v2175 = vrot.slane %v2167, %v2174
        %v2177 = vunpack.c.l.s4 1983009808
        %v2178 = vunpack.c.0.s8 %v2177
        %v2179 = vlaneseq
        %v2180 = vshrl.u32 %v2179, 7
        %v2181 = vsub.s32 %v2178, %v2180
        %v2182 = vrot.slane %v2168, %v2181
        %v2183 = vcombine.high %v2175, %v2175
        %v2184 = vcombine.high %v2182, %v2182
        %v2185 = vcombine.low %v1897, %v1898
        %v2186 = vcombine.high %v1897, %v1898
        %v2188 = vunpack.c.l.s4 1983009808
        %v2189 = vunpack.c.0.s8 %v2188
        %v2190 = vlaneseq
        %v2191 = vshrl.u32 %v2190, 7
        %v2192 = vsub.s32 %v2189, %v2191
        %v2193 = vrot.slane %v2185, %v2192
        %v2195 = vunpack.c.l.s4 1983009808
        %v2196 = vunpack.c.0.s8 %v2195
        %v2197 = vlaneseq
        %v2198 = vshrl.u32 %v2197, 7
        %v2199 = vsub.s32 %v2196, %v2198
        %v2200 = vrot.slane %v2186, %v2199
        %v2201 = vcombine.high %v2193, %v2193
        %v2202 = vcombine.high %v2200, %v2200
        %v2203 = vcombine.low %v1899, %v1900
        %v2204 = vcombine.high %v1899, %v1900
        %v2206 = vunpack.c.l.s4 1983009808
        %v2207 = vunpack.c.0.s8 %v2206
        %v2208 = vlaneseq
        %v2209 = vshrl.u32 %v2208, 7
        %v2210 = vsub.s32 %v2207, %v2209
        %v2211 = vrot.slane %v2203, %v2210
        %v2213 = vunpack.c.l.s4 1983009808
        %v2214 = vunpack.c.0.s8 %v2213
        %v2215 = vlaneseq
        %v2216 = vshrl.u32 %v2215, 7
        %v2217 = vsub.s32 %v2214, %v2216
        %v2218 = vrot.slane %v2204, %v2217
        %v2219 = vcombine.high %v2211, %v2211
        %v2220 = vcombine.high %v2218, %v2218
        %v2221 = vcombine.low %v1901, %v1902
        %v2222 = vcombine.high %v1901, %v1902
        %v2224 = vunpack.c.l.s4 1983009808
        %v2225 = vunpack.c.0.s8 %v2224
        %v2226 = vlaneseq
        %v2227 = vshrl.u32 %v2226, 7
        %v2228 = vsub.s32 %v2225, %v2227
        %v2229 = vrot.slane %v2221, %v2228
        %v2231 = vunpack.c.l.s4 1983009808
        %v2232 = vunpack.c.0.s8 %v2231
        %v2233 = vlaneseq
        %v2234 = vshrl.u32 %v2233, 7
        %v2235 = vsub.s32 %v2232, %v2234
        %v2236 = vrot.slane %v2222, %v2235
        %v2237 = vcombine.high %v2229, %v2229
        %v2238 = vcombine.high %v2236, %v2236
        %v2239 = vcombine.low %v1903, %v1904
        %v2240 = vcombine.high %v1903, %v1904
        %v2242 = vunpack.c.l.s4 1983009808
        %v2243 = vunpack.c.0.s8 %v2242
        %v2244 = vlaneseq
        %v2245 = vshrl.u32 %v2244, 7
        %v2246 = vsub.s32 %v2243, %v2245
        %v2247 = vrot.slane %v2239, %v2246
        %v2249 = vunpack.c.l.s4 1983009808
        %v2250 = vunpack.c.0.s8 %v2249
        %v2251 = vlaneseq
        %v2252 = vshrl.u32 %v2251, 7
        %v2253 = vsub.s32 %v2250, %v2252
        %v2254 = vrot.slane %v2240, %v2253
        %v2255 = vcombine.high %v2247, %v2247
        %v2256 = vcombine.high %v2254, %v2254
        %v2257 = vcombine.low %v1905, %v1906
        %v2258 = vcombine.high %v1905, %v1906
        %v2260 = vunpack.c.l.s4 1983009808
        %v2261 = vunpack.c.0.s8 %v2260
        %v2262 = vlaneseq
        %v2263 = vshrl.u32 %v2262, 7
        %v2264 = vsub.s32 %v2261, %v2263
        %v2265 = vrot.slane %v2257, %v2264
        %v2267 = vunpack.c.l.s4 1983009808
        %v2268 = vunpack.c.0.s8 %v2267
        %v2269 = vlaneseq
        %v2270 = vshrl.u32 %v2269, 7
        %v2271 = vsub.s32 %v2268, %v2270
        %v2272 = vrot.slane %v2258, %v2271
        %v2273 = vcombine.high %v2265, %v2265
        %v2274 = vcombine.high %v2272, %v2272
        %v2275 = vcombine.low %v1907, %v1908
        %v2276 = vcombine.high %v1907, %v1908
        %v2278 = vunpack.c.l.s4 1983009808
        %v2279 = vunpack.c.0.s8 %v2278
        %v2280 = vlaneseq
        %v2281 = vshrl.u32 %v2280, 7
        %v2282 = vsub.s32 %v2279, %v2281
        %v2283 = vrot.slane %v2275, %v2282
        %v2285 = vunpack.c.l.s4 1983009808
        %v2286 = vunpack.c.0.s8 %v2285
        %v2287 = vlaneseq
        %v2288 = vshrl.u32 %v2287, 7
        %v2289 = vsub.s32 %v2286, %v2288
        %v2290 = vrot.slane %v2276, %v2289
        %v2291 = vcombine.high %v2283, %v2283
        %v2292 = vcombine.high %v2290, %v2290
        %v2293 = vcombine.low %v1909, %v1910
        %v2294 = vcombine.high %v1909, %v1910
        %v2296 = vunpack.c.l.s4 1983009808
        %v2297 = vunpack.c.0.s8 %v2296
        %v2298 = vlaneseq
        %v2299 = vshrl.u32 %v2298, 7
        %v2300 = vsub.s32 %v2297, %v2299
        %v2301 = vrot.slane %v2293, %v2300
        %v2303 = vunpack.c.l.s4 1983009808
        %v2304 = vunpack.c.0.s8 %v2303
        %v2305 = vlaneseq
        %v2306 = vshrl.u32 %v2305, 7
        %v2307 = vsub.s32 %v2304, %v2306
        %v2308 = vrot.slane %v2294, %v2307
        %v2309 = vcombine.high %v2301, %v2301
        %v2310 = vcombine.high %v2308, %v2308
        %v2311 = vcombine.low %v1911, %v1912
        %v2312 = vcombine.high %v1911, %v1912
        %v2314 = vunpack.c.l.s4 1983009808
        %v2315 = vunpack.c.0.s8 %v2314
        %v2316 = vlaneseq
        %v2317 = vshrl.u32 %v2316, 7
        %v2318 = vsub.s32 %v2315, %v2317
        %v2319 = vrot.slane %v2311, %v2318
        %v2321 = vunpack.c.l.s4 1983009808
        %v2322 = vunpack.c.0.s8 %v2321
        %v2323 = vlaneseq
        %v2324 = vshrl.u32 %v2323, 7
        %v2325 = vsub.s32 %v2322, %v2324
        %v2326 = vrot.slane %v2312, %v2325
        %v2327 = vcombine.high %v2319, %v2319
        %v2328 = vcombine.high %v2326, %v2326
        %v2329 = vcombine.low %v1913, %v1914
        %v2330 = vcombine.high %v1913, %v1914
        %v2332 = vunpack.c.l.s4 1983009808
        %v2333 = vunpack.c.0.s8 %v2332
        %v2334 = vlaneseq
        %v2335 = vshrl.u32 %v2334, 7
        %v2336 = vsub.s32 %v2333, %v2335
        %v2337 = vrot.slane %v2329, %v2336
        %v2339 = vunpack.c.l.s4 1983009808
        %v2340 = vunpack.c.0.s8 %v2339
        %v2341 = vlaneseq
        %v2342 = vshrl.u32 %v2341, 7
        %v2343 = vsub.s32 %v2340, %v2342
        %v2344 = vrot.slane %v2330, %v2343
        %v2345 = vcombine.high %v2337, %v2337
        %v2346 = vcombine.high %v2344, %v2344
        %v2347 = vcombine.low %v1915, %v1916
        %v2348 = vcombine.high %v1915, %v1916
        %v2350 = vunpack.c.l.s4 1983009808
        %v2351 = vunpack.c.0.s8 %v2350
        %v2352 = vlaneseq
        %v2353 = vshrl.u32 %v2352, 7
        %v2354 = vsub.s32 %v2351, %v2353
        %v2355 = vrot.slane %v2347, %v2354
        %v2357 = vunpack.c.l.s4 1983009808
        %v2358 = vunpack.c.0.s8 %v2357
        %v2359 = vlaneseq
        %v2360 = vshrl.u32 %v2359, 7
        %v2361 = vsub.s32 %v2358, %v2360
        %v2362 = vrot.slane %v2348, %v2361
        %v2363 = vcombine.high %v2355, %v2355
        %v2364 = vcombine.high %v2362, %v2362
        %v2365 = vcombine.low %v1917, %v1918
        %v2366 = vcombine.high %v1917, %v1918
        %v2368 = vunpack.c.l.s4 1983009808
        %v2369 = vunpack.c.0.s8 %v2368
        %v2370 = vlaneseq
        %v2371 = vshrl.u32 %v2370, 7
        %v2372 = vsub.s32 %v2369, %v2371
        %v2373 = vrot.slane %v2365, %v2372
        %v2375 = vunpack.c.l.s4 1983009808
        %v2376 = vunpack.c.0.s8 %v2375
        %v2377 = vlaneseq
        %v2378 = vshrl.u32 %v2377, 7
        %v2379 = vsub.s32 %v2376, %v2378
        %v2380 = vrot.slane %v2366, %v2379
        %v2381 = vcombine.high %v2373, %v2373
        %v2382 = vcombine.high %v2380, %v2380
        %v2383 = vcombine.low %v1919, %v1920
        %v2384 = vcombine.high %v1919, %v1920
        %v2386 = vunpack.c.l.s4 1983009808
        %v2387 = vunpack.c.0.s8 %v2386
        %v2388 = vlaneseq
        %v2389 = vshrl.u32 %v2388, 7
        %v2390 = vsub.s32 %v2387, %v2389
        %v2391 = vrot.slane %v2383, %v2390
        %v2393 = vunpack.c.l.s4 1983009808
        %v2394 = vunpack.c.0.s8 %v2393
        %v2395 = vlaneseq
        %v2396 = vshrl.u32 %v2395, 7
        %v2397 = vsub.s32 %v2394, %v2396
        %v2398 = vrot.slane %v2384, %v2397
        %v2399 = vcombine.high %v2391, %v2391
        %v2400 = vcombine.high %v2398, %v2398
        %v2401 = vcombine.low %v1921, %v1922
        %v2402 = vcombine.high %v1921, %v1922
        %v2404 = vunpack.c.l.s4 1983009808
        %v2405 = vunpack.c.0.s8 %v2404
        %v2406 = vlaneseq
        %v2407 = vshrl.u32 %v2406, 7
        %v2408 = vsub.s32 %v2405, %v2407
        %v2409 = vrot.slane %v2401, %v2408
        %v2411 = vunpack.c.l.s4 1983009808
        %v2412 = vunpack.c.0.s8 %v2411
        %v2413 = vlaneseq
        %v2414 = vshrl.u32 %v2413, 7
        %v2415 = vsub.s32 %v2412, %v2414
        %v2416 = vrot.slane %v2402, %v2415
        %v2417 = vcombine.high %v2409, %v2409
        %v2418 = vcombine.high %v2416, %v2416
        %v2419 = vcombine.low %v1923, %v1924
        %v2420 = vcombine.high %v1923, %v1924
        %v2422 = vunpack.c.l.s4 1983009808
        %v2423 = vunpack.c.0.s8 %v2422
        %v2424 = vlaneseq
        %v2425 = vshrl.u32 %v2424, 7
        %v2426 = vsub.s32 %v2423, %v2425
        %v2427 = vrot.slane %v2419, %v2426
        %v2429 = vunpack.c.l.s4 1983009808
        %v2430 = vunpack.c.0.s8 %v2429
        %v2431 = vlaneseq
        %v2432 = vshrl.u32 %v2431, 7
        %v2433 = vsub.s32 %v2430, %v2432
        %v2434 = vrot.slane %v2420, %v2433
        %v2435 = vcombine.high %v2427, %v2427
        %v2436 = vcombine.high %v2434, %v2434
        %v2437 = vcombine.low %v1925, %v1926
        %v2438 = vcombine.high %v1925, %v1926
        %v2440 = vunpack.c.l.s4 1983009808
        %v2441 = vunpack.c.0.s8 %v2440
        %v2442 = vlaneseq
        %v2443 = vshrl.u32 %v2442, 7
        %v2444 = vsub.s32 %v2441, %v2443
        %v2445 = vrot.slane %v2437, %v2444
        %v2447 = vunpack.c.l.s4 1983009808
        %v2448 = vunpack.c.0.s8 %v2447
        %v2449 = vlaneseq
        %v2450 = vshrl.u32 %v2449, 7
        %v2451 = vsub.s32 %v2448, %v2450
        %v2452 = vrot.slane %v2438, %v2451
        %v2453 = vcombine.high %v2445, %v2445
        %v2454 = vcombine.high %v2452, %v2452
        %v2455 = vcombine.low %v1927, %v1928
        %v2456 = vcombine.high %v1927, %v1928
        %v2458 = vunpack.c.l.s4 1983009808
        %v2459 = vunpack.c.0.s8 %v2458
        %v2460 = vlaneseq
        %v2461 = vshrl.u32 %v2460, 7
        %v2462 = vsub.s32 %v2459, %v2461
        %v2463 = vrot.slane %v2455, %v2462
        %v2465 = vunpack.c.l.s4 1983009808
        %v2466 = vunpack.c.0.s8 %v2465
        %v2467 = vlaneseq
        %v2468 = vshrl.u32 %v2467, 7
        %v2469 = vsub.s32 %v2466, %v2468
        %v2470 = vrot.slane %v2456, %v2469
        %v2471 = vcombine.high %v2463, %v2463
        %v2472 = vcombine.high %v2470, %v2470
        %v2473 = vcombine.low %v1929, %v1930
        %v2474 = vcombine.high %v1929, %v1930
        %v2476 = vunpack.c.l.s4 1983009808
        %v2477 = vunpack.c.0.s8 %v2476
        %v2478 = vlaneseq
        %v2479 = vshrl.u32 %v2478, 7
        %v2480 = vsub.s32 %v2477, %v2479
        %v2481 = vrot.slane %v2473, %v2480
        %v2483 = vunpack.c.l.s4 1983009808
        %v2484 = vunpack.c.0.s8 %v2483
        %v2485 = vlaneseq
        %v2486 = vshrl.u32 %v2485, 7
        %v2487 = vsub.s32 %v2484, %v2486
        %v2488 = vrot.slane %v2474, %v2487
        %v2489 = vcombine.high %v2481, %v2481
        %v2490 = vcombine.high %v2488, %v2488
        %v2491 = vcombine.low %v1931, %v1932
        %v2492 = vcombine.high %v1931, %v1932
        %v2494 = vunpack.c.l.s4 1983009808
        %v2495 = vunpack.c.0.s8 %v2494
        %v2496 = vlaneseq
        %v2497 = vshrl.u32 %v2496, 7
        %v2498 = vsub.s32 %v2495, %v2497
        %v2499 = vrot.slane %v2491, %v2498
        %v2501 = vunpack.c.l.s4 1983009808
        %v2502 = vunpack.c.0.s8 %v2501
        %v2503 = vlaneseq
        %v2504 = vshrl.u32 %v2503, 7
        %v2505 = vsub.s32 %v2502, %v2504
        %v2506 = vrot.slane %v2492, %v2505
        %v2507 = vcombine.high %v2499, %v2499
        %v2508 = vcombine.high %v2506, %v2506
        %v2509 = vcombine.low %v1933, %v1934
        %v2510 = vcombine.high %v1933, %v1934
        %v2512 = vunpack.c.l.s4 1983009808
        %v2513 = vunpack.c.0.s8 %v2512
        %v2514 = vlaneseq
        %v2515 = vshrl.u32 %v2514, 7
        %v2516 = vsub.s32 %v2513, %v2515
        %v2517 = vrot.slane %v2509, %v2516
        %v2519 = vunpack.c.l.s4 1983009808
        %v2520 = vunpack.c.0.s8 %v2519
        %v2521 = vlaneseq
        %v2522 = vshrl.u32 %v2521, 7
        %v2523 = vsub.s32 %v2520, %v2522
        %v2524 = vrot.slane %v2510, %v2523
        %v2525 = vcombine.high %v2517, %v2517
        %v2526 = vcombine.high %v2524, %v2524
        %v2527 = vcombine.low %v1935, %v1936
        %v2528 = vcombine.high %v1935, %v1936
        %v2530 = vunpack.c.l.s4 1983009808
        %v2531 = vunpack.c.0.s8 %v2530
        %v2532 = vlaneseq
        %v2533 = vshrl.u32 %v2532, 7
        %v2534 = vsub.s32 %v2531, %v2533
        %v2535 = vrot.slane %v2527, %v2534
        %v2537 = vunpack.c.l.s4 1983009808
        %v2538 = vunpack.c.0.s8 %v2537
        %v2539 = vlaneseq
        %v2540 = vshrl.u32 %v2539, 7
        %v2541 = vsub.s32 %v2538, %v2540
        %v2542 = vrot.slane %v2528, %v2541
        %v2543 = vcombine.high %v2535, %v2535
        %v2544 = vcombine.high %v2542, %v2542
        %v2545 = vcombine.low %v1937, %v1938
        %v2546 = vcombine.high %v1937, %v1938
        %v2548 = vunpack.c.l.s4 1983009808
        %v2549 = vunpack.c.0.s8 %v2548
        %v2550 = vlaneseq
        %v2551 = vshrl.u32 %v2550, 7
        %v2552 = vsub.s32 %v2549, %v2551
        %v2553 = vrot.slane %v2545, %v2552
        %v2555 = vunpack.c.l.s4 1983009808
        %v2556 = vunpack.c.0.s8 %v2555
        %v2557 = vlaneseq
        %v2558 = vshrl.u32 %v2557, 7
        %v2559 = vsub.s32 %v2556, %v2558
        %v2560 = vrot.slane %v2546, %v2559
        %v2561 = vcombine.high %v2553, %v2553
        %v2562 = vcombine.high %v2560, %v2560
        %v2563 = vcombine.low %v1939, %v1940
        %v2564 = vcombine.high %v1939, %v1940
        %v2566 = vunpack.c.l.s4 1983009808
        %v2567 = vunpack.c.0.s8 %v2566
        %v2568 = vlaneseq
        %v2569 = vshrl.u32 %v2568, 7
        %v2570 = vsub.s32 %v2567, %v2569
        %v2571 = vrot.slane %v2563, %v2570
        %v2573 = vunpack.c.l.s4 1983009808
        %v2574 = vunpack.c.0.s8 %v2573
        %v2575 = vlaneseq
        %v2576 = vshrl.u32 %v2575, 7
        %v2577 = vsub.s32 %v2574, %v2576
        %v2578 = vrot.slane %v2564, %v2577
        %v2579 = vcombine.high %v2571, %v2571
        %v2580 = vcombine.high %v2578, %v2578
        %v2709 = vrot.slane %v2013, 7
        %v2710 = vrot.slane %v2709, 2
        %v2711 = vrot.slane %v2021, 7
        %v2712 = vrot.slane %v2711, 2
        %v2713 = vrot.slane %v2020, 7
        %v2714 = vrot.slane %v2713, 2
        %v2715 = vrot.slane %v2022, 7
        %v2716 = vrot.slane %v2715, 2
        %v2717 = vrot.slane %v2031, 7
        %v2718 = vrot.slane %v2717, 2
        %v2719 = vrot.slane %v2039, 7
        %v2720 = vrot.slane %v2719, 2
        %v2721 = vrot.slane %v2038, 7
        %v2722 = vrot.slane %v2721, 2
        %v2723 = vrot.slane %v2040, 7
        %v2724 = vrot.slane %v2723, 2
        %v2725 = vrot.slane %v2049, 7
        %v2726 = vrot.slane %v2725, 2
        %v2727 = vrot.slane %v2057, 7
        %v2728 = vrot.slane %v2727, 2
        %v2729 = vrot.slane %v2056, 7
        %v2730 = vrot.slane %v2729, 2
        %v2731 = vrot.slane %v2058, 7
        %v2732 = vrot.slane %v2731, 2
        %v2733 = vrot.slane %v2067, 7
        %v2734 = vrot.slane %v2733, 2
        %v2735 = vrot.slane %v2075, 7
        %v2736 = vrot.slane %v2735, 2
        %v2737 = vrot.slane %v2074, 7
        %v2738 = vrot.slane %v2737, 2
        %v2739 = vrot.slane %v2076, 7
        %v2740 = vrot.slane %v2739, 2
        %v2741 = vrot.slane %v2085, 7
        %v2742 = vrot.slane %v2741, 2
        %v2743 = vrot.slane %v2093, 7
        %v2744 = vrot.slane %v2743, 2
        %v2745 = vrot.slane %v2092, 7
        %v2746 = vrot.slane %v2745, 2
        %v2747 = vrot.slane %v2094, 7
        %v2748 = vrot.slane %v2747, 2
        %v2749 = vrot.slane %v2103, 7
        %v2750 = vrot.slane %v2749, 2
        %v2751 = vrot.slane %v2111, 7
        %v2752 = vrot.slane %v2751, 2
        %v2753 = vrot.slane %v2110, 7
        %v2754 = vrot.slane %v2753, 2
        %v2755 = vrot.slane %v2112, 7
        %v2756 = vrot.slane %v2755, 2
        %v2757 = vrot.slane %v2121, 7
        %v2758 = vrot.slane %v2757, 2
        %v2759 = vrot.slane %v2129, 7
        %v2760 = vrot.slane %v2759, 2
        %v2761 = vrot.slane %v2128, 7
        %v2762 = vrot.slane %v2761, 2
        %v2763 = vrot.slane %v2130, 7
        %v2764 = vrot.slane %v2763, 2
        %v2765 = vrot.slane %v2139, 7
        %v2766 = vrot.slane %v2765, 2
        %v2767 = vrot.slane %v2147, 7
        %v2768 = vrot.slane %v2767, 2
        %v2769 = vrot.slane %v2146, 7
        %v2770 = vrot.slane %v2769, 2
        %v2771 = vrot.slane %v2148, 7
        %v2772 = vrot.slane %v2771, 2
        %v2773 = vrot.slane %v2157, 7
        %v2774 = vrot.slane %v2773, 2
        %v2775 = vrot.slane %v2165, 7
        %v2776 = vrot.slane %v2775, 2
        %v2777 = vrot.slane %v2164, 7
        %v2778 = vrot.slane %v2777, 2
        %v2779 = vrot.slane %v2166, 7
        %v2780 = vrot.slane %v2779, 2
        %v2781 = vrot.slane %v2175, 7
        %v2782 = vrot.slane %v2781, 2
        %v2783 = vrot.slane %v2183, 7
        %v2784 = vrot.slane %v2783, 2
        %v2785 = vrot.slane %v2182, 7
        %v2786 = vrot.slane %v2785, 2
        %v2787 = vrot.slane %v2184, 7
        %v2788 = vrot.slane %v2787, 2
        %v2789 = vrot.slane %v2193, 7
        %v2790 = vrot.slane %v2789, 2
        %v2791 = vrot.slane %v2201, 7
        %v2792 = vrot.slane %v2791, 2
        %v2793 = vrot.slane %v2200, 7
        %v2794 = vrot.slane %v2793, 2
        %v2795 = vrot.slane %v2202, 7
        %v2796 = vrot.slane %v2795, 2
        %v2797 = vrot.slane %v2211, 7
        %v2798 = vrot.slane %v2797, 2
        %v2799 = vrot.slane %v2219, 7
        %v2800 = vrot.slane %v2799, 2
        %v2801 = vrot.slane %v2218, 7
        %v2802 = vrot.slane %v2801, 2
        %v2803 = vrot.slane %v2220, 7
        %v2804 = vrot.slane %v2803, 2
        %v2805 = vrot.slane %v2229, 7
        %v2806 = vrot.slane %v2805, 2
        %v2807 = vrot.slane %v2237, 7
        %v2808 = vrot.slane %v2807, 2
        %v2809 = vrot.slane %v2236, 7
        %v2810 = vrot.slane %v2809, 2
        %v2811 = vrot.slane %v2238, 7
        %v2812 = vrot.slane %v2811, 2
        %v2813 = vrot.slane %v2247, 7
        %v2814 = vrot.slane %v2813, 2
        %v2815 = vrot.slane %v2255, 7
        %v2816 = vrot.slane %v2815, 2
        %v2817 = vrot.slane %v2254, 7
        %v2818 = vrot.slane %v2817, 2
        %v2819 = vrot.slane %v2256, 7
        %v2820 = vrot.slane %v2819, 2
        %v2821 = vrot.slane %v2265, 7
        %v2822 = vrot.slane %v2821, 2
        %v2823 = vrot.slane %v2273, 7
        %v2824 = vrot.slane %v2823, 2
        %v2825 = vrot.slane %v2272, 7
        %v2826 = vrot.slane %v2825, 2
        %v2827 = vrot.slane %v2274, 7
        %v2828 = vrot.slane %v2827, 2
        %v2829 = vrot.slane %v2283, 7
        %v2830 = vrot.slane %v2829, 2
        %v2831 = vrot.slane %v2291, 7
        %v2832 = vrot.slane %v2831, 2
        %v2833 = vrot.slane %v2290, 7
        %v2834 = vrot.slane %v2833, 2
        %v2835 = vrot.slane %v2292, 7
        %v2836 = vrot.slane %v2835, 2
        %v2837 = vrot.slane %v2301, 7
        %v2838 = vrot.slane %v2837, 2
        %v2839 = vrot.slane %v2309, 7
        %v2840 = vrot.slane %v2839, 2
        %v2841 = vrot.slane %v2308, 7
        %v2842 = vrot.slane %v2841, 2
        %v2843 = vrot.slane %v2310, 7
        %v2844 = vrot.slane %v2843, 2
        %v2845 = vrot.slane %v2319, 7
        %v2846 = vrot.slane %v2845, 2
        %v2847 = vrot.slane %v2327, 7
        %v2848 = vrot.slane %v2847, 2
        %v2849 = vrot.slane %v2326, 7
        %v2850 = vrot.slane %v2849, 2
        %v2851 = vrot.slane %v2328, 7
        %v2852 = vrot.slane %v2851, 2
        %v2853 = vrot.slane %v2337, 7
        %v2854 = vrot.slane %v2853, 2
        %v2855 = vrot.slane %v2345, 7
        %v2856 = vrot.slane %v2855, 2
        %v2857 = vrot.slane %v2344, 7
        %v2858 = vrot.slane %v2857, 2
        %v2859 = vrot.slane %v2346, 7
        %v2860 = vrot.slane %v2859, 2
        %v2861 = vrot.slane %v2355, 7
        %v2862 = vrot.slane %v2861, 2
        %v2863 = vrot.slane %v2363, 7
        %v2864 = vrot.slane %v2863, 2
        %v2865 = vrot.slane %v2362, 7
        %v2866 = vrot.slane %v2865, 2
        %v2867 = vrot.slane %v2364, 7
        %v2868 = vrot.slane %v2867, 2
        %v2869 = vrot.slane %v2373, 7
        %v2870 = vrot.slane %v2869, 2
        %v2871 = vrot.slane %v2381, 7
        %v2872 = vrot.slane %v2871, 2
        %v2873 = vrot.slane %v2380, 7
        %v2874 = vrot.slane %v2873, 2
        %v2875 = vrot.slane %v2382, 7
        %v2876 = vrot.slane %v2875, 2
        %v2877 = vrot.slane %v2391, 7
        %v2878 = vrot.slane %v2877, 2
        %v2879 = vrot.slane %v2399, 7
        %v2880 = vrot.slane %v2879, 2
        %v2881 = vrot.slane %v2398, 7
        %v2882 = vrot.slane %v2881, 2
        %v2883 = vrot.slane %v2400, 7
        %v2884 = vrot.slane %v2883, 2
        %v2885 = vrot.slane %v2409, 7
        %v2886 = vrot.slane %v2885, 2
        %v2887 = vrot.slane %v2417, 7
        %v2888 = vrot.slane %v2887, 2
        %v2889 = vrot.slane %v2416, 7
        %v2890 = vrot.slane %v2889, 2
        %v2891 = vrot.slane %v2418, 7
        %v2892 = vrot.slane %v2891, 2
        %v2893 = vrot.slane %v2427, 7
        %v2894 = vrot.slane %v2893, 2
        %v2895 = vrot.slane %v2435, 7
        %v2896 = vrot.slane %v2895, 2
        %v2897 = vrot.slane %v2434, 7
        %v2898 = vrot.slane %v2897, 2
        %v2899 = vrot.slane %v2436, 7
        %v2900 = vrot.slane %v2899, 2
        %v2901 = vrot.slane %v2445, 7
        %v2902 = vrot.slane %v2901, 2
        %v2903 = vrot.slane %v2453, 7
        %v2904 = vrot.slane %v2903, 2
        %v2905 = vrot.slane %v2452, 7
        %v2906 = vrot.slane %v2905, 2
        %v2907 = vrot.slane %v2454, 7
        %v2908 = vrot.slane %v2907, 2
        %v2909 = vrot.slane %v2463, 7
        %v2910 = vrot.slane %v2909, 2
        %v2911 = vrot.slane %v2471, 7
        %v2912 = vrot.slane %v2911, 2
        %v2913 = vrot.slane %v2470, 7
        %v2914 = vrot.slane %v2913, 2
        %v2915 = vrot.slane %v2472, 7
        %v2916 = vrot.slane %v2915, 2
        %v2917 = vrot.slane %v2481, 7
        %v2918 = vrot.slane %v2917, 2
        %v2919 = vrot.slane %v2489, 7
        %v2920 = vrot.slane %v2919, 2
        %v2921 = vrot.slane %v2488, 7
        %v2922 = vrot.slane %v2921, 2
        %v2923 = vrot.slane %v2490, 7
        %v2924 = vrot.slane %v2923, 2
        %v2925 = vrot.slane %v2499, 7
        %v2926 = vrot.slane %v2925, 2
        %v2927 = vrot.slane %v2507, 7
        %v2928 = vrot.slane %v2927, 2
        %v2929 = vrot.slane %v2506, 7
        %v2930 = vrot.slane %v2929, 2
        %v2931 = vrot.slane %v2508, 7
        %v2932 = vrot.slane %v2931, 2
        %v2933 = vrot.slane %v2517, 7
        %v2934 = vrot.slane %v2933, 2
        %v2935 = vrot.slane %v2525, 7
        %v2936 = vrot.slane %v2935, 2
        %v2937 = vrot.slane %v2524, 7
        %v2938 = vrot.slane %v2937, 2
        %v2939 = vrot.slane %v2526, 7
        %v2940 = vrot.slane %v2939, 2
        %v2941 = vrot.slane %v2535, 7
        %v2942 = vrot.slane %v2941, 2
        %v2943 = vrot.slane %v2543, 7
        %v2944 = vrot.slane %v2943, 2
        %v2945 = vrot.slane %v2542, 7
        %v2946 = vrot.slane %v2945, 2
        %v2947 = vrot.slane %v2544, 7
        %v2948 = vrot.slane %v2947, 2
        %v2949 = vrot.slane %v2553, 7
        %v2950 = vrot.slane %v2949, 2
        %v2951 = vrot.slane %v2561, 7
        %v2952 = vrot.slane %v2951, 2
        %v2953 = vrot.slane %v2560, 7
        %v2954 = vrot.slane %v2953, 2
        %v2955 = vrot.slane %v2562, 7
        %v2956 = vrot.slane %v2955, 2
        %v2957 = vrot.slane %v2571, 7
        %v2958 = vrot.slane %v2957, 2
        %v2959 = vrot.slane %v2579, 7
        %v2960 = vrot.slane %v2959, 2
        %v2961 = vrot.slane %v2578, 7
        %v2962 = vrot.slane %v2961, 2
        %v2963 = vrot.slane %v2580, 7
        %v2964 = vrot.slane %v2963, 2
        %v3093 = vmax.f32 %v2013, %v2710
        %v3094 = vmax.f32 %v2021, %v2712
        %v3095 = vmax.f32 %v2020, %v2714
        %v3096 = vmax.f32 %v2022, %v2716
        %v3097 = vmax.f32 %v2031, %v2718
        %v3098 = vmax.f32 %v2039, %v2720
        %v3099 = vmax.f32 %v2038, %v2722
        %v3100 = vmax.f32 %v2040, %v2724
        %v3101 = vmax.f32 %v2049, %v2726
        %v3102 = vmax.f32 %v2057, %v2728
        %v3103 = vmax.f32 %v2056, %v2730
        %v3104 = vmax.f32 %v2058, %v2732
        %v3105 = vmax.f32 %v2067, %v2734
        %v3106 = vmax.f32 %v2075, %v2736
        %v3107 = vmax.f32 %v2074, %v2738
        %v3108 = vmax.f32 %v2076, %v2740
        %v3109 = vmax.f32 %v2085, %v2742
        %v3110 = vmax.f32 %v2093, %v2744
        %v3111 = vmax.f32 %v2092, %v2746
        %v3112 = vmax.f32 %v2094, %v2748
        %v3113 = vmax.f32 %v2103, %v2750
        %v3114 = vmax.f32 %v2111, %v2752
        %v3115 = vmax.f32 %v2110, %v2754
        %v3116 = vmax.f32 %v2112, %v2756
        %v3117 = vmax.f32 %v2121, %v2758
        %v3118 = vmax.f32 %v2129, %v2760
        %v3119 = vmax.f32 %v2128, %v2762
        %v3120 = vmax.f32 %v2130, %v2764
        %v3121 = vmax.f32 %v2139, %v2766
        %v3122 = vmax.f32 %v2147, %v2768
        %v3123 = vmax.f32 %v2146, %v2770
        %v3124 = vmax.f32 %v2148, %v2772
        %v3125 = vmax.f32 %v2157, %v2774
        %v3126 = vmax.f32 %v2165, %v2776
        %v3127 = vmax.f32 %v2164, %v2778
        %v3128 = vmax.f32 %v2166, %v2780
        %v3129 = vmax.f32 %v2175, %v2782
        %v3130 = vmax.f32 %v2183, %v2784
        %v3131 = vmax.f32 %v2182, %v2786
        %v3132 = vmax.f32 %v2184, %v2788
        %v3133 = vmax.f32 %v2193, %v2790
        %v3134 = vmax.f32 %v2201, %v2792
        %v3135 = vmax.f32 %v2200, %v2794
        %v3136 = vmax.f32 %v2202, %v2796
        %v3137 = vmax.f32 %v2211, %v2798
        %v3138 = vmax.f32 %v2219, %v2800
        %v3139 = vmax.f32 %v2218, %v2802
        %v3140 = vmax.f32 %v2220, %v2804
        %v3141 = vmax.f32 %v2229, %v2806
        %v3142 = vmax.f32 %v2237, %v2808
        %v3143 = vmax.f32 %v2236, %v2810
        %v3144 = vmax.f32 %v2238, %v2812
        %v3145 = vmax.f32 %v2247, %v2814
        %v3146 = vmax.f32 %v2255, %v2816
        %v3147 = vmax.f32 %v2254, %v2818
        %v3148 = vmax.f32 %v2256, %v2820
        %v3149 = vmax.f32 %v2265, %v2822
        %v3150 = vmax.f32 %v2273, %v2824
        %v3151 = vmax.f32 %v2272, %v2826
        %v3152 = vmax.f32 %v2274, %v2828
        %v3153 = vmax.f32 %v2283, %v2830
        %v3154 = vmax.f32 %v2291, %v2832
        %v3155 = vmax.f32 %v2290, %v2834
        %v3156 = vmax.f32 %v2292, %v2836
        %v3157 = vmax.f32 %v2301, %v2838
        %v3158 = vmax.f32 %v2309, %v2840
        %v3159 = vmax.f32 %v2308, %v2842
        %v3160 = vmax.f32 %v2310, %v2844
        %v3161 = vmax.f32 %v2319, %v2846
        %v3162 = vmax.f32 %v2327, %v2848
        %v3163 = vmax.f32 %v2326, %v2850
        %v3164 = vmax.f32 %v2328, %v2852
        %v3165 = vmax.f32 %v2337, %v2854
        %v3166 = vmax.f32 %v2345, %v2856
        %v3167 = vmax.f32 %v2344, %v2858
        %v3168 = vmax.f32 %v2346, %v2860
        %v3169 = vmax.f32 %v2355, %v2862
        %v3170 = vmax.f32 %v2363, %v2864
        %v3171 = vmax.f32 %v2362, %v2866
        %v3172 = vmax.f32 %v2364, %v2868
        %v3173 = vmax.f32 %v2373, %v2870
        %v3174 = vmax.f32 %v2381, %v2872
        %v3175 = vmax.f32 %v2380, %v2874
        %v3176 = vmax.f32 %v2382, %v2876
        %v3177 = vmax.f32 %v2391, %v2878
        %v3178 = vmax.f32 %v2399, %v2880
        %v3179 = vmax.f32 %v2398, %v2882
        %v3180 = vmax.f32 %v2400, %v2884
        %v3181 = vmax.f32 %v2409, %v2886
        %v3182 = vmax.f32 %v2417, %v2888
        %v3183 = vmax.f32 %v2416, %v2890
        %v3184 = vmax.f32 %v2418, %v2892
        %v3185 = vmax.f32 %v2427, %v2894
        %v3186 = vmax.f32 %v2435, %v2896
        %v3187 = vmax.f32 %v2434, %v2898
        %v3188 = vmax.f32 %v2436, %v2900
        %v3189 = vmax.f32 %v2445, %v2902
        %v3190 = vmax.f32 %v2453, %v2904
        %v3191 = vmax.f32 %v2452, %v2906
        %v3192 = vmax.f32 %v2454, %v2908
        %v3193 = vmax.f32 %v2463, %v2910
        %v3194 = vmax.f32 %v2471, %v2912
        %v3195 = vmax.f32 %v2470, %v2914
        %v3196 = vmax.f32 %v2472, %v2916
        %v3197 = vmax.f32 %v2481, %v2918
        %v3198 = vmax.f32 %v2489, %v2920
        %v3199 = vmax.f32 %v2488, %v2922
        %v3200 = vmax.f32 %v2490, %v2924
        %v3201 = vmax.f32 %v2499, %v2926
        %v3202 = vmax.f32 %v2507, %v2928
        %v3203 = vmax.f32 %v2506, %v2930
        %v3204 = vmax.f32 %v2508, %v2932
        %v3205 = vmax.f32 %v2517, %v2934
        %v3206 = vmax.f32 %v2525, %v2936
        %v3207 = vmax.f32 %v2524, %v2938
        %v3208 = vmax.f32 %v2526, %v2940
        %v3209 = vmax.f32 %v2535, %v2942
        %v3210 = vmax.f32 %v2543, %v2944
        %v3211 = vmax.f32 %v2542, %v2946
        %v3212 = vmax.f32 %v2544, %v2948
        %v3213 = vmax.f32 %v2553, %v2950
        %v3214 = vmax.f32 %v2561, %v2952
        %v3215 = vmax.f32 %v2560, %v2954
        %v3216 = vmax.f32 %v2562, %v2956
        %v3217 = vmax.f32 %v2571, %v2958
        %v3218 = vmax.f32 %v2579, %v2960
        %v3219 = vmax.f32 %v2578, %v2962
        %v3220 = vmax.f32 %v2580, %v2964
        %v3349 = vlaneseq
        %v3350 = vshrl.u32 %v3349, 7
        %v3351 = vsub.s32 0, %v3350
        %v3352 = vrot.slane %v3093, %v3351
        %v3353 = vlaneseq
        %v3354 = vshrl.u32 %v3353, 7
        %v3355 = vsub.s32 2, %v3354
        %v3356 = vrot.slane %v3093, %v3355
        %v3357 = vlaneseq
        %v3358 = vshrl.u32 %v3357, 7
        %v3359 = vsub.s32 0, %v3358
        %v3360 = vrot.slane %v3094, %v3359
        %v3361 = vlaneseq
        %v3362 = vshrl.u32 %v3361, 7
        %v3363 = vsub.s32 2, %v3362
        %v3364 = vrot.slane %v3094, %v3363
        %v3365 = vlaneseq
        %v3366 = vshrl.u32 %v3365, 7
        %v3367 = vsub.s32 0, %v3366
        %v3368 = vrot.slane %v3095, %v3367
        %v3369 = vlaneseq
        %v3370 = vshrl.u32 %v3369, 7
        %v3371 = vsub.s32 2, %v3370
        %v3372 = vrot.slane %v3095, %v3371
        %v3373 = vlaneseq
        %v3374 = vshrl.u32 %v3373, 7
        %v3375 = vsub.s32 0, %v3374
        %v3376 = vrot.slane %v3096, %v3375
        %v3377 = vlaneseq
        %v3378 = vshrl.u32 %v3377, 7
        %v3379 = vsub.s32 2, %v3378
        %v3380 = vrot.slane %v3096, %v3379
        %v3381 = vlaneseq
        %v3382 = vshrl.u32 %v3381, 7
        %v3383 = vsub.s32 0, %v3382
        %v3384 = vrot.slane %v3097, %v3383
        %v3385 = vlaneseq
        %v3386 = vshrl.u32 %v3385, 7
        %v3387 = vsub.s32 2, %v3386
        %v3388 = vrot.slane %v3097, %v3387
        %v3389 = vlaneseq
        %v3390 = vshrl.u32 %v3389, 7
        %v3391 = vsub.s32 0, %v3390
        %v3392 = vrot.slane %v3098, %v3391
        %v3393 = vlaneseq
        %v3394 = vshrl.u32 %v3393, 7
        %v3395 = vsub.s32 2, %v3394
        %v3396 = vrot.slane %v3098, %v3395
        %v3397 = vlaneseq
        %v3398 = vshrl.u32 %v3397, 7
        %v3399 = vsub.s32 0, %v3398
        %v3400 = vrot.slane %v3099, %v3399
        %v3401 = vlaneseq
        %v3402 = vshrl.u32 %v3401, 7
        %v3403 = vsub.s32 2, %v3402
        %v3404 = vrot.slane %v3099, %v3403
        %v3405 = vlaneseq
        %v3406 = vshrl.u32 %v3405, 7
        %v3407 = vsub.s32 0, %v3406
        %v3408 = vrot.slane %v3100, %v3407
        %v3409 = vlaneseq
        %v3410 = vshrl.u32 %v3409, 7
        %v3411 = vsub.s32 2, %v3410
        %v3412 = vrot.slane %v3100, %v3411
        %v3413 = vlaneseq
        %v3414 = vshrl.u32 %v3413, 7
        %v3415 = vsub.s32 0, %v3414
        %v3416 = vrot.slane %v3101, %v3415
        %v3417 = vlaneseq
        %v3418 = vshrl.u32 %v3417, 7
        %v3419 = vsub.s32 2, %v3418
        %v3420 = vrot.slane %v3101, %v3419
        %v3421 = vlaneseq
        %v3422 = vshrl.u32 %v3421, 7
        %v3423 = vsub.s32 0, %v3422
        %v3424 = vrot.slane %v3102, %v3423
        %v3425 = vlaneseq
        %v3426 = vshrl.u32 %v3425, 7
        %v3427 = vsub.s32 2, %v3426
        %v3428 = vrot.slane %v3102, %v3427
        %v3429 = vlaneseq
        %v3430 = vshrl.u32 %v3429, 7
        %v3431 = vsub.s32 0, %v3430
        %v3432 = vrot.slane %v3103, %v3431
        %v3433 = vlaneseq
        %v3434 = vshrl.u32 %v3433, 7
        %v3435 = vsub.s32 2, %v3434
        %v3436 = vrot.slane %v3103, %v3435
        %v3437 = vlaneseq
        %v3438 = vshrl.u32 %v3437, 7
        %v3439 = vsub.s32 0, %v3438
        %v3440 = vrot.slane %v3104, %v3439
        %v3441 = vlaneseq
        %v3442 = vshrl.u32 %v3441, 7
        %v3443 = vsub.s32 2, %v3442
        %v3444 = vrot.slane %v3104, %v3443
        %v3445 = vlaneseq
        %v3446 = vshrl.u32 %v3445, 7
        %v3447 = vsub.s32 0, %v3446
        %v3448 = vrot.slane %v3105, %v3447
        %v3449 = vlaneseq
        %v3450 = vshrl.u32 %v3449, 7
        %v3451 = vsub.s32 2, %v3450
        %v3452 = vrot.slane %v3105, %v3451
        %v3453 = vlaneseq
        %v3454 = vshrl.u32 %v3453, 7
        %v3455 = vsub.s32 0, %v3454
        %v3456 = vrot.slane %v3106, %v3455
        %v3457 = vlaneseq
        %v3458 = vshrl.u32 %v3457, 7
        %v3459 = vsub.s32 2, %v3458
        %v3460 = vrot.slane %v3106, %v3459
        %v3461 = vlaneseq
        %v3462 = vshrl.u32 %v3461, 7
        %v3463 = vsub.s32 0, %v3462
        %v3464 = vrot.slane %v3107, %v3463
        %v3465 = vlaneseq
        %v3466 = vshrl.u32 %v3465, 7
        %v3467 = vsub.s32 2, %v3466
        %v3468 = vrot.slane %v3107, %v3467
        %v3469 = vlaneseq
        %v3470 = vshrl.u32 %v3469, 7
        %v3471 = vsub.s32 0, %v3470
        %v3472 = vrot.slane %v3108, %v3471
        %v3473 = vlaneseq
        %v3474 = vshrl.u32 %v3473, 7
        %v3475 = vsub.s32 2, %v3474
        %v3476 = vrot.slane %v3108, %v3475
        %v3477 = vlaneseq
        %v3478 = vshrl.u32 %v3477, 7
        %v3479 = vsub.s32 0, %v3478
        %v3480 = vrot.slane %v3109, %v3479
        %v3481 = vlaneseq
        %v3482 = vshrl.u32 %v3481, 7
        %v3483 = vsub.s32 2, %v3482
        %v3484 = vrot.slane %v3109, %v3483
        %v3485 = vlaneseq
        %v3486 = vshrl.u32 %v3485, 7
        %v3487 = vsub.s32 0, %v3486
        %v3488 = vrot.slane %v3110, %v3487
        %v3489 = vlaneseq
        %v3490 = vshrl.u32 %v3489, 7
        %v3491 = vsub.s32 2, %v3490
        %v3492 = vrot.slane %v3110, %v3491
        %v3493 = vlaneseq
        %v3494 = vshrl.u32 %v3493, 7
        %v3495 = vsub.s32 0, %v3494
        %v3496 = vrot.slane %v3111, %v3495
        %v3497 = vlaneseq
        %v3498 = vshrl.u32 %v3497, 7
        %v3499 = vsub.s32 2, %v3498
        %v3500 = vrot.slane %v3111, %v3499
        %v3501 = vlaneseq
        %v3502 = vshrl.u32 %v3501, 7
        %v3503 = vsub.s32 0, %v3502
        %v3504 = vrot.slane %v3112, %v3503
        %v3505 = vlaneseq
        %v3506 = vshrl.u32 %v3505, 7
        %v3507 = vsub.s32 2, %v3506
        %v3508 = vrot.slane %v3112, %v3507
        %v3509 = vlaneseq
        %v3510 = vshrl.u32 %v3509, 7
        %v3511 = vsub.s32 0, %v3510
        %v3512 = vrot.slane %v3113, %v3511
        %v3513 = vlaneseq
        %v3514 = vshrl.u32 %v3513, 7
        %v3515 = vsub.s32 2, %v3514
        %v3516 = vrot.slane %v3113, %v3515
        %v3517 = vlaneseq
        %v3518 = vshrl.u32 %v3517, 7
        %v3519 = vsub.s32 0, %v3518
        %v3520 = vrot.slane %v3114, %v3519
        %v3521 = vlaneseq
        %v3522 = vshrl.u32 %v3521, 7
        %v3523 = vsub.s32 2, %v3522
        %v3524 = vrot.slane %v3114, %v3523
        %v3525 = vlaneseq
        %v3526 = vshrl.u32 %v3525, 7
        %v3527 = vsub.s32 0, %v3526
        %v3528 = vrot.slane %v3115, %v3527
        %v3529 = vlaneseq
        %v3530 = vshrl.u32 %v3529, 7
        %v3531 = vsub.s32 2, %v3530
        %v3532 = vrot.slane %v3115, %v3531
        %v3533 = vlaneseq
        %v3534 = vshrl.u32 %v3533, 7
        %v3535 = vsub.s32 0, %v3534
        %v3536 = vrot.slane %v3116, %v3535
        %v3537 = vlaneseq
        %v3538 = vshrl.u32 %v3537, 7
        %v3539 = vsub.s32 2, %v3538
        %v3540 = vrot.slane %v3116, %v3539
        %v3541 = vlaneseq
        %v3542 = vshrl.u32 %v3541, 7
        %v3543 = vsub.s32 0, %v3542
        %v3544 = vrot.slane %v3117, %v3543
        %v3545 = vlaneseq
        %v3546 = vshrl.u32 %v3545, 7
        %v3547 = vsub.s32 2, %v3546
        %v3548 = vrot.slane %v3117, %v3547
        %v3549 = vlaneseq
        %v3550 = vshrl.u32 %v3549, 7
        %v3551 = vsub.s32 0, %v3550
        %v3552 = vrot.slane %v3118, %v3551
        %v3553 = vlaneseq
        %v3554 = vshrl.u32 %v3553, 7
        %v3555 = vsub.s32 2, %v3554
        %v3556 = vrot.slane %v3118, %v3555
        %v3557 = vlaneseq
        %v3558 = vshrl.u32 %v3557, 7
        %v3559 = vsub.s32 0, %v3558
        %v3560 = vrot.slane %v3119, %v3559
        %v3561 = vlaneseq
        %v3562 = vshrl.u32 %v3561, 7
        %v3563 = vsub.s32 2, %v3562
        %v3564 = vrot.slane %v3119, %v3563
        %v3565 = vlaneseq
        %v3566 = vshrl.u32 %v3565, 7
        %v3567 = vsub.s32 0, %v3566
        %v3568 = vrot.slane %v3120, %v3567
        %v3569 = vlaneseq
        %v3570 = vshrl.u32 %v3569, 7
        %v3571 = vsub.s32 2, %v3570
        %v3572 = vrot.slane %v3120, %v3571
        %v3573 = vlaneseq
        %v3574 = vshrl.u32 %v3573, 7
        %v3575 = vsub.s32 0, %v3574
        %v3576 = vrot.slane %v3121, %v3575
        %v3577 = vlaneseq
        %v3578 = vshrl.u32 %v3577, 7
        %v3579 = vsub.s32 2, %v3578
        %v3580 = vrot.slane %v3121, %v3579
        %v3581 = vlaneseq
        %v3582 = vshrl.u32 %v3581, 7
        %v3583 = vsub.s32 0, %v3582
        %v3584 = vrot.slane %v3122, %v3583
        %v3585 = vlaneseq
        %v3586 = vshrl.u32 %v3585, 7
        %v3587 = vsub.s32 2, %v3586
        %v3588 = vrot.slane %v3122, %v3587
        %v3589 = vlaneseq
        %v3590 = vshrl.u32 %v3589, 7
        %v3591 = vsub.s32 0, %v3590
        %v3592 = vrot.slane %v3123, %v3591
        %v3593 = vlaneseq
        %v3594 = vshrl.u32 %v3593, 7
        %v3595 = vsub.s32 2, %v3594
        %v3596 = vrot.slane %v3123, %v3595
        %v3597 = vlaneseq
        %v3598 = vshrl.u32 %v3597, 7
        %v3599 = vsub.s32 0, %v3598
        %v3600 = vrot.slane %v3124, %v3599
        %v3601 = vlaneseq
        %v3602 = vshrl.u32 %v3601, 7
        %v3603 = vsub.s32 2, %v3602
        %v3604 = vrot.slane %v3124, %v3603
        %v3605 = vlaneseq
        %v3606 = vshrl.u32 %v3605, 7
        %v3607 = vsub.s32 0, %v3606
        %v3608 = vrot.slane %v3125, %v3607
        %v3609 = vlaneseq
        %v3610 = vshrl.u32 %v3609, 7
        %v3611 = vsub.s32 2, %v3610
        %v3612 = vrot.slane %v3125, %v3611
        %v3613 = vlaneseq
        %v3614 = vshrl.u32 %v3613, 7
        %v3615 = vsub.s32 0, %v3614
        %v3616 = vrot.slane %v3126, %v3615
        %v3617 = vlaneseq
        %v3618 = vshrl.u32 %v3617, 7
        %v3619 = vsub.s32 2, %v3618
        %v3620 = vrot.slane %v3126, %v3619
        %v3621 = vlaneseq
        %v3622 = vshrl.u32 %v3621, 7
        %v3623 = vsub.s32 0, %v3622
        %v3624 = vrot.slane %v3127, %v3623
        %v3625 = vlaneseq
        %v3626 = vshrl.u32 %v3625, 7
        %v3627 = vsub.s32 2, %v3626
        %v3628 = vrot.slane %v3127, %v3627
        %v3629 = vlaneseq
        %v3630 = vshrl.u32 %v3629, 7
        %v3631 = vsub.s32 0, %v3630
        %v3632 = vrot.slane %v3128, %v3631
        %v3633 = vlaneseq
        %v3634 = vshrl.u32 %v3633, 7
        %v3635 = vsub.s32 2, %v3634
        %v3636 = vrot.slane %v3128, %v3635
        %v3637 = vlaneseq
        %v3638 = vshrl.u32 %v3637, 7
        %v3639 = vsub.s32 0, %v3638
        %v3640 = vrot.slane %v3129, %v3639
        %v3641 = vlaneseq
        %v3642 = vshrl.u32 %v3641, 7
        %v3643 = vsub.s32 2, %v3642
        %v3644 = vrot.slane %v3129, %v3643
        %v3645 = vlaneseq
        %v3646 = vshrl.u32 %v3645, 7
        %v3647 = vsub.s32 0, %v3646
        %v3648 = vrot.slane %v3130, %v3647
        %v3649 = vlaneseq
        %v3650 = vshrl.u32 %v3649, 7
        %v3651 = vsub.s32 2, %v3650
        %v3652 = vrot.slane %v3130, %v3651
        %v3653 = vlaneseq
        %v3654 = vshrl.u32 %v3653, 7
        %v3655 = vsub.s32 0, %v3654
        %v3656 = vrot.slane %v3131, %v3655
        %v3657 = vlaneseq
        %v3658 = vshrl.u32 %v3657, 7
        %v3659 = vsub.s32 2, %v3658
        %v3660 = vrot.slane %v3131, %v3659
        %v3661 = vlaneseq
        %v3662 = vshrl.u32 %v3661, 7
        %v3663 = vsub.s32 0, %v3662
        %v3664 = vrot.slane %v3132, %v3663
        %v3665 = vlaneseq
        %v3666 = vshrl.u32 %v3665, 7
        %v3667 = vsub.s32 2, %v3666
        %v3668 = vrot.slane %v3132, %v3667
        %v3669 = vlaneseq
        %v3670 = vshrl.u32 %v3669, 7
        %v3671 = vsub.s32 0, %v3670
        %v3672 = vrot.slane %v3133, %v3671
        %v3673 = vlaneseq
        %v3674 = vshrl.u32 %v3673, 7
        %v3675 = vsub.s32 2, %v3674
        %v3676 = vrot.slane %v3133, %v3675
        %v3677 = vlaneseq
        %v3678 = vshrl.u32 %v3677, 7
        %v3679 = vsub.s32 0, %v3678
        %v3680 = vrot.slane %v3134, %v3679
        %v3681 = vlaneseq
        %v3682 = vshrl.u32 %v3681, 7
        %v3683 = vsub.s32 2, %v3682
        %v3684 = vrot.slane %v3134, %v3683
        %v3685 = vlaneseq
        %v3686 = vshrl.u32 %v3685, 7
        %v3687 = vsub.s32 0, %v3686
        %v3688 = vrot.slane %v3135, %v3687
        %v3689 = vlaneseq
        %v3690 = vshrl.u32 %v3689, 7
        %v3691 = vsub.s32 2, %v3690
        %v3692 = vrot.slane %v3135, %v3691
        %v3693 = vlaneseq
        %v3694 = vshrl.u32 %v3693, 7
        %v3695 = vsub.s32 0, %v3694
        %v3696 = vrot.slane %v3136, %v3695
        %v3697 = vlaneseq
        %v3698 = vshrl.u32 %v3697, 7
        %v3699 = vsub.s32 2, %v3698
        %v3700 = vrot.slane %v3136, %v3699
        %v3701 = vlaneseq
        %v3702 = vshrl.u32 %v3701, 7
        %v3703 = vsub.s32 0, %v3702
        %v3704 = vrot.slane %v3137, %v3703
        %v3705 = vlaneseq
        %v3706 = vshrl.u32 %v3705, 7
        %v3707 = vsub.s32 2, %v3706
        %v3708 = vrot.slane %v3137, %v3707
        %v3709 = vlaneseq
        %v3710 = vshrl.u32 %v3709, 7
        %v3711 = vsub.s32 0, %v3710
        %v3712 = vrot.slane %v3138, %v3711
        %v3713 = vlaneseq
        %v3714 = vshrl.u32 %v3713, 7
        %v3715 = vsub.s32 2, %v3714
        %v3716 = vrot.slane %v3138, %v3715
        %v3717 = vlaneseq
        %v3718 = vshrl.u32 %v3717, 7
        %v3719 = vsub.s32 0, %v3718
        %v3720 = vrot.slane %v3139, %v3719
        %v3721 = vlaneseq
        %v3722 = vshrl.u32 %v3721, 7
        %v3723 = vsub.s32 2, %v3722
        %v3724 = vrot.slane %v3139, %v3723
        %v3725 = vlaneseq
        %v3726 = vshrl.u32 %v3725, 7
        %v3727 = vsub.s32 0, %v3726
        %v3728 = vrot.slane %v3140, %v3727
        %v3729 = vlaneseq
        %v3730 = vshrl.u32 %v3729, 7
        %v3731 = vsub.s32 2, %v3730
        %v3732 = vrot.slane %v3140, %v3731
        %v3733 = vlaneseq
        %v3734 = vshrl.u32 %v3733, 7
        %v3735 = vsub.s32 0, %v3734
        %v3736 = vrot.slane %v3141, %v3735
        %v3737 = vlaneseq
        %v3738 = vshrl.u32 %v3737, 7
        %v3739 = vsub.s32 2, %v3738
        %v3740 = vrot.slane %v3141, %v3739
        %v3741 = vlaneseq
        %v3742 = vshrl.u32 %v3741, 7
        %v3743 = vsub.s32 0, %v3742
        %v3744 = vrot.slane %v3142, %v3743
        %v3745 = vlaneseq
        %v3746 = vshrl.u32 %v3745, 7
        %v3747 = vsub.s32 2, %v3746
        %v3748 = vrot.slane %v3142, %v3747
        %v3749 = vlaneseq
        %v3750 = vshrl.u32 %v3749, 7
        %v3751 = vsub.s32 0, %v3750
        %v3752 = vrot.slane %v3143, %v3751
        %v3753 = vlaneseq
        %v3754 = vshrl.u32 %v3753, 7
        %v3755 = vsub.s32 2, %v3754
        %v3756 = vrot.slane %v3143, %v3755
        %v3757 = vlaneseq
        %v3758 = vshrl.u32 %v3757, 7
        %v3759 = vsub.s32 0, %v3758
        %v3760 = vrot.slane %v3144, %v3759
        %v3761 = vlaneseq
        %v3762 = vshrl.u32 %v3761, 7
        %v3763 = vsub.s32 2, %v3762
        %v3764 = vrot.slane %v3144, %v3763
        %v3765 = vlaneseq
        %v3766 = vshrl.u32 %v3765, 7
        %v3767 = vsub.s32 0, %v3766
        %v3768 = vrot.slane %v3145, %v3767
        %v3769 = vlaneseq
        %v3770 = vshrl.u32 %v3769, 7
        %v3771 = vsub.s32 2, %v3770
        %v3772 = vrot.slane %v3145, %v3771
        %v3773 = vlaneseq
        %v3774 = vshrl.u32 %v3773, 7
        %v3775 = vsub.s32 0, %v3774
        %v3776 = vrot.slane %v3146, %v3775
        %v3777 = vlaneseq
        %v3778 = vshrl.u32 %v3777, 7
        %v3779 = vsub.s32 2, %v3778
        %v3780 = vrot.slane %v3146, %v3779
        %v3781 = vlaneseq
        %v3782 = vshrl.u32 %v3781, 7
        %v3783 = vsub.s32 0, %v3782
        %v3784 = vrot.slane %v3147, %v3783
        %v3785 = vlaneseq
        %v3786 = vshrl.u32 %v3785, 7
        %v3787 = vsub.s32 2, %v3786
        %v3788 = vrot.slane %v3147, %v3787
        %v3789 = vlaneseq
        %v3790 = vshrl.u32 %v3789, 7
        %v3791 = vsub.s32 0, %v3790
        %v3792 = vrot.slane %v3148, %v3791
        %v3793 = vlaneseq
        %v3794 = vshrl.u32 %v3793, 7
        %v3795 = vsub.s32 2, %v3794
        %v3796 = vrot.slane %v3148, %v3795
        %v3797 = vlaneseq
        %v3798 = vshrl.u32 %v3797, 7
        %v3799 = vsub.s32 0, %v3798
        %v3800 = vrot.slane %v3149, %v3799
        %v3801 = vlaneseq
        %v3802 = vshrl.u32 %v3801, 7
        %v3803 = vsub.s32 2, %v3802
        %v3804 = vrot.slane %v3149, %v3803
        %v3805 = vlaneseq
        %v3806 = vshrl.u32 %v3805, 7
        %v3807 = vsub.s32 0, %v3806
        %v3808 = vrot.slane %v3150, %v3807
        %v3809 = vlaneseq
        %v3810 = vshrl.u32 %v3809, 7
        %v3811 = vsub.s32 2, %v3810
        %v3812 = vrot.slane %v3150, %v3811
        %v3813 = vlaneseq
        %v3814 = vshrl.u32 %v3813, 7
        %v3815 = vsub.s32 0, %v3814
        %v3816 = vrot.slane %v3151, %v3815
        %v3817 = vlaneseq
        %v3818 = vshrl.u32 %v3817, 7
        %v3819 = vsub.s32 2, %v3818
        %v3820 = vrot.slane %v3151, %v3819
        %v3821 = vlaneseq
        %v3822 = vshrl.u32 %v3821, 7
        %v3823 = vsub.s32 0, %v3822
        %v3824 = vrot.slane %v3152, %v3823
        %v3825 = vlaneseq
        %v3826 = vshrl.u32 %v3825, 7
        %v3827 = vsub.s32 2, %v3826
        %v3828 = vrot.slane %v3152, %v3827
        %v3829 = vlaneseq
        %v3830 = vshrl.u32 %v3829, 7
        %v3831 = vsub.s32 0, %v3830
        %v3832 = vrot.slane %v3153, %v3831
        %v3833 = vlaneseq
        %v3834 = vshrl.u32 %v3833, 7
        %v3835 = vsub.s32 2, %v3834
        %v3836 = vrot.slane %v3153, %v3835
        %v3837 = vlaneseq
        %v3838 = vshrl.u32 %v3837, 7
        %v3839 = vsub.s32 0, %v3838
        %v3840 = vrot.slane %v3154, %v3839
        %v3841 = vlaneseq
        %v3842 = vshrl.u32 %v3841, 7
        %v3843 = vsub.s32 2, %v3842
        %v3844 = vrot.slane %v3154, %v3843
        %v3845 = vlaneseq
        %v3846 = vshrl.u32 %v3845, 7
        %v3847 = vsub.s32 0, %v3846
        %v3848 = vrot.slane %v3155, %v3847
        %v3849 = vlaneseq
        %v3850 = vshrl.u32 %v3849, 7
        %v3851 = vsub.s32 2, %v3850
        %v3852 = vrot.slane %v3155, %v3851
        %v3853 = vlaneseq
        %v3854 = vshrl.u32 %v3853, 7
        %v3855 = vsub.s32 0, %v3854
        %v3856 = vrot.slane %v3156, %v3855
        %v3857 = vlaneseq
        %v3858 = vshrl.u32 %v3857, 7
        %v3859 = vsub.s32 2, %v3858
        %v3860 = vrot.slane %v3156, %v3859
        %v3861 = vlaneseq
        %v3862 = vshrl.u32 %v3861, 7
        %v3863 = vsub.s32 0, %v3862
        %v3864 = vrot.slane %v3157, %v3863
        %v3865 = vlaneseq
        %v3866 = vshrl.u32 %v3865, 7
        %v3867 = vsub.s32 2, %v3866
        %v3868 = vrot.slane %v3157, %v3867
        %v3869 = vlaneseq
        %v3870 = vshrl.u32 %v3869, 7
        %v3871 = vsub.s32 0, %v3870
        %v3872 = vrot.slane %v3158, %v3871
        %v3873 = vlaneseq
        %v3874 = vshrl.u32 %v3873, 7
        %v3875 = vsub.s32 2, %v3874
        %v3876 = vrot.slane %v3158, %v3875
        %v3877 = vlaneseq
        %v3878 = vshrl.u32 %v3877, 7
        %v3879 = vsub.s32 0, %v3878
        %v3880 = vrot.slane %v3159, %v3879
        %v3881 = vlaneseq
        %v3882 = vshrl.u32 %v3881, 7
        %v3883 = vsub.s32 2, %v3882
        %v3884 = vrot.slane %v3159, %v3883
        %v3885 = vlaneseq
        %v3886 = vshrl.u32 %v3885, 7
        %v3887 = vsub.s32 0, %v3886
        %v3888 = vrot.slane %v3160, %v3887
        %v3889 = vlaneseq
        %v3890 = vshrl.u32 %v3889, 7
        %v3891 = vsub.s32 2, %v3890
        %v3892 = vrot.slane %v3160, %v3891
        %v3893 = vlaneseq
        %v3894 = vshrl.u32 %v3893, 7
        %v3895 = vsub.s32 0, %v3894
        %v3896 = vrot.slane %v3161, %v3895
        %v3897 = vlaneseq
        %v3898 = vshrl.u32 %v3897, 7
        %v3899 = vsub.s32 2, %v3898
        %v3900 = vrot.slane %v3161, %v3899
        %v3901 = vlaneseq
        %v3902 = vshrl.u32 %v3901, 7
        %v3903 = vsub.s32 0, %v3902
        %v3904 = vrot.slane %v3162, %v3903
        %v3905 = vlaneseq
        %v3906 = vshrl.u32 %v3905, 7
        %v3907 = vsub.s32 2, %v3906
        %v3908 = vrot.slane %v3162, %v3907
        %v3909 = vlaneseq
        %v3910 = vshrl.u32 %v3909, 7
        %v3911 = vsub.s32 0, %v3910
        %v3912 = vrot.slane %v3163, %v3911
        %v3913 = vlaneseq
        %v3914 = vshrl.u32 %v3913, 7
        %v3915 = vsub.s32 2, %v3914
        %v3916 = vrot.slane %v3163, %v3915
        %v3917 = vlaneseq
        %v3918 = vshrl.u32 %v3917, 7
        %v3919 = vsub.s32 0, %v3918
        %v3920 = vrot.slane %v3164, %v3919
        %v3921 = vlaneseq
        %v3922 = vshrl.u32 %v3921, 7
        %v3923 = vsub.s32 2, %v3922
        %v3924 = vrot.slane %v3164, %v3923
        %v3925 = vlaneseq
        %v3926 = vshrl.u32 %v3925, 7
        %v3927 = vsub.s32 0, %v3926
        %v3928 = vrot.slane %v3165, %v3927
        %v3929 = vlaneseq
        %v3930 = vshrl.u32 %v3929, 7
        %v3931 = vsub.s32 2, %v3930
        %v3932 = vrot.slane %v3165, %v3931
        %v3933 = vlaneseq
        %v3934 = vshrl.u32 %v3933, 7
        %v3935 = vsub.s32 0, %v3934
        %v3936 = vrot.slane %v3166, %v3935
        %v3937 = vlaneseq
        %v3938 = vshrl.u32 %v3937, 7
        %v3939 = vsub.s32 2, %v3938
        %v3940 = vrot.slane %v3166, %v3939
        %v3941 = vlaneseq
        %v3942 = vshrl.u32 %v3941, 7
        %v3943 = vsub.s32 0, %v3942
        %v3944 = vrot.slane %v3167, %v3943
        %v3945 = vlaneseq
        %v3946 = vshrl.u32 %v3945, 7
        %v3947 = vsub.s32 2, %v3946
        %v3948 = vrot.slane %v3167, %v3947
        %v3949 = vlaneseq
        %v3950 = vshrl.u32 %v3949, 7
        %v3951 = vsub.s32 0, %v3950
        %v3952 = vrot.slane %v3168, %v3951
        %v3953 = vlaneseq
        %v3954 = vshrl.u32 %v3953, 7
        %v3955 = vsub.s32 2, %v3954
        %v3956 = vrot.slane %v3168, %v3955
        %v3957 = vlaneseq
        %v3958 = vshrl.u32 %v3957, 7
        %v3959 = vsub.s32 0, %v3958
        %v3960 = vrot.slane %v3169, %v3959
        %v3961 = vlaneseq
        %v3962 = vshrl.u32 %v3961, 7
        %v3963 = vsub.s32 2, %v3962
        %v3964 = vrot.slane %v3169, %v3963
        %v3965 = vlaneseq
        %v3966 = vshrl.u32 %v3965, 7
        %v3967 = vsub.s32 0, %v3966
        %v3968 = vrot.slane %v3170, %v3967
        %v3969 = vlaneseq
        %v3970 = vshrl.u32 %v3969, 7
        %v3971 = vsub.s32 2, %v3970
        %v3972 = vrot.slane %v3170, %v3971
        %v3973 = vlaneseq
        %v3974 = vshrl.u32 %v3973, 7
        %v3975 = vsub.s32 0, %v3974
        %v3976 = vrot.slane %v3171, %v3975
        %v3977 = vlaneseq
        %v3978 = vshrl.u32 %v3977, 7
        %v3979 = vsub.s32 2, %v3978
        %v3980 = vrot.slane %v3171, %v3979
        %v3981 = vlaneseq
        %v3982 = vshrl.u32 %v3981, 7
        %v3983 = vsub.s32 0, %v3982
        %v3984 = vrot.slane %v3172, %v3983
        %v3985 = vlaneseq
        %v3986 = vshrl.u32 %v3985, 7
        %v3987 = vsub.s32 2, %v3986
        %v3988 = vrot.slane %v3172, %v3987
        %v3989 = vlaneseq
        %v3990 = vshrl.u32 %v3989, 7
        %v3991 = vsub.s32 0, %v3990
        %v3992 = vrot.slane %v3173, %v3991
        %v3993 = vlaneseq
        %v3994 = vshrl.u32 %v3993, 7
        %v3995 = vsub.s32 2, %v3994
        %v3996 = vrot.slane %v3173, %v3995
        %v3997 = vlaneseq
        %v3998 = vshrl.u32 %v3997, 7
        %v3999 = vsub.s32 0, %v3998
        %v4000 = vrot.slane %v3174, %v3999
        %v4001 = vlaneseq
        %v4002 = vshrl.u32 %v4001, 7
        %v4003 = vsub.s32 2, %v4002
        %v4004 = vrot.slane %v3174, %v4003
        %v4005 = vlaneseq
        %v4006 = vshrl.u32 %v4005, 7
        %v4007 = vsub.s32 0, %v4006
        %v4008 = vrot.slane %v3175, %v4007
        %v4009 = vlaneseq
        %v4010 = vshrl.u32 %v4009, 7
        %v4011 = vsub.s32 2, %v4010
        %v4012 = vrot.slane %v3175, %v4011
        %v4013 = vlaneseq
        %v4014 = vshrl.u32 %v4013, 7
        %v4015 = vsub.s32 0, %v4014
        %v4016 = vrot.slane %v3176, %v4015
        %v4017 = vlaneseq
        %v4018 = vshrl.u32 %v4017, 7
        %v4019 = vsub.s32 2, %v4018
        %v4020 = vrot.slane %v3176, %v4019
        %v4021 = vlaneseq
        %v4022 = vshrl.u32 %v4021, 7
        %v4023 = vsub.s32 0, %v4022
        %v4024 = vrot.slane %v3177, %v4023
        %v4025 = vlaneseq
        %v4026 = vshrl.u32 %v4025, 7
        %v4027 = vsub.s32 2, %v4026
        %v4028 = vrot.slane %v3177, %v4027
        %v4029 = vlaneseq
        %v4030 = vshrl.u32 %v4029, 7
        %v4031 = vsub.s32 0, %v4030
        %v4032 = vrot.slane %v3178, %v4031
        %v4033 = vlaneseq
        %v4034 = vshrl.u32 %v4033, 7
        %v4035 = vsub.s32 2, %v4034
        %v4036 = vrot.slane %v3178, %v4035
        %v4037 = vlaneseq
        %v4038 = vshrl.u32 %v4037, 7
        %v4039 = vsub.s32 0, %v4038
        %v4040 = vrot.slane %v3179, %v4039
        %v4041 = vlaneseq
        %v4042 = vshrl.u32 %v4041, 7
        %v4043 = vsub.s32 2, %v4042
        %v4044 = vrot.slane %v3179, %v4043
        %v4045 = vlaneseq
        %v4046 = vshrl.u32 %v4045, 7
        %v4047 = vsub.s32 0, %v4046
        %v4048 = vrot.slane %v3180, %v4047
        %v4049 = vlaneseq
        %v4050 = vshrl.u32 %v4049, 7
        %v4051 = vsub.s32 2, %v4050
        %v4052 = vrot.slane %v3180, %v4051
        %v4053 = vlaneseq
        %v4054 = vshrl.u32 %v4053, 7
        %v4055 = vsub.s32 0, %v4054
        %v4056 = vrot.slane %v3181, %v4055
        %v4057 = vlaneseq
        %v4058 = vshrl.u32 %v4057, 7
        %v4059 = vsub.s32 2, %v4058
        %v4060 = vrot.slane %v3181, %v4059
        %v4061 = vlaneseq
        %v4062 = vshrl.u32 %v4061, 7
        %v4063 = vsub.s32 0, %v4062
        %v4064 = vrot.slane %v3182, %v4063
        %v4065 = vlaneseq
        %v4066 = vshrl.u32 %v4065, 7
        %v4067 = vsub.s32 2, %v4066
        %v4068 = vrot.slane %v3182, %v4067
        %v4069 = vlaneseq
        %v4070 = vshrl.u32 %v4069, 7
        %v4071 = vsub.s32 0, %v4070
        %v4072 = vrot.slane %v3183, %v4071
        %v4073 = vlaneseq
        %v4074 = vshrl.u32 %v4073, 7
        %v4075 = vsub.s32 2, %v4074
        %v4076 = vrot.slane %v3183, %v4075
        %v4077 = vlaneseq
        %v4078 = vshrl.u32 %v4077, 7
        %v4079 = vsub.s32 0, %v4078
        %v4080 = vrot.slane %v3184, %v4079
        %v4081 = vlaneseq
        %v4082 = vshrl.u32 %v4081, 7
        %v4083 = vsub.s32 2, %v4082
        %v4084 = vrot.slane %v3184, %v4083
        %v4085 = vlaneseq
        %v4086 = vshrl.u32 %v4085, 7
        %v4087 = vsub.s32 0, %v4086
        %v4088 = vrot.slane %v3185, %v4087
        %v4089 = vlaneseq
        %v4090 = vshrl.u32 %v4089, 7
        %v4091 = vsub.s32 2, %v4090
        %v4092 = vrot.slane %v3185, %v4091
        %v4093 = vlaneseq
        %v4094 = vshrl.u32 %v4093, 7
        %v4095 = vsub.s32 0, %v4094
        %v4096 = vrot.slane %v3186, %v4095
        %v4097 = vlaneseq
        %v4098 = vshrl.u32 %v4097, 7
        %v4099 = vsub.s32 2, %v4098
        %v4100 = vrot.slane %v3186, %v4099
        %v4101 = vlaneseq
        %v4102 = vshrl.u32 %v4101, 7
        %v4103 = vsub.s32 0, %v4102
        %v4104 = vrot.slane %v3187, %v4103
        %v4105 = vlaneseq
        %v4106 = vshrl.u32 %v4105, 7
        %v4107 = vsub.s32 2, %v4106
        %v4108 = vrot.slane %v3187, %v4107
        %v4109 = vlaneseq
        %v4110 = vshrl.u32 %v4109, 7
        %v4111 = vsub.s32 0, %v4110
        %v4112 = vrot.slane %v3188, %v4111
        %v4113 = vlaneseq
        %v4114 = vshrl.u32 %v4113, 7
        %v4115 = vsub.s32 2, %v4114
        %v4116 = vrot.slane %v3188, %v4115
        %v4117 = vlaneseq
        %v4118 = vshrl.u32 %v4117, 7
        %v4119 = vsub.s32 0, %v4118
        %v4120 = vrot.slane %v3189, %v4119
        %v4121 = vlaneseq
        %v4122 = vshrl.u32 %v4121, 7
        %v4123 = vsub.s32 2, %v4122
        %v4124 = vrot.slane %v3189, %v4123
        %v4125 = vlaneseq
        %v4126 = vshrl.u32 %v4125, 7
        %v4127 = vsub.s32 0, %v4126
        %v4128 = vrot.slane %v3190, %v4127
        %v4129 = vlaneseq
        %v4130 = vshrl.u32 %v4129, 7
        %v4131 = vsub.s32 2, %v4130
        %v4132 = vrot.slane %v3190, %v4131
        %v4133 = vlaneseq
        %v4134 = vshrl.u32 %v4133, 7
        %v4135 = vsub.s32 0, %v4134
        %v4136 = vrot.slane %v3191, %v4135
        %v4137 = vlaneseq
        %v4138 = vshrl.u32 %v4137, 7
        %v4139 = vsub.s32 2, %v4138
        %v4140 = vrot.slane %v3191, %v4139
        %v4141 = vlaneseq
        %v4142 = vshrl.u32 %v4141, 7
        %v4143 = vsub.s32 0, %v4142
        %v4144 = vrot.slane %v3192, %v4143
        %v4145 = vlaneseq
        %v4146 = vshrl.u32 %v4145, 7
        %v4147 = vsub.s32 2, %v4146
        %v4148 = vrot.slane %v3192, %v4147
        %v4149 = vlaneseq
        %v4150 = vshrl.u32 %v4149, 7
        %v4151 = vsub.s32 0, %v4150
        %v4152 = vrot.slane %v3193, %v4151
        %v4153 = vlaneseq
        %v4154 = vshrl.u32 %v4153, 7
        %v4155 = vsub.s32 2, %v4154
        %v4156 = vrot.slane %v3193, %v4155
        %v4157 = vlaneseq
        %v4158 = vshrl.u32 %v4157, 7
        %v4159 = vsub.s32 0, %v4158
        %v4160 = vrot.slane %v3194, %v4159
        %v4161 = vlaneseq
        %v4162 = vshrl.u32 %v4161, 7
        %v4163 = vsub.s32 2, %v4162
        %v4164 = vrot.slane %v3194, %v4163
        %v4165 = vlaneseq
        %v4166 = vshrl.u32 %v4165, 7
        %v4167 = vsub.s32 0, %v4166
        %v4168 = vrot.slane %v3195, %v4167
        %v4169 = vlaneseq
        %v4170 = vshrl.u32 %v4169, 7
        %v4171 = vsub.s32 2, %v4170
        %v4172 = vrot.slane %v3195, %v4171
        %v4173 = vlaneseq
        %v4174 = vshrl.u32 %v4173, 7
        %v4175 = vsub.s32 0, %v4174
        %v4176 = vrot.slane %v3196, %v4175
        %v4177 = vlaneseq
        %v4178 = vshrl.u32 %v4177, 7
        %v4179 = vsub.s32 2, %v4178
        %v4180 = vrot.slane %v3196, %v4179
        %v4181 = vlaneseq
        %v4182 = vshrl.u32 %v4181, 7
        %v4183 = vsub.s32 0, %v4182
        %v4184 = vrot.slane %v3197, %v4183
        %v4185 = vlaneseq
        %v4186 = vshrl.u32 %v4185, 7
        %v4187 = vsub.s32 2, %v4186
        %v4188 = vrot.slane %v3197, %v4187
        %v4189 = vlaneseq
        %v4190 = vshrl.u32 %v4189, 7
        %v4191 = vsub.s32 0, %v4190
        %v4192 = vrot.slane %v3198, %v4191
        %v4193 = vlaneseq
        %v4194 = vshrl.u32 %v4193, 7
        %v4195 = vsub.s32 2, %v4194
        %v4196 = vrot.slane %v3198, %v4195
        %v4197 = vlaneseq
        %v4198 = vshrl.u32 %v4197, 7
        %v4199 = vsub.s32 0, %v4198
        %v4200 = vrot.slane %v3199, %v4199
        %v4201 = vlaneseq
        %v4202 = vshrl.u32 %v4201, 7
        %v4203 = vsub.s32 2, %v4202
        %v4204 = vrot.slane %v3199, %v4203
        %v4205 = vlaneseq
        %v4206 = vshrl.u32 %v4205, 7
        %v4207 = vsub.s32 0, %v4206
        %v4208 = vrot.slane %v3200, %v4207
        %v4209 = vlaneseq
        %v4210 = vshrl.u32 %v4209, 7
        %v4211 = vsub.s32 2, %v4210
        %v4212 = vrot.slane %v3200, %v4211
        %v4213 = vlaneseq
        %v4214 = vshrl.u32 %v4213, 7
        %v4215 = vsub.s32 0, %v4214
        %v4216 = vrot.slane %v3201, %v4215
        %v4217 = vlaneseq
        %v4218 = vshrl.u32 %v4217, 7
        %v4219 = vsub.s32 2, %v4218
        %v4220 = vrot.slane %v3201, %v4219
        %v4221 = vlaneseq
        %v4222 = vshrl.u32 %v4221, 7
        %v4223 = vsub.s32 0, %v4222
        %v4224 = vrot.slane %v3202, %v4223
        %v4225 = vlaneseq
        %v4226 = vshrl.u32 %v4225, 7
        %v4227 = vsub.s32 2, %v4226
        %v4228 = vrot.slane %v3202, %v4227
        %v4229 = vlaneseq
        %v4230 = vshrl.u32 %v4229, 7
        %v4231 = vsub.s32 0, %v4230
        %v4232 = vrot.slane %v3203, %v4231
        %v4233 = vlaneseq
        %v4234 = vshrl.u32 %v4233, 7
        %v4235 = vsub.s32 2, %v4234
        %v4236 = vrot.slane %v3203, %v4235
        %v4237 = vlaneseq
        %v4238 = vshrl.u32 %v4237, 7
        %v4239 = vsub.s32 0, %v4238
        %v4240 = vrot.slane %v3204, %v4239
        %v4241 = vlaneseq
        %v4242 = vshrl.u32 %v4241, 7
        %v4243 = vsub.s32 2, %v4242
        %v4244 = vrot.slane %v3204, %v4243
        %v4245 = vlaneseq
        %v4246 = vshrl.u32 %v4245, 7
        %v4247 = vsub.s32 0, %v4246
        %v4248 = vrot.slane %v3205, %v4247
        %v4249 = vlaneseq
        %v4250 = vshrl.u32 %v4249, 7
        %v4251 = vsub.s32 2, %v4250
        %v4252 = vrot.slane %v3205, %v4251
        %v4253 = vlaneseq
        %v4254 = vshrl.u32 %v4253, 7
        %v4255 = vsub.s32 0, %v4254
        %v4256 = vrot.slane %v3206, %v4255
        %v4257 = vlaneseq
        %v4258 = vshrl.u32 %v4257, 7
        %v4259 = vsub.s32 2, %v4258
        %v4260 = vrot.slane %v3206, %v4259
        %v4261 = vlaneseq
        %v4262 = vshrl.u32 %v4261, 7
        %v4263 = vsub.s32 0, %v4262
        %v4264 = vrot.slane %v3207, %v4263
        %v4265 = vlaneseq
        %v4266 = vshrl.u32 %v4265, 7
        %v4267 = vsub.s32 2, %v4266
        %v4268 = vrot.slane %v3207, %v4267
        %v4269 = vlaneseq
        %v4270 = vshrl.u32 %v4269, 7
        %v4271 = vsub.s32 0, %v4270
        %v4272 = vrot.slane %v3208, %v4271
        %v4273 = vlaneseq
        %v4274 = vshrl.u32 %v4273, 7
        %v4275 = vsub.s32 2, %v4274
        %v4276 = vrot.slane %v3208, %v4275
        %v4277 = vlaneseq
        %v4278 = vshrl.u32 %v4277, 7
        %v4279 = vsub.s32 0, %v4278
        %v4280 = vrot.slane %v3209, %v4279
        %v4281 = vlaneseq
        %v4282 = vshrl.u32 %v4281, 7
        %v4283 = vsub.s32 2, %v4282
        %v4284 = vrot.slane %v3209, %v4283
        %v4285 = vlaneseq
        %v4286 = vshrl.u32 %v4285, 7
        %v4287 = vsub.s32 0, %v4286
        %v4288 = vrot.slane %v3210, %v4287
        %v4289 = vlaneseq
        %v4290 = vshrl.u32 %v4289, 7
        %v4291 = vsub.s32 2, %v4290
        %v4292 = vrot.slane %v3210, %v4291
        %v4293 = vlaneseq
        %v4294 = vshrl.u32 %v4293, 7
        %v4295 = vsub.s32 0, %v4294
        %v4296 = vrot.slane %v3211, %v4295
        %v4297 = vlaneseq
        %v4298 = vshrl.u32 %v4297, 7
        %v4299 = vsub.s32 2, %v4298
        %v4300 = vrot.slane %v3211, %v4299
        %v4301 = vlaneseq
        %v4302 = vshrl.u32 %v4301, 7
        %v4303 = vsub.s32 0, %v4302
        %v4304 = vrot.slane %v3212, %v4303
        %v4305 = vlaneseq
        %v4306 = vshrl.u32 %v4305, 7
        %v4307 = vsub.s32 2, %v4306
        %v4308 = vrot.slane %v3212, %v4307
        %v4309 = vlaneseq
        %v4310 = vshrl.u32 %v4309, 7
        %v4311 = vsub.s32 0, %v4310
        %v4312 = vrot.slane %v3213, %v4311
        %v4313 = vlaneseq
        %v4314 = vshrl.u32 %v4313, 7
        %v4315 = vsub.s32 2, %v4314
        %v4316 = vrot.slane %v3213, %v4315
        %v4317 = vlaneseq
        %v4318 = vshrl.u32 %v4317, 7
        %v4319 = vsub.s32 0, %v4318
        %v4320 = vrot.slane %v3214, %v4319
        %v4321 = vlaneseq
        %v4322 = vshrl.u32 %v4321, 7
        %v4323 = vsub.s32 2, %v4322
        %v4324 = vrot.slane %v3214, %v4323
        %v4325 = vlaneseq
        %v4326 = vshrl.u32 %v4325, 7
        %v4327 = vsub.s32 0, %v4326
        %v4328 = vrot.slane %v3215, %v4327
        %v4329 = vlaneseq
        %v4330 = vshrl.u32 %v4329, 7
        %v4331 = vsub.s32 2, %v4330
        %v4332 = vrot.slane %v3215, %v4331
        %v4333 = vlaneseq
        %v4334 = vshrl.u32 %v4333, 7
        %v4335 = vsub.s32 0, %v4334
        %v4336 = vrot.slane %v3216, %v4335
        %v4337 = vlaneseq
        %v4338 = vshrl.u32 %v4337, 7
        %v4339 = vsub.s32 2, %v4338
        %v4340 = vrot.slane %v3216, %v4339
        %v4341 = vlaneseq
        %v4342 = vshrl.u32 %v4341, 7
        %v4343 = vsub.s32 0, %v4342
        %v4344 = vrot.slane %v3217, %v4343
        %v4345 = vlaneseq
        %v4346 = vshrl.u32 %v4345, 7
        %v4347 = vsub.s32 2, %v4346
        %v4348 = vrot.slane %v3217, %v4347
        %v4349 = vlaneseq
        %v4350 = vshrl.u32 %v4349, 7
        %v4351 = vsub.s32 0, %v4350
        %v4352 = vrot.slane %v3218, %v4351
        %v4353 = vlaneseq
        %v4354 = vshrl.u32 %v4353, 7
        %v4355 = vsub.s32 2, %v4354
        %v4356 = vrot.slane %v3218, %v4355
        %v4357 = vlaneseq
        %v4358 = vshrl.u32 %v4357, 7
        %v4359 = vsub.s32 0, %v4358
        %v4360 = vrot.slane %v3219, %v4359
        %v4361 = vlaneseq
        %v4362 = vshrl.u32 %v4361, 7
        %v4363 = vsub.s32 2, %v4362
        %v4364 = vrot.slane %v3219, %v4363
        %v4365 = vlaneseq
        %v4366 = vshrl.u32 %v4365, 7
        %v4367 = vsub.s32 0, %v4366
        %v4368 = vrot.slane %v3220, %v4367
        %v4369 = vlaneseq
        %v4370 = vshrl.u32 %v4369, 7
        %v4371 = vsub.s32 2, %v4370
        %v4372 = vrot.slane %v3220, %v4371
        %vm4373 = vcmask 1042434
        %v4374 = vsel %vm4373, %v3360, %v3352
        %vm4375 = vcmask 1043459
        %v4376 = vsel %vm4375, %v3368, %v4374
        %vm4377 = vcmask 1044484
        %v4378 = vsel %vm4377, %v3376, %v4376
        %vm4379 = vcmask 1045509
        %v4380 = vsel %vm4379, %v3384, %v4378
        %vm4381 = vcmask 1046534
        %v4382 = vsel %vm4381, %v3392, %v4380
        %vm4383 = vcmask 1047559
        %v4384 = vsel %vm4383, %v3400, %v4382
        %v4385 = vsel %vm4373, %v3364, %v3356
        %v4386 = vsel %vm4375, %v3372, %v4385
        %v4387 = vsel %vm4377, %v3380, %v4386
        %v4388 = vsel %vm4379, %v3388, %v4387
        %v4389 = vsel %vm4381, %v3396, %v4388
        %v4390 = vsel %vm4383, %v3404, %v4389
        %v4391 = vsel %vm4373, %v3424, %v3416
        %v4392 = vsel %vm4375, %v3432, %v4391
        %v4393 = vsel %vm4377, %v3440, %v4392
        %v4394 = vsel %vm4379, %v3448, %v4393
        %v4395 = vsel %vm4381, %v3456, %v4394
        %v4396 = vsel %vm4383, %v3464, %v4395
        %v4397 = vsel %vm4373, %v3428, %v3420
        %v4398 = vsel %vm4375, %v3436, %v4397
        %v4399 = vsel %vm4377, %v3444, %v4398
        %v4400 = vsel %vm4379, %v3452, %v4399
        %v4401 = vsel %vm4381, %v3460, %v4400
        %v4402 = vsel %vm4383, %v3468, %v4401
        %v4403 = vsel %vm4373, %v3488, %v3480
        %v4404 = vsel %vm4375, %v3496, %v4403
        %v4405 = vsel %vm4377, %v3504, %v4404
        %v4406 = vsel %vm4379, %v3512, %v4405
        %v4407 = vsel %vm4381, %v3520, %v4406
        %v4408 = vsel %vm4383, %v3528, %v4407
        %v4409 = vsel %vm4373, %v3492, %v3484
        %v4410 = vsel %vm4375, %v3500, %v4409
        %v4411 = vsel %vm4377, %v3508, %v4410
        %v4412 = vsel %vm4379, %v3516, %v4411
        %v4413 = vsel %vm4381, %v3524, %v4412
        %v4414 = vsel %vm4383, %v3532, %v4413
        %v4415 = vsel %vm4373, %v3552, %v3544
        %v4416 = vsel %vm4375, %v3560, %v4415
        %v4417 = vsel %vm4377, %v3568, %v4416
        %v4418 = vsel %vm4379, %v3576, %v4417
        %v4419 = vsel %vm4381, %v3584, %v4418
        %v4420 = vsel %vm4383, %v3592, %v4419
        %v4421 = vsel %vm4373, %v3556, %v3548
        %v4422 = vsel %vm4375, %v3564, %v4421
        %v4423 = vsel %vm4377, %v3572, %v4422
        %v4424 = vsel %vm4379, %v3580, %v4423
        %v4425 = vsel %vm4381, %v3588, %v4424
        %v4426 = vsel %vm4383, %v3596, %v4425
        %v4427 = vsel %vm4373, %v3616, %v3608
        %v4428 = vsel %vm4375, %v3624, %v4427
        %v4429 = vsel %vm4377, %v3632, %v4428
        %v4430 = vsel %vm4379, %v3640, %v4429
        %v4431 = vsel %vm4381, %v3648, %v4430
        %v4432 = vsel %vm4383, %v3656, %v4431
        %v4433 = vsel %vm4373, %v3620, %v3612
        %v4434 = vsel %vm4375, %v3628, %v4433
        %v4435 = vsel %vm4377, %v3636, %v4434
        %v4436 = vsel %vm4379, %v3644, %v4435
        %v4437 = vsel %vm4381, %v3652, %v4436
        %v4438 = vsel %vm4383, %v3660, %v4437
        %v4439 = vsel %vm4373, %v3680, %v3672
        %v4440 = vsel %vm4375, %v3688, %v4439
        %v4441 = vsel %vm4377, %v3696, %v4440
        %v4442 = vsel %vm4379, %v3704, %v4441
        %v4443 = vsel %vm4381, %v3712, %v4442
        %v4444 = vsel %vm4383, %v3720, %v4443
        %v4445 = vsel %vm4373, %v3684, %v3676
        %v4446 = vsel %vm4375, %v3692, %v4445
        %v4447 = vsel %vm4377, %v3700, %v4446
        %v4448 = vsel %vm4379, %v3708, %v4447
        %v4449 = vsel %vm4381, %v3716, %v4448
        %v4450 = vsel %vm4383, %v3724, %v4449
        %v4451 = vsel %vm4373, %v3744, %v3736
        %v4452 = vsel %vm4375, %v3752, %v4451
        %v4453 = vsel %vm4377, %v3760, %v4452
        %v4454 = vsel %vm4379, %v3768, %v4453
        %v4455 = vsel %vm4381, %v3776, %v4454
        %v4456 = vsel %vm4383, %v3784, %v4455
        %v4457 = vsel %vm4373, %v3748, %v3740
        %v4458 = vsel %vm4375, %v3756, %v4457
        %v4459 = vsel %vm4377, %v3764, %v4458
        %v4460 = vsel %vm4379, %v3772, %v4459
        %v4461 = vsel %vm4381, %v3780, %v4460
        %v4462 = vsel %vm4383, %v3788, %v4461
        %v4463 = vsel %vm4373, %v3808, %v3800
        %v4464 = vsel %vm4375, %v3816, %v4463
        %v4465 = vsel %vm4377, %v3824, %v4464
        %v4466 = vsel %vm4379, %v3832, %v4465
        %v4467 = vsel %vm4381, %v3840, %v4466
        %v4468 = vsel %vm4383, %v3848, %v4467
        %v4469 = vsel %vm4373, %v3812, %v3804
        %v4470 = vsel %vm4375, %v3820, %v4469
        %v4471 = vsel %vm4377, %v3828, %v4470
        %v4472 = vsel %vm4379, %v3836, %v4471
        %v4473 = vsel %vm4381, %v3844, %v4472
        %v4474 = vsel %vm4383, %v3852, %v4473
        %v4475 = vsel %vm4373, %v3872, %v3864
        %v4476 = vsel %vm4375, %v3880, %v4475
        %v4477 = vsel %vm4377, %v3888, %v4476
        %v4478 = vsel %vm4379, %v3896, %v4477
        %v4479 = vsel %vm4381, %v3904, %v4478
        %v4480 = vsel %vm4383, %v3912, %v4479
        %v4481 = vsel %vm4373, %v3876, %v3868
        %v4482 = vsel %vm4375, %v3884, %v4481
        %v4483 = vsel %vm4377, %v3892, %v4482
        %v4484 = vsel %vm4379, %v3900, %v4483
        %v4485 = vsel %vm4381, %v3908, %v4484
        %v4486 = vsel %vm4383, %v3916, %v4485
        %v4487 = vsel %vm4373, %v3936, %v3928
        %v4488 = vsel %vm4375, %v3944, %v4487
        %v4489 = vsel %vm4377, %v3952, %v4488
        %v4490 = vsel %vm4379, %v3960, %v4489
        %v4491 = vsel %vm4381, %v3968, %v4490
        %v4492 = vsel %vm4383, %v3976, %v4491
        %v4493 = vsel %vm4373, %v3940, %v3932
        %v4494 = vsel %vm4375, %v3948, %v4493
        %v4495 = vsel %vm4377, %v3956, %v4494
        %v4496 = vsel %vm4379, %v3964, %v4495
        %v4497 = vsel %vm4381, %v3972, %v4496
        %v4498 = vsel %vm4383, %v3980, %v4497
        %v4499 = vsel %vm4373, %v4000, %v3992
        %v4500 = vsel %vm4375, %v4008, %v4499
        %v4501 = vsel %vm4377, %v4016, %v4500
        %v4502 = vsel %vm4379, %v4024, %v4501
        %v4503 = vsel %vm4381, %v4032, %v4502
        %v4504 = vsel %vm4383, %v4040, %v4503
        %v4505 = vsel %vm4373, %v4004, %v3996
        %v4506 = vsel %vm4375, %v4012, %v4505
        %v4507 = vsel %vm4377, %v4020, %v4506
        %v4508 = vsel %vm4379, %v4028, %v4507
        %v4509 = vsel %vm4381, %v4036, %v4508
        %v4510 = vsel %vm4383, %v4044, %v4509
        %v4511 = vsel %vm4373, %v4064, %v4056
        %v4512 = vsel %vm4375, %v4072, %v4511
        %v4513 = vsel %vm4377, %v4080, %v4512
        %v4514 = vsel %vm4379, %v4088, %v4513
        %v4515 = vsel %vm4381, %v4096, %v4514
        %v4516 = vsel %vm4383, %v4104, %v4515
        %v4517 = vsel %vm4373, %v4068, %v4060
        %v4518 = vsel %vm4375, %v4076, %v4517
        %v4519 = vsel %vm4377, %v4084, %v4518
        %v4520 = vsel %vm4379, %v4092, %v4519
        %v4521 = vsel %vm4381, %v4100, %v4520
        %v4522 = vsel %vm4383, %v4108, %v4521
        %v4523 = vsel %vm4373, %v4128, %v4120
        %v4524 = vsel %vm4375, %v4136, %v4523
        %v4525 = vsel %vm4377, %v4144, %v4524
        %v4526 = vsel %vm4379, %v4152, %v4525
        %v4527 = vsel %vm4381, %v4160, %v4526
        %v4528 = vsel %vm4383, %v4168, %v4527
        %v4529 = vsel %vm4373, %v4132, %v4124
        %v4530 = vsel %vm4375, %v4140, %v4529
        %v4531 = vsel %vm4377, %v4148, %v4530
        %v4532 = vsel %vm4379, %v4156, %v4531
        %v4533 = vsel %vm4381, %v4164, %v4532
        %v4534 = vsel %vm4383, %v4172, %v4533
        %v4535 = vsel %vm4373, %v4192, %v4184
        %v4536 = vsel %vm4375, %v4200, %v4535
        %v4537 = vsel %vm4377, %v4208, %v4536
        %v4538 = vsel %vm4379, %v4216, %v4537
        %v4539 = vsel %vm4381, %v4224, %v4538
        %v4540 = vsel %vm4383, %v4232, %v4539
        %v4541 = vsel %vm4373, %v4196, %v4188
        %v4542 = vsel %vm4375, %v4204, %v4541
        %v4543 = vsel %vm4377, %v4212, %v4542
        %v4544 = vsel %vm4379, %v4220, %v4543
        %v4545 = vsel %vm4381, %v4228, %v4544
        %v4546 = vsel %vm4383, %v4236, %v4545
        %v4547 = vsel %vm4373, %v4256, %v4248
        %v4548 = vsel %vm4375, %v4264, %v4547
        %v4549 = vsel %vm4377, %v4272, %v4548
        %v4550 = vsel %vm4379, %v4280, %v4549
        %v4551 = vsel %vm4381, %v4288, %v4550
        %v4552 = vsel %vm4383, %v4296, %v4551
        %v4553 = vsel %vm4373, %v4260, %v4252
        %v4554 = vsel %vm4375, %v4268, %v4553
        %v4555 = vsel %vm4377, %v4276, %v4554
        %v4556 = vsel %vm4379, %v4284, %v4555
        %v4557 = vsel %vm4381, %v4292, %v4556
        %v4558 = vsel %vm4383, %v4300, %v4557
        %v4559 = vsel %vm4373, %v4320, %v4312
        %v4560 = vsel %vm4375, %v4328, %v4559
        %v4561 = vsel %vm4377, %v4336, %v4560
        %v4562 = vsel %vm4379, %v4344, %v4561
        %v4563 = vsel %vm4381, %v4352, %v4562
        %v4564 = vsel %vm4383, %v4360, %v4563
        %v4565 = vsel %vm4373, %v4324, %v4316
        %v4566 = vsel %vm4375, %v4332, %v4565
        %v4567 = vsel %vm4377, %v4340, %v4566
        %v4568 = vsel %vm4379, %v4348, %v4567
        %v4569 = vsel %vm4381, %v4356, %v4568
        %v4570 = vsel %vm4383, %v4364, %v4569
        %s4635 = scalar_lea.vmem [#allocation2], 32
        %4636 = vst [vmem:[%s4635] sm:$0xfe] %v4384
        %4637 = vst [vmem:[%s4635 + $0x8] sm:$0xfe] %v4390
        %4638 = vst [vmem:[%s4635 + $0x10] sm:$0x1] %v3408
        %4639 = vst [vmem:[%s4635 + $0x18] sm:$0x1] %v3412
        %4640 = vst [vmem:[%s4635 + $0x20] sm:$0xfe] %v4396
        %4641 = vst [vmem:[%s4635 + $0x28] sm:$0xfe] %v4402
        %4642 = vst [vmem:[%s4635 + $0x30] sm:$0x1] %v3472
        %4643 = vst [vmem:[%s4635 + $0x38] sm:$0x1] %v3476
        %4644 = vst [vmem:[%s4635 + $0x40] sm:$0xfe] %v4408
        %4645 = vst [vmem:[%s4635 + $0x48] sm:$0xfe] %v4414
        %4646 = vst [vmem:[%s4635 + $0x50] sm:$0x1] %v3536
        %4647 = vst [vmem:[%s4635 + $0x58] sm:$0x1] %v3540
        %4648 = vst [vmem:[%s4635 + $0x60] sm:$0xfe] %v4420
        %4649 = vst [vmem:[%s4635 + $0x68] sm:$0xfe] %v4426
        %4650 = vst [vmem:[%s4635 + $0x70] sm:$0x1] %v3600
        %4651 = vst [vmem:[%s4635 + $0x78] sm:$0x1] %v3604
        %4652 = vst [vmem:[%s4635 + $0x80] sm:$0xfe] %v4432
        %4653 = vst [vmem:[%s4635 + $0x88] sm:$0xfe] %v4438
        %4654 = vst [vmem:[%s4635 + $0x90] sm:$0x1] %v3664
        %4655 = vst [vmem:[%s4635 + $0x98] sm:$0x1] %v3668
        %4656 = vst [vmem:[%s4635 + $0xa0] sm:$0xfe] %v4444
        %4657 = vst [vmem:[%s4635 + $0xa8] sm:$0xfe] %v4450
        %4658 = vst [vmem:[%s4635 + $0xb0] sm:$0x1] %v3728
        %4659 = vst [vmem:[%s4635 + $0xb8] sm:$0x1] %v3732
        %4660 = vst [vmem:[%s4635 + $0xc0] sm:$0xfe] %v4456
        %4661 = vst [vmem:[%s4635 + $0xc8] sm:$0xfe] %v4462
        %4662 = vst [vmem:[%s4635 + $0xd0] sm:$0x1] %v3792
        %4663 = vst [vmem:[%s4635 + $0xd8] sm:$0x1] %v3796
        %4664 = vst [vmem:[%s4635 + $0xe0] sm:$0xfe] %v4468
        %4665 = vst [vmem:[%s4635 + $0xe8] sm:$0xfe] %v4474
        %4666 = vst [vmem:[%s4635 + $0xf0] sm:$0x1] %v3856
        %4667 = vst [vmem:[%s4635 + $0xf8] sm:$0x1] %v3860
        %4668 = vst [vmem:[%s4635 + $0x140] sm:$0xfe] %v4480
        %4669 = vst [vmem:[%s4635 + $0x148] sm:$0xfe] %v4486
        %4670 = vst [vmem:[%s4635 + $0x150] sm:$0x1] %v3920
        %4671 = vst [vmem:[%s4635 + $0x158] sm:$0x1] %v3924
        %4672 = vst [vmem:[%s4635 + $0x160] sm:$0xfe] %v4492
        %4673 = vst [vmem:[%s4635 + $0x168] sm:$0xfe] %v4498
        %4674 = vst [vmem:[%s4635 + $0x170] sm:$0x1] %v3984
        %4675 = vst [vmem:[%s4635 + $0x178] sm:$0x1] %v3988
        %4676 = vst [vmem:[%s4635 + $0x180] sm:$0xfe] %v4504
        %4677 = vst [vmem:[%s4635 + $0x188] sm:$0xfe] %v4510
        %4678 = vst [vmem:[%s4635 + $0x190] sm:$0x1] %v4048
        %4679 = vst [vmem:[%s4635 + $0x198] sm:$0x1] %v4052
        %4680 = vst [vmem:[%s4635 + $0x1a0] sm:$0xfe] %v4516
        %4681 = vst [vmem:[%s4635 + $0x1a8] sm:$0xfe] %v4522
        %4682 = vst [vmem:[%s4635 + $0x1b0] sm:$0x1] %v4112
        %4683 = vst [vmem:[%s4635 + $0x1b8] sm:$0x1] %v4116
        %4684 = vst [vmem:[%s4635 + $0x1c0] sm:$0xfe] %v4528
        %4685 = vst [vmem:[%s4635 + $0x1c8] sm:$0xfe] %v4534
        %4686 = vst [vmem:[%s4635 + $0x1d0] sm:$0x1] %v4176
        %4687 = vst [vmem:[%s4635 + $0x1d8] sm:$0x1] %v4180
        %4688 = vst [vmem:[%s4635 + $0x1e0] sm:$0xfe] %v4540
        %4689 = vst [vmem:[%s4635 + $0x1e8] sm:$0xfe] %v4546
        %4690 = vst [vmem:[%s4635 + $0x1f0] sm:$0x1] %v4240
        %4691 = vst [vmem:[%s4635 + $0x1f8] sm:$0x1] %v4244
        %4692 = vst [vmem:[%s4635 + $0x200] sm:$0xfe] %v4552
        %4693 = vst [vmem:[%s4635 + $0x208] sm:$0xfe] %v4558
        %4694 = vst [vmem:[%s4635 + $0x210] sm:$0x1] %v4304
        %4695 = vst [vmem:[%s4635 + $0x218] sm:$0x1] %v4308
        %4696 = vst [vmem:[%s4635 + $0x220] sm:$0xfe] %v4564
        %4697 = vst [vmem:[%s4635 + $0x228] sm:$0xfe] %v4570
        %4698 = vst [vmem:[%s4635 + $0x230] sm:$0x1] %v4368
        %4699 = vst [vmem:[%s4635 + $0x238] sm:$0x1] %v4372
        %v4700 = vld [vmem:[#allocation2] sm:$0xff]
        %v4701 = vld [vmem:[#allocation2 + $0x8] sm:$0xff]
        %v4702 = vld [vmem:[#allocation2 + $0x10] sm:$0x3]
        %v4703 = vld [vmem:[#allocation2 + $0x18] sm:$0x3]
        %v4704 = vld [vmem:[#allocation2 + $0x20] sm:$0xff]
        %v4705 = vld [vmem:[#allocation2 + $0x28] sm:$0xff]
        %v4706 = vld [vmem:[#allocation2 + $0x30] sm:$0x3]
        %v4707 = vld [vmem:[#allocation2 + $0x38] sm:$0x3]
        %v4708 = vld [vmem:[#allocation2 + $0x40] sm:$0xff]
        %v4709 = vld [vmem:[#allocation2 + $0x48] sm:$0xff]
        %v4710 = vld [vmem:[#allocation2 + $0x50] sm:$0x3]
        %v4711 = vld [vmem:[#allocation2 + $0x58] sm:$0x3]
        %v4712 = vld [vmem:[#allocation2 + $0x60] sm:$0xff]
        %v4713 = vld [vmem:[#allocation2 + $0x68] sm:$0xff]
        %v4714 = vld [vmem:[#allocation2 + $0x70] sm:$0x3]
        %v4715 = vld [vmem:[#allocation2 + $0x78] sm:$0x3]
        %v4716 = vld [vmem:[#allocation2 + $0x80] sm:$0xff]
        %v4717 = vld [vmem:[#allocation2 + $0x88] sm:$0xff]
        %v4718 = vld [vmem:[#allocation2 + $0x90] sm:$0x3]
        %v4719 = vld [vmem:[#allocation2 + $0x98] sm:$0x3]
        %v4720 = vld [vmem:[#allocation2 + $0xa0] sm:$0xff]
        %v4721 = vld [vmem:[#allocation2 + $0xa8] sm:$0xff]
        %v4722 = vld [vmem:[#allocation2 + $0xb0] sm:$0x3]
        %v4723 = vld [vmem:[#allocation2 + $0xb8] sm:$0x3]
        %v4724 = vld [vmem:[#allocation2 + $0xc0] sm:$0xff]
        %v4725 = vld [vmem:[#allocation2 + $0xc8] sm:$0xff]
        %v4726 = vld [vmem:[#allocation2 + $0xd0] sm:$0x3]
        %v4727 = vld [vmem:[#allocation2 + $0xd8] sm:$0x3]
        %v4728 = vld [vmem:[#allocation2 + $0xe0] sm:$0xff]
        %v4729 = vld [vmem:[#allocation2 + $0xe8] sm:$0xff]
        %v4730 = vld [vmem:[#allocation2 + $0xf0] sm:$0x3]
        %v4731 = vld [vmem:[#allocation2 + $0xf8] sm:$0x3]
        %v4732 = vld [vmem:[#allocation2 + $0x100] sm:$0xff]
        %v4733 = vld [vmem:[#allocation2 + $0x108] sm:$0xff]
        %v4734 = vld [vmem:[#allocation2 + $0x110] sm:$0x3]
        %v4735 = vld [vmem:[#allocation2 + $0x118] sm:$0x3]
        %v4736 = vld [vmem:[#allocation2 + $0x120] sm:$0xff]
        %v4737 = vld [vmem:[#allocation2 + $0x128] sm:$0xff]
        %v4738 = vld [vmem:[#allocation2 + $0x130] sm:$0x3]
        %v4739 = vld [vmem:[#allocation2 + $0x138] sm:$0x3]
        %v4740 = vld [vmem:[#allocation2 + $0x140] sm:$0xff]
        %v4741 = vld [vmem:[#allocation2 + $0x148] sm:$0xff]
        %v4742 = vld [vmem:[#allocation2 + $0x150] sm:$0x3]
        %v4743 = vld [vmem:[#allocation2 + $0x158] sm:$0x3]
        %v4744 = vld [vmem:[#allocation2 + $0x160] sm:$0xff]
        %v4745 = vld [vmem:[#allocation2 + $0x168] sm:$0xff]
        %v4746 = vld [vmem:[#allocation2 + $0x170] sm:$0x3]
        %v4747 = vld [vmem:[#allocation2 + $0x178] sm:$0x3]
        %v4748 = vld [vmem:[#allocation2 + $0x180] sm:$0xff]
        %v4749 = vld [vmem:[#allocation2 + $0x188] sm:$0xff]
        %v4750 = vld [vmem:[#allocation2 + $0x190] sm:$0x3]
        %v4751 = vld [vmem:[#allocation2 + $0x198] sm:$0x3]
        %v4752 = vld [vmem:[#allocation2 + $0x1a0] sm:$0xff]
        %v4753 = vld [vmem:[#allocation2 + $0x1a8] sm:$0xff]
        %v4754 = vld [vmem:[#allocation2 + $0x1b0] sm:$0x3]
        %v4755 = vld [vmem:[#allocation2 + $0x1b8] sm:$0x3]
        %v4756 = vld [vmem:[#allocation2 + $0x1c0] sm:$0xff]
        %v4757 = vld [vmem:[#allocation2 + $0x1c8] sm:$0xff]
        %v4758 = vld [vmem:[#allocation2 + $0x1d0] sm:$0x3]
        %v4759 = vld [vmem:[#allocation2 + $0x1d8] sm:$0x3]
        %v4760 = vld [vmem:[#allocation2 + $0x1e0] sm:$0xff]
        %v4761 = vld [vmem:[#allocation2 + $0x1e8] sm:$0xff]
        %v4762 = vld [vmem:[#allocation2 + $0x1f0] sm:$0x3]
        %v4763 = vld [vmem:[#allocation2 + $0x1f8] sm:$0x3]
        %v4764 = vld [vmem:[#allocation2 + $0x200] sm:$0xff]
        %v4765 = vld [vmem:[#allocation2 + $0x208] sm:$0xff]
        %v4766 = vld [vmem:[#allocation2 + $0x210] sm:$0x3]
        %v4767 = vld [vmem:[#allocation2 + $0x218] sm:$0x3]
        %v4768 = vld [vmem:[#allocation2 + $0x220] sm:$0xff]
        %v4769 = vld [vmem:[#allocation2 + $0x228] sm:$0xff]
        %v4770 = vld [vmem:[#allocation2 + $0x230] sm:$0x3]
        %v4771 = vld [vmem:[#allocation2 + $0x238] sm:$0x3]
        %v4772 = vld [vmem:[#allocation2 + $0x240] sm:$0xff]
        %v4773 = vld [vmem:[#allocation2 + $0x248] sm:$0xff]
        %v4774 = vld [vmem:[#allocation2 + $0x250] sm:$0x3]
        %v4775 = vld [vmem:[#allocation2 + $0x258] sm:$0x3]
        %v4776 = vld [vmem:[#allocation2 + $0x260] sm:$0xff]
        %v4777 = vld [vmem:[#allocation2 + $0x268] sm:$0xff]
        %v4778 = vld [vmem:[#allocation2 + $0x270] sm:$0x3]
        %v4779 = vld [vmem:[#allocation2 + $0x278] sm:$0x3]
        %v4780 = vpack.c.bf16 %v4702, %v4700
        %v4781 = vpack.c.bf16 %v4703, %v4701
        %v4782 = vpack.c.bf16 %v4706, %v4704
        %v4783 = vpack.c.bf16 %v4707, %v4705
        %v4784 = vpack.c.bf16 %v4710, %v4708
        %v4785 = vpack.c.bf16 %v4711, %v4709
        %v4786 = vpack.c.bf16 %v4714, %v4712
        %v4787 = vpack.c.bf16 %v4715, %v4713
        %v4788 = vpack.c.bf16 %v4718, %v4716
        %v4789 = vpack.c.bf16 %v4719, %v4717
        %v4790 = vpack.c.bf16 %v4722, %v4720
        %v4791 = vpack.c.bf16 %v4723, %v4721
        %v4792 = vpack.c.bf16 %v4726, %v4724
        %v4793 = vpack.c.bf16 %v4727, %v4725
        %v4794 = vpack.c.bf16 %v4730, %v4728
        %v4795 = vpack.c.bf16 %v4731, %v4729
        %v4796 = vpack.c.bf16 %v4734, %v4732
        %v4797 = vpack.c.bf16 %v4735, %v4733
        %v4798 = vpack.c.bf16 %v4738, %v4736
        %v4799 = vpack.c.bf16 %v4739, %v4737
        %v4800 = vpack.c.bf16 %v4742, %v4740
        %v4801 = vpack.c.bf16 %v4743, %v4741
        %v4802 = vpack.c.bf16 %v4746, %v4744
        %v4803 = vpack.c.bf16 %v4747, %v4745
        %v4804 = vpack.c.bf16 %v4750, %v4748
        %v4805 = vpack.c.bf16 %v4751, %v4749
        %v4806 = vpack.c.bf16 %v4754, %v4752
        %v4807 = vpack.c.bf16 %v4755, %v4753
        %v4808 = vpack.c.bf16 %v4758, %v4756
        %v4809 = vpack.c.bf16 %v4759, %v4757
        %v4810 = vpack.c.bf16 %v4762, %v4760
        %v4811 = vpack.c.bf16 %v4763, %v4761
        %v4812 = vpack.c.bf16 %v4766, %v4764
        %v4813 = vpack.c.bf16 %v4767, %v4765
        %v4814 = vpack.c.bf16 %v4770, %v4768
        %v4815 = vpack.c.bf16 %v4771, %v4769
        %v4816 = vpack.c.bf16 %v4774, %v4772
        %v4817 = vpack.c.bf16 %v4775, %v4773
        %v4818 = vpack.c.bf16 %v4778, %v4776
        %v4819 = vpack.c.bf16 %v4779, %v4777
        %v4852 = vunpack.c.l.b16 %v4780
        %v4853 = vunpack.c.l.b16 %v4781
        %v4854 = vunpack.c.l.b16 %v4782
        %v4855 = vunpack.c.l.b16 %v4783
        %v4856 = vunpack.c.l.b16 %v4784
        %v4857 = vunpack.c.l.b16 %v4785
        %v4858 = vunpack.c.l.b16 %v4786
        %v4859 = vunpack.c.l.b16 %v4787
        %v4860 = vunpack.c.l.b16 %v4788
        %v4861 = vunpack.c.l.b16 %v4789
        %v4862 = vunpack.c.l.b16 %v4790
        %v4863 = vunpack.c.l.b16 %v4791
        %v4864 = vunpack.c.l.b16 %v4792
        %v4865 = vunpack.c.l.b16 %v4793
        %v4866 = vunpack.c.l.b16 %v4794
        %v4867 = vunpack.c.l.b16 %v4795
        %v4868 = vunpack.c.l.b16 %v4800
        %v4869 = vunpack.c.l.b16 %v4801
        %v4870 = vunpack.c.l.b16 %v4802
        %v4871 = vunpack.c.l.b16 %v4803
        %v4872 = vunpack.c.l.b16 %v4804
        %v4873 = vunpack.c.l.b16 %v4805
        %v4874 = vunpack.c.l.b16 %v4806
        %v4875 = vunpack.c.l.b16 %v4807
        %v4876 = vunpack.c.l.b16 %v4808
        %v4877 = vunpack.c.l.b16 %v4809
        %v4878 = vunpack.c.l.b16 %v4810
        %v4879 = vunpack.c.l.b16 %v4811
        %v4880 = vunpack.c.l.b16 %v4812
        %v4881 = vunpack.c.l.b16 %v4813
        %v4882 = vunpack.c.l.b16 %v4814
        %v4883 = vunpack.c.l.b16 %v4815
        %v4884 = vld [vmem:[%s3] sm:$0xf]
        %v4885 = vld [vmem:[%s3 + $0x4] sm:$0xf]
        %v4886 = vld [vmem:[%s3 + $0x8] sm:$0xf]
        %v4887 = vld [vmem:[%s3 + $0xc] sm:$0xf]
        %v4888 = vld [vmem:[%s3 + $0x10] sm:$0xf]
        %v4889 = vld [vmem:[%s3 + $0x14] sm:$0xf]
        %v4890 = vld [vmem:[%s3 + $0x18] sm:$0xf]
        %v4891 = vld [vmem:[%s3 + $0x1c] sm:$0xf]
        %v4892 = vld [vmem:[%s3 + $0x20] sm:$0xf]
        %v4893 = vld [vmem:[%s3 + $0x24] sm:$0xf]
        %v4894 = vld [vmem:[%s3 + $0x28] sm:$0xf]
        %v4895 = vld [vmem:[%s3 + $0x2c] sm:$0xf]
        %v4896 = vld [vmem:[%s3 + $0x30] sm:$0xf]
        %v4897 = vld [vmem:[%s3 + $0x34] sm:$0xf]
        %v4898 = vld [vmem:[%s3 + $0x38] sm:$0xf]
        %v4899 = vld [vmem:[%s3 + $0x3c] sm:$0xf]
        %v4900 = vld [vmem:[%s3 + $0x40] sm:$0xf]
        %v4901 = vld [vmem:[%s3 + $0x44] sm:$0xf]
        %v4902 = vld [vmem:[%s3 + $0x48] sm:$0xf]
        %v4903 = vld [vmem:[%s3 + $0x4c] sm:$0xf]
        %v4904 = vld [vmem:[%s3 + $0x50] sm:$0xf]
        %v4905 = vld [vmem:[%s3 + $0x54] sm:$0xf]
        %v4906 = vld [vmem:[%s3 + $0x58] sm:$0xf]
        %v4907 = vld [vmem:[%s3 + $0x5c] sm:$0xf]
        %v4908 = vld [vmem:[%s3 + $0x60] sm:$0xf]
        %v4909 = vld [vmem:[%s3 + $0x64] sm:$0xf]
        %v4910 = vld [vmem:[%s3 + $0x68] sm:$0xf]
        %v4911 = vld [vmem:[%s3 + $0x6c] sm:$0xf]
        %v4912 = vld [vmem:[%s3 + $0x70] sm:$0xf]
        %v4913 = vld [vmem:[%s3 + $0x74] sm:$0xf]
        %v4914 = vld [vmem:[%s3 + $0x78] sm:$0xf]
        %v4915 = vld [vmem:[%s3 + $0x7c] sm:$0xf]
        %v4916 = vunpack.c.h.b16 %v4780
        %v4917 = vunpack.c.h.b16 %v4781
        %v4918 = vunpack.c.h.b16 %v4782
        %v4919 = vunpack.c.h.b16 %v4783
        %v4920 = vunpack.c.h.b16 %v4784
        %v4921 = vunpack.c.h.b16 %v4785
        %v4922 = vunpack.c.h.b16 %v4786
        %v4923 = vunpack.c.h.b16 %v4787
        %v4924 = vunpack.c.h.b16 %v4788
        %v4925 = vunpack.c.h.b16 %v4789
        %v4926 = vunpack.c.h.b16 %v4790
        %v4927 = vunpack.c.h.b16 %v4791
        %v4928 = vunpack.c.h.b16 %v4792
        %v4929 = vunpack.c.h.b16 %v4793
        %v4930 = vunpack.c.h.b16 %v4794
        %v4931 = vunpack.c.h.b16 %v4795
        %v4932 = vunpack.c.h.b16 %v4800
        %v4933 = vunpack.c.h.b16 %v4801
        %v4934 = vunpack.c.h.b16 %v4802
        %v4935 = vunpack.c.h.b16 %v4803
        %v4936 = vunpack.c.h.b16 %v4804
        %v4937 = vunpack.c.h.b16 %v4805
        %v4938 = vunpack.c.h.b16 %v4806
        %v4939 = vunpack.c.h.b16 %v4807
        %v4940 = vunpack.c.h.b16 %v4808
        %v4941 = vunpack.c.h.b16 %v4809
        %v4942 = vunpack.c.h.b16 %v4810
        %v4943 = vunpack.c.h.b16 %v4811
        %v4944 = vunpack.c.h.b16 %v4812
        %v4945 = vunpack.c.h.b16 %v4813
        %v4946 = vunpack.c.h.b16 %v4814
        %v4947 = vunpack.c.h.b16 %v4815
        %v4948 = vpack.c.b16 %v4853, %v4852
        %v4949 = vpack.c.b16 %v4917, %v4916
        %v4950 = vpack.c.b16 %v4855, %v4854
        %v4951 = vpack.c.b16 %v4919, %v4918
        %v4952 = vpack.c.b16 %v4857, %v4856
        %v4953 = vpack.c.b16 %v4921, %v4920
        %v4954 = vpack.c.b16 %v4859, %v4858
        %v4955 = vpack.c.b16 %v4923, %v4922
        %v4956 = vpack.c.b16 %v4861, %v4860
        %v4957 = vpack.c.b16 %v4925, %v4924
        %v4958 = vpack.c.b16 %v4863, %v4862
        %v4959 = vpack.c.b16 %v4927, %v4926
        %v4960 = vpack.c.b16 %v4865, %v4864
        %v4961 = vpack.c.b16 %v4929, %v4928
        %v4962 = vpack.c.b16 %v4867, %v4866
        %v4963 = vpack.c.b16 %v4931, %v4930
        %v4964 = vpack.c.b16 %v4869, %v4868
        %v4965 = vpack.c.b16 %v4933, %v4932
        %v4966 = vpack.c.b16 %v4871, %v4870
        %v4967 = vpack.c.b16 %v4935, %v4934
        %v4968 = vpack.c.b16 %v4873, %v4872
        %v4969 = vpack.c.b16 %v4937, %v4936
        %v4970 = vpack.c.b16 %v4875, %v4874
        %v4971 = vpack.c.b16 %v4939, %v4938
        %v4972 = vpack.c.b16 %v4877, %v4876
        %v4973 = vpack.c.b16 %v4941, %v4940
        %v4974 = vpack.c.b16 %v4879, %v4878
        %v4975 = vpack.c.b16 %v4943, %v4942
        %v4976 = vpack.c.b16 %v4881, %v4880
        %v4977 = vpack.c.b16 %v4945, %v4944
        %v4978 = vpack.c.b16 %v4883, %v4882
        %v4979 = vpack.c.b16 %v4947, %v4946
        %vm4980 = vsmask.f32 3328
        %vm4981 = vsmask.f32 7440
        %vm4982 = vmor %vm4980, %vm4981
        %v4984 = vshrl.u32 %v4948, 16
        %v4986 = vrot.slane %v4984, 4
        %v4987 = vshll.u32 %v4948, 16
        %v4989 = vrot.slane %v4987, 5
        %v4990 = vor.u32 %v4986, %v4989
        %v4991 = vrot.slane %v4990, 4
        %v4993 = vshll.u32 %v4949, 16
        %v4995 = vrot.slane %v4993, 5
        %v4996 = vsel %vm4982, %v4991, %v4995
        %v4998 = vshrl.u32 %v4950, 16
        %v5000 = vrot.slane %v4998, 4
        %v5001 = vshll.u32 %v4950, 16
        %v5003 = vrot.slane %v5001, 5
        %v5004 = vor.u32 %v5000, %v5003
        %v5005 = vrot.slane %v5004, 4
        %v5007 = vshll.u32 %v4951, 16
        %v5009 = vrot.slane %v5007, 5
        %v5010 = vsel %vm4982, %v5005, %v5009
        %v5012 = vshrl.u32 %v4952, 16
        %v5014 = vrot.slane %v5012, 4
        %v5015 = vshll.u32 %v4952, 16
        %v5017 = vrot.slane %v5015, 5
        %v5018 = vor.u32 %v5014, %v5017
        %v5019 = vrot.slane %v5018, 4
        %v5021 = vshll.u32 %v4953, 16
        %v5023 = vrot.slane %v5021, 5
        %v5024 = vsel %vm4982, %v5019, %v5023
        %v5026 = vshrl.u32 %v4954, 16
        %v5028 = vrot.slane %v5026, 4
        %v5029 = vshll.u32 %v4954, 16
        %v5031 = vrot.slane %v5029, 5
        %v5032 = vor.u32 %v5028, %v5031
        %v5033 = vrot.slane %v5032, 4
        %v5035 = vshll.u32 %v4955, 16
        %v5037 = vrot.slane %v5035, 5
        %v5038 = vsel %vm4982, %v5033, %v5037
        %v5040 = vshrl.u32 %v4956, 16
        %v5042 = vrot.slane %v5040, 4
        %v5043 = vshll.u32 %v4956, 16
        %v5045 = vrot.slane %v5043, 5
        %v5046 = vor.u32 %v5042, %v5045
        %v5047 = vrot.slane %v5046, 4
        %v5049 = vshll.u32 %v4957, 16
        %v5051 = vrot.slane %v5049, 5
        %v5052 = vsel %vm4982, %v5047, %v5051
        %v5054 = vshrl.u32 %v4958, 16
        %v5056 = vrot.slane %v5054, 4
        %v5057 = vshll.u32 %v4958, 16
        %v5059 = vrot.slane %v5057, 5
        %v5060 = vor.u32 %v5056, %v5059
        %v5061 = vrot.slane %v5060, 4
        %v5063 = vshll.u32 %v4959, 16
        %v5065 = vrot.slane %v5063, 5
        %v5066 = vsel %vm4982, %v5061, %v5065
        %v5068 = vshrl.u32 %v4960, 16
        %v5070 = vrot.slane %v5068, 4
        %v5071 = vshll.u32 %v4960, 16
        %v5073 = vrot.slane %v5071, 5
        %v5074 = vor.u32 %v5070, %v5073
        %v5075 = vrot.slane %v5074, 4
        %v5077 = vshll.u32 %v4961, 16
        %v5079 = vrot.slane %v5077, 5
        %v5080 = vsel %vm4982, %v5075, %v5079
        %v5082 = vshrl.u32 %v4962, 16
        %v5084 = vrot.slane %v5082, 4
        %v5085 = vshll.u32 %v4962, 16
        %v5087 = vrot.slane %v5085, 5
        %v5088 = vor.u32 %v5084, %v5087
        %v5089 = vrot.slane %v5088, 4
        %v5091 = vshll.u32 %v4963, 16
        %v5093 = vrot.slane %v5091, 5
        %v5094 = vsel %vm4982, %v5089, %v5093
        %v5096 = vshrl.u32 %v4964, 16
        %v5098 = vrot.slane %v5096, 4
        %v5099 = vshll.u32 %v4964, 16
        %v5101 = vrot.slane %v5099, 5
        %v5102 = vor.u32 %v5098, %v5101
        %v5103 = vrot.slane %v5102, 4
        %v5105 = vshll.u32 %v4965, 16
        %v5107 = vrot.slane %v5105, 5
        %v5108 = vsel %vm4982, %v5103, %v5107
        %v5110 = vshrl.u32 %v4966, 16
        %v5112 = vrot.slane %v5110, 4
        %v5113 = vshll.u32 %v4966, 16
        %v5115 = vrot.slane %v5113, 5
        %v5116 = vor.u32 %v5112, %v5115
        %v5117 = vrot.slane %v5116, 4
        %v5119 = vshll.u32 %v4967, 16
        %v5121 = vrot.slane %v5119, 5
        %v5122 = vsel %vm4982, %v5117, %v5121
        %v5124 = vshrl.u32 %v4968, 16
        %v5126 = vrot.slane %v5124, 4
        %v5127 = vshll.u32 %v4968, 16
        %v5129 = vrot.slane %v5127, 5
        %v5130 = vor.u32 %v5126, %v5129
        %v5131 = vrot.slane %v5130, 4
        %v5133 = vshll.u32 %v4969, 16
        %v5135 = vrot.slane %v5133, 5
        %v5136 = vsel %vm4982, %v5131, %v5135
        %v5138 = vshrl.u32 %v4970, 16
        %v5140 = vrot.slane %v5138, 4
        %v5141 = vshll.u32 %v4970, 16
        %v5143 = vrot.slane %v5141, 5
        %v5144 = vor.u32 %v5140, %v5143
        %v5145 = vrot.slane %v5144, 4
        %v5147 = vshll.u32 %v4971, 16
        %v5149 = vrot.slane %v5147, 5
        %v5150 = vsel %vm4982, %v5145, %v5149
        %v5152 = vshrl.u32 %v4972, 16
        %v5154 = vrot.slane %v5152, 4
        %v5155 = vshll.u32 %v4972, 16
        %v5157 = vrot.slane %v5155, 5
        %v5158 = vor.u32 %v5154, %v5157
        %v5159 = vrot.slane %v5158, 4
        %v5161 = vshll.u32 %v4973, 16
        %v5163 = vrot.slane %v5161, 5
        %v5164 = vsel %vm4982, %v5159, %v5163
        %v5166 = vshrl.u32 %v4974, 16
        %v5168 = vrot.slane %v5166, 4
        %v5169 = vshll.u32 %v4974, 16
        %v5171 = vrot.slane %v5169, 5
        %v5172 = vor.u32 %v5168, %v5171
        %v5173 = vrot.slane %v5172, 4
        %v5175 = vshll.u32 %v4975, 16
        %v5177 = vrot.slane %v5175, 5
        %v5178 = vsel %vm4982, %v5173, %v5177
        %v5180 = vshrl.u32 %v4976, 16
        %v5182 = vrot.slane %v5180, 4
        %v5183 = vshll.u32 %v4976, 16
        %v5185 = vrot.slane %v5183, 5
        %v5186 = vor.u32 %v5182, %v5185
        %v5187 = vrot.slane %v5186, 4
        %v5189 = vshll.u32 %v4977, 16
        %v5191 = vrot.slane %v5189, 5
        %v5192 = vsel %vm4982, %v5187, %v5191
        %v5194 = vshrl.u32 %v4978, 16
        %v5196 = vrot.slane %v5194, 4
        %v5197 = vshll.u32 %v4978, 16
        %v5199 = vrot.slane %v5197, 5
        %v5200 = vor.u32 %v5196, %v5199
        %v5201 = vrot.slane %v5200, 4
        %v5203 = vshll.u32 %v4979, 16
        %v5205 = vrot.slane %v5203, 5
        %v5206 = vsel %vm4982, %v5201, %v5205
        %v5207 = vld [vmem:[%s3 + $0x80] sm:$0xf]
        %v5208 = vld [vmem:[%s3 + $0x84] sm:$0xf]
        %v5209 = vld [vmem:[%s3 + $0x88] sm:$0xf]
        %v5210 = vld [vmem:[%s3 + $0x8c] sm:$0xf]
        %v5211 = vld [vmem:[%s3 + $0x90] sm:$0xf]
        %v5212 = vld [vmem:[%s3 + $0x94] sm:$0xf]
        %v5213 = vld [vmem:[%s3 + $0x98] sm:$0xf]
        %v5214 = vld [vmem:[%s3 + $0x9c] sm:$0xf]
        %v5215 = vld [vmem:[%s3 + $0xa0] sm:$0xf]
        %v5216 = vld [vmem:[%s3 + $0xa4] sm:$0xf]
        %v5217 = vld [vmem:[%s3 + $0xa8] sm:$0xf]
        %v5218 = vld [vmem:[%s3 + $0xac] sm:$0xf]
        %v5219 = vld [vmem:[%s3 + $0xb0] sm:$0xf]
        %v5220 = vld [vmem:[%s3 + $0xb4] sm:$0xf]
        %v5221 = vld [vmem:[%s3 + $0xb8] sm:$0xf]
        %v5222 = vld [vmem:[%s3 + $0xbc] sm:$0xf]
        %v5223 = vld [vmem:[%s3 + $0xc0] sm:$0xf]
        %v5224 = vld [vmem:[%s3 + $0xc4] sm:$0xf]
        %v5225 = vld [vmem:[%s3 + $0xc8] sm:$0xf]
        %v5226 = vld [vmem:[%s3 + $0xcc] sm:$0xf]
        %v5227 = vld [vmem:[%s3 + $0xd0] sm:$0xf]
        %v5228 = vld [vmem:[%s3 + $0xd4] sm:$0xf]
        %v5229 = vld [vmem:[%s3 + $0xd8] sm:$0xf]
        %v5230 = vld [vmem:[%s3 + $0xdc] sm:$0xf]
        %v5231 = vld [vmem:[%s3 + $0xe0] sm:$0xf]
        %v5232 = vld [vmem:[%s3 + $0xe4] sm:$0xf]
        %v5233 = vld [vmem:[%s3 + $0xe8] sm:$0xf]
        %v5234 = vld [vmem:[%s3 + $0xec] sm:$0xf]
        %v5235 = vld [vmem:[%s3 + $0xf0] sm:$0xf]
        %v5236 = vld [vmem:[%s3 + $0xf4] sm:$0xf]
        %v5237 = vld [vmem:[%s3 + $0xf8] sm:$0xf]
        %v5238 = vld [vmem:[%s3 + $0xfc] sm:$0xf]
        %v5239 = vunpack.c.l.b16 %v4996
        %v5240 = vunpack.c.h.b16 %v4996
        %v5241 = vunpack.c.l.b16 %v5010
        %v5242 = vunpack.c.h.b16 %v5010
        %v5243 = vunpack.c.l.b16 %v5024
        %v5244 = vunpack.c.h.b16 %v5024
        %v5245 = vunpack.c.l.b16 %v5038
        %v5246 = vunpack.c.h.b16 %v5038
        %v5247 = vunpack.c.l.b16 %v5052
        %v5248 = vunpack.c.h.b16 %v5052
        %v5249 = vunpack.c.l.b16 %v5066
        %v5250 = vunpack.c.h.b16 %v5066
        %v5251 = vunpack.c.l.b16 %v5080
        %v5252 = vunpack.c.h.b16 %v5080
        %v5253 = vunpack.c.l.b16 %v5094
        %v5254 = vunpack.c.h.b16 %v5094
        %v5255 = vunpack.c.l.b16 %v5108
        %v5256 = vunpack.c.h.b16 %v5108
        %v5257 = vunpack.c.l.b16 %v5122
        %v5258 = vunpack.c.h.b16 %v5122
        %v5259 = vunpack.c.l.b16 %v5136
        %v5260 = vunpack.c.h.b16 %v5136
        %v5261 = vunpack.c.l.b16 %v5150
        %v5262 = vunpack.c.h.b16 %v5150
        %v5263 = vunpack.c.l.b16 %v5164
        %v5264 = vunpack.c.h.b16 %v5164
        %v5265 = vunpack.c.l.b16 %v5178
        %v5266 = vunpack.c.h.b16 %v5178
        %v5267 = vunpack.c.l.b16 %v5192
        %v5268 = vunpack.c.h.b16 %v5192
        %v5269 = vunpack.c.l.b16 %v5206
        %v5270 = vunpack.c.h.b16 %v5206
        %v5271 = vpack.c.b16 %v5241, %v5239
        %v5272 = vpack.c.b16 %v5242, %v5240
        %v5273 = vpack.c.b16 %v5245, %v5243
        %v5274 = vpack.c.b16 %v5246, %v5244
        %v5275 = vpack.c.b16 %v5249, %v5247
        %v5276 = vpack.c.b16 %v5250, %v5248
        %v5277 = vpack.c.b16 %v5253, %v5251
        %v5278 = vpack.c.b16 %v5254, %v5252
        %v5279 = vpack.c.b16 %v5257, %v5255
        %v5280 = vpack.c.b16 %v5258, %v5256
        %v5281 = vpack.c.b16 %v5261, %v5259
        %v5282 = vpack.c.b16 %v5262, %v5260
        %v5283 = vpack.c.b16 %v5265, %v5263
        %v5284 = vpack.c.b16 %v5266, %v5264
        %v5285 = vpack.c.b16 %v5269, %v5267
        %v5286 = vpack.c.b16 %v5270, %v5268
        %v5335 = vunpack.c.l.b16 %v5207
        %v5336 = vunpack.c.l.b16 %v5208
        %v5337 = vunpack.c.l.b16 %v5209
        %v5338 = vunpack.c.l.b16 %v5210
        %v5339 = vunpack.c.l.b16 %v5211
        %v5340 = vunpack.c.l.b16 %v5212
        %v5341 = vunpack.c.l.b16 %v5213
        %v5342 = vunpack.c.l.b16 %v5214
        %v5343 = vunpack.c.l.b16 %v5215
        %v5344 = vunpack.c.l.b16 %v5216
        %v5345 = vunpack.c.l.b16 %v5217
        %v5346 = vunpack.c.l.b16 %v5218
        %v5347 = vunpack.c.l.b16 %v5219
        %v5348 = vunpack.c.l.b16 %v5220
        %v5349 = vunpack.c.l.b16 %v5221
        %v5350 = vunpack.c.l.b16 %v5222
        %v5351 = vunpack.c.l.b16 %v5223
        %v5352 = vunpack.c.l.b16 %v5224
        %v5353 = vunpack.c.l.b16 %v5225
        %v5354 = vunpack.c.l.b16 %v5226
        %v5355 = vunpack.c.l.b16 %v5227
        %v5356 = vunpack.c.l.b16 %v5228
        %v5357 = vunpack.c.l.b16 %v5229
        %v5358 = vunpack.c.l.b16 %v5230
        %v5359 = vunpack.c.l.b16 %v5231
        %v5360 = vunpack.c.l.b16 %v5232
        %v5361 = vunpack.c.l.b16 %v5233
        %v5362 = vunpack.c.l.b16 %v5234
        %v5363 = vunpack.c.l.b16 %v5235
        %v5364 = vunpack.c.l.b16 %v5236
        %v5365 = vunpack.c.l.b16 %v5237
        %v5366 = vunpack.c.l.b16 %v5238
        %v5367 = vpack.c.b16 %v5336, %v5335
        %v5368 = vpack.c.b16 %v5338, %v5337
        %v5369 = vpack.c.b16 %v5340, %v5339
        %v5370 = vpack.c.b16 %v5342, %v5341
        %v5371 = vpack.c.b16 %v5344, %v5343
        %v5372 = vpack.c.b16 %v5346, %v5345
        %v5373 = vpack.c.b16 %v5348, %v5347
        %v5374 = vpack.c.b16 %v5350, %v5349
        %v5375 = vpack.c.b16 %v5352, %v5351
        %v5376 = vpack.c.b16 %v5354, %v5353
        %v5377 = vpack.c.b16 %v5356, %v5355
        %v5378 = vpack.c.b16 %v5358, %v5357
        %v5379 = vpack.c.b16 %v5360, %v5359
        %v5380 = vpack.c.b16 %v5362, %v5361
        %v5381 = vpack.c.b16 %v5364, %v5363
        %v5382 = vpack.c.b16 %v5366, %v5365
        %5399 = vmatprep.subr.bf16.mxu0 0
        %5400 = vmatpush1.bf16.msra.mxu0 %v5374
        %5401 = vmatprep.subr.bf16.mxu0 0
        %5402 = vmatpush1.bf16.msra.mxu0 %v5373
        %5403 = vmatprep.subr.bf16.mxu0 0
        %5404 = vmatpush1.bf16.msra.mxu0 %v5372
        %5405 = vmatprep.subr.bf16.mxu0 0
        %5406 = vmatpush1.bf16.msra.mxu0 %v5371
        %5407 = vmatprep.subr.bf16.mxu0 0
        %5408 = vmatpush1.bf16.msra.mxu0 %v5370
        %5409 = vmatprep.subr.bf16.mxu0 0
        %5410 = vmatpush1.bf16.msra.mxu0 %v5369
        %5411 = vmatprep.subr.bf16.mxu0 0
        %5412 = vmatpush1.bf16.msra.mxu0 %v5368
        %5413 = vmatprep.subr.bf16.mxu0 0
        %5414 = vmatpush1.bf16.msra.mxu0 %v5367
        %5415 = vmatprep.subr.bf16.mxu0 0
        %5416 = vmatpush2.bf16.msra.mxu0 %v5382
        %5417 = vmatprep.subr.bf16.mxu0 0
        %5418 = vmatpush2.bf16.msra.mxu0 %v5381
        %5419 = vmatprep.subr.bf16.mxu0 0
        %5420 = vmatpush2.bf16.msra.mxu0 %v5380
        %5421 = vmatprep.subr.bf16.mxu0 0
        %5422 = vmatpush2.bf16.msra.mxu0 %v5379
        %5423 = vmatprep.subr.bf16.mxu0 0
        %5424 = vmatpush2.bf16.msra.mxu0 %v5378
        %5425 = vmatprep.subr.bf16.mxu0 0
        %5426 = vmatpush2.bf16.msra.mxu0 %v5377
        %5427 = vmatprep.subr.bf16.mxu0 0
        %5428 = vmatpush2.bf16.msra.mxu0 %v5376
        %5429 = vmatprep.subr.bf16.mxu0 0
        %5430 = vmatpush2.bf16.msra.mxu0 %v5375
        %5431 = vmatprep.mubr.bf16.mxu0 %v5272
        %5432 = vmatmul.mubr.bf16.gmra.mxu0 %v5271
        %v5433 = vpop.f32.mrf.mxu0
        %v5434 = vadd.f32 0.0, %v5433
        %v5435 = vpop.f32.mrf.mxu0
        %v5436 = vpop.f32.mrf.mxu0
        %v5437 = vadd.f32 0.0, %v5436
        %v5438 = vpop.f32.mrf.mxu0
        %5439 = vmatprep.mubr.bf16.mxu0 %v5274
        %5440 = vmatmul.mubr.bf16.gmra.mxu0 %v5273
        %v5441 = vpop.f32.mrf.mxu0
        %v5442 = vadd.f32 0.0, %v5441
        %v5443 = vpop.f32.mrf.mxu0
        %v5444 = vpop.f32.mrf.mxu0
        %v5445 = vadd.f32 0.0, %v5444
        %v5446 = vpop.f32.mrf.mxu0
        %5447 = vmatprep.mubr.bf16.mxu0 %v5276
        %5448 = vmatmul.mubr.bf16.gmra.mxu0 %v5275
        %v5449 = vpop.f32.mrf.mxu0
        %v5450 = vadd.f32 0.0, %v5449
        %v5451 = vpop.f32.mrf.mxu0
        %v5452 = vpop.f32.mrf.mxu0
        %v5453 = vadd.f32 0.0, %v5452
        %v5454 = vpop.f32.mrf.mxu0
        %5455 = vmatprep.mubr.bf16.mxu0 %v5278
        %5456 = vmatmul.mubr.bf16.gmra.mxu0 %v5277
        %v5457 = vpop.f32.mrf.mxu0
        %v5458 = vadd.f32 0.0, %v5457
        %v5459 = vpop.f32.mrf.mxu0
        %v5460 = vpop.f32.mrf.mxu0
        %v5461 = vadd.f32 0.0, %v5460
        %v5462 = vpop.f32.mrf.mxu0
        %5463 = vmatprep.mubr.bf16.mxu0 %v5280
        %5464 = vmatmul.mubr.bf16.gmra.mxu0 %v5279
        %v5465 = vpop.f32.mrf.mxu0
        %v5466 = vadd.f32 0.0, %v5465
        %v5467 = vpop.f32.mrf.mxu0
        %v5468 = vpop.f32.mrf.mxu0
        %v5469 = vadd.f32 0.0, %v5468
        %v5470 = vpop.f32.mrf.mxu0
        %5471 = vmatprep.mubr.bf16.mxu0 %v5282
        %5472 = vmatmul.mubr.bf16.gmra.mxu0 %v5281
        %v5473 = vpop.f32.mrf.mxu0
        %v5474 = vadd.f32 0.0, %v5473
        %v5475 = vpop.f32.mrf.mxu0
        %v5476 = vpop.f32.mrf.mxu0
        %v5477 = vadd.f32 0.0, %v5476
        %v5478 = vpop.f32.mrf.mxu0
        %5479 = vmatprep.mubr.bf16.mxu0 %v5284
        %5480 = vmatmul.mubr.bf16.gmra.mxu0 %v5283
        %v5481 = vpop.f32.mrf.mxu0
        %v5482 = vadd.f32 0.0, %v5481
        %v5483 = vpop.f32.mrf.mxu0
        %v5484 = vpop.f32.mrf.mxu0
        %v5485 = vadd.f32 0.0, %v5484
        %v5486 = vpop.f32.mrf.mxu0
        %5487 = vmatprep.mubr.bf16.mxu0 %v5286
        %5488 = vmatmul.mubr.bf16.gmra.mxu0 %v5285
        %v5489 = vpop.f32.mrf.mxu0
        %v5490 = vadd.f32 0.0, %v5489
        %v5491 = vpop.f32.mrf.mxu0
        %v5492 = vpop.f32.mrf.mxu0
        %v5493 = vadd.f32 0.0, %v5492
        %v5494 = vpop.f32.mrf.mxu0
        %5495 = vdwg.mxu0
        %v5496 = vpack.c.b16 %v4854, %v4852
        %v5497 = vpack.c.b16 %v4855, %v4853
        %v5498 = vpack.c.b16 %v4858, %v4856
        %v5499 = vpack.c.b16 %v4859, %v4857
        %v5500 = vpack.c.b16 %v4862, %v4860
        %v5501 = vpack.c.b16 %v4863, %v4861
        %v5502 = vpack.c.b16 %v4866, %v4864
        %v5503 = vpack.c.b16 %v4867, %v4865
        %v5504 = vpack.c.b16 %v4870, %v4868
        %v5505 = vpack.c.b16 %v4871, %v4869
        %v5506 = vpack.c.b16 %v4874, %v4872
        %v5507 = vpack.c.b16 %v4875, %v4873
        %v5508 = vpack.c.b16 %v4878, %v4876
        %v5509 = vpack.c.b16 %v4879, %v4877
        %v5510 = vpack.c.b16 %v4882, %v4880
        %v5511 = vpack.c.b16 %v4883, %v4881
        %v5560 = vunpack.c.l.b16 %v4884
        %v5561 = vunpack.c.l.b16 %v4885
        %v5562 = vunpack.c.l.b16 %v4886
        %v5563 = vunpack.c.l.b16 %v4887
        %v5564 = vunpack.c.l.b16 %v4888
        %v5565 = vunpack.c.l.b16 %v4889
        %v5566 = vunpack.c.l.b16 %v4890
        %v5567 = vunpack.c.l.b16 %v4891
        %v5568 = vunpack.c.l.b16 %v4892
        %v5569 = vunpack.c.l.b16 %v4893
        %v5570 = vunpack.c.l.b16 %v4894
        %v5571 = vunpack.c.l.b16 %v4895
        %v5572 = vunpack.c.l.b16 %v4896
        %v5573 = vunpack.c.l.b16 %v4897
        %v5574 = vunpack.c.l.b16 %v4898
        %v5575 = vunpack.c.l.b16 %v4899
        %v5576 = vunpack.c.l.b16 %v4900
        %v5577 = vunpack.c.l.b16 %v4901
        %v5578 = vunpack.c.l.b16 %v4902
        %v5579 = vunpack.c.l.b16 %v4903
        %v5580 = vunpack.c.l.b16 %v4904
        %v5581 = vunpack.c.l.b16 %v4905
        %v5582 = vunpack.c.l.b16 %v4906
        %v5583 = vunpack.c.l.b16 %v4907
        %v5584 = vunpack.c.l.b16 %v4908
        %v5585 = vunpack.c.l.b16 %v4909
        %v5586 = vunpack.c.l.b16 %v4910
        %v5587 = vunpack.c.l.b16 %v4911
        %v5588 = vunpack.c.l.b16 %v4912
        %v5589 = vunpack.c.l.b16 %v4913
        %v5590 = vunpack.c.l.b16 %v4914
        %v5591 = vunpack.c.l.b16 %v4915
        %v5592 = vpack.c.b16 %v5561, %v5560
        %v5593 = vpack.c.b16 %v5563, %v5562
        %v5594 = vpack.c.b16 %v5565, %v5564
        %v5595 = vpack.c.b16 %v5567, %v5566
        %v5596 = vpack.c.b16 %v5569, %v5568
        %v5597 = vpack.c.b16 %v5571, %v5570
        %v5598 = vpack.c.b16 %v5573, %v5572
        %v5599 = vpack.c.b16 %v5575, %v5574
        %v5600 = vpack.c.b16 %v5577, %v5576
        %v5601 = vpack.c.b16 %v5579, %v5578
        %v5602 = vpack.c.b16 %v5581, %v5580
        %v5603 = vpack.c.b16 %v5583, %v5582
        %v5604 = vpack.c.b16 %v5585, %v5584
        %v5605 = vpack.c.b16 %v5587, %v5586
        %v5606 = vpack.c.b16 %v5589, %v5588
        %v5607 = vpack.c.b16 %v5591, %v5590
        %5624 = vmatprep.subr.bf16.mxu0 0
        %5625 = vmatpush1.bf16.msra.mxu0 %v5599
        %5626 = vmatprep.subr.bf16.mxu0 0
        %5627 = vmatpush1.bf16.msra.mxu0 %v5598
        %5628 = vmatprep.subr.bf16.mxu0 0
        %5629 = vmatpush1.bf16.msra.mxu0 %v5597
        %5630 = vmatprep.subr.bf16.mxu0 0
        %5631 = vmatpush1.bf16.msra.mxu0 %v5596
        %5632 = vmatprep.subr.bf16.mxu0 0
        %5633 = vmatpush1.bf16.msra.mxu0 %v5595
        %5634 = vmatprep.subr.bf16.mxu0 0
        %5635 = vmatpush1.bf16.msra.mxu0 %v5594
        %5636 = vmatprep.subr.bf16.mxu0 0
        %5637 = vmatpush1.bf16.msra.mxu0 %v5593
        %5638 = vmatprep.subr.bf16.mxu0 0
        %5639 = vmatpush1.bf16.msra.mxu0 %v5592
        %5640 = vmatprep.subr.bf16.mxu0 0
        %5641 = vmatpush2.bf16.msra.mxu0 %v5607
        %5642 = vmatprep.subr.bf16.mxu0 0
        %5643 = vmatpush2.bf16.msra.mxu0 %v5606
        %5644 = vmatprep.subr.bf16.mxu0 0
        %5645 = vmatpush2.bf16.msra.mxu0 %v5605
        %5646 = vmatprep.subr.bf16.mxu0 0
        %5647 = vmatpush2.bf16.msra.mxu0 %v5604
        %5648 = vmatprep.subr.bf16.mxu0 0
        %5649 = vmatpush2.bf16.msra.mxu0 %v5603
        %5650 = vmatprep.subr.bf16.mxu0 0
        %5651 = vmatpush2.bf16.msra.mxu0 %v5602
        %5652 = vmatprep.subr.bf16.mxu0 0
        %5653 = vmatpush2.bf16.msra.mxu0 %v5601
        %5654 = vmatprep.subr.bf16.mxu0 0
        %5655 = vmatpush2.bf16.msra.mxu0 %v5600
        %5656 = vmatprep.mubr.bf16.mxu0 %v5497
        %5657 = vmatmul.mubr.bf16.gmra.mxu0 %v5496
        %v5658 = vpop.f32.mrf.mxu0
        %v5659 = vadd.f32 %v5434, %v5658
        %v5660 = vpop.f32.mrf.mxu0
        %v5661 = vpop.f32.mrf.mxu0
        %v5662 = vadd.f32 %v5437, %v5661
        %v5663 = vpop.f32.mrf.mxu0
        %5664 = vmatprep.mubr.bf16.mxu0 %v5499
        %5665 = vmatmul.mubr.bf16.gmra.mxu0 %v5498
        %v5666 = vpop.f32.mrf.mxu0
        %v5667 = vadd.f32 %v5442, %v5666
        %v5668 = vpop.f32.mrf.mxu0
        %v5669 = vpop.f32.mrf.mxu0
        %v5670 = vadd.f32 %v5445, %v5669
        %v5671 = vpop.f32.mrf.mxu0
        %5672 = vmatprep.mubr.bf16.mxu0 %v5501
        %5673 = vmatmul.mubr.bf16.gmra.mxu0 %v5500
        %v5674 = vpop.f32.mrf.mxu0
        %v5675 = vadd.f32 %v5450, %v5674
        %v5676 = vpop.f32.mrf.mxu0
        %v5677 = vpop.f32.mrf.mxu0
        %v5678 = vadd.f32 %v5453, %v5677
        %v5679 = vpop.f32.mrf.mxu0
        %5680 = vmatprep.mubr.bf16.mxu0 %v5503
        %5681 = vmatmul.mubr.bf16.gmra.mxu0 %v5502
        %v5682 = vpop.f32.mrf.mxu0
        %v5683 = vadd.f32 %v5458, %v5682
        %v5684 = vpop.f32.mrf.mxu0
        %v5685 = vpop.f32.mrf.mxu0
        %v5686 = vadd.f32 %v5461, %v5685
        %v5687 = vpop.f32.mrf.mxu0
        %5688 = vmatprep.mubr.bf16.mxu0 %v5505
        %5689 = vmatmul.mubr.bf16.gmra.mxu0 %v5504
        %v5690 = vpop.f32.mrf.mxu0
        %v5691 = vadd.f32 %v5466, %v5690
        %v5692 = vpop.f32.mrf.mxu0
        %v5693 = vpop.f32.mrf.mxu0
        %v5694 = vadd.f32 %v5469, %v5693
        %v5695 = vpop.f32.mrf.mxu0
        %5696 = vmatprep.mubr.bf16.mxu0 %v5507
        %5697 = vmatmul.mubr.bf16.gmra.mxu0 %v5506
        %v5698 = vpop.f32.mrf.mxu0
        %v5699 = vadd.f32 %v5474, %v5698
        %v5700 = vpop.f32.mrf.mxu0
        %v5701 = vpop.f32.mrf.mxu0
        %v5702 = vadd.f32 %v5477, %v5701
        %v5703 = vpop.f32.mrf.mxu0
        %5704 = vmatprep.mubr.bf16.mxu0 %v5509
        %5705 = vmatmul.mubr.bf16.gmra.mxu0 %v5508
        %v5706 = vpop.f32.mrf.mxu0
        %v5707 = vadd.f32 %v5482, %v5706
        %v5708 = vpop.f32.mrf.mxu0
        %v5709 = vpop.f32.mrf.mxu0
        %v5710 = vadd.f32 %v5485, %v5709
        %v5711 = vpop.f32.mrf.mxu0
        %5712 = vmatprep.mubr.bf16.mxu0 %v5511
        %5713 = vmatmul.mubr.bf16.gmra.mxu0 %v5510
        %v5714 = vpop.f32.mrf.mxu0
        %v5715 = vadd.f32 %v5490, %v5714
        %v5716 = vpop.f32.mrf.mxu0
        %v5717 = vpop.f32.mrf.mxu0
        %v5718 = vadd.f32 %v5493, %v5717
        %v5719 = vpop.f32.mrf.mxu0
        %5720 = vdwg.mxu0
        %vm5721 = vcmask 1042432
        %vm5722 = vcmask 1046532
        %vm5723 = vmor %vm5721, %vm5722
        %v5724 = vrot.slane %v4948, 5
        %v5725 = vrot.slane %v5724, 4
        %v5726 = vrot.slane %v4949, 5
        %v5727 = vsel %vm5723, %v5725, %v5726
        %v5728 = vrot.slane %v4950, 5
        %v5729 = vrot.slane %v5728, 4
        %v5730 = vrot.slane %v4951, 5
        %v5731 = vsel %vm5723, %v5729, %v5730
        %v5732 = vrot.slane %v4952, 5
        %v5733 = vrot.slane %v5732, 4
        %v5734 = vrot.slane %v4953, 5
        %v5735 = vsel %vm5723, %v5733, %v5734
        %v5736 = vrot.slane %v4954, 5
        %v5737 = vrot.slane %v5736, 4
        %v5738 = vrot.slane %v4955, 5
        %v5739 = vsel %vm5723, %v5737, %v5738
        %v5740 = vrot.slane %v4956, 5
        %v5741 = vrot.slane %v5740, 4
        %v5742 = vrot.slane %v4957, 5
        %v5743 = vsel %vm5723, %v5741, %v5742
        %v5744 = vrot.slane %v4958, 5
        %v5745 = vrot.slane %v5744, 4
        %v5746 = vrot.slane %v4959, 5
        %v5747 = vsel %vm5723, %v5745, %v5746
        %v5748 = vrot.slane %v4960, 5
        %v5749 = vrot.slane %v5748, 4
        %v5750 = vrot.slane %v4961, 5
        %v5751 = vsel %vm5723, %v5749, %v5750
        %v5752 = vrot.slane %v4962, 5
        %v5753 = vrot.slane %v5752, 4
        %v5754 = vrot.slane %v4963, 5
        %v5755 = vsel %vm5723, %v5753, %v5754
        %v5756 = vrot.slane %v4964, 5
        %v5757 = vrot.slane %v5756, 4
        %v5758 = vrot.slane %v4965, 5
        %v5759 = vsel %vm5723, %v5757, %v5758
        %v5760 = vrot.slane %v4966, 5
        %v5761 = vrot.slane %v5760, 4
        %v5762 = vrot.slane %v4967, 5
        %v5763 = vsel %vm5723, %v5761, %v5762
        %v5764 = vrot.slane %v4968, 5
        %v5765 = vrot.slane %v5764, 4
        %v5766 = vrot.slane %v4969, 5
        %v5767 = vsel %vm5723, %v5765, %v5766
        %v5768 = vrot.slane %v4970, 5
        %v5769 = vrot.slane %v5768, 4
        %v5770 = vrot.slane %v4971, 5
        %v5771 = vsel %vm5723, %v5769, %v5770
        %v5772 = vrot.slane %v4972, 5
        %v5773 = vrot.slane %v5772, 4
        %v5774 = vrot.slane %v4973, 5
        %v5775 = vsel %vm5723, %v5773, %v5774
        %v5776 = vrot.slane %v4974, 5
        %v5777 = vrot.slane %v5776, 4
        %v5778 = vrot.slane %v4975, 5
        %v5779 = vsel %vm5723, %v5777, %v5778
        %v5780 = vrot.slane %v4976, 5
        %v5781 = vrot.slane %v5780, 4
        %v5782 = vrot.slane %v4977, 5
        %v5783 = vsel %vm5723, %v5781, %v5782
        %v5784 = vrot.slane %v4978, 5
        %v5785 = vrot.slane %v5784, 4
        %v5786 = vrot.slane %v4979, 5
        %v5787 = vsel %vm5723, %v5785, %v5786
        %v5788 = vld [vmem:[%s3 + $0x100] sm:$0xf]
        %v5789 = vld [vmem:[%s3 + $0x104] sm:$0xf]
        %v5790 = vld [vmem:[%s3 + $0x108] sm:$0xf]
        %v5791 = vld [vmem:[%s3 + $0x10c] sm:$0xf]
        %v5792 = vld [vmem:[%s3 + $0x110] sm:$0xf]
        %v5793 = vld [vmem:[%s3 + $0x114] sm:$0xf]
        %v5794 = vld [vmem:[%s3 + $0x118] sm:$0xf]
        %v5795 = vld [vmem:[%s3 + $0x11c] sm:$0xf]
        %v5796 = vld [vmem:[%s3 + $0x120] sm:$0xf]
        %v5797 = vld [vmem:[%s3 + $0x124] sm:$0xf]
        %v5798 = vld [vmem:[%s3 + $0x128] sm:$0xf]
        %v5799 = vld [vmem:[%s3 + $0x12c] sm:$0xf]
        %v5800 = vld [vmem:[%s3 + $0x130] sm:$0xf]
        %v5801 = vld [vmem:[%s3 + $0x134] sm:$0xf]
        %v5802 = vld [vmem:[%s3 + $0x138] sm:$0xf]
        %v5803 = vld [vmem:[%s3 + $0x13c] sm:$0xf]
        %v5804 = vld [vmem:[%s3 + $0x140] sm:$0xf]
        %v5805 = vld [vmem:[%s3 + $0x144] sm:$0xf]
        %v5806 = vld [vmem:[%s3 + $0x148] sm:$0xf]
        %v5807 = vld [vmem:[%s3 + $0x14c] sm:$0xf]
        %v5808 = vld [vmem:[%s3 + $0x150] sm:$0xf]
        %v5809 = vld [vmem:[%s3 + $0x154] sm:$0xf]
        %v5810 = vld [vmem:[%s3 + $0x158] sm:$0xf]
        %v5811 = vld [vmem:[%s3 + $0x15c] sm:$0xf]
        %v5812 = vld [vmem:[%s3 + $0x160] sm:$0xf]
        %v5813 = vld [vmem:[%s3 + $0x164] sm:$0xf]
        %v5814 = vld [vmem:[%s3 + $0x168] sm:$0xf]
        %v5815 = vld [vmem:[%s3 + $0x16c] sm:$0xf]
        %v5816 = vld [vmem:[%s3 + $0x170] sm:$0xf]
        %v5817 = vld [vmem:[%s3 + $0x174] sm:$0xf]
        %v5818 = vld [vmem:[%s3 + $0x178] sm:$0xf]
        %v5819 = vld [vmem:[%s3 + $0x17c] sm:$0xf]
        %v5820 = vunpack.c.l.b16 %v5727
        %v5821 = vunpack.c.h.b16 %v5727
        %v5822 = vunpack.c.l.b16 %v5731
        %v5823 = vunpack.c.h.b16 %v5731
        %v5824 = vunpack.c.l.b16 %v5735
        %v5825 = vunpack.c.h.b16 %v5735
        %v5826 = vunpack.c.l.b16 %v5739
        %v5827 = vunpack.c.h.b16 %v5739
        %v5828 = vunpack.c.l.b16 %v5743
        %v5829 = vunpack.c.h.b16 %v5743
        %v5830 = vunpack.c.l.b16 %v5747
        %v5831 = vunpack.c.h.b16 %v5747
        %v5832 = vunpack.c.l.b16 %v5751
        %v5833 = vunpack.c.h.b16 %v5751
        %v5834 = vunpack.c.l.b16 %v5755
        %v5835 = vunpack.c.h.b16 %v5755
        %v5836 = vunpack.c.l.b16 %v5759
        %v5837 = vunpack.c.h.b16 %v5759
        %v5838 = vunpack.c.l.b16 %v5763
        %v5839 = vunpack.c.h.b16 %v5763
        %v5840 = vunpack.c.l.b16 %v5767
        %v5841 = vunpack.c.h.b16 %v5767
        %v5842 = vunpack.c.l.b16 %v5771
        %v5843 = vunpack.c.h.b16 %v5771
        %v5844 = vunpack.c.l.b16 %v5775
        %v5845 = vunpack.c.h.b16 %v5775
        %v5846 = vunpack.c.l.b16 %v5779
        %v5847 = vunpack.c.h.b16 %v5779
        %v5848 = vunpack.c.l.b16 %v5783
        %v5849 = vunpack.c.h.b16 %v5783
        %v5850 = vunpack.c.l.b16 %v5787
        %v5851 = vunpack.c.h.b16 %v5787
        %v5852 = vpack.c.b16 %v5822, %v5820
        %v5853 = vpack.c.b16 %v5823, %v5821
        %v5854 = vpack.c.b16 %v5826, %v5824
        %v5855 = vpack.c.b16 %v5827, %v5825
        %v5856 = vpack.c.b16 %v5830, %v5828
        %v5857 = vpack.c.b16 %v5831, %v5829
        %v5858 = vpack.c.b16 %v5834, %v5832
        %v5859 = vpack.c.b16 %v5835, %v5833
        %v5860 = vpack.c.b16 %v5838, %v5836
        %v5861 = vpack.c.b16 %v5839, %v5837
        %v5862 = vpack.c.b16 %v5842, %v5840
        %v5863 = vpack.c.b16 %v5843, %v5841
        %v5864 = vpack.c.b16 %v5846, %v5844
        %v5865 = vpack.c.b16 %v5847, %v5845
        %v5866 = vpack.c.b16 %v5850, %v5848
        %v5867 = vpack.c.b16 %v5851, %v5849
        %v5916 = vunpack.c.l.b16 %v5788
        %v5917 = vunpack.c.l.b16 %v5789
        %v5918 = vunpack.c.l.b16 %v5790
        %v5919 = vunpack.c.l.b16 %v5791
        %v5920 = vunpack.c.l.b16 %v5792
        %v5921 = vunpack.c.l.b16 %v5793
        %v5922 = vunpack.c.l.b16 %v5794
        %v5923 = vunpack.c.l.b16 %v5795
        %v5924 = vunpack.c.l.b16 %v5796
        %v5925 = vunpack.c.l.b16 %v5797
        %v5926 = vunpack.c.l.b16 %v5798
        %v5927 = vunpack.c.l.b16 %v5799
        %v5928 = vunpack.c.l.b16 %v5800
        %v5929 = vunpack.c.l.b16 %v5801
        %v5930 = vunpack.c.l.b16 %v5802
        %v5931 = vunpack.c.l.b16 %v5803
        %v5932 = vunpack.c.l.b16 %v5804
        %v5933 = vunpack.c.l.b16 %v5805
        %v5934 = vunpack.c.l.b16 %v5806
        %v5935 = vunpack.c.l.b16 %v5807
        %v5936 = vunpack.c.l.b16 %v5808
        %v5937 = vunpack.c.l.b16 %v5809
        %v5938 = vunpack.c.l.b16 %v5810
        %v5939 = vunpack.c.l.b16 %v5811
        %v5940 = vunpack.c.l.b16 %v5812
        %v5941 = vunpack.c.l.b16 %v5813
        %v5942 = vunpack.c.l.b16 %v5814
        %v5943 = vunpack.c.l.b16 %v5815
        %v5944 = vunpack.c.l.b16 %v5816
        %v5945 = vunpack.c.l.b16 %v5817
        %v5946 = vunpack.c.l.b16 %v5818
        %v5947 = vunpack.c.l.b16 %v5819
        %v5948 = vpack.c.b16 %v5917, %v5916
        %v5949 = vpack.c.b16 %v5919, %v5918
        %v5950 = vpack.c.b16 %v5921, %v5920
        %v5951 = vpack.c.b16 %v5923, %v5922
        %v5952 = vpack.c.b16 %v5925, %v5924
        %v5953 = vpack.c.b16 %v5927, %v5926
        %v5954 = vpack.c.b16 %v5929, %v5928
        %v5955 = vpack.c.b16 %v5931, %v5930
        %v5956 = vpack.c.b16 %v5933, %v5932
        %v5957 = vpack.c.b16 %v5935, %v5934
        %v5958 = vpack.c.b16 %v5937, %v5936
        %v5959 = vpack.c.b16 %v5939, %v5938
        %v5960 = vpack.c.b16 %v5941, %v5940
        %v5961 = vpack.c.b16 %v5943, %v5942
        %v5962 = vpack.c.b16 %v5945, %v5944
        %v5963 = vpack.c.b16 %v5947, %v5946
        %5980 = vmatprep.subr.bf16.mxu0 0
        %5981 = vmatpush1.bf16.msra.mxu0 %v5955
        %5982 = vmatprep.subr.bf16.mxu0 0
        %5983 = vmatpush1.bf16.msra.mxu0 %v5954
        %5984 = vmatprep.subr.bf16.mxu0 0
        %5985 = vmatpush1.bf16.msra.mxu0 %v5953
        %5986 = vmatprep.subr.bf16.mxu0 0
        %5987 = vmatpush1.bf16.msra.mxu0 %v5952
        %5988 = vmatprep.subr.bf16.mxu0 0
        %5989 = vmatpush1.bf16.msra.mxu0 %v5951
        %5990 = vmatprep.subr.bf16.mxu0 0
        %5991 = vmatpush1.bf16.msra.mxu0 %v5950
        %5992 = vmatprep.subr.bf16.mxu0 0
        %5993 = vmatpush1.bf16.msra.mxu0 %v5949
        %5994 = vmatprep.subr.bf16.mxu0 0
        %5995 = vmatpush1.bf16.msra.mxu0 %v5948
        %5996 = vmatprep.subr.bf16.mxu0 0
        %5997 = vmatpush2.bf16.msra.mxu0 %v5963
        %5998 = vmatprep.subr.bf16.mxu0 0
        %5999 = vmatpush2.bf16.msra.mxu0 %v5962
        %6000 = vmatprep.subr.bf16.mxu0 0
        %6001 = vmatpush2.bf16.msra.mxu0 %v5961
        %6002 = vmatprep.subr.bf16.mxu0 0
        %6003 = vmatpush2.bf16.msra.mxu0 %v5960
        %6004 = vmatprep.subr.bf16.mxu0 0
        %6005 = vmatpush2.bf16.msra.mxu0 %v5959
        %6006 = vmatprep.subr.bf16.mxu0 0
        %6007 = vmatpush2.bf16.msra.mxu0 %v5958
        %6008 = vmatprep.subr.bf16.mxu0 0
        %6009 = vmatpush2.bf16.msra.mxu0 %v5957
        %6010 = vmatprep.subr.bf16.mxu0 0
        %6011 = vmatpush2.bf16.msra.mxu0 %v5956
        %6012 = vmatprep.mubr.bf16.mxu0 %v5853
        %6013 = vmatmul.mubr.bf16.gmra.mxu0 %v5852
        %v6014 = vpop.f32.mrf.mxu0
        %v6015 = vadd.f32 0.0, %v6014
        %v6016 = vpop.f32.mrf.mxu0
        %v6017 = vpop.f32.mrf.mxu0
        %v6018 = vadd.f32 0.0, %v6017
        %v6019 = vpop.f32.mrf.mxu0
        %6020 = vmatprep.mubr.bf16.mxu0 %v5855
        %6021 = vmatmul.mubr.bf16.gmra.mxu0 %v5854
        %v6022 = vpop.f32.mrf.mxu0
        %v6023 = vadd.f32 0.0, %v6022
        %v6024 = vpop.f32.mrf.mxu0
        %v6025 = vpop.f32.mrf.mxu0
        %v6026 = vadd.f32 0.0, %v6025
        %v6027 = vpop.f32.mrf.mxu0
        %6028 = vmatprep.mubr.bf16.mxu0 %v5857
        %6029 = vmatmul.mubr.bf16.gmra.mxu0 %v5856
        %v6030 = vpop.f32.mrf.mxu0
        %v6031 = vadd.f32 0.0, %v6030
        %v6032 = vpop.f32.mrf.mxu0
        %v6033 = vpop.f32.mrf.mxu0
        %v6034 = vadd.f32 0.0, %v6033
        %v6035 = vpop.f32.mrf.mxu0
        %6036 = vmatprep.mubr.bf16.mxu0 %v5859
        %6037 = vmatmul.mubr.bf16.gmra.mxu0 %v5858
        %v6038 = vpop.f32.mrf.mxu0
        %v6039 = vadd.f32 0.0, %v6038
        %v6040 = vpop.f32.mrf.mxu0
        %v6041 = vpop.f32.mrf.mxu0
        %v6042 = vadd.f32 0.0, %v6041
        %v6043 = vpop.f32.mrf.mxu0
        %6044 = vmatprep.mubr.bf16.mxu0 %v5861
        %6045 = vmatmul.mubr.bf16.gmra.mxu0 %v5860
        %v6046 = vpop.f32.mrf.mxu0
        %v6047 = vadd.f32 0.0, %v6046
        %v6048 = vpop.f32.mrf.mxu0
        %v6049 = vpop.f32.mrf.mxu0
        %v6050 = vadd.f32 0.0, %v6049
        %v6051 = vpop.f32.mrf.mxu0
        %6052 = vmatprep.mubr.bf16.mxu0 %v5863
        %6053 = vmatmul.mubr.bf16.gmra.mxu0 %v5862
        %v6054 = vpop.f32.mrf.mxu0
        %v6055 = vadd.f32 0.0, %v6054
        %v6056 = vpop.f32.mrf.mxu0
        %v6057 = vpop.f32.mrf.mxu0
        %v6058 = vadd.f32 0.0, %v6057
        %v6059 = vpop.f32.mrf.mxu0
        %6060 = vmatprep.mubr.bf16.mxu0 %v5865
        %6061 = vmatmul.mubr.bf16.gmra.mxu0 %v5864
        %v6062 = vpop.f32.mrf.mxu0
        %v6063 = vadd.f32 0.0, %v6062
        %v6064 = vpop.f32.mrf.mxu0
        %v6065 = vpop.f32.mrf.mxu0
        %v6066 = vadd.f32 0.0, %v6065
        %v6067 = vpop.f32.mrf.mxu0
        %6068 = vmatprep.mubr.bf16.mxu0 %v5867
        %6069 = vmatmul.mubr.bf16.gmra.mxu0 %v5866
        %v6070 = vpop.f32.mrf.mxu0
        %v6071 = vadd.f32 0.0, %v6070
        %v6072 = vpop.f32.mrf.mxu0
        %v6073 = vpop.f32.mrf.mxu0
        %v6074 = vadd.f32 0.0, %v6073
        %v6075 = vpop.f32.mrf.mxu0
        %6076 = vdwg.mxu0
        %v6077 = vadd.f32 %v5659, %v6015
        %v6078 = vadd.f32 %v5662, %v6018
        %v6079 = vadd.f32 %v5667, %v6023
        %v6080 = vadd.f32 %v5670, %v6026
        %v6081 = vadd.f32 %v5675, %v6031
        %v6082 = vadd.f32 %v5678, %v6034
        %v6083 = vadd.f32 %v5683, %v6039
        %v6084 = vadd.f32 %v5686, %v6042
        %v6085 = vadd.f32 %v5691, %v6047
        %v6086 = vadd.f32 %v5694, %v6050
        %v6087 = vadd.f32 %v5699, %v6055
        %v6088 = vadd.f32 %v5702, %v6058
        %v6089 = vadd.f32 %v5707, %v6063
        %v6090 = vadd.f32 %v5710, %v6066
        %v6091 = vadd.f32 %v5715, %v6071
        %v6092 = vadd.f32 %v5718, %v6074
        %v6097 = vunpack.c.l.b16 %v4796
        %v6098 = vunpack.c.l.b16 %v4797
        %v6099 = vunpack.c.l.b16 %v4816
        %v6100 = vunpack.c.l.b16 %v4817
        %v6101 = vld [vmem:[%s3 + $0x180] sm:$0xf]
        %v6102 = vld [vmem:[%s3 + $0x184] sm:$0xf]
        %v6103 = vld [vmem:[%s3 + $0x188] sm:$0xf]
        %v6104 = vld [vmem:[%s3 + $0x18c] sm:$0xf]
        %v6105 = vld [vmem:[%s3 + $0x190] sm:$0xf]
        %v6106 = vld [vmem:[%s3 + $0x194] sm:$0xf]
        %v6107 = vld [vmem:[%s3 + $0x198] sm:$0xf]
        %v6108 = vld [vmem:[%s3 + $0x19c] sm:$0xf]
        %v6109 = vld [vmem:[%s3 + $0x1a0] sm:$0xf]
        %v6110 = vld [vmem:[%s3 + $0x1a4] sm:$0xf]
        %v6111 = vld [vmem:[%s3 + $0x1a8] sm:$0xf]
        %v6112 = vld [vmem:[%s3 + $0x1ac] sm:$0xf]
        %v6113 = vld [vmem:[%s3 + $0x1b0] sm:$0xf]
        %v6114 = vld [vmem:[%s3 + $0x1b4] sm:$0xf]
        %v6115 = vld [vmem:[%s3 + $0x1b8] sm:$0xf]
        %v6116 = vld [vmem:[%s3 + $0x1bc] sm:$0xf]
        %v6117 = vld [vmem:[%s3 + $0x1c0] sm:$0xf]
        %v6118 = vld [vmem:[%s3 + $0x1c4] sm:$0xf]
        %v6119 = vld [vmem:[%s3 + $0x1c8] sm:$0xf]
        %v6120 = vld [vmem:[%s3 + $0x1cc] sm:$0xf]
        %v6121 = vld [vmem:[%s3 + $0x1d0] sm:$0xf]
        %v6122 = vld [vmem:[%s3 + $0x1d4] sm:$0xf]
        %v6123 = vld [vmem:[%s3 + $0x1d8] sm:$0xf]
        %v6124 = vld [vmem:[%s3 + $0x1dc] sm:$0xf]
        %v6125 = vld [vmem:[%s3 + $0x1e0] sm:$0xf]
        %v6126 = vld [vmem:[%s3 + $0x1e4] sm:$0xf]
        %v6127 = vld [vmem:[%s3 + $0x1e8] sm:$0xf]
        %v6128 = vld [vmem:[%s3 + $0x1ec] sm:$0xf]
        %v6129 = vld [vmem:[%s3 + $0x1f0] sm:$0xf]
        %v6130 = vld [vmem:[%s3 + $0x1f4] sm:$0xf]
        %v6131 = vld [vmem:[%s3 + $0x1f8] sm:$0xf]
        %v6132 = vld [vmem:[%s3 + $0x1fc] sm:$0xf]
        %v6133 = vpack.c.b16 %v4856, %v4854
        %v6134 = vpack.c.b16 %v4857, %v4855
        %v6135 = vpack.c.b16 %v4860, %v4858
        %v6136 = vpack.c.b16 %v4861, %v4859
        %v6137 = vpack.c.b16 %v4864, %v4862
        %v6138 = vpack.c.b16 %v4865, %v4863
        %v6139 = vpack.c.b16 %v6097, %v4866
        %v6140 = vpack.c.b16 %v6098, %v4867
        %v6141 = vpack.c.b16 %v4872, %v4870
        %v6142 = vpack.c.b16 %v4873, %v4871
        %v6143 = vpack.c.b16 %v4876, %v4874
        %v6144 = vpack.c.b16 %v4877, %v4875
        %v6145 = vpack.c.b16 %v4880, %v4878
        %v6146 = vpack.c.b16 %v4881, %v4879
        %v6147 = vpack.c.b16 %v6099, %v4882
        %v6148 = vpack.c.b16 %v6100, %v4883
        %v6197 = vunpack.c.l.b16 %v6101
        %v6198 = vunpack.c.l.b16 %v6102
        %v6199 = vunpack.c.l.b16 %v6103
        %v6200 = vunpack.c.l.b16 %v6104
        %v6201 = vunpack.c.l.b16 %v6105
        %v6202 = vunpack.c.l.b16 %v6106
        %v6203 = vunpack.c.l.b16 %v6107
        %v6204 = vunpack.c.l.b16 %v6108
        %v6205 = vunpack.c.l.b16 %v6109
        %v6206 = vunpack.c.l.b16 %v6110
        %v6207 = vunpack.c.l.b16 %v6111
        %v6208 = vunpack.c.l.b16 %v6112
        %v6209 = vunpack.c.l.b16 %v6113
        %v6210 = vunpack.c.l.b16 %v6114
        %v6211 = vunpack.c.l.b16 %v6115
        %v6212 = vunpack.c.l.b16 %v6116
        %v6213 = vunpack.c.l.b16 %v6117
        %v6214 = vunpack.c.l.b16 %v6118
        %v6215 = vunpack.c.l.b16 %v6119
        %v6216 = vunpack.c.l.b16 %v6120
        %v6217 = vunpack.c.l.b16 %v6121
        %v6218 = vunpack.c.l.b16 %v6122
        %v6219 = vunpack.c.l.b16 %v6123
        %v6220 = vunpack.c.l.b16 %v6124
        %v6221 = vunpack.c.l.b16 %v6125
        %v6222 = vunpack.c.l.b16 %v6126
        %v6223 = vunpack.c.l.b16 %v6127
        %v6224 = vunpack.c.l.b16 %v6128
        %v6225 = vunpack.c.l.b16 %v6129
        %v6226 = vunpack.c.l.b16 %v6130
        %v6227 = vunpack.c.l.b16 %v6131
        %v6228 = vunpack.c.l.b16 %v6132
        %v6229 = vpack.c.b16 %v6198, %v6197
        %v6230 = vpack.c.b16 %v6200, %v6199
        %v6231 = vpack.c.b16 %v6202, %v6201
        %v6232 = vpack.c.b16 %v6204, %v6203
        %v6233 = vpack.c.b16 %v6206, %v6205
        %v6234 = vpack.c.b16 %v6208, %v6207
        %v6235 = vpack.c.b16 %v6210, %v6209
        %v6236 = vpack.c.b16 %v6212, %v6211
        %v6237 = vpack.c.b16 %v6214, %v6213
        %v6238 = vpack.c.b16 %v6216, %v6215
        %v6239 = vpack.c.b16 %v6218, %v6217
        %v6240 = vpack.c.b16 %v6220, %v6219
        %v6241 = vpack.c.b16 %v6222, %v6221
        %v6242 = vpack.c.b16 %v6224, %v6223
        %v6243 = vpack.c.b16 %v6226, %v6225
        %v6244 = vpack.c.b16 %v6228, %v6227
        %6261 = vmatprep.subr.bf16.mxu0 0
        %6262 = vmatpush1.bf16.msra.mxu0 %v6236
        %6263 = vmatprep.subr.bf16.mxu0 0
        %6264 = vmatpush1.bf16.msra.mxu0 %v6235
        %6265 = vmatprep.subr.bf16.mxu0 0
        %6266 = vmatpush1.bf16.msra.mxu0 %v6234
        %6267 = vmatprep.subr.bf16.mxu0 0
        %6268 = vmatpush1.bf16.msra.mxu0 %v6233
        %6269 = vmatprep.subr.bf16.mxu0 0
        %6270 = vmatpush1.bf16.msra.mxu0 %v6232
        %6271 = vmatprep.subr.bf16.mxu0 0
        %6272 = vmatpush1.bf16.msra.mxu0 %v6231
        %6273 = vmatprep.subr.bf16.mxu0 0
        %6274 = vmatpush1.bf16.msra.mxu0 %v6230
        %6275 = vmatprep.subr.bf16.mxu0 0
        %6276 = vmatpush1.bf16.msra.mxu0 %v6229
        %6277 = vmatprep.subr.bf16.mxu0 0
        %6278 = vmatpush2.bf16.msra.mxu0 %v6244
        %6279 = vmatprep.subr.bf16.mxu0 0
        %6280 = vmatpush2.bf16.msra.mxu0 %v6243
        %6281 = vmatprep.subr.bf16.mxu0 0
        %6282 = vmatpush2.bf16.msra.mxu0 %v6242
        %6283 = vmatprep.subr.bf16.mxu0 0
        %6284 = vmatpush2.bf16.msra.mxu0 %v6241
        %6285 = vmatprep.subr.bf16.mxu0 0
        %6286 = vmatpush2.bf16.msra.mxu0 %v6240
        %6287 = vmatprep.subr.bf16.mxu0 0
        %6288 = vmatpush2.bf16.msra.mxu0 %v6239
        %6289 = vmatprep.subr.bf16.mxu0 0
        %6290 = vmatpush2.bf16.msra.mxu0 %v6238
        %6291 = vmatprep.subr.bf16.mxu0 0
        %6292 = vmatpush2.bf16.msra.mxu0 %v6237
        %6293 = vmatprep.mubr.bf16.mxu0 %v6134
        %6294 = vmatmul.mubr.bf16.gmra.mxu0 %v6133
        %v6295 = vpop.f32.mrf.mxu0
        %v6296 = vadd.f32 0.0, %v6295
        %v6297 = vpop.f32.mrf.mxu0
        %v6298 = vpop.f32.mrf.mxu0
        %v6299 = vadd.f32 0.0, %v6298
        %v6300 = vpop.f32.mrf.mxu0
        %6301 = vmatprep.mubr.bf16.mxu0 %v6136
        %6302 = vmatmul.mubr.bf16.gmra.mxu0 %v6135
        %v6303 = vpop.f32.mrf.mxu0
        %v6304 = vadd.f32 0.0, %v6303
        %v6305 = vpop.f32.mrf.mxu0
        %v6306 = vpop.f32.mrf.mxu0
        %v6307 = vadd.f32 0.0, %v6306
        %v6308 = vpop.f32.mrf.mxu0
        %6309 = vmatprep.mubr.bf16.mxu0 %v6138
        %6310 = vmatmul.mubr.bf16.gmra.mxu0 %v6137
        %v6311 = vpop.f32.mrf.mxu0
        %v6312 = vadd.f32 0.0, %v6311
        %v6313 = vpop.f32.mrf.mxu0
        %v6314 = vpop.f32.mrf.mxu0
        %v6315 = vadd.f32 0.0, %v6314
        %v6316 = vpop.f32.mrf.mxu0
        %6317 = vmatprep.mubr.bf16.mxu0 %v6140
        %6318 = vmatmul.mubr.bf16.gmra.mxu0 %v6139
        %v6319 = vpop.f32.mrf.mxu0
        %v6320 = vadd.f32 0.0, %v6319
        %v6321 = vpop.f32.mrf.mxu0
        %v6322 = vpop.f32.mrf.mxu0
        %v6323 = vadd.f32 0.0, %v6322
        %v6324 = vpop.f32.mrf.mxu0
        %6325 = vmatprep.mubr.bf16.mxu0 %v6142
        %6326 = vmatmul.mubr.bf16.gmra.mxu0 %v6141
        %v6327 = vpop.f32.mrf.mxu0
        %v6328 = vadd.f32 0.0, %v6327
        %v6329 = vpop.f32.mrf.mxu0
        %v6330 = vpop.f32.mrf.mxu0
        %v6331 = vadd.f32 0.0, %v6330
        %v6332 = vpop.f32.mrf.mxu0
        %6333 = vmatprep.mubr.bf16.mxu0 %v6144
        %6334 = vmatmul.mubr.bf16.gmra.mxu0 %v6143
        %v6335 = vpop.f32.mrf.mxu0
        %v6336 = vadd.f32 0.0, %v6335
        %v6337 = vpop.f32.mrf.mxu0
        %v6338 = vpop.f32.mrf.mxu0
        %v6339 = vadd.f32 0.0, %v6338
        %v6340 = vpop.f32.mrf.mxu0
        %6341 = vmatprep.mubr.bf16.mxu0 %v6146
        %6342 = vmatmul.mubr.bf16.gmra.mxu0 %v6145
        %v6343 = vpop.f32.mrf.mxu0
        %v6344 = vadd.f32 0.0, %v6343
        %v6345 = vpop.f32.mrf.mxu0
        %v6346 = vpop.f32.mrf.mxu0
        %v6347 = vadd.f32 0.0, %v6346
        %v6348 = vpop.f32.mrf.mxu0
        %6349 = vmatprep.mubr.bf16.mxu0 %v6148
        %6350 = vmatmul.mubr.bf16.gmra.mxu0 %v6147
        %v6351 = vpop.f32.mrf.mxu0
        %v6352 = vadd.f32 0.0, %v6351
        %v6353 = vpop.f32.mrf.mxu0
        %v6354 = vpop.f32.mrf.mxu0
        %v6355 = vadd.f32 0.0, %v6354
        %v6356 = vpop.f32.mrf.mxu0
        %6357 = vdwg.mxu0
        %v6358 = vadd.f32 %v6077, %v6296
        %v6359 = vadd.f32 %v6078, %v6299
        %v6360 = vadd.f32 %v6079, %v6304
        %v6361 = vadd.f32 %v6080, %v6307
        %v6362 = vadd.f32 %v6081, %v6312
        %v6363 = vadd.f32 %v6082, %v6315
        %v6364 = vadd.f32 %v6083, %v6320
        %v6365 = vadd.f32 %v6084, %v6323
        %v6366 = vadd.f32 %v6085, %v6328
        %v6367 = vadd.f32 %v6086, %v6331
        %v6368 = vadd.f32 %v6087, %v6336
        %v6369 = vadd.f32 %v6088, %v6339
        %v6370 = vadd.f32 %v6089, %v6344
        %v6371 = vadd.f32 %v6090, %v6347
        %v6372 = vadd.f32 %v6091, %v6352
        %v6373 = vadd.f32 %v6092, %v6355
        %v6374 = vunpack.c.h.b16 %v4796
        %v6375 = vunpack.c.h.b16 %v4797
        %v6376 = vunpack.c.h.b16 %v4816
        %v6377 = vunpack.c.h.b16 %v4817
        %v6378 = vpack.c.b16 %v6098, %v6097
        %v6379 = vpack.c.b16 %v6375, %v6374
        %v6380 = vpack.c.b16 %v6100, %v6099
        %v6381 = vpack.c.b16 %v6377, %v6376
        %v6383 = vshrl.u32 %v6378, 16
        %v6385 = vrot.slane %v6383, 4
        %v6386 = vshll.u32 %v6378, 16
        %v6388 = vrot.slane %v6386, 5
        %v6389 = vor.u32 %v6385, %v6388
        %v6390 = vrot.slane %v6389, 4
        %v6392 = vshll.u32 %v6379, 16
        %v6394 = vrot.slane %v6392, 5
        %v6395 = vsel %vm4982, %v6390, %v6394
        %v6397 = vshrl.u32 %v6380, 16
        %v6399 = vrot.slane %v6397, 4
        %v6400 = vshll.u32 %v6380, 16
        %v6402 = vrot.slane %v6400, 5
        %v6403 = vor.u32 %v6399, %v6402
        %v6404 = vrot.slane %v6403, 4
        %v6406 = vshll.u32 %v6381, 16
        %v6408 = vrot.slane %v6406, 5
        %v6409 = vsel %vm4982, %v6404, %v6408
        %v6410 = vld [vmem:[%s3 + $0x200] sm:$0xf]
        %v6411 = vld [vmem:[%s3 + $0x204] sm:$0xf]
        %v6412 = vld [vmem:[%s3 + $0x208] sm:$0xf]
        %v6413 = vld [vmem:[%s3 + $0x20c] sm:$0xf]
        %v6414 = vld [vmem:[%s3 + $0x210] sm:$0xf]
        %v6415 = vld [vmem:[%s3 + $0x214] sm:$0xf]
        %v6416 = vld [vmem:[%s3 + $0x218] sm:$0xf]
        %v6417 = vld [vmem:[%s3 + $0x21c] sm:$0xf]
        %v6418 = vld [vmem:[%s3 + $0x220] sm:$0xf]
        %v6419 = vld [vmem:[%s3 + $0x224] sm:$0xf]
        %v6420 = vld [vmem:[%s3 + $0x228] sm:$0xf]
        %v6421 = vld [vmem:[%s3 + $0x22c] sm:$0xf]
        %v6422 = vld [vmem:[%s3 + $0x230] sm:$0xf]
        %v6423 = vld [vmem:[%s3 + $0x234] sm:$0xf]
        %v6424 = vld [vmem:[%s3 + $0x238] sm:$0xf]
        %v6425 = vld [vmem:[%s3 + $0x23c] sm:$0xf]
        %v6426 = vld [vmem:[%s3 + $0x240] sm:$0xf]
        %v6427 = vld [vmem:[%s3 + $0x244] sm:$0xf]
        %v6428 = vld [vmem:[%s3 + $0x248] sm:$0xf]
        %v6429 = vld [vmem:[%s3 + $0x24c] sm:$0xf]
        %v6430 = vld [vmem:[%s3 + $0x250] sm:$0xf]
        %v6431 = vld [vmem:[%s3 + $0x254] sm:$0xf]
        %v6432 = vld [vmem:[%s3 + $0x258] sm:$0xf]
        %v6433 = vld [vmem:[%s3 + $0x25c] sm:$0xf]
        %v6434 = vld [vmem:[%s3 + $0x260] sm:$0xf]
        %v6435 = vld [vmem:[%s3 + $0x264] sm:$0xf]
        %v6436 = vld [vmem:[%s3 + $0x268] sm:$0xf]
        %v6437 = vld [vmem:[%s3 + $0x26c] sm:$0xf]
        %v6438 = vld [vmem:[%s3 + $0x270] sm:$0xf]
        %v6439 = vld [vmem:[%s3 + $0x274] sm:$0xf]
        %v6440 = vld [vmem:[%s3 + $0x278] sm:$0xf]
        %v6441 = vld [vmem:[%s3 + $0x27c] sm:$0xf]
        %v6442 = vunpack.c.l.b16 %v6395
        %v6443 = vunpack.c.h.b16 %v6395
        %v6444 = vunpack.c.l.b16 %v6409
        %v6445 = vunpack.c.h.b16 %v6409
        %v6446 = vpack.c.b16 %v5243, %v5241
        %v6447 = vpack.c.b16 %v5244, %v5242
        %v6448 = vpack.c.b16 %v5247, %v5245
        %v6449 = vpack.c.b16 %v5248, %v5246
        %v6450 = vpack.c.b16 %v5251, %v5249
        %v6451 = vpack.c.b16 %v5252, %v5250
        %v6452 = vpack.c.b16 %v6442, %v5253
        %v6453 = vpack.c.b16 %v6443, %v5254
        %v6454 = vpack.c.b16 %v5259, %v5257
        %v6455 = vpack.c.b16 %v5260, %v5258
        %v6456 = vpack.c.b16 %v5263, %v5261
        %v6457 = vpack.c.b16 %v5264, %v5262
        %v6458 = vpack.c.b16 %v5267, %v5265
        %v6459 = vpack.c.b16 %v5268, %v5266
        %v6460 = vpack.c.b16 %v6444, %v5269
        %v6461 = vpack.c.b16 %v6445, %v5270
        %v6510 = vunpack.c.l.b16 %v6410
        %v6511 = vunpack.c.l.b16 %v6411
        %v6512 = vunpack.c.l.b16 %v6412
        %v6513 = vunpack.c.l.b16 %v6413
        %v6514 = vunpack.c.l.b16 %v6414
        %v6515 = vunpack.c.l.b16 %v6415
        %v6516 = vunpack.c.l.b16 %v6416
        %v6517 = vunpack.c.l.b16 %v6417
        %v6518 = vunpack.c.l.b16 %v6418
        %v6519 = vunpack.c.l.b16 %v6419
        %v6520 = vunpack.c.l.b16 %v6420
        %v6521 = vunpack.c.l.b16 %v6421
        %v6522 = vunpack.c.l.b16 %v6422
        %v6523 = vunpack.c.l.b16 %v6423
        %v6524 = vunpack.c.l.b16 %v6424
        %v6525 = vunpack.c.l.b16 %v6425
        %v6526 = vunpack.c.l.b16 %v6426
        %v6527 = vunpack.c.l.b16 %v6427
        %v6528 = vunpack.c.l.b16 %v6428
        %v6529 = vunpack.c.l.b16 %v6429
        %v6530 = vunpack.c.l.b16 %v6430
        %v6531 = vunpack.c.l.b16 %v6431
        %v6532 = vunpack.c.l.b16 %v6432
        %v6533 = vunpack.c.l.b16 %v6433
        %v6534 = vunpack.c.l.b16 %v6434
        %v6535 = vunpack.c.l.b16 %v6435
        %v6536 = vunpack.c.l.b16 %v6436
        %v6537 = vunpack.c.l.b16 %v6437
        %v6538 = vunpack.c.l.b16 %v6438
        %v6539 = vunpack.c.l.b16 %v6439
        %v6540 = vunpack.c.l.b16 %v6440
        %v6541 = vunpack.c.l.b16 %v6441
        %v6542 = vpack.c.b16 %v6511, %v6510
        %v6543 = vpack.c.b16 %v6513, %v6512
        %v6544 = vpack.c.b16 %v6515, %v6514
        %v6545 = vpack.c.b16 %v6517, %v6516
        %v6546 = vpack.c.b16 %v6519, %v6518
        %v6547 = vpack.c.b16 %v6521, %v6520
        %v6548 = vpack.c.b16 %v6523, %v6522
        %v6549 = vpack.c.b16 %v6525, %v6524
        %v6550 = vpack.c.b16 %v6527, %v6526
        %v6551 = vpack.c.b16 %v6529, %v6528
        %v6552 = vpack.c.b16 %v6531, %v6530
        %v6553 = vpack.c.b16 %v6533, %v6532
        %v6554 = vpack.c.b16 %v6535, %v6534
        %v6555 = vpack.c.b16 %v6537, %v6536
        %v6556 = vpack.c.b16 %v6539, %v6538
        %v6557 = vpack.c.b16 %v6541, %v6540
        %6574 = vmatprep.subr.bf16.mxu0 0
        %6575 = vmatpush1.bf16.msra.mxu0 %v6549
        %6576 = vmatprep.subr.bf16.mxu0 0
        %6577 = vmatpush1.bf16.msra.mxu0 %v6548
        %6578 = vmatprep.subr.bf16.mxu0 0
        %6579 = vmatpush1.bf16.msra.mxu0 %v6547
        %6580 = vmatprep.subr.bf16.mxu0 0
        %6581 = vmatpush1.bf16.msra.mxu0 %v6546
        %6582 = vmatprep.subr.bf16.mxu0 0
        %6583 = vmatpush1.bf16.msra.mxu0 %v6545
        %6584 = vmatprep.subr.bf16.mxu0 0
        %6585 = vmatpush1.bf16.msra.mxu0 %v6544
        %6586 = vmatprep.subr.bf16.mxu0 0
        %6587 = vmatpush1.bf16.msra.mxu0 %v6543
        %6588 = vmatprep.subr.bf16.mxu0 0
        %6589 = vmatpush1.bf16.msra.mxu0 %v6542
        %6590 = vmatprep.subr.bf16.mxu0 0
        %6591 = vmatpush2.bf16.msra.mxu0 %v6557
        %6592 = vmatprep.subr.bf16.mxu0 0
        %6593 = vmatpush2.bf16.msra.mxu0 %v6556
        %6594 = vmatprep.subr.bf16.mxu0 0
        %6595 = vmatpush2.bf16.msra.mxu0 %v6555
        %6596 = vmatprep.subr.bf16.mxu0 0
        %6597 = vmatpush2.bf16.msra.mxu0 %v6554
        %6598 = vmatprep.subr.bf16.mxu0 0
        %6599 = vmatpush2.bf16.msra.mxu0 %v6553
        %6600 = vmatprep.subr.bf16.mxu0 0
        %6601 = vmatpush2.bf16.msra.mxu0 %v6552
        %6602 = vmatprep.subr.bf16.mxu0 0
        %6603 = vmatpush2.bf16.msra.mxu0 %v6551
        %6604 = vmatprep.subr.bf16.mxu0 0
        %6605 = vmatpush2.bf16.msra.mxu0 %v6550
        %6606 = vmatprep.mubr.bf16.mxu0 %v6447
        %6607 = vmatmul.mubr.bf16.gmra.mxu0 %v6446
        %v6608 = vpop.f32.mrf.mxu0
        %v6609 = vadd.f32 0.0, %v6608
        %v6610 = vpop.f32.mrf.mxu0
        %v6611 = vpop.f32.mrf.mxu0
        %v6612 = vadd.f32 0.0, %v6611
        %v6613 = vpop.f32.mrf.mxu0
        %6614 = vmatprep.mubr.bf16.mxu0 %v6449
        %6615 = vmatmul.mubr.bf16.gmra.mxu0 %v6448
        %v6616 = vpop.f32.mrf.mxu0
        %v6617 = vadd.f32 0.0, %v6616
        %v6618 = vpop.f32.mrf.mxu0
        %v6619 = vpop.f32.mrf.mxu0
        %v6620 = vadd.f32 0.0, %v6619
        %v6621 = vpop.f32.mrf.mxu0
        %6622 = vmatprep.mubr.bf16.mxu0 %v6451
        %6623 = vmatmul.mubr.bf16.gmra.mxu0 %v6450
        %v6624 = vpop.f32.mrf.mxu0
        %v6625 = vadd.f32 0.0, %v6624
        %v6626 = vpop.f32.mrf.mxu0
        %v6627 = vpop.f32.mrf.mxu0
        %v6628 = vadd.f32 0.0, %v6627
        %v6629 = vpop.f32.mrf.mxu0
        %6630 = vmatprep.mubr.bf16.mxu0 %v6453
        %6631 = vmatmul.mubr.bf16.gmra.mxu0 %v6452
        %v6632 = vpop.f32.mrf.mxu0
        %v6633 = vadd.f32 0.0, %v6632
        %v6634 = vpop.f32.mrf.mxu0
        %v6635 = vpop.f32.mrf.mxu0
        %v6636 = vadd.f32 0.0, %v6635
        %v6637 = vpop.f32.mrf.mxu0
        %6638 = vmatprep.mubr.bf16.mxu0 %v6455
        %6639 = vmatmul.mubr.bf16.gmra.mxu0 %v6454
        %v6640 = vpop.f32.mrf.mxu0
        %v6641 = vadd.f32 0.0, %v6640
        %v6642 = vpop.f32.mrf.mxu0
        %v6643 = vpop.f32.mrf.mxu0
        %v6644 = vadd.f32 0.0, %v6643
        %v6645 = vpop.f32.mrf.mxu0
        %6646 = vmatprep.mubr.bf16.mxu0 %v6457
        %6647 = vmatmul.mubr.bf16.gmra.mxu0 %v6456
        %v6648 = vpop.f32.mrf.mxu0
        %v6649 = vadd.f32 0.0, %v6648
        %v6650 = vpop.f32.mrf.mxu0
        %v6651 = vpop.f32.mrf.mxu0
        %v6652 = vadd.f32 0.0, %v6651
        %v6653 = vpop.f32.mrf.mxu0
        %6654 = vmatprep.mubr.bf16.mxu0 %v6459
        %6655 = vmatmul.mubr.bf16.gmra.mxu0 %v6458
        %v6656 = vpop.f32.mrf.mxu0
        %v6657 = vadd.f32 0.0, %v6656
        %v6658 = vpop.f32.mrf.mxu0
        %v6659 = vpop.f32.mrf.mxu0
        %v6660 = vadd.f32 0.0, %v6659
        %v6661 = vpop.f32.mrf.mxu0
        %6662 = vmatprep.mubr.bf16.mxu0 %v6461
        %6663 = vmatmul.mubr.bf16.gmra.mxu0 %v6460
        %v6664 = vpop.f32.mrf.mxu0
        %v6665 = vadd.f32 0.0, %v6664
        %v6666 = vpop.f32.mrf.mxu0
        %v6667 = vpop.f32.mrf.mxu0
        %v6668 = vadd.f32 0.0, %v6667
        %v6669 = vpop.f32.mrf.mxu0
        %6670 = vdwg.mxu0
        %v6671 = vadd.f32 %v6358, %v6609
        %v6672 = vadd.f32 %v6359, %v6612
        %v6673 = vadd.f32 %v6360, %v6617
        %v6674 = vadd.f32 %v6361, %v6620
        %v6675 = vadd.f32 %v6362, %v6625
        %v6676 = vadd.f32 %v6363, %v6628
        %v6677 = vadd.f32 %v6364, %v6633
        %v6678 = vadd.f32 %v6365, %v6636
        %v6679 = vadd.f32 %v6366, %v6641
        %v6680 = vadd.f32 %v6367, %v6644
        %v6681 = vadd.f32 %v6368, %v6649
        %v6682 = vadd.f32 %v6369, %v6652
        %v6683 = vadd.f32 %v6370, %v6657
        %v6684 = vadd.f32 %v6371, %v6660
        %v6685 = vadd.f32 %v6372, %v6665
        %v6686 = vadd.f32 %v6373, %v6668
        %v6687 = vrot.slane %v6378, 5
        %v6688 = vrot.slane %v6687, 4
        %v6689 = vrot.slane %v6379, 5
        %v6690 = vsel %vm5723, %v6688, %v6689
        %v6691 = vrot.slane %v6380, 5
        %v6692 = vrot.slane %v6691, 4
        %v6693 = vrot.slane %v6381, 5
        %v6694 = vsel %vm5723, %v6692, %v6693
        %v6695 = vld [vmem:[%s3 + $0x280] sm:$0xf]
        %v6696 = vld [vmem:[%s3 + $0x284] sm:$0xf]
        %v6697 = vld [vmem:[%s3 + $0x288] sm:$0xf]
        %v6698 = vld [vmem:[%s3 + $0x28c] sm:$0xf]
        %v6699 = vld [vmem:[%s3 + $0x290] sm:$0xf]
        %v6700 = vld [vmem:[%s3 + $0x294] sm:$0xf]
        %v6701 = vld [vmem:[%s3 + $0x298] sm:$0xf]
        %v6702 = vld [vmem:[%s3 + $0x29c] sm:$0xf]
        %v6703 = vld [vmem:[%s3 + $0x2a0] sm:$0xf]
        %v6704 = vld [vmem:[%s3 + $0x2a4] sm:$0xf]
        %v6705 = vld [vmem:[%s3 + $0x2a8] sm:$0xf]
        %v6706 = vld [vmem:[%s3 + $0x2ac] sm:$0xf]
        %v6707 = vld [vmem:[%s3 + $0x2b0] sm:$0xf]
        %v6708 = vld [vmem:[%s3 + $0x2b4] sm:$0xf]
        %v6709 = vld [vmem:[%s3 + $0x2b8] sm:$0xf]
        %v6710 = vld [vmem:[%s3 + $0x2bc] sm:$0xf]
        %v6711 = vld [vmem:[%s3 + $0x2c0] sm:$0xf]
        %v6712 = vld [vmem:[%s3 + $0x2c4] sm:$0xf]
        %v6713 = vld [vmem:[%s3 + $0x2c8] sm:$0xf]
        %v6714 = vld [vmem:[%s3 + $0x2cc] sm:$0xf]
        %v6715 = vld [vmem:[%s3 + $0x2d0] sm:$0xf]
        %v6716 = vld [vmem:[%s3 + $0x2d4] sm:$0xf]
        %v6717 = vld [vmem:[%s3 + $0x2d8] sm:$0xf]
        %v6718 = vld [vmem:[%s3 + $0x2dc] sm:$0xf]
        %v6719 = vld [vmem:[%s3 + $0x2e0] sm:$0xf]
        %v6720 = vld [vmem:[%s3 + $0x2e4] sm:$0xf]
        %v6721 = vld [vmem:[%s3 + $0x2e8] sm:$0xf]
        %v6722 = vld [vmem:[%s3 + $0x2ec] sm:$0xf]
        %v6723 = vld [vmem:[%s3 + $0x2f0] sm:$0xf]
        %v6724 = vld [vmem:[%s3 + $0x2f4] sm:$0xf]
        %v6725 = vld [vmem:[%s3 + $0x2f8] sm:$0xf]
        %v6726 = vld [vmem:[%s3 + $0x2fc] sm:$0xf]
        %v6727 = vunpack.c.l.b16 %v6690
        %v6728 = vunpack.c.h.b16 %v6690
        %v6729 = vunpack.c.l.b16 %v6694
        %v6730 = vunpack.c.h.b16 %v6694
        %v6731 = vpack.c.b16 %v5824, %v5822
        %v6732 = vpack.c.b16 %v5825, %v5823
        %v6733 = vpack.c.b16 %v5828, %v5826
        %v6734 = vpack.c.b16 %v5829, %v5827
        %v6735 = vpack.c.b16 %v5832, %v5830
        %v6736 = vpack.c.b16 %v5833, %v5831
        %v6737 = vpack.c.b16 %v6727, %v5834
        %v6738 = vpack.c.b16 %v6728, %v5835
        %v6739 = vpack.c.b16 %v5840, %v5838
        %v6740 = vpack.c.b16 %v5841, %v5839
        %v6741 = vpack.c.b16 %v5844, %v5842
        %v6742 = vpack.c.b16 %v5845, %v5843
        %v6743 = vpack.c.b16 %v5848, %v5846
        %v6744 = vpack.c.b16 %v5849, %v5847
        %v6745 = vpack.c.b16 %v6729, %v5850
        %v6746 = vpack.c.b16 %v6730, %v5851
        %v6795 = vunpack.c.l.b16 %v6695
        %v6796 = vunpack.c.l.b16 %v6696
        %v6797 = vunpack.c.l.b16 %v6697
        %v6798 = vunpack.c.l.b16 %v6698
        %v6799 = vunpack.c.l.b16 %v6699
        %v6800 = vunpack.c.l.b16 %v6700
        %v6801 = vunpack.c.l.b16 %v6701
        %v6802 = vunpack.c.l.b16 %v6702
        %v6803 = vunpack.c.l.b16 %v6703
        %v6804 = vunpack.c.l.b16 %v6704
        %v6805 = vunpack.c.l.b16 %v6705
        %v6806 = vunpack.c.l.b16 %v6706
        %v6807 = vunpack.c.l.b16 %v6707
        %v6808 = vunpack.c.l.b16 %v6708
        %v6809 = vunpack.c.l.b16 %v6709
        %v6810 = vunpack.c.l.b16 %v6710
        %v6811 = vunpack.c.l.b16 %v6711
        %v6812 = vunpack.c.l.b16 %v6712
        %v6813 = vunpack.c.l.b16 %v6713
        %v6814 = vunpack.c.l.b16 %v6714
        %v6815 = vunpack.c.l.b16 %v6715
        %v6816 = vunpack.c.l.b16 %v6716
        %v6817 = vunpack.c.l.b16 %v6717
        %v6818 = vunpack.c.l.b16 %v6718
        %v6819 = vunpack.c.l.b16 %v6719
        %v6820 = vunpack.c.l.b16 %v6720
        %v6821 = vunpack.c.l.b16 %v6721
        %v6822 = vunpack.c.l.b16 %v6722
        %v6823 = vunpack.c.l.b16 %v6723
        %v6824 = vunpack.c.l.b16 %v6724
        %v6825 = vunpack.c.l.b16 %v6725
        %v6826 = vunpack.c.l.b16 %v6726
        %v6827 = vpack.c.b16 %v6796, %v6795
        %v6828 = vpack.c.b16 %v6798, %v6797
        %v6829 = vpack.c.b16 %v6800, %v6799
        %v6830 = vpack.c.b16 %v6802, %v6801
        %v6831 = vpack.c.b16 %v6804, %v6803
        %v6832 = vpack.c.b16 %v6806, %v6805
        %v6833 = vpack.c.b16 %v6808, %v6807
        %v6834 = vpack.c.b16 %v6810, %v6809
        %v6835 = vpack.c.b16 %v6812, %v6811
        %v6836 = vpack.c.b16 %v6814, %v6813
        %v6837 = vpack.c.b16 %v6816, %v6815
        %v6838 = vpack.c.b16 %v6818, %v6817
        %v6839 = vpack.c.b16 %v6820, %v6819
        %v6840 = vpack.c.b16 %v6822, %v6821
        %v6841 = vpack.c.b16 %v6824, %v6823
        %v6842 = vpack.c.b16 %v6826, %v6825
        %6859 = vmatprep.subr.bf16.mxu0 0
        %6860 = vmatpush1.bf16.msra.mxu0 %v6834
        %6861 = vmatprep.subr.bf16.mxu0 0
        %6862 = vmatpush1.bf16.msra.mxu0 %v6833
        %6863 = vmatprep.subr.bf16.mxu0 0
        %6864 = vmatpush1.bf16.msra.mxu0 %v6832
        %6865 = vmatprep.subr.bf16.mxu0 0
        %6866 = vmatpush1.bf16.msra.mxu0 %v6831
        %6867 = vmatprep.subr.bf16.mxu0 0
        %6868 = vmatpush1.bf16.msra.mxu0 %v6830
        %6869 = vmatprep.subr.bf16.mxu0 0
        %6870 = vmatpush1.bf16.msra.mxu0 %v6829
        %6871 = vmatprep.subr.bf16.mxu0 0
        %6872 = vmatpush1.bf16.msra.mxu0 %v6828
        %6873 = vmatprep.subr.bf16.mxu0 0
        %6874 = vmatpush1.bf16.msra.mxu0 %v6827
        %6875 = vmatprep.subr.bf16.mxu0 0
        %6876 = vmatpush2.bf16.msra.mxu0 %v6842
        %6877 = vmatprep.subr.bf16.mxu0 0
        %6878 = vmatpush2.bf16.msra.mxu0 %v6841
        %6879 = vmatprep.subr.bf16.mxu0 0
        %6880 = vmatpush2.bf16.msra.mxu0 %v6840
        %6881 = vmatprep.subr.bf16.mxu0 0
        %6882 = vmatpush2.bf16.msra.mxu0 %v6839
        %6883 = vmatprep.subr.bf16.mxu0 0
        %6884 = vmatpush2.bf16.msra.mxu0 %v6838
        %6885 = vmatprep.subr.bf16.mxu0 0
        %6886 = vmatpush2.bf16.msra.mxu0 %v6837
        %6887 = vmatprep.subr.bf16.mxu0 0
        %6888 = vmatpush2.bf16.msra.mxu0 %v6836
        %6889 = vmatprep.subr.bf16.mxu0 0
        %6890 = vmatpush2.bf16.msra.mxu0 %v6835
        %6891 = vmatprep.mubr.bf16.mxu0 %v6732
        %6892 = vmatmul.mubr.bf16.gmra.mxu0 %v6731
        %v6893 = vpop.f32.mrf.mxu0
        %v6894 = vadd.f32 0.0, %v6893
        %v6895 = vpop.f32.mrf.mxu0
        %v6896 = vpop.f32.mrf.mxu0
        %v6897 = vadd.f32 0.0, %v6896
        %v6898 = vpop.f32.mrf.mxu0
        %6899 = vmatprep.mubr.bf16.mxu0 %v6734
        %6900 = vmatmul.mubr.bf16.gmra.mxu0 %v6733
        %v6901 = vpop.f32.mrf.mxu0
        %v6902 = vadd.f32 0.0, %v6901
        %v6903 = vpop.f32.mrf.mxu0
        %v6904 = vpop.f32.mrf.mxu0
        %v6905 = vadd.f32 0.0, %v6904
        %v6906 = vpop.f32.mrf.mxu0
        %6907 = vmatprep.mubr.bf16.mxu0 %v6736
        %6908 = vmatmul.mubr.bf16.gmra.mxu0 %v6735
        %v6909 = vpop.f32.mrf.mxu0
        %v6910 = vadd.f32 0.0, %v6909
        %v6911 = vpop.f32.mrf.mxu0
        %v6912 = vpop.f32.mrf.mxu0
        %v6913 = vadd.f32 0.0, %v6912
        %v6914 = vpop.f32.mrf.mxu0
        %6915 = vmatprep.mubr.bf16.mxu0 %v6738
        %6916 = vmatmul.mubr.bf16.gmra.mxu0 %v6737
        %v6917 = vpop.f32.mrf.mxu0
        %v6918 = vadd.f32 0.0, %v6917
        %v6919 = vpop.f32.mrf.mxu0
        %v6920 = vpop.f32.mrf.mxu0
        %v6921 = vadd.f32 0.0, %v6920
        %v6922 = vpop.f32.mrf.mxu0
        %6923 = vmatprep.mubr.bf16.mxu0 %v6740
        %6924 = vmatmul.mubr.bf16.gmra.mxu0 %v6739
        %v6925 = vpop.f32.mrf.mxu0
        %v6926 = vadd.f32 0.0, %v6925
        %v6927 = vpop.f32.mrf.mxu0
        %v6928 = vpop.f32.mrf.mxu0
        %v6929 = vadd.f32 0.0, %v6928
        %v6930 = vpop.f32.mrf.mxu0
        %6931 = vmatprep.mubr.bf16.mxu0 %v6742
        %6932 = vmatmul.mubr.bf16.gmra.mxu0 %v6741
        %v6933 = vpop.f32.mrf.mxu0
        %v6934 = vadd.f32 0.0, %v6933
        %v6935 = vpop.f32.mrf.mxu0
        %v6936 = vpop.f32.mrf.mxu0
        %v6937 = vadd.f32 0.0, %v6936
        %v6938 = vpop.f32.mrf.mxu0
        %6939 = vmatprep.mubr.bf16.mxu0 %v6744
        %6940 = vmatmul.mubr.bf16.gmra.mxu0 %v6743
        %v6941 = vpop.f32.mrf.mxu0
        %v6942 = vadd.f32 0.0, %v6941
        %v6943 = vpop.f32.mrf.mxu0
        %v6944 = vpop.f32.mrf.mxu0
        %v6945 = vadd.f32 0.0, %v6944
        %v6946 = vpop.f32.mrf.mxu0
        %6947 = vmatprep.mubr.bf16.mxu0 %v6746
        %6948 = vmatmul.mubr.bf16.gmra.mxu0 %v6745
        %v6949 = vpop.f32.mrf.mxu0
        %v6950 = vadd.f32 0.0, %v6949
        %v6951 = vpop.f32.mrf.mxu0
        %v6952 = vpop.f32.mrf.mxu0
        %v6953 = vadd.f32 0.0, %v6952
        %v6954 = vpop.f32.mrf.mxu0
        %6955 = vdwg.mxu0
        %v6956 = vadd.f32 %v6671, %v6894
        %v6957 = vadd.f32 %v6672, %v6897
        %v6958 = vadd.f32 %v6673, %v6902
        %v6959 = vadd.f32 %v6674, %v6905
        %v6960 = vadd.f32 %v6675, %v6910
        %v6961 = vadd.f32 %v6676, %v6913
        %v6962 = vadd.f32 %v6677, %v6918
        %v6963 = vadd.f32 %v6678, %v6921
        %v6964 = vadd.f32 %v6679, %v6926
        %v6965 = vadd.f32 %v6680, %v6929
        %v6966 = vadd.f32 %v6681, %v6934
        %v6967 = vadd.f32 %v6682, %v6937
        %v6968 = vadd.f32 %v6683, %v6942
        %v6969 = vadd.f32 %v6684, %v6945
        %v6970 = vadd.f32 %v6685, %v6950
        %v6971 = vadd.f32 %v6686, %v6953
        %v6976 = vunpack.c.l.b16 %v4798
        %v6977 = vunpack.c.l.b16 %v4799
        %v6978 = vunpack.c.l.b16 %v4818
        %v6979 = vunpack.c.l.b16 %v4819
        %v6980 = vld [vmem:[%s3 + $0x300] sm:$0xf]
        %v6981 = vld [vmem:[%s3 + $0x304] sm:$0xf]
        %v6982 = vld [vmem:[%s3 + $0x308] sm:$0xf]
        %v6983 = vld [vmem:[%s3 + $0x30c] sm:$0xf]
        %v6984 = vld [vmem:[%s3 + $0x310] sm:$0xf]
        %v6985 = vld [vmem:[%s3 + $0x314] sm:$0xf]
        %v6986 = vld [vmem:[%s3 + $0x318] sm:$0xf]
        %v6987 = vld [vmem:[%s3 + $0x31c] sm:$0xf]
        %v6988 = vld [vmem:[%s3 + $0x320] sm:$0xf]
        %v6989 = vld [vmem:[%s3 + $0x324] sm:$0xf]
        %v6990 = vld [vmem:[%s3 + $0x328] sm:$0xf]
        %v6991 = vld [vmem:[%s3 + $0x32c] sm:$0xf]
        %v6992 = vld [vmem:[%s3 + $0x330] sm:$0xf]
        %v6993 = vld [vmem:[%s3 + $0x334] sm:$0xf]
        %v6994 = vld [vmem:[%s3 + $0x338] sm:$0xf]
        %v6995 = vld [vmem:[%s3 + $0x33c] sm:$0xf]
        %v6996 = vld [vmem:[%s3 + $0x340] sm:$0xf]
        %v6997 = vld [vmem:[%s3 + $0x344] sm:$0xf]
        %v6998 = vld [vmem:[%s3 + $0x348] sm:$0xf]
        %v6999 = vld [vmem:[%s3 + $0x34c] sm:$0xf]
        %v7000 = vld [vmem:[%s3 + $0x350] sm:$0xf]
        %v7001 = vld [vmem:[%s3 + $0x354] sm:$0xf]
        %v7002 = vld [vmem:[%s3 + $0x358] sm:$0xf]
        %v7003 = vld [vmem:[%s3 + $0x35c] sm:$0xf]
        %v7004 = vld [vmem:[%s3 + $0x360] sm:$0xf]
        %v7005 = vld [vmem:[%s3 + $0x364] sm:$0xf]
        %v7006 = vld [vmem:[%s3 + $0x368] sm:$0xf]
        %v7007 = vld [vmem:[%s3 + $0x36c] sm:$0xf]
        %v7008 = vld [vmem:[%s3 + $0x370] sm:$0xf]
        %v7009 = vld [vmem:[%s3 + $0x374] sm:$0xf]
        %v7010 = vld [vmem:[%s3 + $0x378] sm:$0xf]
        %v7011 = vld [vmem:[%s3 + $0x37c] sm:$0xf]
        %v7012 = vpack.c.b16 %v6976, %v6097
        %v7013 = vpack.c.b16 %v6977, %v6098
        %v7014 = vpack.c.b16 %v6978, %v6099
        %v7015 = vpack.c.b16 %v6979, %v6100
        %v7052 = vunpack.c.l.b16 %v6980
        %v7053 = vunpack.c.l.b16 %v6981
        %v7054 = vunpack.c.l.b16 %v6982
        %v7055 = vunpack.c.l.b16 %v6983
        %v7056 = vunpack.c.l.b16 %v6984
        %v7057 = vunpack.c.l.b16 %v6985
        %v7058 = vunpack.c.l.b16 %v6986
        %v7059 = vunpack.c.l.b16 %v6987
        %v7060 = vunpack.c.l.b16 %v6988
        %v7061 = vunpack.c.l.b16 %v6989
        %v7062 = vunpack.c.l.b16 %v6990
        %v7063 = vunpack.c.l.b16 %v6991
        %v7064 = vunpack.c.l.b16 %v6992
        %v7065 = vunpack.c.l.b16 %v6993
        %v7066 = vunpack.c.l.b16 %v6994
        %v7067 = vunpack.c.l.b16 %v6995
        %v7068 = vunpack.c.l.b16 %v6996
        %v7069 = vunpack.c.l.b16 %v6997
        %v7070 = vunpack.c.l.b16 %v6998
        %v7071 = vunpack.c.l.b16 %v6999
        %v7072 = vunpack.c.l.b16 %v7000
        %v7073 = vunpack.c.l.b16 %v7001
        %v7074 = vunpack.c.l.b16 %v7002
        %v7075 = vunpack.c.l.b16 %v7003
        %v7076 = vunpack.c.l.b16 %v7004
        %v7077 = vunpack.c.l.b16 %v7005
        %v7078 = vunpack.c.l.b16 %v7006
        %v7079 = vunpack.c.l.b16 %v7007
        %v7080 = vunpack.c.l.b16 %v7008
        %v7081 = vunpack.c.l.b16 %v7009
        %v7082 = vunpack.c.l.b16 %v7010
        %v7083 = vunpack.c.l.b16 %v7011
        %v7084 = vpack.c.b16 %v7053, %v7052
        %v7085 = vpack.c.b16 %v7055, %v7054
        %v7086 = vpack.c.b16 %v7057, %v7056
        %v7087 = vpack.c.b16 %v7059, %v7058
        %v7088 = vpack.c.b16 %v7061, %v7060
        %v7089 = vpack.c.b16 %v7063, %v7062
        %v7090 = vpack.c.b16 %v7065, %v7064
        %v7091 = vpack.c.b16 %v7067, %v7066
        %v7092 = vpack.c.b16 %v7069, %v7068
        %v7093 = vpack.c.b16 %v7071, %v7070
        %v7094 = vpack.c.b16 %v7073, %v7072
        %v7095 = vpack.c.b16 %v7075, %v7074
        %v7096 = vpack.c.b16 %v7077, %v7076
        %v7097 = vpack.c.b16 %v7079, %v7078
        %v7098 = vpack.c.b16 %v7081, %v7080
        %v7099 = vpack.c.b16 %v7083, %v7082
        %7116 = vmatprep.subr.bf16.mxu0 0
        %7117 = vmatpush1.bf16.msra.mxu0 %v7091
        %7118 = vmatprep.subr.bf16.mxu0 0
        %7119 = vmatpush1.bf16.msra.mxu0 %v7090
        %7120 = vmatprep.subr.bf16.mxu0 0
        %7121 = vmatpush1.bf16.msra.mxu0 %v7089
        %7122 = vmatprep.subr.bf16.mxu0 0
        %7123 = vmatpush1.bf16.msra.mxu0 %v7088
        %7124 = vmatprep.subr.bf16.mxu0 0
        %7125 = vmatpush1.bf16.msra.mxu0 %v7087
        %7126 = vmatprep.subr.bf16.mxu0 0
        %7127 = vmatpush1.bf16.msra.mxu0 %v7086
        %7128 = vmatprep.subr.bf16.mxu0 0
        %7129 = vmatpush1.bf16.msra.mxu0 %v7085
        %7130 = vmatprep.subr.bf16.mxu0 0
        %7131 = vmatpush1.bf16.msra.mxu0 %v7084
        %7132 = vmatprep.subr.bf16.mxu0 0
        %7133 = vmatpush2.bf16.msra.mxu0 %v7099
        %7134 = vmatprep.subr.bf16.mxu0 0
        %7135 = vmatpush2.bf16.msra.mxu0 %v7098
        %7136 = vmatprep.subr.bf16.mxu0 0
        %7137 = vmatpush2.bf16.msra.mxu0 %v7097
        %7138 = vmatprep.subr.bf16.mxu0 0
        %7139 = vmatpush2.bf16.msra.mxu0 %v7096
        %7140 = vmatprep.subr.bf16.mxu0 0
        %7141 = vmatpush2.bf16.msra.mxu0 %v7095
        %7142 = vmatprep.subr.bf16.mxu0 0
        %7143 = vmatpush2.bf16.msra.mxu0 %v7094
        %7144 = vmatprep.subr.bf16.mxu0 0
        %7145 = vmatpush2.bf16.msra.mxu0 %v7093
        %7146 = vmatprep.subr.bf16.mxu0 0
        %7147 = vmatpush2.bf16.msra.mxu0 %v7092
        %7148 = vmatprep.mubr.bf16.mxu0 %v5499
        %7149 = vmatmul.mubr.bf16.gmra.mxu0 %v5498
        %v7150 = vpop.f32.mrf.mxu0
        %v7151 = vadd.f32 0.0, %v7150
        %v7152 = vpop.f32.mrf.mxu0
        %v7153 = vpop.f32.mrf.mxu0
        %v7154 = vadd.f32 0.0, %v7153
        %v7155 = vpop.f32.mrf.mxu0
        %7156 = vmatprep.mubr.bf16.mxu0 %v5501
        %7157 = vmatmul.mubr.bf16.gmra.mxu0 %v5500
        %v7158 = vpop.f32.mrf.mxu0
        %v7159 = vadd.f32 0.0, %v7158
        %v7160 = vpop.f32.mrf.mxu0
        %v7161 = vpop.f32.mrf.mxu0
        %v7162 = vadd.f32 0.0, %v7161
        %v7163 = vpop.f32.mrf.mxu0
        %7164 = vmatprep.mubr.bf16.mxu0 %v5503
        %7165 = vmatmul.mubr.bf16.gmra.mxu0 %v5502
        %v7166 = vpop.f32.mrf.mxu0
        %v7167 = vadd.f32 0.0, %v7166
        %v7168 = vpop.f32.mrf.mxu0
        %v7169 = vpop.f32.mrf.mxu0
        %v7170 = vadd.f32 0.0, %v7169
        %v7171 = vpop.f32.mrf.mxu0
        %7172 = vmatprep.mubr.bf16.mxu0 %v7013
        %7173 = vmatmul.mubr.bf16.gmra.mxu0 %v7012
        %v7174 = vpop.f32.mrf.mxu0
        %v7175 = vadd.f32 0.0, %v7174
        %v7176 = vpop.f32.mrf.mxu0
        %v7177 = vpop.f32.mrf.mxu0
        %v7178 = vadd.f32 0.0, %v7177
        %v7179 = vpop.f32.mrf.mxu0
        %7180 = vmatprep.mubr.bf16.mxu0 %v5507
        %7181 = vmatmul.mubr.bf16.gmra.mxu0 %v5506
        %v7182 = vpop.f32.mrf.mxu0
        %v7183 = vadd.f32 0.0, %v7182
        %v7184 = vpop.f32.mrf.mxu0
        %v7185 = vpop.f32.mrf.mxu0
        %v7186 = vadd.f32 0.0, %v7185
        %v7187 = vpop.f32.mrf.mxu0
        %7188 = vmatprep.mubr.bf16.mxu0 %v5509
        %7189 = vmatmul.mubr.bf16.gmra.mxu0 %v5508
        %v7190 = vpop.f32.mrf.mxu0
        %v7191 = vadd.f32 0.0, %v7190
        %v7192 = vpop.f32.mrf.mxu0
        %v7193 = vpop.f32.mrf.mxu0
        %v7194 = vadd.f32 0.0, %v7193
        %v7195 = vpop.f32.mrf.mxu0
        %7196 = vmatprep.mubr.bf16.mxu0 %v5511
        %7197 = vmatmul.mubr.bf16.gmra.mxu0 %v5510
        %v7198 = vpop.f32.mrf.mxu0
        %v7199 = vadd.f32 0.0, %v7198
        %v7200 = vpop.f32.mrf.mxu0
        %v7201 = vpop.f32.mrf.mxu0
        %v7202 = vadd.f32 0.0, %v7201
        %v7203 = vpop.f32.mrf.mxu0
        %7204 = vmatprep.mubr.bf16.mxu0 %v7015
        %7205 = vmatmul.mubr.bf16.gmra.mxu0 %v7014
        %v7206 = vpop.f32.mrf.mxu0
        %v7207 = vadd.f32 0.0, %v7206
        %v7208 = vpop.f32.mrf.mxu0
        %v7209 = vpop.f32.mrf.mxu0
        %v7210 = vadd.f32 0.0, %v7209
        %v7211 = vpop.f32.mrf.mxu0
        %7212 = vdwg.mxu0
        %v7213 = vadd.f32 %v6956, %v7151
        %v7214 = vadd.f32 %v6957, %v7154
        %v7215 = vadd.f32 %v6958, %v7159
        %v7216 = vadd.f32 %v6959, %v7162
        %v7217 = vadd.f32 %v6960, %v7167
        %v7218 = vadd.f32 %v6961, %v7170
        %v7219 = vadd.f32 %v6962, %v7175
        %v7220 = vadd.f32 %v6963, %v7178
        %v7221 = vadd.f32 %v6964, %v7183
        %v7222 = vadd.f32 %v6965, %v7186
        %v7223 = vadd.f32 %v6966, %v7191
        %v7224 = vadd.f32 %v6967, %v7194
        %v7225 = vadd.f32 %v6968, %v7199
        %v7226 = vadd.f32 %v6969, %v7202
        %v7227 = vadd.f32 %v6970, %v7207
        %v7228 = vadd.f32 %v6971, %v7210
        %v7229 = vunpack.c.h.b16 %v4798
        %v7230 = vunpack.c.h.b16 %v4799
        %v7231 = vunpack.c.h.b16 %v4818
        %v7232 = vunpack.c.h.b16 %v4819
        %v7233 = vpack.c.b16 %v6977, %v6976
        %v7234 = vpack.c.b16 %v7230, %v7229
        %v7235 = vpack.c.b16 %v6979, %v6978
        %v7236 = vpack.c.b16 %v7232, %v7231
        %v7238 = vshrl.u32 %v7233, 16
        %v7240 = vrot.slane %v7238, 4
        %v7241 = vshll.u32 %v7233, 16
        %v7243 = vrot.slane %v7241, 5
        %v7244 = vor.u32 %v7240, %v7243
        %v7245 = vrot.slane %v7244, 4
        %v7247 = vshll.u32 %v7234, 16
        %v7249 = vrot.slane %v7247, 5
        %v7250 = vsel %vm4982, %v7245, %v7249
        %v7252 = vshrl.u32 %v7235, 16
        %v7254 = vrot.slane %v7252, 4
        %v7255 = vshll.u32 %v7235, 16
        %v7257 = vrot.slane %v7255, 5
        %v7258 = vor.u32 %v7254, %v7257
        %v7259 = vrot.slane %v7258, 4
        %v7261 = vshll.u32 %v7236, 16
        %v7263 = vrot.slane %v7261, 5
        %v7264 = vsel %vm4982, %v7259, %v7263
        %v7265 = vld [vmem:[%s3 + $0x380] sm:$0xf]
        %v7266 = vld [vmem:[%s3 + $0x384] sm:$0xf]
        %v7267 = vld [vmem:[%s3 + $0x388] sm:$0xf]
        %v7268 = vld [vmem:[%s3 + $0x38c] sm:$0xf]
        %v7269 = vld [vmem:[%s3 + $0x390] sm:$0xf]
        %v7270 = vld [vmem:[%s3 + $0x394] sm:$0xf]
        %v7271 = vld [vmem:[%s3 + $0x398] sm:$0xf]
        %v7272 = vld [vmem:[%s3 + $0x39c] sm:$0xf]
        %v7273 = vld [vmem:[%s3 + $0x3a0] sm:$0xf]
        %v7274 = vld [vmem:[%s3 + $0x3a4] sm:$0xf]
        %v7275 = vld [vmem:[%s3 + $0x3a8] sm:$0xf]
        %v7276 = vld [vmem:[%s3 + $0x3ac] sm:$0xf]
        %v7277 = vld [vmem:[%s3 + $0x3b0] sm:$0xf]
        %v7278 = vld [vmem:[%s3 + $0x3b4] sm:$0xf]
        %v7279 = vld [vmem:[%s3 + $0x3b8] sm:$0xf]
        %v7280 = vld [vmem:[%s3 + $0x3bc] sm:$0xf]
        %v7281 = vld [vmem:[%s3 + $0x3c0] sm:$0xf]
        %v7282 = vld [vmem:[%s3 + $0x3c4] sm:$0xf]
        %v7283 = vld [vmem:[%s3 + $0x3c8] sm:$0xf]
        %v7284 = vld [vmem:[%s3 + $0x3cc] sm:$0xf]
        %v7285 = vld [vmem:[%s3 + $0x3d0] sm:$0xf]
        %v7286 = vld [vmem:[%s3 + $0x3d4] sm:$0xf]
        %v7287 = vld [vmem:[%s3 + $0x3d8] sm:$0xf]
        %v7288 = vld [vmem:[%s3 + $0x3dc] sm:$0xf]
        %v7289 = vld [vmem:[%s3 + $0x3e0] sm:$0xf]
        %v7290 = vld [vmem:[%s3 + $0x3e4] sm:$0xf]
        %v7291 = vld [vmem:[%s3 + $0x3e8] sm:$0xf]
        %v7292 = vld [vmem:[%s3 + $0x3ec] sm:$0xf]
        %v7293 = vld [vmem:[%s3 + $0x3f0] sm:$0xf]
        %v7294 = vld [vmem:[%s3 + $0x3f4] sm:$0xf]
        %v7295 = vld [vmem:[%s3 + $0x3f8] sm:$0xf]
        %v7296 = vld [vmem:[%s3 + $0x3fc] sm:$0xf]
        %v7297 = vunpack.c.l.b16 %v7250
        %v7298 = vunpack.c.h.b16 %v7250
        %v7299 = vunpack.c.l.b16 %v7264
        %v7300 = vunpack.c.h.b16 %v7264
        %v7301 = vpack.c.b16 %v7297, %v6442
        %v7302 = vpack.c.b16 %v7298, %v6443
        %v7303 = vpack.c.b16 %v7299, %v6444
        %v7304 = vpack.c.b16 %v7300, %v6445
        %v7341 = vunpack.c.l.b16 %v7265
        %v7342 = vunpack.c.l.b16 %v7266
        %v7343 = vunpack.c.l.b16 %v7267
        %v7344 = vunpack.c.l.b16 %v7268
        %v7345 = vunpack.c.l.b16 %v7269
        %v7346 = vunpack.c.l.b16 %v7270
        %v7347 = vunpack.c.l.b16 %v7271
        %v7348 = vunpack.c.l.b16 %v7272
        %v7349 = vunpack.c.l.b16 %v7273
        %v7350 = vunpack.c.l.b16 %v7274
        %v7351 = vunpack.c.l.b16 %v7275
        %v7352 = vunpack.c.l.b16 %v7276
        %v7353 = vunpack.c.l.b16 %v7277
        %v7354 = vunpack.c.l.b16 %v7278
        %v7355 = vunpack.c.l.b16 %v7279
        %v7356 = vunpack.c.l.b16 %v7280
        %v7357 = vunpack.c.l.b16 %v7281
        %v7358 = vunpack.c.l.b16 %v7282
        %v7359 = vunpack.c.l.b16 %v7283
        %v7360 = vunpack.c.l.b16 %v7284
        %v7361 = vunpack.c.l.b16 %v7285
        %v7362 = vunpack.c.l.b16 %v7286
        %v7363 = vunpack.c.l.b16 %v7287
        %v7364 = vunpack.c.l.b16 %v7288
        %v7365 = vunpack.c.l.b16 %v7289
        %v7366 = vunpack.c.l.b16 %v7290
        %v7367 = vunpack.c.l.b16 %v7291
        %v7368 = vunpack.c.l.b16 %v7292
        %v7369 = vunpack.c.l.b16 %v7293
        %v7370 = vunpack.c.l.b16 %v7294
        %v7371 = vunpack.c.l.b16 %v7295
        %v7372 = vunpack.c.l.b16 %v7296
        %v7373 = vpack.c.b16 %v7342, %v7341
        %v7374 = vpack.c.b16 %v7344, %v7343
        %v7375 = vpack.c.b16 %v7346, %v7345
        %v7376 = vpack.c.b16 %v7348, %v7347
        %v7377 = vpack.c.b16 %v7350, %v7349
        %v7378 = vpack.c.b16 %v7352, %v7351
        %v7379 = vpack.c.b16 %v7354, %v7353
        %v7380 = vpack.c.b16 %v7356, %v7355
        %v7381 = vpack.c.b16 %v7358, %v7357
        %v7382 = vpack.c.b16 %v7360, %v7359
        %v7383 = vpack.c.b16 %v7362, %v7361
        %v7384 = vpack.c.b16 %v7364, %v7363
        %v7385 = vpack.c.b16 %v7366, %v7365
        %v7386 = vpack.c.b16 %v7368, %v7367
        %v7387 = vpack.c.b16 %v7370, %v7369
        %v7388 = vpack.c.b16 %v7372, %v7371
        %7405 = vmatprep.subr.bf16.mxu0 0
        %7406 = vmatpush1.bf16.msra.mxu0 %v7380
        %7407 = vmatprep.subr.bf16.mxu0 0
        %7408 = vmatpush1.bf16.msra.mxu0 %v7379
        %7409 = vmatprep.subr.bf16.mxu0 0
        %7410 = vmatpush1.bf16.msra.mxu0 %v7378
        %7411 = vmatprep.subr.bf16.mxu0 0
        %7412 = vmatpush1.bf16.msra.mxu0 %v7377
        %7413 = vmatprep.subr.bf16.mxu0 0
        %7414 = vmatpush1.bf16.msra.mxu0 %v7376
        %7415 = vmatprep.subr.bf16.mxu0 0
        %7416 = vmatpush1.bf16.msra.mxu0 %v7375
        %7417 = vmatprep.subr.bf16.mxu0 0
        %7418 = vmatpush1.bf16.msra.mxu0 %v7374
        %7419 = vmatprep.subr.bf16.mxu0 0
        %7420 = vmatpush1.bf16.msra.mxu0 %v7373
        %7421 = vmatprep.subr.bf16.mxu0 0
        %7422 = vmatpush2.bf16.msra.mxu0 %v7388
        %7423 = vmatprep.subr.bf16.mxu0 0
        %7424 = vmatpush2.bf16.msra.mxu0 %v7387
        %7425 = vmatprep.subr.bf16.mxu0 0
        %7426 = vmatpush2.bf16.msra.mxu0 %v7386
        %7427 = vmatprep.subr.bf16.mxu0 0
        %7428 = vmatpush2.bf16.msra.mxu0 %v7385
        %7429 = vmatprep.subr.bf16.mxu0 0
        %7430 = vmatpush2.bf16.msra.mxu0 %v7384
        %7431 = vmatprep.subr.bf16.mxu0 0
        %7432 = vmatpush2.bf16.msra.mxu0 %v7383
        %7433 = vmatprep.subr.bf16.mxu0 0
        %7434 = vmatpush2.bf16.msra.mxu0 %v7382
        %7435 = vmatprep.subr.bf16.mxu0 0
        %7436 = vmatpush2.bf16.msra.mxu0 %v7381
        %7437 = vmatprep.mubr.bf16.mxu0 %v5274
        %7438 = vmatmul.mubr.bf16.gmra.mxu0 %v5273
        %v7439 = vpop.f32.mrf.mxu0
        %v7440 = vadd.f32 0.0, %v7439
        %v7441 = vpop.f32.mrf.mxu0
        %v7442 = vpop.f32.mrf.mxu0
        %v7443 = vadd.f32 0.0, %v7442
        %v7444 = vpop.f32.mrf.mxu0
        %7445 = vmatprep.mubr.bf16.mxu0 %v5276
        %7446 = vmatmul.mubr.bf16.gmra.mxu0 %v5275
        %v7447 = vpop.f32.mrf.mxu0
        %v7448 = vadd.f32 0.0, %v7447
        %v7449 = vpop.f32.mrf.mxu0
        %v7450 = vpop.f32.mrf.mxu0
        %v7451 = vadd.f32 0.0, %v7450
        %v7452 = vpop.f32.mrf.mxu0
        %7453 = vmatprep.mubr.bf16.mxu0 %v5278
        %7454 = vmatmul.mubr.bf16.gmra.mxu0 %v5277
        %v7455 = vpop.f32.mrf.mxu0
        %v7456 = vadd.f32 0.0, %v7455
        %v7457 = vpop.f32.mrf.mxu0
        %v7458 = vpop.f32.mrf.mxu0
        %v7459 = vadd.f32 0.0, %v7458
        %v7460 = vpop.f32.mrf.mxu0
        %7461 = vmatprep.mubr.bf16.mxu0 %v7302
        %7462 = vmatmul.mubr.bf16.gmra.mxu0 %v7301
        %v7463 = vpop.f32.mrf.mxu0
        %v7464 = vadd.f32 0.0, %v7463
        %v7465 = vpop.f32.mrf.mxu0
        %v7466 = vpop.f32.mrf.mxu0
        %v7467 = vadd.f32 0.0, %v7466
        %v7468 = vpop.f32.mrf.mxu0
        %7469 = vmatprep.mubr.bf16.mxu0 %v5282
        %7470 = vmatmul.mubr.bf16.gmra.mxu0 %v5281
        %v7471 = vpop.f32.mrf.mxu0
        %v7472 = vadd.f32 0.0, %v7471
        %v7473 = vpop.f32.mrf.mxu0
        %v7474 = vpop.f32.mrf.mxu0
        %v7475 = vadd.f32 0.0, %v7474
        %v7476 = vpop.f32.mrf.mxu0
        %7477 = vmatprep.mubr.bf16.mxu0 %v5284
        %7478 = vmatmul.mubr.bf16.gmra.mxu0 %v5283
        %v7479 = vpop.f32.mrf.mxu0
        %v7480 = vadd.f32 0.0, %v7479
        %v7481 = vpop.f32.mrf.mxu0
        %v7482 = vpop.f32.mrf.mxu0
        %v7483 = vadd.f32 0.0, %v7482
        %v7484 = vpop.f32.mrf.mxu0
        %7485 = vmatprep.mubr.bf16.mxu0 %v5286
        %7486 = vmatmul.mubr.bf16.gmra.mxu0 %v5285
        %v7487 = vpop.f32.mrf.mxu0
        %v7488 = vadd.f32 0.0, %v7487
        %v7489 = vpop.f32.mrf.mxu0
        %v7490 = vpop.f32.mrf.mxu0
        %v7491 = vadd.f32 0.0, %v7490
        %v7492 = vpop.f32.mrf.mxu0
        %7493 = vmatprep.mubr.bf16.mxu0 %v7304
        %7494 = vmatmul.mubr.bf16.gmra.mxu0 %v7303
        %v7495 = vpop.f32.mrf.mxu0
        %v7496 = vadd.f32 0.0, %v7495
        %v7497 = vpop.f32.mrf.mxu0
        %v7498 = vpop.f32.mrf.mxu0
        %v7499 = vadd.f32 0.0, %v7498
        %v7500 = vpop.f32.mrf.mxu0
        %7501 = vdwg.mxu0
        %v7502 = vadd.f32 %v7213, %v7440
        %v7503 = vadd.f32 %v7214, %v7443
        %v7504 = vadd.f32 %v7215, %v7448
        %v7505 = vadd.f32 %v7216, %v7451
        %v7506 = vadd.f32 %v7217, %v7456
        %v7507 = vadd.f32 %v7218, %v7459
        %v7508 = vadd.f32 %v7219, %v7464
        %v7509 = vadd.f32 %v7220, %v7467
        %v7510 = vadd.f32 %v7221, %v7472
        %v7511 = vadd.f32 %v7222, %v7475
        %v7512 = vadd.f32 %v7223, %v7480
        %v7513 = vadd.f32 %v7224, %v7483
        %v7514 = vadd.f32 %v7225, %v7488
        %v7515 = vadd.f32 %v7226, %v7491
        %v7516 = vadd.f32 %v7227, %v7496
        %v7517 = vadd.f32 %v7228, %v7499
        %v7518 = vrot.slane %v7233, 5
        %v7519 = vrot.slane %v7518, 4
        %v7520 = vrot.slane %v7234, 5
        %v7521 = vsel %vm5723, %v7519, %v7520
        %v7522 = vrot.slane %v7235, 5
        %v7523 = vrot.slane %v7522, 4
        %v7524 = vrot.slane %v7236, 5
        %v7525 = vsel %vm5723, %v7523, %v7524
        %v7526 = vld [vmem:[%s3 + $0x400] sm:$0xf]
        %v7527 = vld [vmem:[%s3 + $0x404] sm:$0xf]
        %v7528 = vld [vmem:[%s3 + $0x408] sm:$0xf]
        %v7529 = vld [vmem:[%s3 + $0x40c] sm:$0xf]
        %v7530 = vld [vmem:[%s3 + $0x410] sm:$0xf]
        %v7531 = vld [vmem:[%s3 + $0x414] sm:$0xf]
        %v7532 = vld [vmem:[%s3 + $0x418] sm:$0xf]
        %v7533 = vld [vmem:[%s3 + $0x41c] sm:$0xf]
        %v7534 = vld [vmem:[%s3 + $0x420] sm:$0xf]
        %v7535 = vld [vmem:[%s3 + $0x424] sm:$0xf]
        %v7536 = vld [vmem:[%s3 + $0x428] sm:$0xf]
        %v7537 = vld [vmem:[%s3 + $0x42c] sm:$0xf]
        %v7538 = vld [vmem:[%s3 + $0x430] sm:$0xf]
        %v7539 = vld [vmem:[%s3 + $0x434] sm:$0xf]
        %v7540 = vld [vmem:[%s3 + $0x438] sm:$0xf]
        %v7541 = vld [vmem:[%s3 + $0x43c] sm:$0xf]
        %v7542 = vld [vmem:[%s3 + $0x440] sm:$0xf]
        %v7543 = vld [vmem:[%s3 + $0x444] sm:$0xf]
        %v7544 = vld [vmem:[%s3 + $0x448] sm:$0xf]
        %v7545 = vld [vmem:[%s3 + $0x44c] sm:$0xf]
        %v7546 = vld [vmem:[%s3 + $0x450] sm:$0xf]
        %v7547 = vld [vmem:[%s3 + $0x454] sm:$0xf]
        %v7548 = vld [vmem:[%s3 + $0x458] sm:$0xf]
        %v7549 = vld [vmem:[%s3 + $0x45c] sm:$0xf]
        %v7550 = vld [vmem:[%s3 + $0x460] sm:$0xf]
        %v7551 = vld [vmem:[%s3 + $0x464] sm:$0xf]
        %v7552 = vld [vmem:[%s3 + $0x468] sm:$0xf]
        %v7553 = vld [vmem:[%s3 + $0x46c] sm:$0xf]
        %v7554 = vld [vmem:[%s3 + $0x470] sm:$0xf]
        %v7555 = vld [vmem:[%s3 + $0x474] sm:$0xf]
        %v7556 = vld [vmem:[%s3 + $0x478] sm:$0xf]
        %v7557 = vld [vmem:[%s3 + $0x47c] sm:$0xf]
        %v7558 = vunpack.c.l.b16 %v7521
        %v7559 = vunpack.c.h.b16 %v7521
        %v7560 = vunpack.c.l.b16 %v7525
        %v7561 = vunpack.c.h.b16 %v7525
        %v7562 = vpack.c.b16 %v7558, %v6727
        %v7563 = vpack.c.b16 %v7559, %v6728
        %v7564 = vpack.c.b16 %v7560, %v6729
        %v7565 = vpack.c.b16 %v7561, %v6730
        %v7602 = vunpack.c.l.b16 %v7526
        %v7603 = vunpack.c.l.b16 %v7527
        %v7604 = vunpack.c.l.b16 %v7528
        %v7605 = vunpack.c.l.b16 %v7529
        %v7606 = vunpack.c.l.b16 %v7530
        %v7607 = vunpack.c.l.b16 %v7531
        %v7608 = vunpack.c.l.b16 %v7532
        %v7609 = vunpack.c.l.b16 %v7533
        %v7610 = vunpack.c.l.b16 %v7534
        %v7611 = vunpack.c.l.b16 %v7535
        %v7612 = vunpack.c.l.b16 %v7536
        %v7613 = vunpack.c.l.b16 %v7537
        %v7614 = vunpack.c.l.b16 %v7538
        %v7615 = vunpack.c.l.b16 %v7539
        %v7616 = vunpack.c.l.b16 %v7540
        %v7617 = vunpack.c.l.b16 %v7541
        %v7618 = vunpack.c.l.b16 %v7542
        %v7619 = vunpack.c.l.b16 %v7543
        %v7620 = vunpack.c.l.b16 %v7544
        %v7621 = vunpack.c.l.b16 %v7545
        %v7622 = vunpack.c.l.b16 %v7546
        %v7623 = vunpack.c.l.b16 %v7547
        %v7624 = vunpack.c.l.b16 %v7548
        %v7625 = vunpack.c.l.b16 %v7549
        %v7626 = vunpack.c.l.b16 %v7550
        %v7627 = vunpack.c.l.b16 %v7551
        %v7628 = vunpack.c.l.b16 %v7552
        %v7629 = vunpack.c.l.b16 %v7553
        %v7630 = vunpack.c.l.b16 %v7554
        %v7631 = vunpack.c.l.b16 %v7555
        %v7632 = vunpack.c.l.b16 %v7556
        %v7633 = vunpack.c.l.b16 %v7557
        %v7634 = vpack.c.b16 %v7603, %v7602
        %v7635 = vpack.c.b16 %v7605, %v7604
        %v7636 = vpack.c.b16 %v7607, %v7606
        %v7637 = vpack.c.b16 %v7609, %v7608
        %v7638 = vpack.c.b16 %v7611, %v7610
        %v7639 = vpack.c.b16 %v7613, %v7612
        %v7640 = vpack.c.b16 %v7615, %v7614
        %v7641 = vpack.c.b16 %v7617, %v7616
        %v7642 = vpack.c.b16 %v7619, %v7618
        %v7643 = vpack.c.b16 %v7621, %v7620
        %v7644 = vpack.c.b16 %v7623, %v7622
        %v7645 = vpack.c.b16 %v7625, %v7624
        %v7646 = vpack.c.b16 %v7627, %v7626
        %v7647 = vpack.c.b16 %v7629, %v7628
        %v7648 = vpack.c.b16 %v7631, %v7630
        %v7649 = vpack.c.b16 %v7633, %v7632
        %7666 = vmatprep.subr.bf16.mxu0 0
        %7667 = vmatpush1.bf16.msra.mxu0 %v7641
        %7668 = vmatprep.subr.bf16.mxu0 0
        %7669 = vmatpush1.bf16.msra.mxu0 %v7640
        %7670 = vmatprep.subr.bf16.mxu0 0
        %7671 = vmatpush1.bf16.msra.mxu0 %v7639
        %7672 = vmatprep.subr.bf16.mxu0 0
        %7673 = vmatpush1.bf16.msra.mxu0 %v7638
        %7674 = vmatprep.subr.bf16.mxu0 0
        %7675 = vmatpush1.bf16.msra.mxu0 %v7637
        %7676 = vmatprep.subr.bf16.mxu0 0
        %7677 = vmatpush1.bf16.msra.mxu0 %v7636
        %7678 = vmatprep.subr.bf16.mxu0 0
        %7679 = vmatpush1.bf16.msra.mxu0 %v7635
        %7680 = vmatprep.subr.bf16.mxu0 0
        %7681 = vmatpush1.bf16.msra.mxu0 %v7634
        %7682 = vmatprep.subr.bf16.mxu0 0
        %7683 = vmatpush2.bf16.msra.mxu0 %v7649
        %7684 = vmatprep.subr.bf16.mxu0 0
        %7685 = vmatpush2.bf16.msra.mxu0 %v7648
        %7686 = vmatprep.subr.bf16.mxu0 0
        %7687 = vmatpush2.bf16.msra.mxu0 %v7647
        %7688 = vmatprep.subr.bf16.mxu0 0
        %7689 = vmatpush2.bf16.msra.mxu0 %v7646
        %7690 = vmatprep.subr.bf16.mxu0 0
        %7691 = vmatpush2.bf16.msra.mxu0 %v7645
        %7692 = vmatprep.subr.bf16.mxu0 0
        %7693 = vmatpush2.bf16.msra.mxu0 %v7644
        %7694 = vmatprep.subr.bf16.mxu0 0
        %7695 = vmatpush2.bf16.msra.mxu0 %v7643
        %7696 = vmatprep.subr.bf16.mxu0 0
        %7697 = vmatpush2.bf16.msra.mxu0 %v7642
        %7698 = vmatprep.mubr.bf16.mxu0 %v5855
        %7699 = vmatmul.mubr.bf16.gmra.mxu0 %v5854
        %v7700 = vpop.f32.mrf.mxu0
        %v7701 = vadd.f32 0.0, %v7700
        %v7702 = vpop.f32.mrf.mxu0
        %v7703 = vpop.f32.mrf.mxu0
        %v7704 = vadd.f32 0.0, %v7703
        %v7705 = vpop.f32.mrf.mxu0
        %7706 = vmatprep.mubr.bf16.mxu0 %v5857
        %7707 = vmatmul.mubr.bf16.gmra.mxu0 %v5856
        %v7708 = vpop.f32.mrf.mxu0
        %v7709 = vadd.f32 0.0, %v7708
        %v7710 = vpop.f32.mrf.mxu0
        %v7711 = vpop.f32.mrf.mxu0
        %v7712 = vadd.f32 0.0, %v7711
        %v7713 = vpop.f32.mrf.mxu0
        %7714 = vmatprep.mubr.bf16.mxu0 %v5859
        %7715 = vmatmul.mubr.bf16.gmra.mxu0 %v5858
        %v7716 = vpop.f32.mrf.mxu0
        %v7717 = vadd.f32 0.0, %v7716
        %v7718 = vpop.f32.mrf.mxu0
        %v7719 = vpop.f32.mrf.mxu0
        %v7720 = vadd.f32 0.0, %v7719
        %v7721 = vpop.f32.mrf.mxu0
        %7722 = vmatprep.mubr.bf16.mxu0 %v7563
        %7723 = vmatmul.mubr.bf16.gmra.mxu0 %v7562
        %v7724 = vpop.f32.mrf.mxu0
        %v7725 = vadd.f32 0.0, %v7724
        %v7726 = vpop.f32.mrf.mxu0
        %v7727 = vpop.f32.mrf.mxu0
        %v7728 = vadd.f32 0.0, %v7727
        %v7729 = vpop.f32.mrf.mxu0
        %7730 = vmatprep.mubr.bf16.mxu0 %v5863
        %7731 = vmatmul.mubr.bf16.gmra.mxu0 %v5862
        %v7732 = vpop.f32.mrf.mxu0
        %v7733 = vadd.f32 0.0, %v7732
        %v7734 = vpop.f32.mrf.mxu0
        %v7735 = vpop.f32.mrf.mxu0
        %v7736 = vadd.f32 0.0, %v7735
        %v7737 = vpop.f32.mrf.mxu0
        %7738 = vmatprep.mubr.bf16.mxu0 %v5865
        %7739 = vmatmul.mubr.bf16.gmra.mxu0 %v5864
        %v7740 = vpop.f32.mrf.mxu0
        %v7741 = vadd.f32 0.0, %v7740
        %v7742 = vpop.f32.mrf.mxu0
        %v7743 = vpop.f32.mrf.mxu0
        %v7744 = vadd.f32 0.0, %v7743
        %v7745 = vpop.f32.mrf.mxu0
        %7746 = vmatprep.mubr.bf16.mxu0 %v5867
        %7747 = vmatmul.mubr.bf16.gmra.mxu0 %v5866
        %v7748 = vpop.f32.mrf.mxu0
        %v7749 = vadd.f32 0.0, %v7748
        %v7750 = vpop.f32.mrf.mxu0
        %v7751 = vpop.f32.mrf.mxu0
        %v7752 = vadd.f32 0.0, %v7751
        %v7753 = vpop.f32.mrf.mxu0
        %7754 = vmatprep.mubr.bf16.mxu0 %v7565
        %7755 = vmatmul.mubr.bf16.gmra.mxu0 %v7564
        %v7756 = vpop.f32.mrf.mxu0
        %v7757 = vadd.f32 0.0, %v7756
        %v7758 = vpop.f32.mrf.mxu0
        %v7759 = vpop.f32.mrf.mxu0
        %v7760 = vadd.f32 0.0, %v7759
        %v7761 = vpop.f32.mrf.mxu0
        %7762 = vdwg.mxu0
        %v7763 = vadd.f32 %v7502, %v7701
        %v7764 = vadd.f32 %v7503, %v7704
        %v7765 = vadd.f32 %v7504, %v7709
        %v7766 = vadd.f32 %v7505, %v7712
        %v7767 = vadd.f32 %v7506, %v7717
        %v7768 = vadd.f32 %v7507, %v7720
        %v7769 = vadd.f32 %v7508, %v7725
        %v7770 = vadd.f32 %v7509, %v7728
        %v7771 = vadd.f32 %v7510, %v7733
        %v7772 = vadd.f32 %v7511, %v7736
        %v7773 = vadd.f32 %v7512, %v7741
        %v7774 = vadd.f32 %v7513, %v7744
        %v7775 = vadd.f32 %v7514, %v7749
        %v7776 = vadd.f32 %v7515, %v7752
        %v7777 = vadd.f32 %v7516, %v7757
        %v7778 = vadd.f32 %v7517, %v7760
        %v7779 = vld [vmem:[%s4] sm:$0x1]
        %v7781 = vlaneseq
        %v7782 = vshrl.u32 %v7781, 7
        %v7783 = vsub.s32 0, %v7782
        %v7784 = vrot.slane %v7779, %v7783
        %v7786 = vadd.f32 %v7763, %v7784
        %v7787 = vadd.f32 %v7764, %v7784
        %v7788 = vadd.f32 %v7765, %v7784
        %v7789 = vadd.f32 %v7766, %v7784
        %v7790 = vadd.f32 %v7767, %v7784
        %v7791 = vadd.f32 %v7768, %v7784
        %v7792 = vadd.f32 %v7769, %v7784
        %v7793 = vadd.f32 %v7770, %v7784
        %v7794 = vadd.f32 %v7771, %v7784
        %v7795 = vadd.f32 %v7772, %v7784
        %v7796 = vadd.f32 %v7773, %v7784
        %v7797 = vadd.f32 %v7774, %v7784
        %v7798 = vadd.f32 %v7775, %v7784
        %v7799 = vadd.f32 %v7776, %v7784
        %v7800 = vadd.f32 %v7777, %v7784
        %v7801 = vadd.f32 %v7778, %v7784
        %vm7802 = vcmp.ge.f32.partialorder %v7786, 0.0
        %vm7803 = vcmp.ge.f32.partialorder %v7787, 0.0
        %vm7804 = vcmp.ge.f32.partialorder %v7788, 0.0
        %vm7805 = vcmp.ge.f32.partialorder %v7789, 0.0
        %vm7806 = vcmp.ge.f32.partialorder %v7790, 0.0
        %vm7807 = vcmp.ge.f32.partialorder %v7791, 0.0
        %vm7808 = vcmp.ge.f32.partialorder %v7792, 0.0
        %vm7809 = vcmp.ge.f32.partialorder %v7793, 0.0
        %vm7810 = vcmp.ge.f32.partialorder %v7794, 0.0
        %vm7811 = vcmp.ge.f32.partialorder %v7795, 0.0
        %vm7812 = vcmp.ge.f32.partialorder %v7796, 0.0
        %vm7813 = vcmp.ge.f32.partialorder %v7797, 0.0
        %vm7814 = vcmp.ge.f32.partialorder %v7798, 0.0
        %vm7815 = vcmp.ge.f32.partialorder %v7799, 0.0
        %vm7816 = vcmp.ge.f32.partialorder %v7800, 0.0
        %vm7817 = vcmp.ge.f32.partialorder %v7801, 0.0
        %v7818 = vstv %s379
        %v7819 = vmul.f32 %v7818, %v7786
        %v7820 = vmul.f32 %v7818, %v7787
        %v7821 = vmul.f32 %v7818, %v7788
        %v7822 = vmul.f32 %v7818, %v7789
        %v7823 = vmul.f32 %v7818, %v7790
        %v7824 = vmul.f32 %v7818, %v7791
        %v7825 = vmul.f32 %v7818, %v7792
        %v7826 = vmul.f32 %v7818, %v7793
        %v7827 = vmul.f32 %v7818, %v7794
        %v7828 = vmul.f32 %v7818, %v7795
        %v7829 = vmul.f32 %v7818, %v7796
        %v7830 = vmul.f32 %v7818, %v7797
        %v7831 = vmul.f32 %v7818, %v7798
        %v7832 = vmul.f32 %v7818, %v7799
        %v7833 = vmul.f32 %v7818, %v7800
        %v7834 = vmul.f32 %v7818, %v7801
        %v7835 = vsel %vm7802, %v7786, %v7819
        %v7836 = vsel %vm7803, %v7787, %v7820
        %v7837 = vsel %vm7804, %v7788, %v7821
        %v7838 = vsel %vm7805, %v7789, %v7822
        %v7839 = vsel %vm7806, %v7790, %v7823
        %v7840 = vsel %vm7807, %v7791, %v7824
        %v7841 = vsel %vm7808, %v7792, %v7825
        %v7842 = vsel %vm7809, %v7793, %v7826
        %v7843 = vsel %vm7810, %v7794, %v7827
        %v7844 = vsel %vm7811, %v7795, %v7828
        %v7845 = vsel %vm7812, %v7796, %v7829
        %v7846 = vsel %vm7813, %v7797, %v7830
        %v7847 = vsel %vm7814, %v7798, %v7831
        %v7848 = vsel %vm7815, %v7799, %v7832
        %v7849 = vsel %vm7816, %v7800, %v7833
        %v7850 = vsel %vm7817, %v7801, %v7834
        %v7851 = vmax.f32 %v7835, %v7836
        %v7852 = vmax.f32 %v7837, %v7838
        %v7853 = vmax.f32 %v7839, %v7840
        %v7854 = vmax.f32 %v7841, %v7842
        %v7855 = vmax.f32 %v7843, %v7844
        %v7856 = vmax.f32 %v7845, %v7846
        %v7857 = vmax.f32 %v7847, %v7848
        %v7858 = vmax.f32 %v7849, %v7850
        %v7867 = vcombine.high %v7851, %v7851
        %v7869 = vunpack.c.l.s4 1983009808
        %v7870 = vunpack.c.0.s8 %v7869
        %v7871 = vlaneseq
        %v7872 = vshrl.u32 %v7871, 7
        %v7873 = vsub.s32 %v7870, %v7872
        %v7874 = vrot.slane %v7851, %v7873
        %v7876 = vunpack.c.l.s4 1983009808
        %v7877 = vunpack.c.0.s8 %v7876
        %v7878 = vlaneseq
        %v7879 = vshrl.u32 %v7878, 7
        %v7880 = vsub.s32 %v7877, %v7879
        %v7881 = vrot.slane %v7867, %v7880
        %v7882 = vcombine.high %v7874, %v7874
        %v7883 = vcombine.high %v7881, %v7881
        %v7884 = vcombine.high %v7852, %v7852
        %v7886 = vunpack.c.l.s4 1983009808
        %v7887 = vunpack.c.0.s8 %v7886
        %v7888 = vlaneseq
        %v7889 = vshrl.u32 %v7888, 7
        %v7890 = vsub.s32 %v7887, %v7889
        %v7891 = vrot.slane %v7852, %v7890
        %v7893 = vunpack.c.l.s4 1983009808
        %v7894 = vunpack.c.0.s8 %v7893
        %v7895 = vlaneseq
        %v7896 = vshrl.u32 %v7895, 7
        %v7897 = vsub.s32 %v7894, %v7896
        %v7898 = vrot.slane %v7884, %v7897
        %v7899 = vcombine.high %v7891, %v7891
        %v7900 = vcombine.high %v7898, %v7898
        %v7901 = vcombine.high %v7853, %v7853
        %v7903 = vunpack.c.l.s4 1983009808
        %v7904 = vunpack.c.0.s8 %v7903
        %v7905 = vlaneseq
        %v7906 = vshrl.u32 %v7905, 7
        %v7907 = vsub.s32 %v7904, %v7906
        %v7908 = vrot.slane %v7853, %v7907
        %v7910 = vunpack.c.l.s4 1983009808
        %v7911 = vunpack.c.0.s8 %v7910
        %v7912 = vlaneseq
        %v7913 = vshrl.u32 %v7912, 7
        %v7914 = vsub.s32 %v7911, %v7913
        %v7915 = vrot.slane %v7901, %v7914
        %v7916 = vcombine.high %v7908, %v7908
        %v7917 = vcombine.high %v7915, %v7915
        %v7918 = vcombine.high %v7854, %v7854
        %v7920 = vunpack.c.l.s4 1983009808
        %v7921 = vunpack.c.0.s8 %v7920
        %v7922 = vlaneseq
        %v7923 = vshrl.u32 %v7922, 7
        %v7924 = vsub.s32 %v7921, %v7923
        %v7925 = vrot.slane %v7854, %v7924
        %v7927 = vunpack.c.l.s4 1983009808
        %v7928 = vunpack.c.0.s8 %v7927
        %v7929 = vlaneseq
        %v7930 = vshrl.u32 %v7929, 7
        %v7931 = vsub.s32 %v7928, %v7930
        %v7932 = vrot.slane %v7918, %v7931
        %v7933 = vcombine.high %v7925, %v7925
        %v7934 = vcombine.high %v7932, %v7932
        %v7935 = vcombine.high %v7855, %v7855
        %v7937 = vunpack.c.l.s4 1983009808
        %v7938 = vunpack.c.0.s8 %v7937
        %v7939 = vlaneseq
        %v7940 = vshrl.u32 %v7939, 7
        %v7941 = vsub.s32 %v7938, %v7940
        %v7942 = vrot.slane %v7855, %v7941
        %v7944 = vunpack.c.l.s4 1983009808
        %v7945 = vunpack.c.0.s8 %v7944
        %v7946 = vlaneseq
        %v7947 = vshrl.u32 %v7946, 7
        %v7948 = vsub.s32 %v7945, %v7947
        %v7949 = vrot.slane %v7935, %v7948
        %v7950 = vcombine.high %v7942, %v7942
        %v7951 = vcombine.high %v7949, %v7949
        %v7952 = vcombine.high %v7856, %v7856
        %v7954 = vunpack.c.l.s4 1983009808
        %v7955 = vunpack.c.0.s8 %v7954
        %v7956 = vlaneseq
        %v7957 = vshrl.u32 %v7956, 7
        %v7958 = vsub.s32 %v7955, %v7957
        %v7959 = vrot.slane %v7856, %v7958
        %v7961 = vunpack.c.l.s4 1983009808
        %v7962 = vunpack.c.0.s8 %v7961
        %v7963 = vlaneseq
        %v7964 = vshrl.u32 %v7963, 7
        %v7965 = vsub.s32 %v7962, %v7964
        %v7966 = vrot.slane %v7952, %v7965
        %v7967 = vcombine.high %v7959, %v7959
        %v7968 = vcombine.high %v7966, %v7966
        %v7969 = vcombine.high %v7857, %v7857
        %v7971 = vunpack.c.l.s4 1983009808
        %v7972 = vunpack.c.0.s8 %v7971
        %v7973 = vlaneseq
        %v7974 = vshrl.u32 %v7973, 7
        %v7975 = vsub.s32 %v7972, %v7974
        %v7976 = vrot.slane %v7857, %v7975
        %v7978 = vunpack.c.l.s4 1983009808
        %v7979 = vunpack.c.0.s8 %v7978
        %v7980 = vlaneseq
        %v7981 = vshrl.u32 %v7980, 7
        %v7982 = vsub.s32 %v7979, %v7981
        %v7983 = vrot.slane %v7969, %v7982
        %v7984 = vcombine.high %v7976, %v7976
        %v7985 = vcombine.high %v7983, %v7983
        %v7986 = vcombine.high %v7858, %v7858
        %v7988 = vunpack.c.l.s4 1983009808
        %v7989 = vunpack.c.0.s8 %v7988
        %v7990 = vlaneseq
        %v7991 = vshrl.u32 %v7990, 7
        %v7992 = vsub.s32 %v7989, %v7991
        %v7993 = vrot.slane %v7858, %v7992
        %v7995 = vunpack.c.l.s4 1983009808
        %v7996 = vunpack.c.0.s8 %v7995
        %v7997 = vlaneseq
        %v7998 = vshrl.u32 %v7997, 7
        %v7999 = vsub.s32 %v7996, %v7998
        %v8000 = vrot.slane %v7986, %v7999
        %v8001 = vcombine.high %v7993, %v7993
        %v8002 = vcombine.high %v8000, %v8000
        %v8035 = vrot.slane %v7874, 7
        %v8036 = vrot.slane %v8035, 2
        %v8037 = vrot.slane %v7882, 7
        %v8038 = vrot.slane %v8037, 2
        %v8039 = vrot.slane %v7881, 7
        %v8040 = vrot.slane %v8039, 2
        %v8041 = vrot.slane %v7883, 7
        %v8042 = vrot.slane %v8041, 2
        %v8043 = vrot.slane %v7891, 7
        %v8044 = vrot.slane %v8043, 2
        %v8045 = vrot.slane %v7899, 7
        %v8046 = vrot.slane %v8045, 2
        %v8047 = vrot.slane %v7898, 7
        %v8048 = vrot.slane %v8047, 2
        %v8049 = vrot.slane %v7900, 7
        %v8050 = vrot.slane %v8049, 2
        %v8051 = vrot.slane %v7908, 7
        %v8052 = vrot.slane %v8051, 2
        %v8053 = vrot.slane %v7916, 7
        %v8054 = vrot.slane %v8053, 2
        %v8055 = vrot.slane %v7915, 7
        %v8056 = vrot.slane %v8055, 2
        %v8057 = vrot.slane %v7917, 7
        %v8058 = vrot.slane %v8057, 2
        %v8059 = vrot.slane %v7925, 7
        %v8060 = vrot.slane %v8059, 2
        %v8061 = vrot.slane %v7933, 7
        %v8062 = vrot.slane %v8061, 2
        %v8063 = vrot.slane %v7932, 7
        %v8064 = vrot.slane %v8063, 2
        %v8065 = vrot.slane %v7934, 7
        %v8066 = vrot.slane %v8065, 2
        %v8067 = vrot.slane %v7942, 7
        %v8068 = vrot.slane %v8067, 2
        %v8069 = vrot.slane %v7950, 7
        %v8070 = vrot.slane %v8069, 2
        %v8071 = vrot.slane %v7949, 7
        %v8072 = vrot.slane %v8071, 2
        %v8073 = vrot.slane %v7951, 7
        %v8074 = vrot.slane %v8073, 2
        %v8075 = vrot.slane %v7959, 7
        %v8076 = vrot.slane %v8075, 2
        %v8077 = vrot.slane %v7967, 7
        %v8078 = vrot.slane %v8077, 2
        %v8079 = vrot.slane %v7966, 7
        %v8080 = vrot.slane %v8079, 2
        %v8081 = vrot.slane %v7968, 7
        %v8082 = vrot.slane %v8081, 2
        %v8083 = vrot.slane %v7976, 7
        %v8084 = vrot.slane %v8083, 2
        %v8085 = vrot.slane %v7984, 7
        %v8086 = vrot.slane %v8085, 2
        %v8087 = vrot.slane %v7983, 7
        %v8088 = vrot.slane %v8087, 2
        %v8089 = vrot.slane %v7985, 7
        %v8090 = vrot.slane %v8089, 2
        %v8091 = vrot.slane %v7993, 7
        %v8092 = vrot.slane %v8091, 2
        %v8093 = vrot.slane %v8001, 7
        %v8094 = vrot.slane %v8093, 2
        %v8095 = vrot.slane %v8000, 7
        %v8096 = vrot.slane %v8095, 2
        %v8097 = vrot.slane %v8002, 7
        %v8098 = vrot.slane %v8097, 2
        %v8131 = vmax.f32 %v7874, %v8036
        %v8132 = vmax.f32 %v7882, %v8038
        %v8133 = vmax.f32 %v7881, %v8040
        %v8134 = vmax.f32 %v7883, %v8042
        %v8135 = vmax.f32 %v7891, %v8044
        %v8136 = vmax.f32 %v7899, %v8046
        %v8137 = vmax.f32 %v7898, %v8048
        %v8138 = vmax.f32 %v7900, %v8050
        %v8139 = vmax.f32 %v7908, %v8052
        %v8140 = vmax.f32 %v7916, %v8054
        %v8141 = vmax.f32 %v7915, %v8056
        %v8142 = vmax.f32 %v7917, %v8058
        %v8143 = vmax.f32 %v7925, %v8060
        %v8144 = vmax.f32 %v7933, %v8062
        %v8145 = vmax.f32 %v7932, %v8064
        %v8146 = vmax.f32 %v7934, %v8066
        %v8147 = vmax.f32 %v7942, %v8068
        %v8148 = vmax.f32 %v7950, %v8070
        %v8149 = vmax.f32 %v7949, %v8072
        %v8150 = vmax.f32 %v7951, %v8074
        %v8151 = vmax.f32 %v7959, %v8076
        %v8152 = vmax.f32 %v7967, %v8078
        %v8153 = vmax.f32 %v7966, %v8080
        %v8154 = vmax.f32 %v7968, %v8082
        %v8155 = vmax.f32 %v7976, %v8084
        %v8156 = vmax.f32 %v7984, %v8086
        %v8157 = vmax.f32 %v7983, %v8088
        %v8158 = vmax.f32 %v7985, %v8090
        %v8159 = vmax.f32 %v7993, %v8092
        %v8160 = vmax.f32 %v8001, %v8094
        %v8161 = vmax.f32 %v8000, %v8096
        %v8162 = vmax.f32 %v8002, %v8098
        %v8195 = vlaneseq
        %v8196 = vshrl.u32 %v8195, 7
        %v8197 = vsub.s32 0, %v8196
        %v8198 = vrot.slane %v8131, %v8197
        %v8199 = vlaneseq
        %v8200 = vshrl.u32 %v8199, 7
        %v8201 = vsub.s32 0, %v8200
        %v8202 = vrot.slane %v8132, %v8201
        %v8203 = vlaneseq
        %v8204 = vshrl.u32 %v8203, 7
        %v8205 = vsub.s32 0, %v8204
        %v8206 = vrot.slane %v8133, %v8205
        %v8207 = vlaneseq
        %v8208 = vshrl.u32 %v8207, 7
        %v8209 = vsub.s32 0, %v8208
        %v8210 = vrot.slane %v8134, %v8209
        %v8211 = vlaneseq
        %v8212 = vshrl.u32 %v8211, 7
        %v8213 = vsub.s32 0, %v8212
        %v8214 = vrot.slane %v8135, %v8213
        %v8215 = vlaneseq
        %v8216 = vshrl.u32 %v8215, 7
        %v8217 = vsub.s32 0, %v8216
        %v8218 = vrot.slane %v8136, %v8217
        %v8219 = vlaneseq
        %v8220 = vshrl.u32 %v8219, 7
        %v8221 = vsub.s32 0, %v8220
        %v8222 = vrot.slane %v8137, %v8221
        %v8223 = vlaneseq
        %v8224 = vshrl.u32 %v8223, 7
        %v8225 = vsub.s32 0, %v8224
        %v8226 = vrot.slane %v8138, %v8225
        %v8227 = vlaneseq
        %v8228 = vshrl.u32 %v8227, 7
        %v8229 = vsub.s32 0, %v8228
        %v8230 = vrot.slane %v8139, %v8229
        %v8231 = vlaneseq
        %v8232 = vshrl.u32 %v8231, 7
        %v8233 = vsub.s32 0, %v8232
        %v8234 = vrot.slane %v8140, %v8233
        %v8235 = vlaneseq
        %v8236 = vshrl.u32 %v8235, 7
        %v8237 = vsub.s32 0, %v8236
        %v8238 = vrot.slane %v8141, %v8237
        %v8239 = vlaneseq
        %v8240 = vshrl.u32 %v8239, 7
        %v8241 = vsub.s32 0, %v8240
        %v8242 = vrot.slane %v8142, %v8241
        %v8243 = vlaneseq
        %v8244 = vshrl.u32 %v8243, 7
        %v8245 = vsub.s32 0, %v8244
        %v8246 = vrot.slane %v8143, %v8245
        %v8247 = vlaneseq
        %v8248 = vshrl.u32 %v8247, 7
        %v8249 = vsub.s32 0, %v8248
        %v8250 = vrot.slane %v8144, %v8249
        %v8251 = vlaneseq
        %v8252 = vshrl.u32 %v8251, 7
        %v8253 = vsub.s32 0, %v8252
        %v8254 = vrot.slane %v8145, %v8253
        %v8255 = vlaneseq
        %v8256 = vshrl.u32 %v8255, 7
        %v8257 = vsub.s32 0, %v8256
        %v8258 = vrot.slane %v8146, %v8257
        %v8259 = vlaneseq
        %v8260 = vshrl.u32 %v8259, 7
        %v8261 = vsub.s32 0, %v8260
        %v8262 = vrot.slane %v8147, %v8261
        %v8263 = vlaneseq
        %v8264 = vshrl.u32 %v8263, 7
        %v8265 = vsub.s32 0, %v8264
        %v8266 = vrot.slane %v8148, %v8265
        %v8267 = vlaneseq
        %v8268 = vshrl.u32 %v8267, 7
        %v8269 = vsub.s32 0, %v8268
        %v8270 = vrot.slane %v8149, %v8269
        %v8271 = vlaneseq
        %v8272 = vshrl.u32 %v8271, 7
        %v8273 = vsub.s32 0, %v8272
        %v8274 = vrot.slane %v8150, %v8273
        %v8275 = vlaneseq
        %v8276 = vshrl.u32 %v8275, 7
        %v8277 = vsub.s32 0, %v8276
        %v8278 = vrot.slane %v8151, %v8277
        %v8279 = vlaneseq
        %v8280 = vshrl.u32 %v8279, 7
        %v8281 = vsub.s32 0, %v8280
        %v8282 = vrot.slane %v8152, %v8281
        %v8283 = vlaneseq
        %v8284 = vshrl.u32 %v8283, 7
        %v8285 = vsub.s32 0, %v8284
        %v8286 = vrot.slane %v8153, %v8285
        %v8287 = vlaneseq
        %v8288 = vshrl.u32 %v8287, 7
        %v8289 = vsub.s32 0, %v8288
        %v8290 = vrot.slane %v8154, %v8289
        %v8291 = vlaneseq
        %v8292 = vshrl.u32 %v8291, 7
        %v8293 = vsub.s32 0, %v8292
        %v8294 = vrot.slane %v8155, %v8293
        %v8295 = vlaneseq
        %v8296 = vshrl.u32 %v8295, 7
        %v8297 = vsub.s32 0, %v8296
        %v8298 = vrot.slane %v8156, %v8297
        %v8299 = vlaneseq
        %v8300 = vshrl.u32 %v8299, 7
        %v8301 = vsub.s32 0, %v8300
        %v8302 = vrot.slane %v8157, %v8301
        %v8303 = vlaneseq
        %v8304 = vshrl.u32 %v8303, 7
        %v8305 = vsub.s32 0, %v8304
        %v8306 = vrot.slane %v8158, %v8305
        %v8307 = vlaneseq
        %v8308 = vshrl.u32 %v8307, 7
        %v8309 = vsub.s32 0, %v8308
        %v8310 = vrot.slane %v8159, %v8309
        %v8311 = vlaneseq
        %v8312 = vshrl.u32 %v8311, 7
        %v8313 = vsub.s32 0, %v8312
        %v8314 = vrot.slane %v8160, %v8313
        %v8315 = vlaneseq
        %v8316 = vshrl.u32 %v8315, 7
        %v8317 = vsub.s32 0, %v8316
        %v8318 = vrot.slane %v8161, %v8317
        %v8319 = vlaneseq
        %v8320 = vshrl.u32 %v8319, 7
        %v8321 = vsub.s32 0, %v8320
        %v8322 = vrot.slane %v8162, %v8321
        %vm8323 = vcmask 1041409
        %v8324 = vsel %vm8323, %v8202, %v8198
        %v8325 = vsel %vm4373, %v8206, %v8324
        %v8326 = vsel %vm4375, %v8210, %v8325
        %v8327 = vsel %vm4377, %v8214, %v8326
        %v8328 = vsel %vm4379, %v8218, %v8327
        %v8329 = vsel %vm4381, %v8222, %v8328
        %v8330 = vsel %vm4383, %v8226, %v8329
        %v8331 = vsel %vm8323, %v8234, %v8230
        %v8332 = vsel %vm4373, %v8238, %v8331
        %v8333 = vsel %vm4375, %v8242, %v8332
        %v8334 = vsel %vm4377, %v8246, %v8333
        %v8335 = vsel %vm4379, %v8250, %v8334
        %v8336 = vsel %vm4381, %v8254, %v8335
        %v8337 = vsel %vm4383, %v8258, %v8336
        %v8338 = vsel %vm8323, %v8266, %v8262
        %v8339 = vsel %vm4373, %v8270, %v8338
        %v8340 = vsel %vm4375, %v8274, %v8339
        %v8341 = vsel %vm4377, %v8278, %v8340
        %v8342 = vsel %vm4379, %v8282, %v8341
        %v8343 = vsel %vm4381, %v8286, %v8342
        %v8344 = vsel %vm4383, %v8290, %v8343
        %v8345 = vsel %vm8323, %v8298, %v8294
        %v8346 = vsel %vm4373, %v8302, %v8345
        %v8347 = vsel %vm4375, %v8306, %v8346
        %v8348 = vsel %vm4377, %v8310, %v8347
        %v8349 = vsel %vm4379, %v8314, %v8348
        %v8350 = vsel %vm4381, %v8318, %v8349
        %v8351 = vsel %vm4383, %v8322, %v8350
        %v8352 = vcombine.low %v8330, %v8344
        %v8353 = vcombine.high %v8330, %v8344
        %v8355 = vunpack.c.l.s4 1966171168
        %v8356 = vunpack.c.0.s8 %v8355
        %v8357 = vlaneseq
        %v8358 = vshrl.u32 %v8357, 7
        %v8359 = vsub.s32 %v8356, %v8358
        %v8360 = vrot.slane %v8352, %v8359
        %v8362 = vunpack.c.l.s4 1966171168
        %v8363 = vunpack.c.0.s8 %v8362
        %v8364 = vlaneseq
        %v8365 = vshrl.u32 %v8364, 7
        %v8366 = vsub.s32 %v8363, %v8365
        %v8367 = vrot.slane %v8353, %v8366
        %v8368 = vcombine.high %v8360, %v8360
        %v8369 = vcombine.high %v8367, %v8367
        %v8371 = vunpack.c.l.s4 1966171168
        %v8372 = vunpack.c.0.s8 %v8371
        %v8373 = vlaneseq
        %v8374 = vshrl.u32 %v8373, 7
        %v8375 = vsub.s32 %v8372, %v8374
        %v8376 = vrot.slane %v8360, %v8375
        %v8378 = vunpack.c.l.s4 1966171168
        %v8379 = vunpack.c.0.s8 %v8378
        %v8380 = vlaneseq
        %v8381 = vshrl.u32 %v8380, 7
        %v8382 = vsub.s32 %v8379, %v8381
        %v8383 = vrot.slane %v8367, %v8382
        %v8385 = vunpack.c.l.s4 1966171168
        %v8386 = vunpack.c.0.s8 %v8385
        %v8387 = vlaneseq
        %v8388 = vshrl.u32 %v8387, 7
        %v8389 = vsub.s32 %v8386, %v8388
        %v8390 = vrot.slane %v8368, %v8389
        %v8392 = vunpack.c.l.s4 1966171168
        %v8393 = vunpack.c.0.s8 %v8392
        %v8394 = vlaneseq
        %v8395 = vshrl.u32 %v8394, 7
        %v8396 = vsub.s32 %v8393, %v8395
        %v8397 = vrot.slane %v8369, %v8396
        %v8398 = vcombine.high %v8376, %v8376
        %v8399 = vcombine.high %v8383, %v8383
        %v8400 = vcombine.high %v8390, %v8390
        %v8401 = vcombine.high %v8397, %v8397
        %v8402 = vcombine.low %v8337, %v8351
        %v8403 = vcombine.high %v8337, %v8351
        %v8405 = vunpack.c.l.s4 1966171168
        %v8406 = vunpack.c.0.s8 %v8405
        %v8407 = vlaneseq
        %v8408 = vshrl.u32 %v8407, 7
        %v8409 = vsub.s32 %v8406, %v8408
        %v8410 = vrot.slane %v8402, %v8409
        %v8412 = vunpack.c.l.s4 1966171168
        %v8413 = vunpack.c.0.s8 %v8412
        %v8414 = vlaneseq
        %v8415 = vshrl.u32 %v8414, 7
        %v8416 = vsub.s32 %v8413, %v8415
        %v8417 = vrot.slane %v8403, %v8416
        %v8418 = vcombine.high %v8410, %v8410
        %v8419 = vcombine.high %v8417, %v8417
        %v8421 = vunpack.c.l.s4 1966171168
        %v8422 = vunpack.c.0.s8 %v8421
        %v8423 = vlaneseq
        %v8424 = vshrl.u32 %v8423, 7
        %v8425 = vsub.s32 %v8422, %v8424
        %v8426 = vrot.slane %v8410, %v8425
        %v8428 = vunpack.c.l.s4 1966171168
        %v8429 = vunpack.c.0.s8 %v8428
        %v8430 = vlaneseq
        %v8431 = vshrl.u32 %v8430, 7
        %v8432 = vsub.s32 %v8429, %v8431
        %v8433 = vrot.slane %v8417, %v8432
        %v8435 = vunpack.c.l.s4 1966171168
        %v8436 = vunpack.c.0.s8 %v8435
        %v8437 = vlaneseq
        %v8438 = vshrl.u32 %v8437, 7
        %v8439 = vsub.s32 %v8436, %v8438
        %v8440 = vrot.slane %v8418, %v8439
        %v8442 = vunpack.c.l.s4 1966171168
        %v8443 = vunpack.c.0.s8 %v8442
        %v8444 = vlaneseq
        %v8445 = vshrl.u32 %v8444, 7
        %v8446 = vsub.s32 %v8443, %v8445
        %v8447 = vrot.slane %v8419, %v8446
        %v8448 = vcombine.high %v8426, %v8426
        %v8449 = vcombine.high %v8433, %v8433
        %v8450 = vcombine.high %v8440, %v8440
        %v8451 = vcombine.high %v8447, %v8447
        %v8468 = vpack.c.bf16 %v8376, %v8376
        %v8469 = vpack.c.bf16 %v8390, %v8390
        %v8470 = vpack.c.bf16 %v8398, %v8398
        %v8471 = vpack.c.bf16 %v8400, %v8400
        %v8472 = vpack.c.bf16 %v8383, %v8383
        %v8473 = vpack.c.bf16 %v8397, %v8397
        %v8474 = vpack.c.bf16 %v8399, %v8399
        %v8475 = vpack.c.bf16 %v8401, %v8401
        %v8476 = vpack.c.bf16 %v8426, %v8426
        %v8477 = vpack.c.bf16 %v8440, %v8440
        %v8478 = vpack.c.bf16 %v8448, %v8448
        %v8479 = vpack.c.bf16 %v8450, %v8450
        %v8480 = vpack.c.bf16 %v8433, %v8433
        %v8481 = vpack.c.bf16 %v8447, %v8447
        %v8482 = vpack.c.bf16 %v8449, %v8449
        %v8483 = vpack.c.bf16 %v8451, %v8451
        %v8484 = vld [vmem:[%s5] sm:$0xf]
        %v8485 = vld [vmem:[%s5 + $0x4] sm:$0xf]
        %v8486 = vld [vmem:[%s5 + $0x8] sm:$0xf]
        %v8487 = vld [vmem:[%s5 + $0xc] sm:$0xf]
        %v8488 = vld [vmem:[%s5 + $0x10] sm:$0xf]
        %v8489 = vld [vmem:[%s5 + $0x14] sm:$0xf]
        %v8490 = vld [vmem:[%s5 + $0x18] sm:$0xf]
        %v8491 = vld [vmem:[%s5 + $0x1c] sm:$0xf]
        %v8492 = vld [vmem:[%s5 + $0x20] sm:$0xf]
        %v8493 = vld [vmem:[%s5 + $0x24] sm:$0xf]
        %v8494 = vld [vmem:[%s5 + $0x28] sm:$0xf]
        %v8495 = vld [vmem:[%s5 + $0x2c] sm:$0xf]
        %v8496 = vld [vmem:[%s5 + $0x30] sm:$0xf]
        %v8497 = vld [vmem:[%s5 + $0x34] sm:$0xf]
        %v8498 = vld [vmem:[%s5 + $0x38] sm:$0xf]
        %v8499 = vld [vmem:[%s5 + $0x3c] sm:$0xf]
        %v8500 = vld [vmem:[%s5 + $0x40] sm:$0xf]
        %v8501 = vld [vmem:[%s5 + $0x44] sm:$0xf]
        %v8502 = vld [vmem:[%s5 + $0x48] sm:$0xf]
        %v8503 = vld [vmem:[%s5 + $0x4c] sm:$0xf]
        %v8504 = vld [vmem:[%s5 + $0x50] sm:$0xf]
        %v8505 = vld [vmem:[%s5 + $0x54] sm:$0xf]
        %v8506 = vld [vmem:[%s5 + $0x58] sm:$0xf]
        %v8507 = vld [vmem:[%s5 + $0x5c] sm:$0xf]
        %v8508 = vld [vmem:[%s5 + $0x60] sm:$0xf]
        %v8509 = vld [vmem:[%s5 + $0x64] sm:$0xf]
        %v8510 = vld [vmem:[%s5 + $0x68] sm:$0xf]
        %v8511 = vld [vmem:[%s5 + $0x6c] sm:$0xf]
        %v8512 = vld [vmem:[%s5 + $0x70] sm:$0xf]
        %v8513 = vld [vmem:[%s5 + $0x74] sm:$0xf]
        %v8514 = vld [vmem:[%s5 + $0x78] sm:$0xf]
        %v8515 = vld [vmem:[%s5 + $0x7c] sm:$0xf]
        %v8516 = vld [vmem:[%s5 + $0x80] sm:$0xf]
        %v8517 = vld [vmem:[%s5 + $0x84] sm:$0xf]
        %v8518 = vld [vmem:[%s5 + $0x88] sm:$0xf]
        %v8519 = vld [vmem:[%s5 + $0x8c] sm:$0xf]
        %v8520 = vld [vmem:[%s5 + $0x90] sm:$0xf]
        %v8521 = vld [vmem:[%s5 + $0x94] sm:$0xf]
        %v8522 = vld [vmem:[%s5 + $0x98] sm:$0xf]
        %v8523 = vld [vmem:[%s5 + $0x9c] sm:$0xf]
        %v8524 = vld [vmem:[%s5 + $0xa0] sm:$0xf]
        %v8525 = vld [vmem:[%s5 + $0xa4] sm:$0xf]
        %v8526 = vld [vmem:[%s5 + $0xa8] sm:$0xf]
        %v8527 = vld [vmem:[%s5 + $0xac] sm:$0xf]
        %v8528 = vld [vmem:[%s5 + $0xb0] sm:$0xf]
        %v8529 = vld [vmem:[%s5 + $0xb4] sm:$0xf]
        %v8530 = vld [vmem:[%s5 + $0xb8] sm:$0xf]
        %v8531 = vld [vmem:[%s5 + $0xbc] sm:$0xf]
        %v8532 = vld [vmem:[%s5 + $0xc0] sm:$0xf]
        %v8533 = vld [vmem:[%s5 + $0xc4] sm:$0xf]
        %v8534 = vld [vmem:[%s5 + $0xc8] sm:$0xf]
        %v8535 = vld [vmem:[%s5 + $0xcc] sm:$0xf]
        %v8536 = vld [vmem:[%s5 + $0xd0] sm:$0xf]
        %v8537 = vld [vmem:[%s5 + $0xd4] sm:$0xf]
        %v8538 = vld [vmem:[%s5 + $0xd8] sm:$0xf]
        %v8539 = vld [vmem:[%s5 + $0xdc] sm:$0xf]
        %v8540 = vld [vmem:[%s5 + $0xe0] sm:$0xf]
        %v8541 = vld [vmem:[%s5 + $0xe4] sm:$0xf]
        %v8542 = vld [vmem:[%s5 + $0xe8] sm:$0xf]
        %v8543 = vld [vmem:[%s5 + $0xec] sm:$0xf]
        %v8544 = vld [vmem:[%s5 + $0xf0] sm:$0xf]
        %v8545 = vld [vmem:[%s5 + $0xf4] sm:$0xf]
        %v8546 = vld [vmem:[%s5 + $0xf8] sm:$0xf]
        %v8547 = vld [vmem:[%s5 + $0xfc] sm:$0xf]
        %v8548 = vld [vmem:[%s5 + $0x100] sm:$0xf]
        %v8549 = vld [vmem:[%s5 + $0x104] sm:$0xf]
        %v8550 = vld [vmem:[%s5 + $0x108] sm:$0xf]
        %v8551 = vld [vmem:[%s5 + $0x10c] sm:$0xf]
        %v8552 = vld [vmem:[%s5 + $0x110] sm:$0xf]
        %v8553 = vld [vmem:[%s5 + $0x114] sm:$0xf]
        %v8554 = vld [vmem:[%s5 + $0x118] sm:$0xf]
        %v8555 = vld [vmem:[%s5 + $0x11c] sm:$0xf]
        %v8556 = vld [vmem:[%s5 + $0x120] sm:$0xf]
        %v8557 = vld [vmem:[%s5 + $0x124] sm:$0xf]
        %v8558 = vld [vmem:[%s5 + $0x128] sm:$0xf]
        %v8559 = vld [vmem:[%s5 + $0x12c] sm:$0xf]
        %v8560 = vld [vmem:[%s5 + $0x130] sm:$0xf]
        %v8561 = vld [vmem:[%s5 + $0x134] sm:$0xf]
        %v8562 = vld [vmem:[%s5 + $0x138] sm:$0xf]
        %v8563 = vld [vmem:[%s5 + $0x13c] sm:$0xf]
        %v8564 = vld [vmem:[%s5 + $0x140] sm:$0xf]
        %v8565 = vld [vmem:[%s5 + $0x144] sm:$0xf]
        %v8566 = vld [vmem:[%s5 + $0x148] sm:$0xf]
        %v8567 = vld [vmem:[%s5 + $0x14c] sm:$0xf]
        %v8568 = vld [vmem:[%s5 + $0x150] sm:$0xf]
        %v8569 = vld [vmem:[%s5 + $0x154] sm:$0xf]
        %v8570 = vld [vmem:[%s5 + $0x158] sm:$0xf]
        %v8571 = vld [vmem:[%s5 + $0x15c] sm:$0xf]
        %v8572 = vld [vmem:[%s5 + $0x160] sm:$0xf]
        %v8573 = vld [vmem:[%s5 + $0x164] sm:$0xf]
        %v8574 = vld [vmem:[%s5 + $0x168] sm:$0xf]
        %v8575 = vld [vmem:[%s5 + $0x16c] sm:$0xf]
        %v8576 = vld [vmem:[%s5 + $0x170] sm:$0xf]
        %v8577 = vld [vmem:[%s5 + $0x174] sm:$0xf]
        %v8578 = vld [vmem:[%s5 + $0x178] sm:$0xf]
        %v8579 = vld [vmem:[%s5 + $0x17c] sm:$0xf]
        %v8580 = vld [vmem:[%s5 + $0x180] sm:$0xf]
        %v8581 = vld [vmem:[%s5 + $0x184] sm:$0xf]
        %v8582 = vld [vmem:[%s5 + $0x188] sm:$0xf]
        %v8583 = vld [vmem:[%s5 + $0x18c] sm:$0xf]
        %v8584 = vld [vmem:[%s5 + $0x190] sm:$0xf]
        %v8585 = vld [vmem:[%s5 + $0x194] sm:$0xf]
        %v8586 = vld [vmem:[%s5 + $0x198] sm:$0xf]
        %v8587 = vld [vmem:[%s5 + $0x19c] sm:$0xf]
        %v8588 = vld [vmem:[%s5 + $0x1a0] sm:$0xf]
        %v8589 = vld [vmem:[%s5 + $0x1a4] sm:$0xf]
        %v8590 = vld [vmem:[%s5 + $0x1a8] sm:$0xf]
        %v8591 = vld [vmem:[%s5 + $0x1ac] sm:$0xf]
        %v8592 = vld [vmem:[%s5 + $0x1b0] sm:$0xf]
        %v8593 = vld [vmem:[%s5 + $0x1b4] sm:$0xf]
        %v8594 = vld [vmem:[%s5 + $0x1b8] sm:$0xf]
        %v8595 = vld [vmem:[%s5 + $0x1bc] sm:$0xf]
        %v8596 = vld [vmem:[%s5 + $0x1c0] sm:$0xf]
        %v8597 = vld [vmem:[%s5 + $0x1c4] sm:$0xf]
        %v8598 = vld [vmem:[%s5 + $0x1c8] sm:$0xf]
        %v8599 = vld [vmem:[%s5 + $0x1cc] sm:$0xf]
        %v8600 = vld [vmem:[%s5 + $0x1d0] sm:$0xf]
        %v8601 = vld [vmem:[%s5 + $0x1d4] sm:$0xf]
        %v8602 = vld [vmem:[%s5 + $0x1d8] sm:$0xf]
        %v8603 = vld [vmem:[%s5 + $0x1dc] sm:$0xf]
        %v8604 = vld [vmem:[%s5 + $0x1e0] sm:$0xf]
        %v8605 = vld [vmem:[%s5 + $0x1e4] sm:$0xf]
        %v8606 = vld [vmem:[%s5 + $0x1e8] sm:$0xf]
        %v8607 = vld [vmem:[%s5 + $0x1ec] sm:$0xf]
        %v8608 = vld [vmem:[%s5 + $0x1f0] sm:$0xf]
        %v8609 = vld [vmem:[%s5 + $0x1f4] sm:$0xf]
        %v8610 = vld [vmem:[%s5 + $0x1f8] sm:$0xf]
        %v8611 = vld [vmem:[%s5 + $0x1fc] sm:$0xf]
        %v8612 = vld [vmem:[%s5 + $0x200] sm:$0xf]
        %v8613 = vld [vmem:[%s5 + $0x204] sm:$0xf]
        %v8614 = vld [vmem:[%s5 + $0x208] sm:$0xf]
        %v8615 = vld [vmem:[%s5 + $0x20c] sm:$0xf]
        %v8616 = vld [vmem:[%s5 + $0x210] sm:$0xf]
        %v8617 = vld [vmem:[%s5 + $0x214] sm:$0xf]
        %v8618 = vld [vmem:[%s5 + $0x218] sm:$0xf]
        %v8619 = vld [vmem:[%s5 + $0x21c] sm:$0xf]
        %v8620 = vld [vmem:[%s5 + $0x220] sm:$0xf]
        %v8621 = vld [vmem:[%s5 + $0x224] sm:$0xf]
        %v8622 = vld [vmem:[%s5 + $0x228] sm:$0xf]
        %v8623 = vld [vmem:[%s5 + $0x22c] sm:$0xf]
        %v8624 = vld [vmem:[%s5 + $0x230] sm:$0xf]
        %v8625 = vld [vmem:[%s5 + $0x234] sm:$0xf]
        %v8626 = vld [vmem:[%s5 + $0x238] sm:$0xf]
        %v8627 = vld [vmem:[%s5 + $0x23c] sm:$0xf]
        %v8628 = vld [vmem:[%s5 + $0x240] sm:$0xf]
        %v8629 = vld [vmem:[%s5 + $0x244] sm:$0xf]
        %v8630 = vld [vmem:[%s5 + $0x248] sm:$0xf]
        %v8631 = vld [vmem:[%s5 + $0x24c] sm:$0xf]
        %v8632 = vld [vmem:[%s5 + $0x250] sm:$0xf]
        %v8633 = vld [vmem:[%s5 + $0x254] sm:$0xf]
        %v8634 = vld [vmem:[%s5 + $0x258] sm:$0xf]
        %v8635 = vld [vmem:[%s5 + $0x25c] sm:$0xf]
        %v8636 = vld [vmem:[%s5 + $0x260] sm:$0xf]
        %v8637 = vld [vmem:[%s5 + $0x264] sm:$0xf]
        %v8638 = vld [vmem:[%s5 + $0x268] sm:$0xf]
        %v8639 = vld [vmem:[%s5 + $0x26c] sm:$0xf]
        %v8640 = vld [vmem:[%s5 + $0x270] sm:$0xf]
        %v8641 = vld [vmem:[%s5 + $0x274] sm:$0xf]
        %v8642 = vld [vmem:[%s5 + $0x278] sm:$0xf]
        %v8643 = vld [vmem:[%s5 + $0x27c] sm:$0xf]
        %v8644 = vld [vmem:[%s5 + $0x280] sm:$0xf]
        %v8645 = vld [vmem:[%s5 + $0x284] sm:$0xf]
        %v8646 = vld [vmem:[%s5 + $0x288] sm:$0xf]
        %v8647 = vld [vmem:[%s5 + $0x28c] sm:$0xf]
        %v8648 = vld [vmem:[%s5 + $0x290] sm:$0xf]
        %v8649 = vld [vmem:[%s5 + $0x294] sm:$0xf]
        %v8650 = vld [vmem:[%s5 + $0x298] sm:$0xf]
        %v8651 = vld [vmem:[%s5 + $0x29c] sm:$0xf]
        %v8652 = vld [vmem:[%s5 + $0x2a0] sm:$0xf]
        %v8653 = vld [vmem:[%s5 + $0x2a4] sm:$0xf]
        %v8654 = vld [vmem:[%s5 + $0x2a8] sm:$0xf]
        %v8655 = vld [vmem:[%s5 + $0x2ac] sm:$0xf]
        %v8656 = vld [vmem:[%s5 + $0x2b0] sm:$0xf]
        %v8657 = vld [vmem:[%s5 + $0x2b4] sm:$0xf]
        %v8658 = vld [vmem:[%s5 + $0x2b8] sm:$0xf]
        %v8659 = vld [vmem:[%s5 + $0x2bc] sm:$0xf]
        %v8660 = vld [vmem:[%s5 + $0x2c0] sm:$0xf]
        %v8661 = vld [vmem:[%s5 + $0x2c4] sm:$0xf]
        %v8662 = vld [vmem:[%s5 + $0x2c8] sm:$0xf]
        %v8663 = vld [vmem:[%s5 + $0x2cc] sm:$0xf]
        %v8664 = vld [vmem:[%s5 + $0x2d0] sm:$0xf]
        %v8665 = vld [vmem:[%s5 + $0x2d4] sm:$0xf]
        %v8666 = vld [vmem:[%s5 + $0x2d8] sm:$0xf]
        %v8667 = vld [vmem:[%s5 + $0x2dc] sm:$0xf]
        %v8668 = vld [vmem:[%s5 + $0x2e0] sm:$0xf]
        %v8669 = vld [vmem:[%s5 + $0x2e4] sm:$0xf]
        %v8670 = vld [vmem:[%s5 + $0x2e8] sm:$0xf]
        %v8671 = vld [vmem:[%s5 + $0x2ec] sm:$0xf]
        %v8672 = vld [vmem:[%s5 + $0x2f0] sm:$0xf]
        %v8673 = vld [vmem:[%s5 + $0x2f4] sm:$0xf]
        %v8674 = vld [vmem:[%s5 + $0x2f8] sm:$0xf]
        %v8675 = vld [vmem:[%s5 + $0x2fc] sm:$0xf]
        %v8676 = vld [vmem:[%s5 + $0x300] sm:$0xf]
        %v8677 = vld [vmem:[%s5 + $0x304] sm:$0xf]
        %v8678 = vld [vmem:[%s5 + $0x308] sm:$0xf]
        %v8679 = vld [vmem:[%s5 + $0x30c] sm:$0xf]
        %v8680 = vld [vmem:[%s5 + $0x310] sm:$0xf]
        %v8681 = vld [vmem:[%s5 + $0x314] sm:$0xf]
        %v8682 = vld [vmem:[%s5 + $0x318] sm:$0xf]
        %v8683 = vld [vmem:[%s5 + $0x31c] sm:$0xf]
        %v8684 = vld [vmem:[%s5 + $0x320] sm:$0xf]
        %v8685 = vld [vmem:[%s5 + $0x324] sm:$0xf]
        %v8686 = vld [vmem:[%s5 + $0x328] sm:$0xf]
        %v8687 = vld [vmem:[%s5 + $0x32c] sm:$0xf]
        %v8688 = vld [vmem:[%s5 + $0x330] sm:$0xf]
        %v8689 = vld [vmem:[%s5 + $0x334] sm:$0xf]
        %v8690 = vld [vmem:[%s5 + $0x338] sm:$0xf]
        %v8691 = vld [vmem:[%s5 + $0x33c] sm:$0xf]
        %v8692 = vld [vmem:[%s5 + $0x340] sm:$0xf]
        %v8693 = vld [vmem:[%s5 + $0x344] sm:$0xf]
        %v8694 = vld [vmem:[%s5 + $0x348] sm:$0xf]
        %v8695 = vld [vmem:[%s5 + $0x34c] sm:$0xf]
        %v8696 = vld [vmem:[%s5 + $0x350] sm:$0xf]
        %v8697 = vld [vmem:[%s5 + $0x354] sm:$0xf]
        %v8698 = vld [vmem:[%s5 + $0x358] sm:$0xf]
        %v8699 = vld [vmem:[%s5 + $0x35c] sm:$0xf]
        %v8700 = vld [vmem:[%s5 + $0x360] sm:$0xf]
        %v8701 = vld [vmem:[%s5 + $0x364] sm:$0xf]
        %v8702 = vld [vmem:[%s5 + $0x368] sm:$0xf]
        %v8703 = vld [vmem:[%s5 + $0x36c] sm:$0xf]
        %v8704 = vld [vmem:[%s5 + $0x370] sm:$0xf]
        %v8705 = vld [vmem:[%s5 + $0x374] sm:$0xf]
        %v8706 = vld [vmem:[%s5 + $0x378] sm:$0xf]
        %v8707 = vld [vmem:[%s5 + $0x37c] sm:$0xf]
        %v8708 = vld [vmem:[%s5 + $0x380] sm:$0xf]
        %v8709 = vld [vmem:[%s5 + $0x384] sm:$0xf]
        %v8710 = vld [vmem:[%s5 + $0x388] sm:$0xf]
        %v8711 = vld [vmem:[%s5 + $0x38c] sm:$0xf]
        %v8712 = vld [vmem:[%s5 + $0x390] sm:$0xf]
        %v8713 = vld [vmem:[%s5 + $0x394] sm:$0xf]
        %v8714 = vld [vmem:[%s5 + $0x398] sm:$0xf]
        %v8715 = vld [vmem:[%s5 + $0x39c] sm:$0xf]
        %v8716 = vld [vmem:[%s5 + $0x3a0] sm:$0xf]
        %v8717 = vld [vmem:[%s5 + $0x3a4] sm:$0xf]
        %v8718 = vld [vmem:[%s5 + $0x3a8] sm:$0xf]
        %v8719 = vld [vmem:[%s5 + $0x3ac] sm:$0xf]
        %v8720 = vld [vmem:[%s5 + $0x3b0] sm:$0xf]
        %v8721 = vld [vmem:[%s5 + $0x3b4] sm:$0xf]
        %v8722 = vld [vmem:[%s5 + $0x3b8] sm:$0xf]
        %v8723 = vld [vmem:[%s5 + $0x3bc] sm:$0xf]
        %v8724 = vld [vmem:[%s5 + $0x3c0] sm:$0xf]
        %v8725 = vld [vmem:[%s5 + $0x3c4] sm:$0xf]
        %v8726 = vld [vmem:[%s5 + $0x3c8] sm:$0xf]
        %v8727 = vld [vmem:[%s5 + $0x3cc] sm:$0xf]
        %v8728 = vld [vmem:[%s5 + $0x3d0] sm:$0xf]
        %v8729 = vld [vmem:[%s5 + $0x3d4] sm:$0xf]
        %v8730 = vld [vmem:[%s5 + $0x3d8] sm:$0xf]
        %v8731 = vld [vmem:[%s5 + $0x3dc] sm:$0xf]
        %v8732 = vld [vmem:[%s5 + $0x3e0] sm:$0xf]
        %v8733 = vld [vmem:[%s5 + $0x3e4] sm:$0xf]
        %v8734 = vld [vmem:[%s5 + $0x3e8] sm:$0xf]
        %v8735 = vld [vmem:[%s5 + $0x3ec] sm:$0xf]
        %v8736 = vld [vmem:[%s5 + $0x3f0] sm:$0xf]
        %v8737 = vld [vmem:[%s5 + $0x3f4] sm:$0xf]
        %v8738 = vld [vmem:[%s5 + $0x3f8] sm:$0xf]
        %v8739 = vld [vmem:[%s5 + $0x3fc] sm:$0xf]
        %v8740 = vld [vmem:[%s6] sm:$0x1]
        %v8742 = vlaneseq
        %v8743 = vshrl.u32 %v8742, 7
        %v8744 = vsub.s32 0, %v8743
        %v8745 = vrot.slane %v8740, %v8744
        %v9003 = vunpack.c.l.b16 %v8484
        %v9004 = vunpack.c.l.b16 %v8485
        %v9005 = vunpack.c.l.b16 %v8486
        %v9006 = vunpack.c.l.b16 %v8487
        %v9007 = vunpack.c.l.b16 %v8488
        %v9008 = vunpack.c.l.b16 %v8489
        %v9009 = vunpack.c.l.b16 %v8490
        %v9010 = vunpack.c.l.b16 %v8491
        %v9011 = vunpack.c.l.b16 %v8492
        %v9012 = vunpack.c.l.b16 %v8493
        %v9013 = vunpack.c.l.b16 %v8494
        %v9014 = vunpack.c.l.b16 %v8495
        %v9015 = vunpack.c.l.b16 %v8496
        %v9016 = vunpack.c.l.b16 %v8497
        %v9017 = vunpack.c.l.b16 %v8498
        %v9018 = vunpack.c.l.b16 %v8499
        %v9019 = vunpack.c.l.b16 %v8500
        %v9020 = vunpack.c.l.b16 %v8501
        %v9021 = vunpack.c.l.b16 %v8502
        %v9022 = vunpack.c.l.b16 %v8503
        %v9023 = vunpack.c.l.b16 %v8504
        %v9024 = vunpack.c.l.b16 %v8505
        %v9025 = vunpack.c.l.b16 %v8506
        %v9026 = vunpack.c.l.b16 %v8507
        %v9027 = vunpack.c.l.b16 %v8508
        %v9028 = vunpack.c.l.b16 %v8509
        %v9029 = vunpack.c.l.b16 %v8510
        %v9030 = vunpack.c.l.b16 %v8511
        %v9031 = vunpack.c.l.b16 %v8512
        %v9032 = vunpack.c.l.b16 %v8513
        %v9033 = vunpack.c.l.b16 %v8514
        %v9034 = vunpack.c.l.b16 %v8515
        %v9035 = vunpack.c.l.b16 %v8516
        %v9036 = vunpack.c.l.b16 %v8517
        %v9037 = vunpack.c.l.b16 %v8518
        %v9038 = vunpack.c.l.b16 %v8519
        %v9039 = vunpack.c.l.b16 %v8520
        %v9040 = vunpack.c.l.b16 %v8521
        %v9041 = vunpack.c.l.b16 %v8522
        %v9042 = vunpack.c.l.b16 %v8523
        %v9043 = vunpack.c.l.b16 %v8524
        %v9044 = vunpack.c.l.b16 %v8525
        %v9045 = vunpack.c.l.b16 %v8526
        %v9046 = vunpack.c.l.b16 %v8527
        %v9047 = vunpack.c.l.b16 %v8528
        %v9048 = vunpack.c.l.b16 %v8529
        %v9049 = vunpack.c.l.b16 %v8530
        %v9050 = vunpack.c.l.b16 %v8531
        %v9051 = vunpack.c.l.b16 %v8532
        %v9052 = vunpack.c.l.b16 %v8533
        %v9053 = vunpack.c.l.b16 %v8534
        %v9054 = vunpack.c.l.b16 %v8535
        %v9055 = vunpack.c.l.b16 %v8536
        %v9056 = vunpack.c.l.b16 %v8537
        %v9057 = vunpack.c.l.b16 %v8538
        %v9058 = vunpack.c.l.b16 %v8539
        %v9059 = vunpack.c.l.b16 %v8540
        %v9060 = vunpack.c.l.b16 %v8541
        %v9061 = vunpack.c.l.b16 %v8542
        %v9062 = vunpack.c.l.b16 %v8543
        %v9063 = vunpack.c.l.b16 %v8544
        %v9064 = vunpack.c.l.b16 %v8545
        %v9065 = vunpack.c.l.b16 %v8546
        %v9066 = vunpack.c.l.b16 %v8547
        %v9067 = vunpack.c.l.b16 %v8548
        %v9068 = vunpack.c.l.b16 %v8549
        %v9069 = vunpack.c.l.b16 %v8550
        %v9070 = vunpack.c.l.b16 %v8551
        %v9071 = vunpack.c.l.b16 %v8552
        %v9072 = vunpack.c.l.b16 %v8553
        %v9073 = vunpack.c.l.b16 %v8554
        %v9074 = vunpack.c.l.b16 %v8555
        %v9075 = vunpack.c.l.b16 %v8556
        %v9076 = vunpack.c.l.b16 %v8557
        %v9077 = vunpack.c.l.b16 %v8558
        %v9078 = vunpack.c.l.b16 %v8559
        %v9079 = vunpack.c.l.b16 %v8560
        %v9080 = vunpack.c.l.b16 %v8561
        %v9081 = vunpack.c.l.b16 %v8562
        %v9082 = vunpack.c.l.b16 %v8563
        %v9083 = vunpack.c.l.b16 %v8564
        %v9084 = vunpack.c.l.b16 %v8565
        %v9085 = vunpack.c.l.b16 %v8566
        %v9086 = vunpack.c.l.b16 %v8567
        %v9087 = vunpack.c.l.b16 %v8568
        %v9088 = vunpack.c.l.b16 %v8569
        %v9089 = vunpack.c.l.b16 %v8570
        %v9090 = vunpack.c.l.b16 %v8571
        %v9091 = vunpack.c.l.b16 %v8572
        %v9092 = vunpack.c.l.b16 %v8573
        %v9093 = vunpack.c.l.b16 %v8574
        %v9094 = vunpack.c.l.b16 %v8575
        %v9095 = vunpack.c.l.b16 %v8576
        %v9096 = vunpack.c.l.b16 %v8577
        %v9097 = vunpack.c.l.b16 %v8578
        %v9098 = vunpack.c.l.b16 %v8579
        %v9099 = vunpack.c.l.b16 %v8580
        %v9100 = vunpack.c.l.b16 %v8581
        %v9101 = vunpack.c.l.b16 %v8582
        %v9102 = vunpack.c.l.b16 %v8583
        %v9103 = vunpack.c.l.b16 %v8584
        %v9104 = vunpack.c.l.b16 %v8585
        %v9105 = vunpack.c.l.b16 %v8586
        %v9106 = vunpack.c.l.b16 %v8587
        %v9107 = vunpack.c.l.b16 %v8588
        %v9108 = vunpack.c.l.b16 %v8589
        %v9109 = vunpack.c.l.b16 %v8590
        %v9110 = vunpack.c.l.b16 %v8591
        %v9111 = vunpack.c.l.b16 %v8592
        %v9112 = vunpack.c.l.b16 %v8593
        %v9113 = vunpack.c.l.b16 %v8594
        %v9114 = vunpack.c.l.b16 %v8595
        %v9115 = vunpack.c.l.b16 %v8596
        %v9116 = vunpack.c.l.b16 %v8597
        %v9117 = vunpack.c.l.b16 %v8598
        %v9118 = vunpack.c.l.b16 %v8599
        %v9119 = vunpack.c.l.b16 %v8600
        %v9120 = vunpack.c.l.b16 %v8601
        %v9121 = vunpack.c.l.b16 %v8602
        %v9122 = vunpack.c.l.b16 %v8603
        %v9123 = vunpack.c.l.b16 %v8604
        %v9124 = vunpack.c.l.b16 %v8605
        %v9125 = vunpack.c.l.b16 %v8606
        %v9126 = vunpack.c.l.b16 %v8607
        %v9127 = vunpack.c.l.b16 %v8608
        %v9128 = vunpack.c.l.b16 %v8609
        %v9129 = vunpack.c.l.b16 %v8610
        %v9130 = vunpack.c.l.b16 %v8611
        %v9131 = vunpack.c.l.b16 %v8612
        %v9132 = vunpack.c.l.b16 %v8613
        %v9133 = vunpack.c.l.b16 %v8614
        %v9134 = vunpack.c.l.b16 %v8615
        %v9135 = vunpack.c.l.b16 %v8616
        %v9136 = vunpack.c.l.b16 %v8617
        %v9137 = vunpack.c.l.b16 %v8618
        %v9138 = vunpack.c.l.b16 %v8619
        %v9139 = vunpack.c.l.b16 %v8620
        %v9140 = vunpack.c.l.b16 %v8621
        %v9141 = vunpack.c.l.b16 %v8622
        %v9142 = vunpack.c.l.b16 %v8623
        %v9143 = vunpack.c.l.b16 %v8624
        %v9144 = vunpack.c.l.b16 %v8625
        %v9145 = vunpack.c.l.b16 %v8626
        %v9146 = vunpack.c.l.b16 %v8627
        %v9147 = vunpack.c.l.b16 %v8628
        %v9148 = vunpack.c.l.b16 %v8629
        %v9149 = vunpack.c.l.b16 %v8630
        %v9150 = vunpack.c.l.b16 %v8631
        %v9151 = vunpack.c.l.b16 %v8632
        %v9152 = vunpack.c.l.b16 %v8633
        %v9153 = vunpack.c.l.b16 %v8634
        %v9154 = vunpack.c.l.b16 %v8635
        %v9155 = vunpack.c.l.b16 %v8636
        %v9156 = vunpack.c.l.b16 %v8637
        %v9157 = vunpack.c.l.b16 %v8638
        %v9158 = vunpack.c.l.b16 %v8639
        %v9159 = vunpack.c.l.b16 %v8640
        %v9160 = vunpack.c.l.b16 %v8641
        %v9161 = vunpack.c.l.b16 %v8642
        %v9162 = vunpack.c.l.b16 %v8643
        %v9163 = vunpack.c.l.b16 %v8644
        %v9164 = vunpack.c.l.b16 %v8645
        %v9165 = vunpack.c.l.b16 %v8646
        %v9166 = vunpack.c.l.b16 %v8647
        %v9167 = vunpack.c.l.b16 %v8648
        %v9168 = vunpack.c.l.b16 %v8649
        %v9169 = vunpack.c.l.b16 %v8650
        %v9170 = vunpack.c.l.b16 %v8651
        %v9171 = vunpack.c.l.b16 %v8652
        %v9172 = vunpack.c.l.b16 %v8653
        %v9173 = vunpack.c.l.b16 %v8654
        %v9174 = vunpack.c.l.b16 %v8655
        %v9175 = vunpack.c.l.b16 %v8656
        %v9176 = vunpack.c.l.b16 %v8657
        %v9177 = vunpack.c.l.b16 %v8658
        %v9178 = vunpack.c.l.b16 %v8659
        %v9179 = vunpack.c.l.b16 %v8660
        %v9180 = vunpack.c.l.b16 %v8661
        %v9181 = vunpack.c.l.b16 %v8662
        %v9182 = vunpack.c.l.b16 %v8663
        %v9183 = vunpack.c.l.b16 %v8664
        %v9184 = vunpack.c.l.b16 %v8665
        %v9185 = vunpack.c.l.b16 %v8666
        %v9186 = vunpack.c.l.b16 %v8667
        %v9187 = vunpack.c.l.b16 %v8668
        %v9188 = vunpack.c.l.b16 %v8669
        %v9189 = vunpack.c.l.b16 %v8670
        %v9190 = vunpack.c.l.b16 %v8671
        %v9191 = vunpack.c.l.b16 %v8672
        %v9192 = vunpack.c.l.b16 %v8673
        %v9193 = vunpack.c.l.b16 %v8674
        %v9194 = vunpack.c.l.b16 %v8675
        %v9195 = vunpack.c.l.b16 %v8676
        %v9196 = vunpack.c.l.b16 %v8677
        %v9197 = vunpack.c.l.b16 %v8678
        %v9198 = vunpack.c.l.b16 %v8679
        %v9199 = vunpack.c.l.b16 %v8680
        %v9200 = vunpack.c.l.b16 %v8681
        %v9201 = vunpack.c.l.b16 %v8682
        %v9202 = vunpack.c.l.b16 %v8683
        %v9203 = vunpack.c.l.b16 %v8684
        %v9204 = vunpack.c.l.b16 %v8685
        %v9205 = vunpack.c.l.b16 %v8686
        %v9206 = vunpack.c.l.b16 %v8687
        %v9207 = vunpack.c.l.b16 %v8688
        %v9208 = vunpack.c.l.b16 %v8689
        %v9209 = vunpack.c.l.b16 %v8690
        %v9210 = vunpack.c.l.b16 %v8691
        %v9211 = vunpack.c.l.b16 %v8692
        %v9212 = vunpack.c.l.b16 %v8693
        %v9213 = vunpack.c.l.b16 %v8694
        %v9214 = vunpack.c.l.b16 %v8695
        %v9215 = vunpack.c.l.b16 %v8696
        %v9216 = vunpack.c.l.b16 %v8697
        %v9217 = vunpack.c.l.b16 %v8698
        %v9218 = vunpack.c.l.b16 %v8699
        %v9219 = vunpack.c.l.b16 %v8700
        %v9220 = vunpack.c.l.b16 %v8701
        %v9221 = vunpack.c.l.b16 %v8702
        %v9222 = vunpack.c.l.b16 %v8703
        %v9223 = vunpack.c.l.b16 %v8704
        %v9224 = vunpack.c.l.b16 %v8705
        %v9225 = vunpack.c.l.b16 %v8706
        %v9226 = vunpack.c.l.b16 %v8707
        %v9227 = vunpack.c.l.b16 %v8708
        %v9228 = vunpack.c.l.b16 %v8709
        %v9229 = vunpack.c.l.b16 %v8710
        %v9230 = vunpack.c.l.b16 %v8711
        %v9231 = vunpack.c.l.b16 %v8712
        %v9232 = vunpack.c.l.b16 %v8713
        %v9233 = vunpack.c.l.b16 %v8714
        %v9234 = vunpack.c.l.b16 %v8715
        %v9235 = vunpack.c.l.b16 %v8716
        %v9236 = vunpack.c.l.b16 %v8717
        %v9237 = vunpack.c.l.b16 %v8718
        %v9238 = vunpack.c.l.b16 %v8719
        %v9239 = vunpack.c.l.b16 %v8720
        %v9240 = vunpack.c.l.b16 %v8721
        %v9241 = vunpack.c.l.b16 %v8722
        %v9242 = vunpack.c.l.b16 %v8723
        %v9243 = vunpack.c.l.b16 %v8724
        %v9244 = vunpack.c.l.b16 %v8725
        %v9245 = vunpack.c.l.b16 %v8726
        %v9246 = vunpack.c.l.b16 %v8727
        %v9247 = vunpack.c.l.b16 %v8728
        %v9248 = vunpack.c.l.b16 %v8729
        %v9249 = vunpack.c.l.b16 %v8730
        %v9250 = vunpack.c.l.b16 %v8731
        %v9251 = vunpack.c.l.b16 %v8732
        %v9252 = vunpack.c.l.b16 %v8733
        %v9253 = vunpack.c.l.b16 %v8734
        %v9254 = vunpack.c.l.b16 %v8735
        %v9255 = vunpack.c.l.b16 %v8736
        %v9256 = vunpack.c.l.b16 %v8737
        %v9257 = vunpack.c.l.b16 %v8738
        %v9258 = vunpack.c.l.b16 %v8739
        %v9259 = vpack.c.b16 %v9004, %v9003
        %v9260 = vpack.c.b16 %v9006, %v9005
        %v9261 = vpack.c.b16 %v9008, %v9007
        %v9262 = vpack.c.b16 %v9010, %v9009
        %v9263 = vpack.c.b16 %v9012, %v9011
        %v9264 = vpack.c.b16 %v9014, %v9013
        %v9265 = vpack.c.b16 %v9016, %v9015
        %v9266 = vpack.c.b16 %v9018, %v9017
        %v9267 = vpack.c.b16 %v9020, %v9019
        %v9268 = vpack.c.b16 %v9022, %v9021
        %v9269 = vpack.c.b16 %v9024, %v9023
        %v9270 = vpack.c.b16 %v9026, %v9025
        %v9271 = vpack.c.b16 %v9028, %v9027
        %v9272 = vpack.c.b16 %v9030, %v9029
        %v9273 = vpack.c.b16 %v9032, %v9031
        %v9274 = vpack.c.b16 %v9034, %v9033
        %v9275 = vpack.c.b16 %v9036, %v9035
        %v9276 = vpack.c.b16 %v9038, %v9037
        %v9277 = vpack.c.b16 %v9040, %v9039
        %v9278 = vpack.c.b16 %v9042, %v9041
        %v9279 = vpack.c.b16 %v9044, %v9043
        %v9280 = vpack.c.b16 %v9046, %v9045
        %v9281 = vpack.c.b16 %v9048, %v9047
        %v9282 = vpack.c.b16 %v9050, %v9049
        %v9283 = vpack.c.b16 %v9052, %v9051
        %v9284 = vpack.c.b16 %v9054, %v9053
        %v9285 = vpack.c.b16 %v9056, %v9055
        %v9286 = vpack.c.b16 %v9058, %v9057
        %v9287 = vpack.c.b16 %v9060, %v9059
        %v9288 = vpack.c.b16 %v9062, %v9061
        %v9289 = vpack.c.b16 %v9064, %v9063
        %v9290 = vpack.c.b16 %v9066, %v9065
        %v9291 = vpack.c.b16 %v9068, %v9067
        %v9292 = vpack.c.b16 %v9070, %v9069
        %v9293 = vpack.c.b16 %v9072, %v9071
        %v9294 = vpack.c.b16 %v9074, %v9073
        %v9295 = vpack.c.b16 %v9076, %v9075
        %v9296 = vpack.c.b16 %v9078, %v9077
        %v9297 = vpack.c.b16 %v9080, %v9079
        %v9298 = vpack.c.b16 %v9082, %v9081
        %v9299 = vpack.c.b16 %v9084, %v9083
        %v9300 = vpack.c.b16 %v9086, %v9085
        %v9301 = vpack.c.b16 %v9088, %v9087
        %v9302 = vpack.c.b16 %v9090, %v9089
        %v9303 = vpack.c.b16 %v9092, %v9091
        %v9304 = vpack.c.b16 %v9094, %v9093
        %v9305 = vpack.c.b16 %v9096, %v9095
        %v9306 = vpack.c.b16 %v9098, %v9097
        %v9307 = vpack.c.b16 %v9100, %v9099
        %v9308 = vpack.c.b16 %v9102, %v9101
        %v9309 = vpack.c.b16 %v9104, %v9103
        %v9310 = vpack.c.b16 %v9106, %v9105
        %v9311 = vpack.c.b16 %v9108, %v9107
        %v9312 = vpack.c.b16 %v9110, %v9109
        %v9313 = vpack.c.b16 %v9112, %v9111
        %v9314 = vpack.c.b16 %v9114, %v9113
        %v9315 = vpack.c.b16 %v9116, %v9115
        %v9316 = vpack.c.b16 %v9118, %v9117
        %v9317 = vpack.c.b16 %v9120, %v9119
        %v9318 = vpack.c.b16 %v9122, %v9121
        %v9319 = vpack.c.b16 %v9124, %v9123
        %v9320 = vpack.c.b16 %v9126, %v9125
        %v9321 = vpack.c.b16 %v9128, %v9127
        %v9322 = vpack.c.b16 %v9130, %v9129
        %v9323 = vpack.c.b16 %v9132, %v9131
        %v9324 = vpack.c.b16 %v9134, %v9133
        %v9325 = vpack.c.b16 %v9136, %v9135
        %v9326 = vpack.c.b16 %v9138, %v9137
        %v9327 = vpack.c.b16 %v9140, %v9139
        %v9328 = vpack.c.b16 %v9142, %v9141
        %v9329 = vpack.c.b16 %v9144, %v9143
        %v9330 = vpack.c.b16 %v9146, %v9145
        %v9331 = vpack.c.b16 %v9148, %v9147
        %v9332 = vpack.c.b16 %v9150, %v9149
        %v9333 = vpack.c.b16 %v9152, %v9151
        %v9334 = vpack.c.b16 %v9154, %v9153
        %v9335 = vpack.c.b16 %v9156, %v9155
        %v9336 = vpack.c.b16 %v9158, %v9157
        %v9337 = vpack.c.b16 %v9160, %v9159
        %v9338 = vpack.c.b16 %v9162, %v9161
        %v9339 = vpack.c.b16 %v9164, %v9163
        %v9340 = vpack.c.b16 %v9166, %v9165
        %v9341 = vpack.c.b16 %v9168, %v9167
        %v9342 = vpack.c.b16 %v9170, %v9169
        %v9343 = vpack.c.b16 %v9172, %v9171
        %v9344 = vpack.c.b16 %v9174, %v9173
        %v9345 = vpack.c.b16 %v9176, %v9175
        %v9346 = vpack.c.b16 %v9178, %v9177
        %v9347 = vpack.c.b16 %v9180, %v9179
        %v9348 = vpack.c.b16 %v9182, %v9181
        %v9349 = vpack.c.b16 %v9184, %v9183
        %v9350 = vpack.c.b16 %v9186, %v9185
        %v9351 = vpack.c.b16 %v9188, %v9187
        %v9352 = vpack.c.b16 %v9190, %v9189
        %v9353 = vpack.c.b16 %v9192, %v9191
        %v9354 = vpack.c.b16 %v9194, %v9193
        %v9355 = vpack.c.b16 %v9196, %v9195
        %v9356 = vpack.c.b16 %v9198, %v9197
        %v9357 = vpack.c.b16 %v9200, %v9199
        %v9358 = vpack.c.b16 %v9202, %v9201
        %v9359 = vpack.c.b16 %v9204, %v9203
        %v9360 = vpack.c.b16 %v9206, %v9205
        %v9361 = vpack.c.b16 %v9208, %v9207
        %v9362 = vpack.c.b16 %v9210, %v9209
        %v9363 = vpack.c.b16 %v9212, %v9211
        %v9364 = vpack.c.b16 %v9214, %v9213
        %v9365 = vpack.c.b16 %v9216, %v9215
        %v9366 = vpack.c.b16 %v9218, %v9217
        %v9367 = vpack.c.b16 %v9220, %v9219
        %v9368 = vpack.c.b16 %v9222, %v9221
        %v9369 = vpack.c.b16 %v9224, %v9223
        %v9370 = vpack.c.b16 %v9226, %v9225
        %v9371 = vpack.c.b16 %v9228, %v9227
        %v9372 = vpack.c.b16 %v9230, %v9229
        %v9373 = vpack.c.b16 %v9232, %v9231
        %v9374 = vpack.c.b16 %v9234, %v9233
        %v9375 = vpack.c.b16 %v9236, %v9235
        %v9376 = vpack.c.b16 %v9238, %v9237
        %v9377 = vpack.c.b16 %v9240, %v9239
        %v9378 = vpack.c.b16 %v9242, %v9241
        %v9379 = vpack.c.b16 %v9244, %v9243
        %v9380 = vpack.c.b16 %v9246, %v9245
        %v9381 = vpack.c.b16 %v9248, %v9247
        %v9382 = vpack.c.b16 %v9250, %v9249
        %v9383 = vpack.c.b16 %v9252, %v9251
        %v9384 = vpack.c.b16 %v9254, %v9253
        %v9385 = vpack.c.b16 %v9256, %v9255
        %v9386 = vpack.c.b16 %v9258, %v9257
        %9515 = vmatprep.subr.bf16.mxu0 0
        %9516 = vmatpush1.bf16.msra.mxu0 %v9266
        %9517 = vmatprep.subr.bf16.mxu0 0
        %9518 = vmatpush1.bf16.msra.mxu0 %v9265
        %9519 = vmatprep.subr.bf16.mxu0 0
        %9520 = vmatpush1.bf16.msra.mxu0 %v9264
        %9521 = vmatprep.subr.bf16.mxu0 0
        %9522 = vmatpush1.bf16.msra.mxu0 %v9263
        %9523 = vmatprep.subr.bf16.mxu0 0
        %9524 = vmatpush1.bf16.msra.mxu0 %v9262
        %9525 = vmatprep.subr.bf16.mxu0 0
        %9526 = vmatpush1.bf16.msra.mxu0 %v9261
        %9527 = vmatprep.subr.bf16.mxu0 0
        %9528 = vmatpush1.bf16.msra.mxu0 %v9260
        %9529 = vmatprep.subr.bf16.mxu0 0
        %9530 = vmatpush1.bf16.msra.mxu0 %v9259
        %9531 = vmatprep.subr.bf16.mxu0 0
        %9532 = vmatpush2.bf16.msra.mxu0 %v9274
        %9533 = vmatprep.subr.bf16.mxu0 0
        %9534 = vmatpush2.bf16.msra.mxu0 %v9273
        %9535 = vmatprep.subr.bf16.mxu0 0
        %9536 = vmatpush2.bf16.msra.mxu0 %v9272
        %9537 = vmatprep.subr.bf16.mxu0 0
        %9538 = vmatpush2.bf16.msra.mxu0 %v9271
        %9539 = vmatprep.subr.bf16.mxu0 0
        %9540 = vmatpush2.bf16.msra.mxu0 %v9270
        %9541 = vmatprep.subr.bf16.mxu0 0
        %9542 = vmatpush2.bf16.msra.mxu0 %v9269
        %9543 = vmatprep.subr.bf16.mxu0 0
        %9544 = vmatpush2.bf16.msra.mxu0 %v9268
        %9545 = vmatprep.subr.bf16.mxu0 0
        %9546 = vmatpush2.bf16.msra.mxu0 %v9267
        %9547 = vmatprep.mubr.bf16.mxu0 %v8469
        %9548 = vmatmul.mubr.bf16.gmra.mxu0 %v8468
        %v9549 = vpop.f32.mrf.mxu0
        %v9550 = vadd.f32 %v8745, %v9549
        %v9551 = vpop.f32.mrf.mxu0
        %v9552 = vpop.f32.mrf.mxu0
        %v9553 = vpop.f32.mrf.mxu0
        %9554 = vdwg.mxu0
        %9555 = vmatprep.subr.bf16.mxu0 0
        %9556 = vmatpush1.bf16.msra.mxu0 %v9282
        %9557 = vmatprep.subr.bf16.mxu0 0
        %9558 = vmatpush1.bf16.msra.mxu0 %v9281
        %9559 = vmatprep.subr.bf16.mxu0 0
        %9560 = vmatpush1.bf16.msra.mxu0 %v9280
        %9561 = vmatprep.subr.bf16.mxu0 0
        %9562 = vmatpush1.bf16.msra.mxu0 %v9279
        %9563 = vmatprep.subr.bf16.mxu0 0
        %9564 = vmatpush1.bf16.msra.mxu0 %v9278
        %9565 = vmatprep.subr.bf16.mxu0 0
        %9566 = vmatpush1.bf16.msra.mxu0 %v9277
        %9567 = vmatprep.subr.bf16.mxu0 0
        %9568 = vmatpush1.bf16.msra.mxu0 %v9276
        %9569 = vmatprep.subr.bf16.mxu0 0
        %9570 = vmatpush1.bf16.msra.mxu0 %v9275
        %9571 = vmatprep.subr.bf16.mxu0 0
        %9572 = vmatpush2.bf16.msra.mxu0 %v9290
        %9573 = vmatprep.subr.bf16.mxu0 0
        %9574 = vmatpush2.bf16.msra.mxu0 %v9289
        %9575 = vmatprep.subr.bf16.mxu0 0
        %9576 = vmatpush2.bf16.msra.mxu0 %v9288
        %9577 = vmatprep.subr.bf16.mxu0 0
        %9578 = vmatpush2.bf16.msra.mxu0 %v9287
        %9579 = vmatprep.subr.bf16.mxu0 0
        %9580 = vmatpush2.bf16.msra.mxu0 %v9286
        %9581 = vmatprep.subr.bf16.mxu0 0
        %9582 = vmatpush2.bf16.msra.mxu0 %v9285
        %9583 = vmatprep.subr.bf16.mxu0 0
        %9584 = vmatpush2.bf16.msra.mxu0 %v9284
        %9585 = vmatprep.subr.bf16.mxu0 0
        %9586 = vmatpush2.bf16.msra.mxu0 %v9283
        %9587 = vmatprep.mubr.bf16.mxu0 %v8471
        %9588 = vmatmul.mubr.bf16.gmra.mxu0 %v8470
        %v9589 = vpop.f32.mrf.mxu0
        %v9590 = vadd.f32 %v9550, %v9589
        %v9591 = vpop.f32.mrf.mxu0
        %v9592 = vpop.f32.mrf.mxu0
        %v9593 = vpop.f32.mrf.mxu0
        %9594 = vdwg.mxu0
        %9595 = vmatprep.subr.bf16.mxu0 0
        %9596 = vmatpush1.bf16.msra.mxu0 %v9298
        %9597 = vmatprep.subr.bf16.mxu0 0
        %9598 = vmatpush1.bf16.msra.mxu0 %v9297
        %9599 = vmatprep.subr.bf16.mxu0 0
        %9600 = vmatpush1.bf16.msra.mxu0 %v9296
        %9601 = vmatprep.subr.bf16.mxu0 0
        %9602 = vmatpush1.bf16.msra.mxu0 %v9295
        %9603 = vmatprep.subr.bf16.mxu0 0
        %9604 = vmatpush1.bf16.msra.mxu0 %v9294
        %9605 = vmatprep.subr.bf16.mxu0 0
        %9606 = vmatpush1.bf16.msra.mxu0 %v9293
        %9607 = vmatprep.subr.bf16.mxu0 0
        %9608 = vmatpush1.bf16.msra.mxu0 %v9292
        %9609 = vmatprep.subr.bf16.mxu0 0
        %9610 = vmatpush1.bf16.msra.mxu0 %v9291
        %9611 = vmatprep.subr.bf16.mxu0 0
        %9612 = vmatpush2.bf16.msra.mxu0 %v9306
        %9613 = vmatprep.subr.bf16.mxu0 0
        %9614 = vmatpush2.bf16.msra.mxu0 %v9305
        %9615 = vmatprep.subr.bf16.mxu0 0
        %9616 = vmatpush2.bf16.msra.mxu0 %v9304
        %9617 = vmatprep.subr.bf16.mxu0 0
        %9618 = vmatpush2.bf16.msra.mxu0 %v9303
        %9619 = vmatprep.subr.bf16.mxu0 0
        %9620 = vmatpush2.bf16.msra.mxu0 %v9302
        %9621 = vmatprep.subr.bf16.mxu0 0
        %9622 = vmatpush2.bf16.msra.mxu0 %v9301
        %9623 = vmatprep.subr.bf16.mxu0 0
        %9624 = vmatpush2.bf16.msra.mxu0 %v9300
        %9625 = vmatprep.subr.bf16.mxu0 0
        %9626 = vmatpush2.bf16.msra.mxu0 %v9299
        %9627 = vmatprep.mubr.bf16.mxu0 %v8473
        %9628 = vmatmul.mubr.bf16.gmra.mxu0 %v8472
        %v9629 = vpop.f32.mrf.mxu0
        %v9630 = vadd.f32 %v9590, %v9629
        %v9631 = vpop.f32.mrf.mxu0
        %v9632 = vpop.f32.mrf.mxu0
        %v9633 = vpop.f32.mrf.mxu0
        %9634 = vdwg.mxu0
        %9635 = vmatprep.subr.bf16.mxu0 0
        %9636 = vmatpush1.bf16.msra.mxu0 %v9314
        %9637 = vmatprep.subr.bf16.mxu0 0
        %9638 = vmatpush1.bf16.msra.mxu0 %v9313
        %9639 = vmatprep.subr.bf16.mxu0 0
        %9640 = vmatpush1.bf16.msra.mxu0 %v9312
        %9641 = vmatprep.subr.bf16.mxu0 0
        %9642 = vmatpush1.bf16.msra.mxu0 %v9311
        %9643 = vmatprep.subr.bf16.mxu0 0
        %9644 = vmatpush1.bf16.msra.mxu0 %v9310
        %9645 = vmatprep.subr.bf16.mxu0 0
        %9646 = vmatpush1.bf16.msra.mxu0 %v9309
        %9647 = vmatprep.subr.bf16.mxu0 0
        %9648 = vmatpush1.bf16.msra.mxu0 %v9308
        %9649 = vmatprep.subr.bf16.mxu0 0
        %9650 = vmatpush1.bf16.msra.mxu0 %v9307
        %9651 = vmatprep.subr.bf16.mxu0 0
        %9652 = vmatpush2.bf16.msra.mxu0 %v9322
        %9653 = vmatprep.subr.bf16.mxu0 0
        %9654 = vmatpush2.bf16.msra.mxu0 %v9321
        %9655 = vmatprep.subr.bf16.mxu0 0
        %9656 = vmatpush2.bf16.msra.mxu0 %v9320
        %9657 = vmatprep.subr.bf16.mxu0 0
        %9658 = vmatpush2.bf16.msra.mxu0 %v9319
        %9659 = vmatprep.subr.bf16.mxu0 0
        %9660 = vmatpush2.bf16.msra.mxu0 %v9318
        %9661 = vmatprep.subr.bf16.mxu0 0
        %9662 = vmatpush2.bf16.msra.mxu0 %v9317
        %9663 = vmatprep.subr.bf16.mxu0 0
        %9664 = vmatpush2.bf16.msra.mxu0 %v9316
        %9665 = vmatprep.subr.bf16.mxu0 0
        %9666 = vmatpush2.bf16.msra.mxu0 %v9315
        %9667 = vmatprep.mubr.bf16.mxu0 %v8475
        %9668 = vmatmul.mubr.bf16.gmra.mxu0 %v8474
        %v9669 = vpop.f32.mrf.mxu0
        %v9670 = vadd.f32 %v9630, %v9669
        %v9671 = vpop.f32.mrf.mxu0
        %v9672 = vpop.f32.mrf.mxu0
        %v9673 = vpop.f32.mrf.mxu0
        %9674 = vdwg.mxu0
        %9675 = vmatprep.subr.bf16.mxu0 0
        %9676 = vmatpush1.bf16.msra.mxu0 %v9330
        %9677 = vmatprep.subr.bf16.mxu0 0
        %9678 = vmatpush1.bf16.msra.mxu0 %v9329
        %9679 = vmatprep.subr.bf16.mxu0 0
        %9680 = vmatpush1.bf16.msra.mxu0 %v9328
        %9681 = vmatprep.subr.bf16.mxu0 0
        %9682 = vmatpush1.bf16.msra.mxu0 %v9327
        %9683 = vmatprep.subr.bf16.mxu0 0
        %9684 = vmatpush1.bf16.msra.mxu0 %v9326
        %9685 = vmatprep.subr.bf16.mxu0 0
        %9686 = vmatpush1.bf16.msra.mxu0 %v9325
        %9687 = vmatprep.subr.bf16.mxu0 0
        %9688 = vmatpush1.bf16.msra.mxu0 %v9324
        %9689 = vmatprep.subr.bf16.mxu0 0
        %9690 = vmatpush1.bf16.msra.mxu0 %v9323
        %9691 = vmatprep.subr.bf16.mxu0 0
        %9692 = vmatpush2.bf16.msra.mxu0 %v9338
        %9693 = vmatprep.subr.bf16.mxu0 0
        %9694 = vmatpush2.bf16.msra.mxu0 %v9337
        %9695 = vmatprep.subr.bf16.mxu0 0
        %9696 = vmatpush2.bf16.msra.mxu0 %v9336
        %9697 = vmatprep.subr.bf16.mxu0 0
        %9698 = vmatpush2.bf16.msra.mxu0 %v9335
        %9699 = vmatprep.subr.bf16.mxu0 0
        %9700 = vmatpush2.bf16.msra.mxu0 %v9334
        %9701 = vmatprep.subr.bf16.mxu0 0
        %9702 = vmatpush2.bf16.msra.mxu0 %v9333
        %9703 = vmatprep.subr.bf16.mxu0 0
        %9704 = vmatpush2.bf16.msra.mxu0 %v9332
        %9705 = vmatprep.subr.bf16.mxu0 0
        %9706 = vmatpush2.bf16.msra.mxu0 %v9331
        %9707 = vmatprep.mubr.bf16.mxu0 %v8477
        %9708 = vmatmul.mubr.bf16.gmra.mxu0 %v8476
        %v9709 = vpop.f32.mrf.mxu0
        %v9710 = vadd.f32 %v9670, %v9709
        %v9711 = vpop.f32.mrf.mxu0
        %v9712 = vpop.f32.mrf.mxu0
        %v9713 = vpop.f32.mrf.mxu0
        %9714 = vdwg.mxu0
        %9715 = vmatprep.subr.bf16.mxu0 0
        %9716 = vmatpush1.bf16.msra.mxu0 %v9346
        %9717 = vmatprep.subr.bf16.mxu0 0
        %9718 = vmatpush1.bf16.msra.mxu0 %v9345
        %9719 = vmatprep.subr.bf16.mxu0 0
        %9720 = vmatpush1.bf16.msra.mxu0 %v9344
        %9721 = vmatprep.subr.bf16.mxu0 0
        %9722 = vmatpush1.bf16.msra.mxu0 %v9343
        %9723 = vmatprep.subr.bf16.mxu0 0
        %9724 = vmatpush1.bf16.msra.mxu0 %v9342
        %9725 = vmatprep.subr.bf16.mxu0 0
        %9726 = vmatpush1.bf16.msra.mxu0 %v9341
        %9727 = vmatprep.subr.bf16.mxu0 0
        %9728 = vmatpush1.bf16.msra.mxu0 %v9340
        %9729 = vmatprep.subr.bf16.mxu0 0
        %9730 = vmatpush1.bf16.msra.mxu0 %v9339
        %9731 = vmatprep.subr.bf16.mxu0 0
        %9732 = vmatpush2.bf16.msra.mxu0 %v9354
        %9733 = vmatprep.subr.bf16.mxu0 0
        %9734 = vmatpush2.bf16.msra.mxu0 %v9353
        %9735 = vmatprep.subr.bf16.mxu0 0
        %9736 = vmatpush2.bf16.msra.mxu0 %v9352
        %9737 = vmatprep.subr.bf16.mxu0 0
        %9738 = vmatpush2.bf16.msra.mxu0 %v9351
        %9739 = vmatprep.subr.bf16.mxu0 0
        %9740 = vmatpush2.bf16.msra.mxu0 %v9350
        %9741 = vmatprep.subr.bf16.mxu0 0
        %9742 = vmatpush2.bf16.msra.mxu0 %v9349
        %9743 = vmatprep.subr.bf16.mxu0 0
        %9744 = vmatpush2.bf16.msra.mxu0 %v9348
        %9745 = vmatprep.subr.bf16.mxu0 0
        %9746 = vmatpush2.bf16.msra.mxu0 %v9347
        %9747 = vmatprep.mubr.bf16.mxu0 %v8479
        %9748 = vmatmul.mubr.bf16.gmra.mxu0 %v8478
        %v9749 = vpop.f32.mrf.mxu0
        %v9750 = vadd.f32 %v9710, %v9749
        %v9751 = vpop.f32.mrf.mxu0
        %v9752 = vpop.f32.mrf.mxu0
        %v9753 = vpop.f32.mrf.mxu0
        %9754 = vdwg.mxu0
        %9755 = vmatprep.subr.bf16.mxu0 0
        %9756 = vmatpush1.bf16.msra.mxu0 %v9362
        %9757 = vmatprep.subr.bf16.mxu0 0
        %9758 = vmatpush1.bf16.msra.mxu0 %v9361
        %9759 = vmatprep.subr.bf16.mxu0 0
        %9760 = vmatpush1.bf16.msra.mxu0 %v9360
        %9761 = vmatprep.subr.bf16.mxu0 0
        %9762 = vmatpush1.bf16.msra.mxu0 %v9359
        %9763 = vmatprep.subr.bf16.mxu0 0
        %9764 = vmatpush1.bf16.msra.mxu0 %v9358
        %9765 = vmatprep.subr.bf16.mxu0 0
        %9766 = vmatpush1.bf16.msra.mxu0 %v9357
        %9767 = vmatprep.subr.bf16.mxu0 0
        %9768 = vmatpush1.bf16.msra.mxu0 %v9356
        %9769 = vmatprep.subr.bf16.mxu0 0
        %9770 = vmatpush1.bf16.msra.mxu0 %v9355
        %9771 = vmatprep.subr.bf16.mxu0 0
        %9772 = vmatpush2.bf16.msra.mxu0 %v9370
        %9773 = vmatprep.subr.bf16.mxu0 0
        %9774 = vmatpush2.bf16.msra.mxu0 %v9369
        %9775 = vmatprep.subr.bf16.mxu0 0
        %9776 = vmatpush2.bf16.msra.mxu0 %v9368
        %9777 = vmatprep.subr.bf16.mxu0 0
        %9778 = vmatpush2.bf16.msra.mxu0 %v9367
        %9779 = vmatprep.subr.bf16.mxu0 0
        %9780 = vmatpush2.bf16.msra.mxu0 %v9366
        %9781 = vmatprep.subr.bf16.mxu0 0
        %9782 = vmatpush2.bf16.msra.mxu0 %v9365
        %9783 = vmatprep.subr.bf16.mxu0 0
        %9784 = vmatpush2.bf16.msra.mxu0 %v9364
        %9785 = vmatprep.subr.bf16.mxu0 0
        %9786 = vmatpush2.bf16.msra.mxu0 %v9363
        %9787 = vmatprep.mubr.bf16.mxu0 %v8481
        %9788 = vmatmul.mubr.bf16.gmra.mxu0 %v8480
        %v9789 = vpop.f32.mrf.mxu0
        %v9790 = vadd.f32 %v9750, %v9789
        %v9791 = vpop.f32.mrf.mxu0
        %v9792 = vpop.f32.mrf.mxu0
        %v9793 = vpop.f32.mrf.mxu0
        %9794 = vdwg.mxu0
        %9795 = vmatprep.subr.bf16.mxu0 0
        %9796 = vmatpush1.bf16.msra.mxu0 %v9378
        %9797 = vmatprep.subr.bf16.mxu0 0
        %9798 = vmatpush1.bf16.msra.mxu0 %v9377
        %9799 = vmatprep.subr.bf16.mxu0 0
        %9800 = vmatpush1.bf16.msra.mxu0 %v9376
        %9801 = vmatprep.subr.bf16.mxu0 0
        %9802 = vmatpush1.bf16.msra.mxu0 %v9375
        %9803 = vmatprep.subr.bf16.mxu0 0
        %9804 = vmatpush1.bf16.msra.mxu0 %v9374
        %9805 = vmatprep.subr.bf16.mxu0 0
        %9806 = vmatpush1.bf16.msra.mxu0 %v9373
        %9807 = vmatprep.subr.bf16.mxu0 0
        %9808 = vmatpush1.bf16.msra.mxu0 %v9372
        %9809 = vmatprep.subr.bf16.mxu0 0
        %9810 = vmatpush1.bf16.msra.mxu0 %v9371
        %9811 = vmatprep.subr.bf16.mxu0 0
        %9812 = vmatpush2.bf16.msra.mxu0 %v9386
        %9813 = vmatprep.subr.bf16.mxu0 0
        %9814 = vmatpush2.bf16.msra.mxu0 %v9385
        %9815 = vmatprep.subr.bf16.mxu0 0
        %9816 = vmatpush2.bf16.msra.mxu0 %v9384
        %9817 = vmatprep.subr.bf16.mxu0 0
        %9818 = vmatpush2.bf16.msra.mxu0 %v9383
        %9819 = vmatprep.subr.bf16.mxu0 0
        %9820 = vmatpush2.bf16.msra.mxu0 %v9382
        %9821 = vmatprep.subr.bf16.mxu0 0
        %9822 = vmatpush2.bf16.msra.mxu0 %v9381
        %9823 = vmatprep.subr.bf16.mxu0 0
        %9824 = vmatpush2.bf16.msra.mxu0 %v9380
        %9825 = vmatprep.subr.bf16.mxu0 0
        %9826 = vmatpush2.bf16.msra.mxu0 %v9379
        %9827 = vmatprep.mubr.bf16.mxu0 %v8483
        %9828 = vmatmul.mubr.bf16.gmra.mxu0 %v8482
        %v9829 = vpop.f32.mrf.mxu0
        %v9830 = vadd.f32 %v9790, %v9829
        %v9831 = vpop.f32.mrf.mxu0
        %v9832 = vpop.f32.mrf.mxu0
        %v9833 = vpop.f32.mrf.mxu0
        %9834 = vdwg.mxu0
        %vm9835 = vcmp.ge.f32.partialorder %v9830, 0.0
        %v9836 = vstv %s380
        %v9837 = vmul.f32 %v9836, %v9830
        %v9838 = vsel %vm9835, %v9830, %v9837
        %v9839 = vpack.c.bf16 %v9838, %v9838
        %v9840 = vld [vmem:[%s7] sm:$0xf]
        %v9841 = vld [vmem:[%s7 + $0x4] sm:$0xf]
        %v9842 = vld [vmem:[%s7 + $0x8] sm:$0xf]
        %v9843 = vld [vmem:[%s7 + $0xc] sm:$0xf]
        %v9844 = vld [vmem:[%s8] sm:$0x1]
        %v9846 = vlaneseq
        %v9847 = vshrl.u32 %v9846, 7
        %v9848 = vsub.s32 0, %v9847
        %v9849 = vrot.slane %v9844, %v9848
        %v9855 = vunpack.c.l.b16 %v9840
        %v9856 = vunpack.c.l.b16 %v9841
        %v9857 = vunpack.c.l.b16 %v9842
        %v9858 = vunpack.c.l.b16 %v9843
        %v9859 = vpack.c.b16 %v9856, %v9855
        %v9860 = vpack.c.b16 %v9858, %v9857
        %vm9863 = vcmask 261120
        %v9865 = vsel %vm9863, %v9839, 0
        %9867 = vmatprep.subr.bf16.mxu0 0
        %9868 = vmatpush1.bf16.msra.mxu0 0
        %9869 = vmatprep.subr.bf16.mxu0 0
        %9870 = vmatpush1.bf16.msra.mxu0 0
        %9871 = vmatprep.subr.bf16.mxu0 0
        %9872 = vmatpush1.bf16.msra.mxu0 0
        %9873 = vmatprep.subr.bf16.mxu0 0
        %9874 = vmatpush1.bf16.msra.mxu0 0
        %9875 = vmatprep.subr.bf16.mxu0 0
        %9876 = vmatpush1.bf16.msra.mxu0 0
        %9877 = vmatprep.subr.bf16.mxu0 0
        %9878 = vmatpush1.bf16.msra.mxu0 0
        %9879 = vmatprep.subr.bf16.mxu0 0
        %9880 = vmatpush1.bf16.msra.mxu0 %v9860
        %9881 = vmatprep.subr.bf16.mxu0 0
        %9882 = vmatpush1.bf16.msra.mxu0 %v9859
        %9883 = vmatprep.subr.bf16.mxu0 0
        %9884 = vmatpush2.bf16.msra.mxu0 0
        %9885 = vmatprep.subr.bf16.mxu0 0
        %9886 = vmatpush2.bf16.msra.mxu0 0
        %9887 = vmatprep.subr.bf16.mxu0 0
        %9888 = vmatpush2.bf16.msra.mxu0 0
        %9889 = vmatprep.subr.bf16.mxu0 0
        %9890 = vmatpush2.bf16.msra.mxu0 0
        %9891 = vmatprep.subr.bf16.mxu0 0
        %9892 = vmatpush2.bf16.msra.mxu0 0
        %9893 = vmatprep.subr.bf16.mxu0 0
        %9894 = vmatpush2.bf16.msra.mxu0 0
        %9895 = vmatprep.subr.bf16.mxu0 0
        %9896 = vmatpush2.bf16.msra.mxu0 0
        %9897 = vmatprep.subr.bf16.mxu0 0
        %9898 = vmatpush2.bf16.msra.mxu0 0
        %9899 = vmatprep.mubr.bf16.mxu0 0
        %9900 = vmatmul.mubr.bf16.gmra.mxu0 %v9865
        %v9901 = vpop.f32.mrf.mxu0
        %v9902 = vadd.f32 %v9849, %v9901
        %v9903 = vpop.f32.mrf.mxu0
        %v9904 = vpop.f32.mrf.mxu0
        %v9905 = vpop.f32.mrf.mxu0
        %9906 = vdwg.mxu0
        %vm9907 = vcmask 254976
        %9908 = vst.msk [vmem:[%s369] sm:$0x3] %vm9907, %v9902
        %s9909 = sand.u32 %s248, 1
        %s9910 = scalar_lea.sflag [#allocation4], %s9909
        %s9911 = sand.u32 %s248, 1
        %s9912 = smul.addr %s9911, 2
        %s9913 = scalar_lea.vmem [#allocation6], %s9912
        // Predicated region
        $region65: #{embedding_net_forward.1} parent=59 // pred_check
          %p9914 = pneg %p258
        $region66: #{embedding_net_forward.1} parent=59 // pred_check_branch
          %9916 = sbr.rel (%p9914) target = $region68
        $region67: #{embedding_net_forward.1} parent=59 // pred_region
          %s9918 = ssub.s32 32, 32
          %9919 = vsyncadd %s9910, %s9918
          %s9920 = smul.addr %s25, 32
          %s9921 = scalar_lea.hbm %s10, %s9920
          %s9923 = sshll.u32 %s9913, 4
          %s9924 = int_to_ptr.vmem [resolvable:$true] %s9923
          %9926 = dma.vmem_to_hbm [thread:$0]  %s9924, 32, %s9921, %s9910
        $region68: #{embedding_net_forward.1} parent=59 // pred_fallthru
          _
      $region60: #{embedding_net_forward.1} parent=5 // pred_fallthru
        _
      %p9927 = scmp.le.s32.totalorder 2, %s20
      // Predicated region
      $region69: #{embedding_net_forward.1} parent=5 // pred_check
        %p9928 = pneg %p9927
      $region70: #{embedding_net_forward.1} parent=5 // pred_check_branch
        %9930 = sbr.rel (%p9928) target = $region72
      $region71: #{embedding_net_forward.1} parent=5 // pred_region
        %s9931 = ssub.s32 %s20, 2
        // Predicated region
        $region73: #{embedding_net_forward.1} parent=71 // pred_check
          %p9932 = pneg %p264
        $region74: #{embedding_net_forward.1} parent=71 // pred_check_branch
          %9934 = sbr.rel (%p9932) target = $region76
        $region75: #{embedding_net_forward.1} parent=71 // pred_region
          %s9935 = sand.u32 %s249, 1
          %s9936 = scalar_lea.sflag [#allocation4], %s9935
          %s9937 = sand.u32 %s249, 1
          %s9938 = smul.addr %s9937, 2
          %s9939 = scalar_lea.vmem [#allocation6], %s9938
          %9940 = dma.done %s9936, 32
        $region76: #{embedding_net_forward.1} parent=71 // pred_fallthru
          _
      $region72: #{embedding_net_forward.1} parent=5 // pred_fallthru
        _
    $region6: #{embedding_net_forward.1} parent=1 // loop_footer
      %s24 = sadd.s32 1, %s20
    $region7: #{embedding_net_forward.1} parent=1 // loop_footer_branch
      %19 = sbr.rel target = $region3
    $region8: #{embedding_net_forward.1} parent=1 // loop_exit
      _
    %9941 = vsyncpa [#allocation4], 1
    %s9942 = scalar_lea.sflag [#allocation4], 1
    %9943 = vsyncpa %s9942, 1
    %9944 = vsyncpa [#allocation5], 1
    %s9945 = scalar_lea.sflag [#allocation5], 1
    %9946 = vsyncpa %s9945, 1

</llo_original>
